<compile_context>
chip_gen: v6e
topology: v6e:2x2x1
jax: 0.10.0
libtpu: 0.0.40
codegen_flags: <defaults>
</compile_context>

<pallas_src>
import numpy as np
import jax
import jax.numpy as jnp
from jax.experimental import pallas as pl
from jax.experimental.pallas import tpu as pltpu


# ---------------------------------------------------------------------------
# Kernel helpers (fully unrolled at trace time -- sizes are 1..3, 18 planes max)
# ---------------------------------------------------------------------------
def _softplus(x):
    # torch.nn.Softplus(beta=1, threshold=20); unclamped exp is safe under the where.
    return jnp.where(x > 20.0, x, jnp.log1p(jnp.exp(x)))


def _linear(w, b, inputs, n_in, n_out):
    """Unrolled Linear(n_in, n_out) as scalar-broadcast FMAs on the VPU.

    `w` is a flat Python list of n_in*n_out scalar values, row-major in (in, out)
    order; `b` is a list of n_out scalars.  `inputs` is a list of n_in arrays with
    the batch on the trailing (S, 128) tile.
    """
    outs = []
    for k in range(n_out):
        acc = inputs[0] * w[k]
        for f in range(1, n_in):
            acc = acc + inputs[f] * w[f * n_out + k]
        outs.append(acc + b[k])
    return outs


def _read_fc(p_ref, base, n_in, n_mid, n_out):
    """Read the 6 weight/bias chunks of one FCLayer(num_fc=3) from SMEM once."""
    layers = []
    off = base
    for i, o in ((n_in, n_mid), (n_mid, n_mid), (n_mid, n_out)):
        w = [p_ref[off + t] for t in range(i * o)]
        off += i * o
        b = [p_ref[off + t] for t in range(o)]
        off += o
        layers.append((w, b))
    return layers, off


def _fc_apply(fc_params, inputs, dims):
    """FCLayer(num_fc=3): Linear -> Softplus -> Linear -> Softplus -> Linear."""
    (w1, b1), (w2, b2), (w3, b3) = fc_params
    n_in, n_mid, n_out = dims
    h = _linear(w1, b1, inputs, n_in, n_mid)
    h = [_softplus(v) for v in h]
    h = _linear(w2, b2, h, n_mid, n_mid)
    h = [_softplus(v) for v in h]
    return _linear(w3, b3, h, n_mid, n_out)


def alloy_kernel(p_ref, x1_ref, x2_ref, o_ref):
    # p_ref : SMEM (84,) f32                      -- all weights/biases, flat.
    # x1_ref: VMEM (3 feat, 3 group, 6 j, S, 128) -- batch on dense (S,128) tile.
    # x2_ref: VMEM (2 feat, 3 row, S, 128)
    # o_ref : VMEM (S, 128)                       -- dense, unmasked store.

    # Hoist all 84 scalar parameters out of the compute loops (single SMEM read each).
    fc1_p, off = _read_fc(p_ref, 0, 3, 3, 1)
    fc2_p, off = _read_fc(p_ref, off, 3, 3, 1)
    fc3_p, off = _read_fc(p_ref, off, 2, 3, 1)
    w_ln0, w_ln1, b_ln = p_ref[off], p_ref[off + 1], p_ref[off + 2]

    # --- fc1 branch: run the tiny MLP on each of the 18 (group, j) planes and fuse the
    # reshape(B,3,6).sum(2) into a per-group running accumulator (plain VPU adds).
    g = []
    for gi in range(3):
        gacc = None
        for j in range(6):
            feats = [x1_ref[f, gi, j] for f in range(3)]          # each (S, 128)
            (y,) = _fc_apply(fc1_p, feats, (3, 3, 1))
            gacc = y if gacc is None else gacc + y
        g.append(gacc)                                            # (S, 128)

    # --- fc2 branch on the 3 group-sums: 3 -> 3 -> 3 -> 1
    (m,) = _fc_apply(fc2_p, g, (3, 3, 1))                         # (S, 128)

    # --- fc3 branch: 2 -> 3 -> 3 -> 1 per row of x2, row-sum fused
    nacc = None
    for r in range(3):
        feats = [x2_ref[f, r] for f in range(2)]                  # each (S, 128)
        (y,) = _fc_apply(fc3_p, feats, (2, 3, 1))
        nacc = y if nacc is None else nacc + y

    # --- ln1 over cat([m, n], 1):  out = m*W[0] + n*W[1] + b
    o_ref[...] = m * w_ln0 + nacc * w_ln1 + b_ln


# ---------------------------------------------------------------------------
# Wrapper
# ---------------------------------------------------------------------------
def _round_up(x, m):
    return (x + m - 1) // m * m


def _cdiv(a, b):
    return -(-a // b)


def _choose_bt(B, block_b):
    """Lane tile: multiple of 1024 (so S = bt/128 is a multiple of 8); >= 2 grid steps
    whenever B > 1024 (v7x has 2 TensorCores sharing the 'parallel' axis); minimal tail
    padding for awkward batch sizes."""
    block_b = max(1024, _round_up(block_b, 1024))
    if B <= 1024:
        return 1024
    n_steps = max(2, _cdiv(B, block_b))
    return min(block_b, _round_up(_cdiv(B, n_steps), 1024))


def alloy_net_forward(x1, x2, params, *, block_b=4096):
    """x1: (B,3,6,3) f32, x2: (B,3,2) f32, params: flat list of 20 arrays
    (weights stored (in, out), biases (1, out)), in order fc1, fc2, fc3, ln1."""
    B = x1.shape[0]

    bt = _choose_bt(B, block_b)
    bp = _round_up(B, bt)
    S = bt // 128
    pad = bp - B

    # Put the batch last, pad, then split it into a dense (bp/128, 128) tile.
    x1_t = jnp.transpose(x1.astype(jnp.float32), (3, 1, 2, 0))    # (3, 3, 6, B)
    x2_t = jnp.transpose(x2.astype(jnp.float32), (2, 1, 0))       # (2, 3, B)
    if pad:
        x1_t = jnp.pad(x1_t, ((0, 0), (0, 0), (0, 0), (0, pad)))
        x2_t = jnp.pad(x2_t, ((0, 0), (0, 0), (0, pad)))
    x1_t = x1_t.reshape(3, 3, 6, bp // 128, 128)
    x2_t = x2_t.reshape(2, 3, bp // 128, 128)

    # Pack all 20 tiny parameter tensors into one flat SMEM vector (84 scalars).
    p_flat = jnp.concatenate([jnp.asarray(p, jnp.float32).reshape(-1) for p in params])

    out = pl.pallas_call(
        alloy_kernel,
        grid=(bp // bt,),
        in_specs=[
            pl.BlockSpec(memory_space=pltpu.MemorySpace.SMEM),            # packed params
            pl.BlockSpec((3, 3, 6, S, 128), lambda i: (0, 0, 0, i, 0)),   # x1 (batch tiled)
            pl.BlockSpec((2, 3, S, 128), lambda i: (0, 0, i, 0)),         # x2 (batch tiled)
        ],
        out_specs=pl.BlockSpec((S, 128), lambda i: (i, 0)),               # dense output
        out_shape=jax.ShapeDtypeStruct((bp // 128, 128), jnp.float32),
        compiler_params=pltpu.CompilerParams(
            dimension_semantics=("parallel",),
            allow_input_fusion=[False, True, True],
        ),
    )(p_flat, x1_t, x2_t)

    return out.reshape(-1)[:B].reshape(B, 1)


# ---------------- deterministic parameter construction ----------------
def _xavier(key, fan_in, fan_out):
    limit = float(np.sqrt(6.0 / (fan_in + fan_out)))
    # stored already transposed to (in, out) so the math is x @ W
    return jax.random.uniform(key, (fan_in, fan_out), jnp.float32, -limit, limit)


def make_fc_params(key, in_dim, mid_dim, out_dim):
    k1, k2, k3 = jax.random.split(key, 3)
    return [
        _xavier(k1, in_dim, mid_dim), jnp.zeros((1, mid_dim), jnp.float32),
        _xavier(k2, mid_dim, mid_dim), jnp.zeros((1, mid_dim), jnp.float32),
        _xavier(k3, mid_dim, out_dim), jnp.zeros((1, out_dim), jnp.float32),
    ]


# ---------------- pure-JAX reference (for correctness check) ----------------
def _fc_ref(x, p):
    wa, ba, wb, bb, wc, bc = p
    hp = jax.lax.Precision.HIGHEST
    h = jax.nn.softplus(jnp.dot(x, wa, precision=hp) + ba)
    h = jax.nn.softplus(jnp.dot(h, wb, precision=hp) + bb)
    return jnp.dot(h, wc, precision=hp) + bc


def ref_forward(x1, x2, fc1_p, fc2_p, fc3_p, wl, bl):
    B = x1.shape[0]
    hp = jax.lax.Precision.HIGHEST
    m = _fc_ref(x1.reshape(B * 18, 3), fc1_p).reshape(B, 3, 6).sum(2)
    m = _fc_ref(m, fc2_p)
    n = _fc_ref(x2.reshape(B * 3, 2), fc3_p).reshape(B, 3).sum(1, keepdims=True)
    mn = jnp.concatenate([m, n], axis=1)
    return jnp.dot(mn, wl, precision=hp) + bl


def _check(B, key, params, fc1_p, fc2_p, fc3_p, wl, bl):
    k_x1, k_x2 = jax.random.split(key, 2)
    x1 = jax.random.normal(k_x1, (B, 3, 6, 3), jnp.float32)
    x2 = jax.random.normal(k_x2, (B, 3, 2), jnp.float32)
    out = jax.block_until_ready(alloy_net_forward(x1, x2, params))
    expected = ref_forward(x1, x2, fc1_p, fc2_p, fc3_p, wl, bl)
    if not np.allclose(np.asarray(out), np.asarray(expected), rtol=1e-5, atol=1e-5):
        raise AssertionError(f"Pallas kernel output mismatch vs reference (B={B})")


if __name__ == "__main__":
    root = jax.random.PRNGKey(0)
    k_data, k_data2, k_f1, k_f2, k_f3, k_l = jax.random.split(root, 6)

    fc1_p = make_fc_params(k_f1, 3, 3, 1)
    fc2_p = make_fc_params(k_f2, 3, 3, 1)
    fc3_p = make_fc_params(k_f3, 2, 3, 1)
    wl = _xavier(k_l, 2, 1)                      # (2, 1) == nn.Linear(2,1).weight.T
    bl = jnp.zeros((1, 1), jnp.float32)
    params = fc1_p + fc2_p + fc3_p + [wl, bl]

    # Small batch (single grid step) and an awkward batch exercising the 2-step grid.
    _check(2, k_data, params, fc1_p, fc2_p, fc3_p, wl, bl)
    _check(2500, k_data2, params, fc1_p, fc2_p, fc3_p, wl, bl)

    print("KERNEL_OK")
</pallas_src>

<mosaic_0001>
module attributes {stable_mosaic.version = 11 : i64} {
  func.func @alloy_kernel(%arg0: i32, %arg1: memref<84xf32, #tpu.memory_space<smem>>, %arg2: memref<3x3x6x8x128xf32, #tpu.memory_space<vmem>>, %arg3: memref<2x3x8x128xf32, #tpu.memory_space<vmem>>, %arg4: memref<8x128xf32, #tpu.memory_space<vmem>>) attributes {dimension_semantics = [#tpu.dimension_semantics<parallel>], iteration_bounds = array<i64: 1>, scalar_prefetch = 0 : i64, scratch_operands = 0 : i64, tpu.core_type = #tpu.core_type<tc>, window_params = [{transform_indices = @transform_0, window_bounds = array<i64: 84>}, {transform_indices = @transform_1, window_bounds = array<i64: 3, 3, 6, 8, 128>}, {transform_indices = @transform_2, window_bounds = array<i64: 2, 3, 8, 128>}, {transform_indices = @transform_3, window_bounds = array<i64: 8, 128>}]} {
    %c0 = arith.constant 0 : index
    %0 = memref.load %arg1[%c0] : memref<84xf32, #tpu.memory_space<smem>>
    %c1 = arith.constant 1 : index
    %1 = memref.load %arg1[%c1] : memref<84xf32, #tpu.memory_space<smem>>
    %c2 = arith.constant 2 : index
    %2 = memref.load %arg1[%c2] : memref<84xf32, #tpu.memory_space<smem>>
    %c3 = arith.constant 3 : index
    %3 = memref.load %arg1[%c3] : memref<84xf32, #tpu.memory_space<smem>>
    %c4 = arith.constant 4 : index
    %4 = memref.load %arg1[%c4] : memref<84xf32, #tpu.memory_space<smem>>
    %c5 = arith.constant 5 : index
    %5 = memref.load %arg1[%c5] : memref<84xf32, #tpu.memory_space<smem>>
    %c6 = arith.constant 6 : index
    %6 = memref.load %arg1[%c6] : memref<84xf32, #tpu.memory_space<smem>>
    %c7 = arith.constant 7 : index
    %7 = memref.load %arg1[%c7] : memref<84xf32, #tpu.memory_space<smem>>
    %c8 = arith.constant 8 : index
    %8 = memref.load %arg1[%c8] : memref<84xf32, #tpu.memory_space<smem>>
    %c9 = arith.constant 9 : index
    %9 = memref.load %arg1[%c9] : memref<84xf32, #tpu.memory_space<smem>>
    %c10 = arith.constant 10 : index
    %10 = memref.load %arg1[%c10] : memref<84xf32, #tpu.memory_space<smem>>
    %c11 = arith.constant 11 : index
    %11 = memref.load %arg1[%c11] : memref<84xf32, #tpu.memory_space<smem>>
    %c12 = arith.constant 12 : index
    %12 = memref.load %arg1[%c12] : memref<84xf32, #tpu.memory_space<smem>>
    %c13 = arith.constant 13 : index
    %13 = memref.load %arg1[%c13] : memref<84xf32, #tpu.memory_space<smem>>
    %c14 = arith.constant 14 : index
    %14 = memref.load %arg1[%c14] : memref<84xf32, #tpu.memory_space<smem>>
    %c15 = arith.constant 15 : index
    %15 = memref.load %arg1[%c15] : memref<84xf32, #tpu.memory_space<smem>>
    %c16 = arith.constant 16 : index
    %16 = memref.load %arg1[%c16] : memref<84xf32, #tpu.memory_space<smem>>
    %c17 = arith.constant 17 : index
    %17 = memref.load %arg1[%c17] : memref<84xf32, #tpu.memory_space<smem>>
    %c18 = arith.constant 18 : index
    %18 = memref.load %arg1[%c18] : memref<84xf32, #tpu.memory_space<smem>>
    %c19 = arith.constant 19 : index
    %19 = memref.load %arg1[%c19] : memref<84xf32, #tpu.memory_space<smem>>
    %c20 = arith.constant 20 : index
    %20 = memref.load %arg1[%c20] : memref<84xf32, #tpu.memory_space<smem>>
    %c21 = arith.constant 21 : index
    %21 = memref.load %arg1[%c21] : memref<84xf32, #tpu.memory_space<smem>>
    %c22 = arith.constant 22 : index
    %22 = memref.load %arg1[%c22] : memref<84xf32, #tpu.memory_space<smem>>
    %c23 = arith.constant 23 : index
    %23 = memref.load %arg1[%c23] : memref<84xf32, #tpu.memory_space<smem>>
    %c24 = arith.constant 24 : index
    %24 = memref.load %arg1[%c24] : memref<84xf32, #tpu.memory_space<smem>>
    %c25 = arith.constant 25 : index
    %25 = memref.load %arg1[%c25] : memref<84xf32, #tpu.memory_space<smem>>
    %c26 = arith.constant 26 : index
    %26 = memref.load %arg1[%c26] : memref<84xf32, #tpu.memory_space<smem>>
    %c27 = arith.constant 27 : index
    %27 = memref.load %arg1[%c27] : memref<84xf32, #tpu.memory_space<smem>>
    %c28 = arith.constant 28 : index
    %28 = memref.load %arg1[%c28] : memref<84xf32, #tpu.memory_space<smem>>
    %c29 = arith.constant 29 : index
    %29 = memref.load %arg1[%c29] : memref<84xf32, #tpu.memory_space<smem>>
    %c30 = arith.constant 30 : index
    %30 = memref.load %arg1[%c30] : memref<84xf32, #tpu.memory_space<smem>>
    %c31 = arith.constant 31 : index
    %31 = memref.load %arg1[%c31] : memref<84xf32, #tpu.memory_space<smem>>
    %c32 = arith.constant 32 : index
    %32 = memref.load %arg1[%c32] : memref<84xf32, #tpu.memory_space<smem>>
    %c33 = arith.constant 33 : index
    %33 = memref.load %arg1[%c33] : memref<84xf32, #tpu.memory_space<smem>>
    %c34 = arith.constant 34 : index
    %34 = memref.load %arg1[%c34] : memref<84xf32, #tpu.memory_space<smem>>
    %c35 = arith.constant 35 : index
    %35 = memref.load %arg1[%c35] : memref<84xf32, #tpu.memory_space<smem>>
    %c36 = arith.constant 36 : index
    %36 = memref.load %arg1[%c36] : memref<84xf32, #tpu.memory_space<smem>>
    %c37 = arith.constant 37 : index
    %37 = memref.load %arg1[%c37] : memref<84xf32, #tpu.memory_space<smem>>
    %c38 = arith.constant 38 : index
    %38 = memref.load %arg1[%c38] : memref<84xf32, #tpu.memory_space<smem>>
    %c39 = arith.constant 39 : index
    %39 = memref.load %arg1[%c39] : memref<84xf32, #tpu.memory_space<smem>>
    %c40 = arith.constant 40 : index
    %40 = memref.load %arg1[%c40] : memref<84xf32, #tpu.memory_space<smem>>
    %c41 = arith.constant 41 : index
    %41 = memref.load %arg1[%c41] : memref<84xf32, #tpu.memory_space<smem>>
    %c42 = arith.constant 42 : index
    %42 = memref.load %arg1[%c42] : memref<84xf32, #tpu.memory_space<smem>>
    %c43 = arith.constant 43 : index
    %43 = memref.load %arg1[%c43] : memref<84xf32, #tpu.memory_space<smem>>
    %c44 = arith.constant 44 : index
    %44 = memref.load %arg1[%c44] : memref<84xf32, #tpu.memory_space<smem>>
    %c45 = arith.constant 45 : index
    %45 = memref.load %arg1[%c45] : memref<84xf32, #tpu.memory_space<smem>>
    %c46 = arith.constant 46 : index
    %46 = memref.load %arg1[%c46] : memref<84xf32, #tpu.memory_space<smem>>
    %c47 = arith.constant 47 : index
    %47 = memref.load %arg1[%c47] : memref<84xf32, #tpu.memory_space<smem>>
    %c48 = arith.constant 48 : index
    %48 = memref.load %arg1[%c48] : memref<84xf32, #tpu.memory_space<smem>>
    %c49 = arith.constant 49 : index
    %49 = memref.load %arg1[%c49] : memref<84xf32, #tpu.memory_space<smem>>
    %c50 = arith.constant 50 : index
    %50 = memref.load %arg1[%c50] : memref<84xf32, #tpu.memory_space<smem>>
    %c51 = arith.constant 51 : index
    %51 = memref.load %arg1[%c51] : memref<84xf32, #tpu.memory_space<smem>>
    %c52 = arith.constant 52 : index
    %52 = memref.load %arg1[%c52] : memref<84xf32, #tpu.memory_space<smem>>
    %c53 = arith.constant 53 : index
    %53 = memref.load %arg1[%c53] : memref<84xf32, #tpu.memory_space<smem>>
    %c54 = arith.constant 54 : index
    %54 = memref.load %arg1[%c54] : memref<84xf32, #tpu.memory_space<smem>>
    %c55 = arith.constant 55 : index
    %55 = memref.load %arg1[%c55] : memref<84xf32, #tpu.memory_space<smem>>
    %c56 = arith.constant 56 : index
    %56 = memref.load %arg1[%c56] : memref<84xf32, #tpu.memory_space<smem>>
    %c57 = arith.constant 57 : index
    %57 = memref.load %arg1[%c57] : memref<84xf32, #tpu.memory_space<smem>>
    %c58 = arith.constant 58 : index
    %58 = memref.load %arg1[%c58] : memref<84xf32, #tpu.memory_space<smem>>
    %c59 = arith.constant 59 : index
    %59 = memref.load %arg1[%c59] : memref<84xf32, #tpu.memory_space<smem>>
    %c60 = arith.constant 60 : index
    %60 = memref.load %arg1[%c60] : memref<84xf32, #tpu.memory_space<smem>>
    %c61 = arith.constant 61 : index
    %61 = memref.load %arg1[%c61] : memref<84xf32, #tpu.memory_space<smem>>
    %c62 = arith.constant 62 : index
    %62 = memref.load %arg1[%c62] : memref<84xf32, #tpu.memory_space<smem>>
    %c63 = arith.constant 63 : index
    %63 = memref.load %arg1[%c63] : memref<84xf32, #tpu.memory_space<smem>>
    %c64 = arith.constant 64 : index
    %64 = memref.load %arg1[%c64] : memref<84xf32, #tpu.memory_space<smem>>
    %c65 = arith.constant 65 : index
    %65 = memref.load %arg1[%c65] : memref<84xf32, #tpu.memory_space<smem>>
    %c66 = arith.constant 66 : index
    %66 = memref.load %arg1[%c66] : memref<84xf32, #tpu.memory_space<smem>>
    %c67 = arith.constant 67 : index
    %67 = memref.load %arg1[%c67] : memref<84xf32, #tpu.memory_space<smem>>
    %c68 = arith.constant 68 : index
    %68 = memref.load %arg1[%c68] : memref<84xf32, #tpu.memory_space<smem>>
    %c69 = arith.constant 69 : index
    %69 = memref.load %arg1[%c69] : memref<84xf32, #tpu.memory_space<smem>>
    %c70 = arith.constant 70 : index
    %70 = memref.load %arg1[%c70] : memref<84xf32, #tpu.memory_space<smem>>
    %c71 = arith.constant 71 : index
    %71 = memref.load %arg1[%c71] : memref<84xf32, #tpu.memory_space<smem>>
    %c72 = arith.constant 72 : index
    %72 = memref.load %arg1[%c72] : memref<84xf32, #tpu.memory_space<smem>>
    %c73 = arith.constant 73 : index
    %73 = memref.load %arg1[%c73] : memref<84xf32, #tpu.memory_space<smem>>
    %c74 = arith.constant 74 : index
    %74 = memref.load %arg1[%c74] : memref<84xf32, #tpu.memory_space<smem>>
    %c75 = arith.constant 75 : index
    %75 = memref.load %arg1[%c75] : memref<84xf32, #tpu.memory_space<smem>>
    %c76 = arith.constant 76 : index
    %76 = memref.load %arg1[%c76] : memref<84xf32, #tpu.memory_space<smem>>
    %c77 = arith.constant 77 : index
    %77 = memref.load %arg1[%c77] : memref<84xf32, #tpu.memory_space<smem>>
    %c78 = arith.constant 78 : index
    %78 = memref.load %arg1[%c78] : memref<84xf32, #tpu.memory_space<smem>>
    %c79 = arith.constant 79 : index
    %79 = memref.load %arg1[%c79] : memref<84xf32, #tpu.memory_space<smem>>
    %c80 = arith.constant 80 : index
    %80 = memref.load %arg1[%c80] : memref<84xf32, #tpu.memory_space<smem>>
    %c81 = arith.constant 81 : index
    %81 = memref.load %arg1[%c81] : memref<84xf32, #tpu.memory_space<smem>>
    %c82 = arith.constant 82 : index
    %82 = memref.load %arg1[%c82] : memref<84xf32, #tpu.memory_space<smem>>
    %c83 = arith.constant 83 : index
    %83 = memref.load %arg1[%c83] : memref<84xf32, #tpu.memory_space<smem>>
    %c0_0 = arith.constant 0 : index
    %c0_1 = arith.constant 0 : index
    %c0_2 = arith.constant 0 : index
    %c0_3 = arith.constant 0 : index
    %c0_4 = arith.constant 0 : index
    %84 = vector.load %arg2[%c0_0, %c0_1, %c0_2, %c0_3, %c0_4] : memref<3x3x6x8x128xf32, #tpu.memory_space<vmem>>, vector<1x1x1x8x128xf32>
    %85 = vector.shape_cast %84 : vector<1x1x1x8x128xf32> to vector<8x128xf32>
    %c1_5 = arith.constant 1 : index
    %c0_6 = arith.constant 0 : index
    %c0_7 = arith.constant 0 : index
    %c0_8 = arith.constant 0 : index
    %c0_9 = arith.constant 0 : index
    %86 = vector.load %arg2[%c1_5, %c0_6, %c0_7, %c0_8, %c0_9] : memref<3x3x6x8x128xf32, #tpu.memory_space<vmem>>, vector<1x1x1x8x128xf32>
    %87 = vector.shape_cast %86 : vector<1x1x1x8x128xf32> to vector<8x128xf32>
    %c2_10 = arith.constant 2 : index
    %c0_11 = arith.constant 0 : index
    %c0_12 = arith.constant 0 : index
    %c0_13 = arith.constant 0 : index
    %c0_14 = arith.constant 0 : index
    %88 = vector.load %arg2[%c2_10, %c0_11, %c0_12, %c0_13, %c0_14] : memref<3x3x6x8x128xf32, #tpu.memory_space<vmem>>, vector<1x1x1x8x128xf32>
    %89 = vector.shape_cast %88 : vector<1x1x1x8x128xf32> to vector<8x128xf32>
    %90 = vector.broadcast %0 : f32 to vector<8x128xf32>
    %91 = arith.mulf %85, %90 : vector<8x128xf32>
    %92 = vector.broadcast %3 : f32 to vector<8x128xf32>
    %93 = arith.mulf %87, %92 : vector<8x128xf32>
    %94 = arith.addf %91, %93 : vector<8x128xf32>
    %95 = vector.broadcast %6 : f32 to vector<8x128xf32>
    %96 = arith.mulf %89, %95 : vector<8x128xf32>
    %97 = arith.addf %94, %96 : vector<8x128xf32>
    %98 = vector.broadcast %9 : f32 to vector<8x128xf32>
    %99 = arith.addf %97, %98 : vector<8x128xf32>
    %100 = vector.broadcast %1 : f32 to vector<8x128xf32>
    %101 = arith.mulf %85, %100 : vector<8x128xf32>
    %102 = vector.broadcast %4 : f32 to vector<8x128xf32>
    %103 = arith.mulf %87, %102 : vector<8x128xf32>
    %104 = arith.addf %101, %103 : vector<8x128xf32>
    %105 = vector.broadcast %7 : f32 to vector<8x128xf32>
    %106 = arith.mulf %89, %105 : vector<8x128xf32>
    %107 = arith.addf %104, %106 : vector<8x128xf32>
    %108 = vector.broadcast %10 : f32 to vector<8x128xf32>
    %109 = arith.addf %107, %108 : vector<8x128xf32>
    %110 = vector.broadcast %2 : f32 to vector<8x128xf32>
    %111 = arith.mulf %85, %110 : vector<8x128xf32>
    %112 = vector.broadcast %5 : f32 to vector<8x128xf32>
    %113 = arith.mulf %87, %112 : vector<8x128xf32>
    %114 = arith.addf %111, %113 : vector<8x128xf32>
    %115 = vector.broadcast %8 : f32 to vector<8x128xf32>
    %116 = arith.mulf %89, %115 : vector<8x128xf32>
    %117 = arith.addf %114, %116 : vector<8x128xf32>
    %118 = vector.broadcast %11 : f32 to vector<8x128xf32>
    %119 = arith.addf %117, %118 : vector<8x128xf32>
    %cst = arith.constant 2.000000e+01 : f32
    %120 = vector.broadcast %cst : f32 to vector<8x128xf32>
    %121 = arith.cmpf ogt, %99, %120 : vector<8x128xf32>
    %122 = math.exp %99 : vector<8x128xf32>
    %123 = math.log1p %122 : vector<8x128xf32>
    %124 = arith.select %121, %99, %123 : vector<8x128xi1>, vector<8x128xf32>
    %cst_15 = arith.constant 2.000000e+01 : f32
    %125 = vector.broadcast %cst_15 : f32 to vector<8x128xf32>
    %126 = arith.cmpf ogt, %109, %125 : vector<8x128xf32>
    %127 = math.exp %109 : vector<8x128xf32>
    %128 = math.log1p %127 : vector<8x128xf32>
    %129 = arith.select %126, %109, %128 : vector<8x128xi1>, vector<8x128xf32>
    %cst_16 = arith.constant 2.000000e+01 : f32
    %130 = vector.broadcast %cst_16 : f32 to vector<8x128xf32>
    %131 = arith.cmpf ogt, %119, %130 : vector<8x128xf32>
    %132 = math.exp %119 : vector<8x128xf32>
    %133 = math.log1p %132 : vector<8x128xf32>
    %134 = arith.select %131, %119, %133 : vector<8x128xi1>, vector<8x128xf32>
    %135 = vector.broadcast %12 : f32 to vector<8x128xf32>
    %136 = arith.mulf %124, %135 : vector<8x128xf32>
    %137 = vector.broadcast %15 : f32 to vector<8x128xf32>
    %138 = arith.mulf %129, %137 : vector<8x128xf32>
    %139 = arith.addf %136, %138 : vector<8x128xf32>
    %140 = vector.broadcast %18 : f32 to vector<8x128xf32>
    %141 = arith.mulf %134, %140 : vector<8x128xf32>
    %142 = arith.addf %139, %141 : vector<8x128xf32>
    %143 = vector.broadcast %21 : f32 to vector<8x128xf32>
    %144 = arith.addf %142, %143 : vector<8x128xf32>
    %145 = vector.broadcast %13 : f32 to vector<8x128xf32>
    %146 = arith.mulf %124, %145 : vector<8x128xf32>
    %147 = vector.broadcast %16 : f32 to vector<8x128xf32>
    %148 = arith.mulf %129, %147 : vector<8x128xf32>
    %149 = arith.addf %146, %148 : vector<8x128xf32>
    %150 = vector.broadcast %19 : f32 to vector<8x128xf32>
    %151 = arith.mulf %134, %150 : vector<8x128xf32>
    %152 = arith.addf %149, %151 : vector<8x128xf32>
    %153 = vector.broadcast %22 : f32 to vector<8x128xf32>
    %154 = arith.addf %152, %153 : vector<8x128xf32>
    %155 = vector.broadcast %14 : f32 to vector<8x128xf32>
    %156 = arith.mulf %124, %155 : vector<8x128xf32>
    %157 = vector.broadcast %17 : f32 to vector<8x128xf32>
    %158 = arith.mulf %129, %157 : vector<8x128xf32>
    %159 = arith.addf %156, %158 : vector<8x128xf32>
    %160 = vector.broadcast %20 : f32 to vector<8x128xf32>
    %161 = arith.mulf %134, %160 : vector<8x128xf32>
    %162 = arith.addf %159, %161 : vector<8x128xf32>
    %163 = vector.broadcast %23 : f32 to vector<8x128xf32>
    %164 = arith.addf %162, %163 : vector<8x128xf32>
    %cst_17 = arith.constant 2.000000e+01 : f32
    %165 = vector.broadcast %cst_17 : f32 to vector<8x128xf32>
    %166 = arith.cmpf ogt, %144, %165 : vector<8x128xf32>
    %167 = math.exp %144 : vector<8x128xf32>
    %168 = math.log1p %167 : vector<8x128xf32>
    %169 = arith.select %166, %144, %168 : vector<8x128xi1>, vector<8x128xf32>
    %cst_18 = arith.constant 2.000000e+01 : f32
    %170 = vector.broadcast %cst_18 : f32 to vector<8x128xf32>
    %171 = arith.cmpf ogt, %154, %170 : vector<8x128xf32>
    %172 = math.exp %154 : vector<8x128xf32>
    %173 = math.log1p %172 : vector<8x128xf32>
    %174 = arith.select %171, %154, %173 : vector<8x128xi1>, vector<8x128xf32>
    %cst_19 = arith.constant 2.000000e+01 : f32
    %175 = vector.broadcast %cst_19 : f32 to vector<8x128xf32>
    %176 = arith.cmpf ogt, %164, %175 : vector<8x128xf32>
    %177 = math.exp %164 : vector<8x128xf32>
    %178 = math.log1p %177 : vector<8x128xf32>
    %179 = arith.select %176, %164, %178 : vector<8x128xi1>, vector<8x128xf32>
    %180 = vector.broadcast %24 : f32 to vector<8x128xf32>
    %181 = arith.mulf %169, %180 : vector<8x128xf32>
    %182 = vector.broadcast %25 : f32 to vector<8x128xf32>
    %183 = arith.mulf %174, %182 : vector<8x128xf32>
    %184 = arith.addf %181, %183 : vector<8x128xf32>
    %185 = vector.broadcast %26 : f32 to vector<8x128xf32>
    %186 = arith.mulf %179, %185 : vector<8x128xf32>
    %187 = arith.addf %184, %186 : vector<8x128xf32>
    %188 = vector.broadcast %27 : f32 to vector<8x128xf32>
    %189 = arith.addf %187, %188 : vector<8x128xf32>
    %c0_20 = arith.constant 0 : index
    %c0_21 = arith.constant 0 : index
    %c1_22 = arith.constant 1 : index
    %c0_23 = arith.constant 0 : index
    %c0_24 = arith.constant 0 : index
    %190 = vector.load %arg2[%c0_20, %c0_21, %c1_22, %c0_23, %c0_24] : memref<3x3x6x8x128xf32, #tpu.memory_space<vmem>>, vector<1x1x1x8x128xf32>
    %191 = vector.shape_cast %190 : vector<1x1x1x8x128xf32> to vector<8x128xf32>
    %c1_25 = arith.constant 1 : index
    %c0_26 = arith.constant 0 : index
    %c1_27 = arith.constant 1 : index
    %c0_28 = arith.constant 0 : index
    %c0_29 = arith.constant 0 : index
    %192 = vector.load %arg2[%c1_25, %c0_26, %c1_27, %c0_28, %c0_29] : memref<3x3x6x8x128xf32, #tpu.memory_space<vmem>>, vector<1x1x1x8x128xf32>
    %193 = vector.shape_cast %192 : vector<1x1x1x8x128xf32> to vector<8x128xf32>
    %c2_30 = arith.constant 2 : index
    %c0_31 = arith.constant 0 : index
    %c1_32 = arith.constant 1 : index
    %c0_33 = arith.constant 0 : index
    %c0_34 = arith.constant 0 : index
    %194 = vector.load %arg2[%c2_30, %c0_31, %c1_32, %c0_33, %c0_34] : memref<3x3x6x8x128xf32, #tpu.memory_space<vmem>>, vector<1x1x1x8x128xf32>
    %195 = vector.shape_cast %194 : vector<1x1x1x8x128xf32> to vector<8x128xf32>
    %196 = vector.broadcast %0 : f32 to vector<8x128xf32>
    %197 = arith.mulf %191, %196 : vector<8x128xf32>
    %198 = vector.broadcast %3 : f32 to vector<8x128xf32>
    %199 = arith.mulf %193, %198 : vector<8x128xf32>
    %200 = arith.addf %197, %199 : vector<8x128xf32>
    %201 = vector.broadcast %6 : f32 to vector<8x128xf32>
    %202 = arith.mulf %195, %201 : vector<8x128xf32>
    %203 = arith.addf %200, %202 : vector<8x128xf32>
    %204 = vector.broadcast %9 : f32 to vector<8x128xf32>
    %205 = arith.addf %203, %204 : vector<8x128xf32>
    %206 = vector.broadcast %1 : f32 to vector<8x128xf32>
    %207 = arith.mulf %191, %206 : vector<8x128xf32>
    %208 = vector.broadcast %4 : f32 to vector<8x128xf32>
    %209 = arith.mulf %193, %208 : vector<8x128xf32>
    %210 = arith.addf %207, %209 : vector<8x128xf32>
    %211 = vector.broadcast %7 : f32 to vector<8x128xf32>
    %212 = arith.mulf %195, %211 : vector<8x128xf32>
    %213 = arith.addf %210, %212 : vector<8x128xf32>
    %214 = vector.broadcast %10 : f32 to vector<8x128xf32>
    %215 = arith.addf %213, %214 : vector<8x128xf32>
    %216 = vector.broadcast %2 : f32 to vector<8x128xf32>
    %217 = arith.mulf %191, %216 : vector<8x128xf32>
    %218 = vector.broadcast %5 : f32 to vector<8x128xf32>
    %219 = arith.mulf %193, %218 : vector<8x128xf32>
    %220 = arith.addf %217, %219 : vector<8x128xf32>
    %221 = vector.broadcast %8 : f32 to vector<8x128xf32>
    %222 = arith.mulf %195, %221 : vector<8x128xf32>
    %223 = arith.addf %220, %222 : vector<8x128xf32>
    %224 = vector.broadcast %11 : f32 to vector<8x128xf32>
    %225 = arith.addf %223, %224 : vector<8x128xf32>
    %cst_35 = arith.constant 2.000000e+01 : f32
    %226 = vector.broadcast %cst_35 : f32 to vector<8x128xf32>
    %227 = arith.cmpf ogt, %205, %226 : vector<8x128xf32>
    %228 = math.exp %205 : vector<8x128xf32>
    %229 = math.log1p %228 : vector<8x128xf32>
    %230 = arith.select %227, %205, %229 : vector<8x128xi1>, vector<8x128xf32>
    %cst_36 = arith.constant 2.000000e+01 : f32
    %231 = vector.broadcast %cst_36 : f32 to vector<8x128xf32>
    %232 = arith.cmpf ogt, %215, %231 : vector<8x128xf32>
    %233 = math.exp %215 : vector<8x128xf32>
    %234 = math.log1p %233 : vector<8x128xf32>
    %235 = arith.select %232, %215, %234 : vector<8x128xi1>, vector<8x128xf32>
    %cst_37 = arith.constant 2.000000e+01 : f32
    %236 = vector.broadcast %cst_37 : f32 to vector<8x128xf32>
    %237 = arith.cmpf ogt, %225, %236 : vector<8x128xf32>
    %238 = math.exp %225 : vector<8x128xf32>
    %239 = math.log1p %238 : vector<8x128xf32>
    %240 = arith.select %237, %225, %239 : vector<8x128xi1>, vector<8x128xf32>
    %241 = vector.broadcast %12 : f32 to vector<8x128xf32>
    %242 = arith.mulf %230, %241 : vector<8x128xf32>
    %243 = vector.broadcast %15 : f32 to vector<8x128xf32>
    %244 = arith.mulf %235, %243 : vector<8x128xf32>
    %245 = arith.addf %242, %244 : vector<8x128xf32>
    %246 = vector.broadcast %18 : f32 to vector<8x128xf32>
    %247 = arith.mulf %240, %246 : vector<8x128xf32>
    %248 = arith.addf %245, %247 : vector<8x128xf32>
    %249 = vector.broadcast %21 : f32 to vector<8x128xf32>
    %250 = arith.addf %248, %249 : vector<8x128xf32>
    %251 = vector.broadcast %13 : f32 to vector<8x128xf32>
    %252 = arith.mulf %230, %251 : vector<8x128xf32>
    %253 = vector.broadcast %16 : f32 to vector<8x128xf32>
    %254 = arith.mulf %235, %253 : vector<8x128xf32>
    %255 = arith.addf %252, %254 : vector<8x128xf32>
    %256 = vector.broadcast %19 : f32 to vector<8x128xf32>
    %257 = arith.mulf %240, %256 : vector<8x128xf32>
    %258 = arith.addf %255, %257 : vector<8x128xf32>
    %259 = vector.broadcast %22 : f32 to vector<8x128xf32>
    %260 = arith.addf %258, %259 : vector<8x128xf32>
    %261 = vector.broadcast %14 : f32 to vector<8x128xf32>
    %262 = arith.mulf %230, %261 : vector<8x128xf32>
    %263 = vector.broadcast %17 : f32 to vector<8x128xf32>
    %264 = arith.mulf %235, %263 : vector<8x128xf32>
    %265 = arith.addf %262, %264 : vector<8x128xf32>
    %266 = vector.broadcast %20 : f32 to vector<8x128xf32>
    %267 = arith.mulf %240, %266 : vector<8x128xf32>
    %268 = arith.addf %265, %267 : vector<8x128xf32>
    %269 = vector.broadcast %23 : f32 to vector<8x128xf32>
    %270 = arith.addf %268, %269 : vector<8x128xf32>
    %cst_38 = arith.constant 2.000000e+01 : f32
    %271 = vector.broadcast %cst_38 : f32 to vector<8x128xf32>
    %272 = arith.cmpf ogt, %250, %271 : vector<8x128xf32>
    %273 = math.exp %250 : vector<8x128xf32>
    %274 = math.log1p %273 : vector<8x128xf32>
    %275 = arith.select %272, %250, %274 : vector<8x128xi1>, vector<8x128xf32>
    %cst_39 = arith.constant 2.000000e+01 : f32
    %276 = vector.broadcast %cst_39 : f32 to vector<8x128xf32>
    %277 = arith.cmpf ogt, %260, %276 : vector<8x128xf32>
    %278 = math.exp %260 : vector<8x128xf32>
    %279 = math.log1p %278 : vector<8x128xf32>
    %280 = arith.select %277, %260, %279 : vector<8x128xi1>, vector<8x128xf32>
    %cst_40 = arith.constant 2.000000e+01 : f32
    %281 = vector.broadcast %cst_40 : f32 to vector<8x128xf32>
    %282 = arith.cmpf ogt, %270, %281 : vector<8x128xf32>
    %283 = math.exp %270 : vector<8x128xf32>
    %284 = math.log1p %283 : vector<8x128xf32>
    %285 = arith.select %282, %270, %284 : vector<8x128xi1>, vector<8x128xf32>
    %286 = vector.broadcast %24 : f32 to vector<8x128xf32>
    %287 = arith.mulf %275, %286 : vector<8x128xf32>
    %288 = vector.broadcast %25 : f32 to vector<8x128xf32>
    %289 = arith.mulf %280, %288 : vector<8x128xf32>
    %290 = arith.addf %287, %289 : vector<8x128xf32>
    %291 = vector.broadcast %26 : f32 to vector<8x128xf32>
    %292 = arith.mulf %285, %291 : vector<8x128xf32>
    %293 = arith.addf %290, %292 : vector<8x128xf32>
    %294 = vector.broadcast %27 : f32 to vector<8x128xf32>
    %295 = arith.addf %293, %294 : vector<8x128xf32>
    %296 = arith.addf %189, %295 : vector<8x128xf32>
    %c0_41 = arith.constant 0 : index
    %c0_42 = arith.constant 0 : index
    %c2_43 = arith.constant 2 : index
    %c0_44 = arith.constant 0 : index
    %c0_45 = arith.constant 0 : index
    %297 = vector.load %arg2[%c0_41, %c0_42, %c2_43, %c0_44, %c0_45] : memref<3x3x6x8x128xf32, #tpu.memory_space<vmem>>, vector<1x1x1x8x128xf32>
    %298 = vector.shape_cast %297 : vector<1x1x1x8x128xf32> to vector<8x128xf32>
    %c1_46 = arith.constant 1 : index
    %c0_47 = arith.constant 0 : index
    %c2_48 = arith.constant 2 : index
    %c0_49 = arith.constant 0 : index
    %c0_50 = arith.constant 0 : index
    %299 = vector.load %arg2[%c1_46, %c0_47, %c2_48, %c0_49, %c0_50] : memref<3x3x6x8x128xf32, #tpu.memory_space<vmem>>, vector<1x1x1x8x128xf32>
    %300 = vector.shape_cast %299 : vector<1x1x1x8x128xf32> to vector<8x128xf32>
    %c2_51 = arith.constant 2 : index
    %c0_52 = arith.constant 0 : index
    %c2_53 = arith.constant 2 : index
    %c0_54 = arith.constant 0 : index
    %c0_55 = arith.constant 0 : index
    %301 = vector.load %arg2[%c2_51, %c0_52, %c2_53, %c0_54, %c0_55] : memref<3x3x6x8x128xf32, #tpu.memory_space<vmem>>, vector<1x1x1x8x128xf32>
    %302 = vector.shape_cast %301 : vector<1x1x1x8x128xf32> to vector<8x128xf32>
    %303 = vector.broadcast %0 : f32 to vector<8x128xf32>
    %304 = arith.mulf %298, %303 : vector<8x128xf32>
    %305 = vector.broadcast %3 : f32 to vector<8x128xf32>
    %306 = arith.mulf %300, %305 : vector<8x128xf32>
    %307 = arith.addf %304, %306 : vector<8x128xf32>
    %308 = vector.broadcast %6 : f32 to vector<8x128xf32>
    %309 = arith.mulf %302, %308 : vector<8x128xf32>
    %310 = arith.addf %307, %309 : vector<8x128xf32>
    %311 = vector.broadcast %9 : f32 to vector<8x128xf32>
    %312 = arith.addf %310, %311 : vector<8x128xf32>
    %313 = vector.broadcast %1 : f32 to vector<8x128xf32>
    %314 = arith.mulf %298, %313 : vector<8x128xf32>
    %315 = vector.broadcast %4 : f32 to vector<8x128xf32>
    %316 = arith.mulf %300, %315 : vector<8x128xf32>
    %317 = arith.addf %314, %316 : vector<8x128xf32>
    %318 = vector.broadcast %7 : f32 to vector<8x128xf32>
    %319 = arith.mulf %302, %318 : vector<8x128xf32>
    %320 = arith.addf %317, %319 : vector<8x128xf32>
    %321 = vector.broadcast %10 : f32 to vector<8x128xf32>
    %322 = arith.addf %320, %321 : vector<8x128xf32>
    %323 = vector.broadcast %2 : f32 to vector<8x128xf32>
    %324 = arith.mulf %298, %323 : vector<8x128xf32>
    %325 = vector.broadcast %5 : f32 to vector<8x128xf32>
    %326 = arith.mulf %300, %325 : vector<8x128xf32>
    %327 = arith.addf %324, %326 : vector<8x128xf32>
    %328 = vector.broadcast %8 : f32 to vector<8x128xf32>
    %329 = arith.mulf %302, %328 : vector<8x128xf32>
    %330 = arith.addf %327, %329 : vector<8x128xf32>
    %331 = vector.broadcast %11 : f32 to vector<8x128xf32>
    %332 = arith.addf %330, %331 : vector<8x128xf32>
    %cst_56 = arith.constant 2.000000e+01 : f32
    %333 = vector.broadcast %cst_56 : f32 to vector<8x128xf32>
    %334 = arith.cmpf ogt, %312, %333 : vector<8x128xf32>
    %335 = math.exp %312 : vector<8x128xf32>
    %336 = math.log1p %335 : vector<8x128xf32>
    %337 = arith.select %334, %312, %336 : vector<8x128xi1>, vector<8x128xf32>
    %cst_57 = arith.constant 2.000000e+01 : f32
    %338 = vector.broadcast %cst_57 : f32 to vector<8x128xf32>
    %339 = arith.cmpf ogt, %322, %338 : vector<8x128xf32>
    %340 = math.exp %322 : vector<8x128xf32>
    %341 = math.log1p %340 : vector<8x128xf32>
    %342 = arith.select %339, %322, %341 : vector<8x128xi1>, vector<8x128xf32>
    %cst_58 = arith.constant 2.000000e+01 : f32
    %343 = vector.broadcast %cst_58 : f32 to vector<8x128xf32>
    %344 = arith.cmpf ogt, %332, %343 : vector<8x128xf32>
    %345 = math.exp %332 : vector<8x128xf32>
    %346 = math.log1p %345 : vector<8x128xf32>
    %347 = arith.select %344, %332, %346 : vector<8x128xi1>, vector<8x128xf32>
    %348 = vector.broadcast %12 : f32 to vector<8x128xf32>
    %349 = arith.mulf %337, %348 : vector<8x128xf32>
    %350 = vector.broadcast %15 : f32 to vector<8x128xf32>
    %351 = arith.mulf %342, %350 : vector<8x128xf32>
    %352 = arith.addf %349, %351 : vector<8x128xf32>
    %353 = vector.broadcast %18 : f32 to vector<8x128xf32>
    %354 = arith.mulf %347, %353 : vector<8x128xf32>
    %355 = arith.addf %352, %354 : vector<8x128xf32>
    %356 = vector.broadcast %21 : f32 to vector<8x128xf32>
    %357 = arith.addf %355, %356 : vector<8x128xf32>
    %358 = vector.broadcast %13 : f32 to vector<8x128xf32>
    %359 = arith.mulf %337, %358 : vector<8x128xf32>
    %360 = vector.broadcast %16 : f32 to vector<8x128xf32>
    %361 = arith.mulf %342, %360 : vector<8x128xf32>
    %362 = arith.addf %359, %361 : vector<8x128xf32>
    %363 = vector.broadcast %19 : f32 to vector<8x128xf32>
    %364 = arith.mulf %347, %363 : vector<8x128xf32>
    %365 = arith.addf %362, %364 : vector<8x128xf32>
    %366 = vector.broadcast %22 : f32 to vector<8x128xf32>
    %367 = arith.addf %365, %366 : vector<8x128xf32>
    %368 = vector.broadcast %14 : f32 to vector<8x128xf32>
    %369 = arith.mulf %337, %368 : vector<8x128xf32>
    %370 = vector.broadcast %17 : f32 to vector<8x128xf32>
    %371 = arith.mulf %342, %370 : vector<8x128xf32>
    %372 = arith.addf %369, %371 : vector<8x128xf32>
    %373 = vector.broadcast %20 : f32 to vector<8x128xf32>
    %374 = arith.mulf %347, %373 : vector<8x128xf32>
    %375 = arith.addf %372, %374 : vector<8x128xf32>
    %376 = vector.broadcast %23 : f32 to vector<8x128xf32>
    %377 = arith.addf %375, %376 : vector<8x128xf32>
    %cst_59 = arith.constant 2.000000e+01 : f32
    %378 = vector.broadcast %cst_59 : f32 to vector<8x128xf32>
    %379 = arith.cmpf ogt, %357, %378 : vector<8x128xf32>
    %380 = math.exp %357 : vector<8x128xf32>
    %381 = math.log1p %380 : vector<8x128xf32>
    %382 = arith.select %379, %357, %381 : vector<8x128xi1>, vector<8x128xf32>
    %cst_60 = arith.constant 2.000000e+01 : f32
    %383 = vector.broadcast %cst_60 : f32 to vector<8x128xf32>
    %384 = arith.cmpf ogt, %367, %383 : vector<8x128xf32>
    %385 = math.exp %367 : vector<8x128xf32>
    %386 = math.log1p %385 : vector<8x128xf32>
    %387 = arith.select %384, %367, %386 : vector<8x128xi1>, vector<8x128xf32>
    %cst_61 = arith.constant 2.000000e+01 : f32
    %388 = vector.broadcast %cst_61 : f32 to vector<8x128xf32>
    %389 = arith.cmpf ogt, %377, %388 : vector<8x128xf32>
    %390 = math.exp %377 : vector<8x128xf32>
    %391 = math.log1p %390 : vector<8x128xf32>
    %392 = arith.select %389, %377, %391 : vector<8x128xi1>, vector<8x128xf32>
    %393 = vector.broadcast %24 : f32 to vector<8x128xf32>
    %394 = arith.mulf %382, %393 : vector<8x128xf32>
    %395 = vector.broadcast %25 : f32 to vector<8x128xf32>
    %396 = arith.mulf %387, %395 : vector<8x128xf32>
    %397 = arith.addf %394, %396 : vector<8x128xf32>
    %398 = vector.broadcast %26 : f32 to vector<8x128xf32>
    %399 = arith.mulf %392, %398 : vector<8x128xf32>
    %400 = arith.addf %397, %399 : vector<8x128xf32>
    %401 = vector.broadcast %27 : f32 to vector<8x128xf32>
    %402 = arith.addf %400, %401 : vector<8x128xf32>
    %403 = arith.addf %296, %402 : vector<8x128xf32>
    %c0_62 = arith.constant 0 : index
    %c0_63 = arith.constant 0 : index
    %c3_64 = arith.constant 3 : index
    %c0_65 = arith.constant 0 : index
    %c0_66 = arith.constant 0 : index
    %404 = vector.load %arg2[%c0_62, %c0_63, %c3_64, %c0_65, %c0_66] : memref<3x3x6x8x128xf32, #tpu.memory_space<vmem>>, vector<1x1x1x8x128xf32>
    %405 = vector.shape_cast %404 : vector<1x1x1x8x128xf32> to vector<8x128xf32>
    %c1_67 = arith.constant 1 : index
    %c0_68 = arith.constant 0 : index
    %c3_69 = arith.constant 3 : index
    %c0_70 = arith.constant 0 : index
    %c0_71 = arith.constant 0 : index
    %406 = vector.load %arg2[%c1_67, %c0_68, %c3_69, %c0_70, %c0_71] : memref<3x3x6x8x128xf32, #tpu.memory_space<vmem>>, vector<1x1x1x8x128xf32>
    %407 = vector.shape_cast %406 : vector<1x1x1x8x128xf32> to vector<8x128xf32>
    %c2_72 = arith.constant 2 : index
    %c0_73 = arith.constant 0 : index
    %c3_74 = arith.constant 3 : index
    %c0_75 = arith.constant 0 : index
    %c0_76 = arith.constant 0 : index
    %408 = vector.load %arg2[%c2_72, %c0_73, %c3_74, %c0_75, %c0_76] : memref<3x3x6x8x128xf32, #tpu.memory_space<vmem>>, vector<1x1x1x8x128xf32>
    %409 = vector.shape_cast %408 : vector<1x1x1x8x128xf32> to vector<8x128xf32>
    %410 = vector.broadcast %0 : f32 to vector<8x128xf32>
    %411 = arith.mulf %405, %410 : vector<8x128xf32>
    %412 = vector.broadcast %3 : f32 to vector<8x128xf32>
    %413 = arith.mulf %407, %412 : vector<8x128xf32>
    %414 = arith.addf %411, %413 : vector<8x128xf32>
    %415 = vector.broadcast %6 : f32 to vector<8x128xf32>
    %416 = arith.mulf %409, %415 : vector<8x128xf32>
    %417 = arith.addf %414, %416 : vector<8x128xf32>
    %418 = vector.broadcast %9 : f32 to vector<8x128xf32>
    %419 = arith.addf %417, %418 : vector<8x128xf32>
    %420 = vector.broadcast %1 : f32 to vector<8x128xf32>
    %421 = arith.mulf %405, %420 : vector<8x128xf32>
    %422 = vector.broadcast %4 : f32 to vector<8x128xf32>
    %423 = arith.mulf %407, %422 : vector<8x128xf32>
    %424 = arith.addf %421, %423 : vector<8x128xf32>
    %425 = vector.broadcast %7 : f32 to vector<8x128xf32>
    %426 = arith.mulf %409, %425 : vector<8x128xf32>
    %427 = arith.addf %424, %426 : vector<8x128xf32>
    %428 = vector.broadcast %10 : f32 to vector<8x128xf32>
    %429 = arith.addf %427, %428 : vector<8x128xf32>
    %430 = vector.broadcast %2 : f32 to vector<8x128xf32>
    %431 = arith.mulf %405, %430 : vector<8x128xf32>
    %432 = vector.broadcast %5 : f32 to vector<8x128xf32>
    %433 = arith.mulf %407, %432 : vector<8x128xf32>
    %434 = arith.addf %431, %433 : vector<8x128xf32>
    %435 = vector.broadcast %8 : f32 to vector<8x128xf32>
    %436 = arith.mulf %409, %435 : vector<8x128xf32>
    %437 = arith.addf %434, %436 : vector<8x128xf32>
    %438 = vector.broadcast %11 : f32 to vector<8x128xf32>
    %439 = arith.addf %437, %438 : vector<8x128xf32>
    %cst_77 = arith.constant 2.000000e+01 : f32
    %440 = vector.broadcast %cst_77 : f32 to vector<8x128xf32>
    %441 = arith.cmpf ogt, %419, %440 : vector<8x128xf32>
    %442 = math.exp %419 : vector<8x128xf32>
    %443 = math.log1p %442 : vector<8x128xf32>
    %444 = arith.select %441, %419, %443 : vector<8x128xi1>, vector<8x128xf32>
    %cst_78 = arith.constant 2.000000e+01 : f32
    %445 = vector.broadcast %cst_78 : f32 to vector<8x128xf32>
    %446 = arith.cmpf ogt, %429, %445 : vector<8x128xf32>
    %447 = math.exp %429 : vector<8x128xf32>
    %448 = math.log1p %447 : vector<8x128xf32>
    %449 = arith.select %446, %429, %448 : vector<8x128xi1>, vector<8x128xf32>
    %cst_79 = arith.constant 2.000000e+01 : f32
    %450 = vector.broadcast %cst_79 : f32 to vector<8x128xf32>
    %451 = arith.cmpf ogt, %439, %450 : vector<8x128xf32>
    %452 = math.exp %439 : vector<8x128xf32>
    %453 = math.log1p %452 : vector<8x128xf32>
    %454 = arith.select %451, %439, %453 : vector<8x128xi1>, vector<8x128xf32>
    %455 = vector.broadcast %12 : f32 to vector<8x128xf32>
    %456 = arith.mulf %444, %455 : vector<8x128xf32>
    %457 = vector.broadcast %15 : f32 to vector<8x128xf32>
    %458 = arith.mulf %449, %457 : vector<8x128xf32>
    %459 = arith.addf %456, %458 : vector<8x128xf32>
    %460 = vector.broadcast %18 : f32 to vector<8x128xf32>
    %461 = arith.mulf %454, %460 : vector<8x128xf32>
    %462 = arith.addf %459, %461 : vector<8x128xf32>
    %463 = vector.broadcast %21 : f32 to vector<8x128xf32>
    %464 = arith.addf %462, %463 : vector<8x128xf32>
    %465 = vector.broadcast %13 : f32 to vector<8x128xf32>
    %466 = arith.mulf %444, %465 : vector<8x128xf32>
    %467 = vector.broadcast %16 : f32 to vector<8x128xf32>
    %468 = arith.mulf %449, %467 : vector<8x128xf32>
    %469 = arith.addf %466, %468 : vector<8x128xf32>
    %470 = vector.broadcast %19 : f32 to vector<8x128xf32>
    %471 = arith.mulf %454, %470 : vector<8x128xf32>
    %472 = arith.addf %469, %471 : vector<8x128xf32>
    %473 = vector.broadcast %22 : f32 to vector<8x128xf32>
    %474 = arith.addf %472, %473 : vector<8x128xf32>
    %475 = vector.broadcast %14 : f32 to vector<8x128xf32>
    %476 = arith.mulf %444, %475 : vector<8x128xf32>
    %477 = vector.broadcast %17 : f32 to vector<8x128xf32>
    %478 = arith.mulf %449, %477 : vector<8x128xf32>
    %479 = arith.addf %476, %478 : vector<8x128xf32>
    %480 = vector.broadcast %20 : f32 to vector<8x128xf32>
    %481 = arith.mulf %454, %480 : vector<8x128xf32>
    %482 = arith.addf %479, %481 : vector<8x128xf32>
    %483 = vector.broadcast %23 : f32 to vector<8x128xf32>
    %484 = arith.addf %482, %483 : vector<8x128xf32>
    %cst_80 = arith.constant 2.000000e+01 : f32
    %485 = vector.broadcast %cst_80 : f32 to vector<8x128xf32>
    %486 = arith.cmpf ogt, %464, %485 : vector<8x128xf32>
    %487 = math.exp %464 : vector<8x128xf32>
    %488 = math.log1p %487 : vector<8x128xf32>
    %489 = arith.select %486, %464, %488 : vector<8x128xi1>, vector<8x128xf32>
    %cst_81 = arith.constant 2.000000e+01 : f32
    %490 = vector.broadcast %cst_81 : f32 to vector<8x128xf32>
    %491 = arith.cmpf ogt, %474, %490 : vector<8x128xf32>
    %492 = math.exp %474 : vector<8x128xf32>
    %493 = math.log1p %492 : vector<8x128xf32>
    %494 = arith.select %491, %474, %493 : vector<8x128xi1>, vector<8x128xf32>
    %cst_82 = arith.constant 2.000000e+01 : f32
    %495 = vector.broadcast %cst_82 : f32 to vector<8x128xf32>
    %496 = arith.cmpf ogt, %484, %495 : vector<8x128xf32>
    %497 = math.exp %484 : vector<8x128xf32>
    %498 = math.log1p %497 : vector<8x128xf32>
    %499 = arith.select %496, %484, %498 : vector<8x128xi1>, vector<8x128xf32>
    %500 = vector.broadcast %24 : f32 to vector<8x128xf32>
    %501 = arith.mulf %489, %500 : vector<8x128xf32>
    %502 = vector.broadcast %25 : f32 to vector<8x128xf32>
    %503 = arith.mulf %494, %502 : vector<8x128xf32>
    %504 = arith.addf %501, %503 : vector<8x128xf32>
    %505 = vector.broadcast %26 : f32 to vector<8x128xf32>
    %506 = arith.mulf %499, %505 : vector<8x128xf32>
    %507 = arith.addf %504, %506 : vector<8x128xf32>
    %508 = vector.broadcast %27 : f32 to vector<8x128xf32>
    %509 = arith.addf %507, %508 : vector<8x128xf32>
    %510 = arith.addf %403, %509 : vector<8x128xf32>
    %c0_83 = arith.constant 0 : index
    %c0_84 = arith.constant 0 : index
    %c4_85 = arith.constant 4 : index
    %c0_86 = arith.constant 0 : index
    %c0_87 = arith.constant 0 : index
    %511 = vector.load %arg2[%c0_83, %c0_84, %c4_85, %c0_86, %c0_87] : memref<3x3x6x8x128xf32, #tpu.memory_space<vmem>>, vector<1x1x1x8x128xf32>
    %512 = vector.shape_cast %511 : vector<1x1x1x8x128xf32> to vector<8x128xf32>
    %c1_88 = arith.constant 1 : index
    %c0_89 = arith.constant 0 : index
    %c4_90 = arith.constant 4 : index
    %c0_91 = arith.constant 0 : index
    %c0_92 = arith.constant 0 : index
    %513 = vector.load %arg2[%c1_88, %c0_89, %c4_90, %c0_91, %c0_92] : memref<3x3x6x8x128xf32, #tpu.memory_space<vmem>>, vector<1x1x1x8x128xf32>
    %514 = vector.shape_cast %513 : vector<1x1x1x8x128xf32> to vector<8x128xf32>
    %c2_93 = arith.constant 2 : index
    %c0_94 = arith.constant 0 : index
    %c4_95 = arith.constant 4 : index
    %c0_96 = arith.constant 0 : index
    %c0_97 = arith.constant 0 : index
    %515 = vector.load %arg2[%c2_93, %c0_94, %c4_95, %c0_96, %c0_97] : memref<3x3x6x8x128xf32, #tpu.memory_space<vmem>>, vector<1x1x1x8x128xf32>
    %516 = vector.shape_cast %515 : vector<1x1x1x8x128xf32> to vector<8x128xf32>
    %517 = vector.broadcast %0 : f32 to vector<8x128xf32>
    %518 = arith.mulf %512, %517 : vector<8x128xf32>
    %519 = vector.broadcast %3 : f32 to vector<8x128xf32>
    %520 = arith.mulf %514, %519 : vector<8x128xf32>
    %521 = arith.addf %518, %520 : vector<8x128xf32>
    %522 = vector.broadcast %6 : f32 to vector<8x128xf32>
    %523 = arith.mulf %516, %522 : vector<8x128xf32>
    %524 = arith.addf %521, %523 : vector<8x128xf32>
    %525 = vector.broadcast %9 : f32 to vector<8x128xf32>
    %526 = arith.addf %524, %525 : vector<8x128xf32>
    %527 = vector.broadcast %1 : f32 to vector<8x128xf32>
    %528 = arith.mulf %512, %527 : vector<8x128xf32>
    %529 = vector.broadcast %4 : f32 to vector<8x128xf32>
    %530 = arith.mulf %514, %529 : vector<8x128xf32>
    %531 = arith.addf %528, %530 : vector<8x128xf32>
    %532 = vector.broadcast %7 : f32 to vector<8x128xf32>
    %533 = arith.mulf %516, %532 : vector<8x128xf32>
    %534 = arith.addf %531, %533 : vector<8x128xf32>
    %535 = vector.broadcast %10 : f32 to vector<8x128xf32>
    %536 = arith.addf %534, %535 : vector<8x128xf32>
    %537 = vector.broadcast %2 : f32 to vector<8x128xf32>
    %538 = arith.mulf %512, %537 : vector<8x128xf32>
    %539 = vector.broadcast %5 : f32 to vector<8x128xf32>
    %540 = arith.mulf %514, %539 : vector<8x128xf32>
    %541 = arith.addf %538, %540 : vector<8x128xf32>
    %542 = vector.broadcast %8 : f32 to vector<8x128xf32>
    %543 = arith.mulf %516, %542 : vector<8x128xf32>
    %544 = arith.addf %541, %543 : vector<8x128xf32>
    %545 = vector.broadcast %11 : f32 to vector<8x128xf32>
    %546 = arith.addf %544, %545 : vector<8x128xf32>
    %cst_98 = arith.constant 2.000000e+01 : f32
    %547 = vector.broadcast %cst_98 : f32 to vector<8x128xf32>
    %548 = arith.cmpf ogt, %526, %547 : vector<8x128xf32>
    %549 = math.exp %526 : vector<8x128xf32>
    %550 = math.log1p %549 : vector<8x128xf32>
    %551 = arith.select %548, %526, %550 : vector<8x128xi1>, vector<8x128xf32>
    %cst_99 = arith.constant 2.000000e+01 : f32
    %552 = vector.broadcast %cst_99 : f32 to vector<8x128xf32>
    %553 = arith.cmpf ogt, %536, %552 : vector<8x128xf32>
    %554 = math.exp %536 : vector<8x128xf32>
    %555 = math.log1p %554 : vector<8x128xf32>
    %556 = arith.select %553, %536, %555 : vector<8x128xi1>, vector<8x128xf32>
    %cst_100 = arith.constant 2.000000e+01 : f32
    %557 = vector.broadcast %cst_100 : f32 to vector<8x128xf32>
    %558 = arith.cmpf ogt, %546, %557 : vector<8x128xf32>
    %559 = math.exp %546 : vector<8x128xf32>
    %560 = math.log1p %559 : vector<8x128xf32>
    %561 = arith.select %558, %546, %560 : vector<8x128xi1>, vector<8x128xf32>
    %562 = vector.broadcast %12 : f32 to vector<8x128xf32>
    %563 = arith.mulf %551, %562 : vector<8x128xf32>
    %564 = vector.broadcast %15 : f32 to vector<8x128xf32>
    %565 = arith.mulf %556, %564 : vector<8x128xf32>
    %566 = arith.addf %563, %565 : vector<8x128xf32>
    %567 = vector.broadcast %18 : f32 to vector<8x128xf32>
    %568 = arith.mulf %561, %567 : vector<8x128xf32>
    %569 = arith.addf %566, %568 : vector<8x128xf32>
    %570 = vector.broadcast %21 : f32 to vector<8x128xf32>
    %571 = arith.addf %569, %570 : vector<8x128xf32>
    %572 = vector.broadcast %13 : f32 to vector<8x128xf32>
    %573 = arith.mulf %551, %572 : vector<8x128xf32>
    %574 = vector.broadcast %16 : f32 to vector<8x128xf32>
    %575 = arith.mulf %556, %574 : vector<8x128xf32>
    %576 = arith.addf %573, %575 : vector<8x128xf32>
    %577 = vector.broadcast %19 : f32 to vector<8x128xf32>
    %578 = arith.mulf %561, %577 : vector<8x128xf32>
    %579 = arith.addf %576, %578 : vector<8x128xf32>
    %580 = vector.broadcast %22 : f32 to vector<8x128xf32>
    %581 = arith.addf %579, %580 : vector<8x128xf32>
    %582 = vector.broadcast %14 : f32 to vector<8x128xf32>
    %583 = arith.mulf %551, %582 : vector<8x128xf32>
    %584 = vector.broadcast %17 : f32 to vector<8x128xf32>
    %585 = arith.mulf %556, %584 : vector<8x128xf32>
    %586 = arith.addf %583, %585 : vector<8x128xf32>
    %587 = vector.broadcast %20 : f32 to vector<8x128xf32>
    %588 = arith.mulf %561, %587 : vector<8x128xf32>
    %589 = arith.addf %586, %588 : vector<8x128xf32>
    %590 = vector.broadcast %23 : f32 to vector<8x128xf32>
    %591 = arith.addf %589, %590 : vector<8x128xf32>
    %cst_101 = arith.constant 2.000000e+01 : f32
    %592 = vector.broadcast %cst_101 : f32 to vector<8x128xf32>
    %593 = arith.cmpf ogt, %571, %592 : vector<8x128xf32>
    %594 = math.exp %571 : vector<8x128xf32>
    %595 = math.log1p %594 : vector<8x128xf32>
    %596 = arith.select %593, %571, %595 : vector<8x128xi1>, vector<8x128xf32>
    %cst_102 = arith.constant 2.000000e+01 : f32
    %597 = vector.broadcast %cst_102 : f32 to vector<8x128xf32>
    %598 = arith.cmpf ogt, %581, %597 : vector<8x128xf32>
    %599 = math.exp %581 : vector<8x128xf32>
    %600 = math.log1p %599 : vector<8x128xf32>
    %601 = arith.select %598, %581, %600 : vector<8x128xi1>, vector<8x128xf32>
    %cst_103 = arith.constant 2.000000e+01 : f32
    %602 = vector.broadcast %cst_103 : f32 to vector<8x128xf32>
    %603 = arith.cmpf ogt, %591, %602 : vector<8x128xf32>
    %604 = math.exp %591 : vector<8x128xf32>
    %605 = math.log1p %604 : vector<8x128xf32>
    %606 = arith.select %603, %591, %605 : vector<8x128xi1>, vector<8x128xf32>
    %607 = vector.broadcast %24 : f32 to vector<8x128xf32>
    %608 = arith.mulf %596, %607 : vector<8x128xf32>
    %609 = vector.broadcast %25 : f32 to vector<8x128xf32>
    %610 = arith.mulf %601, %609 : vector<8x128xf32>
    %611 = arith.addf %608, %610 : vector<8x128xf32>
    %612 = vector.broadcast %26 : f32 to vector<8x128xf32>
    %613 = arith.mulf %606, %612 : vector<8x128xf32>
    %614 = arith.addf %611, %613 : vector<8x128xf32>
    %615 = vector.broadcast %27 : f32 to vector<8x128xf32>
    %616 = arith.addf %614, %615 : vector<8x128xf32>
    %617 = arith.addf %510, %616 : vector<8x128xf32>
    %c0_104 = arith.constant 0 : index
    %c0_105 = arith.constant 0 : index
    %c5_106 = arith.constant 5 : index
    %c0_107 = arith.constant 0 : index
    %c0_108 = arith.constant 0 : index
    %618 = vector.load %arg2[%c0_104, %c0_105, %c5_106, %c0_107, %c0_108] : memref<3x3x6x8x128xf32, #tpu.memory_space<vmem>>, vector<1x1x1x8x128xf32>
    %619 = vector.shape_cast %618 : vector<1x1x1x8x128xf32> to vector<8x128xf32>
    %c1_109 = arith.constant 1 : index
    %c0_110 = arith.constant 0 : index
    %c5_111 = arith.constant 5 : index
    %c0_112 = arith.constant 0 : index
    %c0_113 = arith.constant 0 : index
    %620 = vector.load %arg2[%c1_109, %c0_110, %c5_111, %c0_112, %c0_113] : memref<3x3x6x8x128xf32, #tpu.memory_space<vmem>>, vector<1x1x1x8x128xf32>
    %621 = vector.shape_cast %620 : vector<1x1x1x8x128xf32> to vector<8x128xf32>
    %c2_114 = arith.constant 2 : index
    %c0_115 = arith.constant 0 : index
    %c5_116 = arith.constant 5 : index
    %c0_117 = arith.constant 0 : index
    %c0_118 = arith.constant 0 : index
    %622 = vector.load %arg2[%c2_114, %c0_115, %c5_116, %c0_117, %c0_118] : memref<3x3x6x8x128xf32, #tpu.memory_space<vmem>>, vector<1x1x1x8x128xf32>
    %623 = vector.shape_cast %622 : vector<1x1x1x8x128xf32> to vector<8x128xf32>
    %624 = vector.broadcast %0 : f32 to vector<8x128xf32>
    %625 = arith.mulf %619, %624 : vector<8x128xf32>
    %626 = vector.broadcast %3 : f32 to vector<8x128xf32>
    %627 = arith.mulf %621, %626 : vector<8x128xf32>
    %628 = arith.addf %625, %627 : vector<8x128xf32>
    %629 = vector.broadcast %6 : f32 to vector<8x128xf32>
    %630 = arith.mulf %623, %629 : vector<8x128xf32>
    %631 = arith.addf %628, %630 : vector<8x128xf32>
    %632 = vector.broadcast %9 : f32 to vector<8x128xf32>
    %633 = arith.addf %631, %632 : vector<8x128xf32>
    %634 = vector.broadcast %1 : f32 to vector<8x128xf32>
    %635 = arith.mulf %619, %634 : vector<8x128xf32>
    %636 = vector.broadcast %4 : f32 to vector<8x128xf32>
    %637 = arith.mulf %621, %636 : vector<8x128xf32>
    %638 = arith.addf %635, %637 : vector<8x128xf32>
    %639 = vector.broadcast %7 : f32 to vector<8x128xf32>
    %640 = arith.mulf %623, %639 : vector<8x128xf32>
    %641 = arith.addf %638, %640 : vector<8x128xf32>
    %642 = vector.broadcast %10 : f32 to vector<8x128xf32>
    %643 = arith.addf %641, %642 : vector<8x128xf32>
    %644 = vector.broadcast %2 : f32 to vector<8x128xf32>
    %645 = arith.mulf %619, %644 : vector<8x128xf32>
    %646 = vector.broadcast %5 : f32 to vector<8x128xf32>
    %647 = arith.mulf %621, %646 : vector<8x128xf32>
    %648 = arith.addf %645, %647 : vector<8x128xf32>
    %649 = vector.broadcast %8 : f32 to vector<8x128xf32>
    %650 = arith.mulf %623, %649 : vector<8x128xf32>
    %651 = arith.addf %648, %650 : vector<8x128xf32>
    %652 = vector.broadcast %11 : f32 to vector<8x128xf32>
    %653 = arith.addf %651, %652 : vector<8x128xf32>
    %cst_119 = arith.constant 2.000000e+01 : f32
    %654 = vector.broadcast %cst_119 : f32 to vector<8x128xf32>
    %655 = arith.cmpf ogt, %633, %654 : vector<8x128xf32>
    %656 = math.exp %633 : vector<8x128xf32>
    %657 = math.log1p %656 : vector<8x128xf32>
    %658 = arith.select %655, %633, %657 : vector<8x128xi1>, vector<8x128xf32>
    %cst_120 = arith.constant 2.000000e+01 : f32
    %659 = vector.broadcast %cst_120 : f32 to vector<8x128xf32>
    %660 = arith.cmpf ogt, %643, %659 : vector<8x128xf32>
    %661 = math.exp %643 : vector<8x128xf32>
    %662 = math.log1p %661 : vector<8x128xf32>
    %663 = arith.select %660, %643, %662 : vector<8x128xi1>, vector<8x128xf32>
    %cst_121 = arith.constant 2.000000e+01 : f32
    %664 = vector.broadcast %cst_121 : f32 to vector<8x128xf32>
    %665 = arith.cmpf ogt, %653, %664 : vector<8x128xf32>
    %666 = math.exp %653 : vector<8x128xf32>
    %667 = math.log1p %666 : vector<8x128xf32>
    %668 = arith.select %665, %653, %667 : vector<8x128xi1>, vector<8x128xf32>
    %669 = vector.broadcast %12 : f32 to vector<8x128xf32>
    %670 = arith.mulf %658, %669 : vector<8x128xf32>
    %671 = vector.broadcast %15 : f32 to vector<8x128xf32>
    %672 = arith.mulf %663, %671 : vector<8x128xf32>
    %673 = arith.addf %670, %672 : vector<8x128xf32>
    %674 = vector.broadcast %18 : f32 to vector<8x128xf32>
    %675 = arith.mulf %668, %674 : vector<8x128xf32>
    %676 = arith.addf %673, %675 : vector<8x128xf32>
    %677 = vector.broadcast %21 : f32 to vector<8x128xf32>
    %678 = arith.addf %676, %677 : vector<8x128xf32>
    %679 = vector.broadcast %13 : f32 to vector<8x128xf32>
    %680 = arith.mulf %658, %679 : vector<8x128xf32>
    %681 = vector.broadcast %16 : f32 to vector<8x128xf32>
    %682 = arith.mulf %663, %681 : vector<8x128xf32>
    %683 = arith.addf %680, %682 : vector<8x128xf32>
    %684 = vector.broadcast %19 : f32 to vector<8x128xf32>
    %685 = arith.mulf %668, %684 : vector<8x128xf32>
    %686 = arith.addf %683, %685 : vector<8x128xf32>
    %687 = vector.broadcast %22 : f32 to vector<8x128xf32>
    %688 = arith.addf %686, %687 : vector<8x128xf32>
    %689 = vector.broadcast %14 : f32 to vector<8x128xf32>
    %690 = arith.mulf %658, %689 : vector<8x128xf32>
    %691 = vector.broadcast %17 : f32 to vector<8x128xf32>
    %692 = arith.mulf %663, %691 : vector<8x128xf32>
    %693 = arith.addf %690, %692 : vector<8x128xf32>
    %694 = vector.broadcast %20 : f32 to vector<8x128xf32>
    %695 = arith.mulf %668, %694 : vector<8x128xf32>
    %696 = arith.addf %693, %695 : vector<8x128xf32>
    %697 = vector.broadcast %23 : f32 to vector<8x128xf32>
    %698 = arith.addf %696, %697 : vector<8x128xf32>
    %cst_122 = arith.constant 2.000000e+01 : f32
    %699 = vector.broadcast %cst_122 : f32 to vector<8x128xf32>
    %700 = arith.cmpf ogt, %678, %699 : vector<8x128xf32>
    %701 = math.exp %678 : vector<8x128xf32>
    %702 = math.log1p %701 : vector<8x128xf32>
    %703 = arith.select %700, %678, %702 : vector<8x128xi1>, vector<8x128xf32>
    %cst_123 = arith.constant 2.000000e+01 : f32
    %704 = vector.broadcast %cst_123 : f32 to vector<8x128xf32>
    %705 = arith.cmpf ogt, %688, %704 : vector<8x128xf32>
    %706 = math.exp %688 : vector<8x128xf32>
    %707 = math.log1p %706 : vector<8x128xf32>
    %708 = arith.select %705, %688, %707 : vector<8x128xi1>, vector<8x128xf32>
    %cst_124 = arith.constant 2.000000e+01 : f32
    %709 = vector.broadcast %cst_124 : f32 to vector<8x128xf32>
    %710 = arith.cmpf ogt, %698, %709 : vector<8x128xf32>
    %711 = math.exp %698 : vector<8x128xf32>
    %712 = math.log1p %711 : vector<8x128xf32>
    %713 = arith.select %710, %698, %712 : vector<8x128xi1>, vector<8x128xf32>
    %714 = vector.broadcast %24 : f32 to vector<8x128xf32>
    %715 = arith.mulf %703, %714 : vector<8x128xf32>
    %716 = vector.broadcast %25 : f32 to vector<8x128xf32>
    %717 = arith.mulf %708, %716 : vector<8x128xf32>
    %718 = arith.addf %715, %717 : vector<8x128xf32>
    %719 = vector.broadcast %26 : f32 to vector<8x128xf32>
    %720 = arith.mulf %713, %719 : vector<8x128xf32>
    %721 = arith.addf %718, %720 : vector<8x128xf32>
    %722 = vector.broadcast %27 : f32 to vector<8x128xf32>
    %723 = arith.addf %721, %722 : vector<8x128xf32>
    %724 = arith.addf %617, %723 : vector<8x128xf32>
    %c0_125 = arith.constant 0 : index
    %c1_126 = arith.constant 1 : index
    %c0_127 = arith.constant 0 : index
    %c0_128 = arith.constant 0 : index
    %c0_129 = arith.constant 0 : index
    %725 = vector.load %arg2[%c0_125, %c1_126, %c0_127, %c0_128, %c0_129] : memref<3x3x6x8x128xf32, #tpu.memory_space<vmem>>, vector<1x1x1x8x128xf32>
    %726 = vector.shape_cast %725 : vector<1x1x1x8x128xf32> to vector<8x128xf32>
    %c1_130 = arith.constant 1 : index
    %c1_131 = arith.constant 1 : index
    %c0_132 = arith.constant 0 : index
    %c0_133 = arith.constant 0 : index
    %c0_134 = arith.constant 0 : index
    %727 = vector.load %arg2[%c1_130, %c1_131, %c0_132, %c0_133, %c0_134] : memref<3x3x6x8x128xf32, #tpu.memory_space<vmem>>, vector<1x1x1x8x128xf32>
    %728 = vector.shape_cast %727 : vector<1x1x1x8x128xf32> to vector<8x128xf32>
    %c2_135 = arith.constant 2 : index
    %c1_136 = arith.constant 1 : index
    %c0_137 = arith.constant 0 : index
    %c0_138 = arith.constant 0 : index
    %c0_139 = arith.constant 0 : index
    %729 = vector.load %arg2[%c2_135, %c1_136, %c0_137, %c0_138, %c0_139] : memref<3x3x6x8x128xf32, #tpu.memory_space<vmem>>, vector<1x1x1x8x128xf32>
    %730 = vector.shape_cast %729 : vector<1x1x1x8x128xf32> to vector<8x128xf32>
    %731 = vector.broadcast %0 : f32 to vector<8x128xf32>
    %732 = arith.mulf %726, %731 : vector<8x128xf32>
    %733 = vector.broadcast %3 : f32 to vector<8x128xf32>
    %734 = arith.mulf %728, %733 : vector<8x128xf32>
    %735 = arith.addf %732, %734 : vector<8x128xf32>
    %736 = vector.broadcast %6 : f32 to vector<8x128xf32>
    %737 = arith.mulf %730, %736 : vector<8x128xf32>
    %738 = arith.addf %735, %737 : vector<8x128xf32>
    %739 = vector.broadcast %9 : f32 to vector<8x128xf32>
    %740 = arith.addf %738, %739 : vector<8x128xf32>
    %741 = vector.broadcast %1 : f32 to vector<8x128xf32>
    %742 = arith.mulf %726, %741 : vector<8x128xf32>
    %743 = vector.broadcast %4 : f32 to vector<8x128xf32>
    %744 = arith.mulf %728, %743 : vector<8x128xf32>
    %745 = arith.addf %742, %744 : vector<8x128xf32>
    %746 = vector.broadcast %7 : f32 to vector<8x128xf32>
    %747 = arith.mulf %730, %746 : vector<8x128xf32>
    %748 = arith.addf %745, %747 : vector<8x128xf32>
    %749 = vector.broadcast %10 : f32 to vector<8x128xf32>
    %750 = arith.addf %748, %749 : vector<8x128xf32>
    %751 = vector.broadcast %2 : f32 to vector<8x128xf32>
    %752 = arith.mulf %726, %751 : vector<8x128xf32>
    %753 = vector.broadcast %5 : f32 to vector<8x128xf32>
    %754 = arith.mulf %728, %753 : vector<8x128xf32>
    %755 = arith.addf %752, %754 : vector<8x128xf32>
    %756 = vector.broadcast %8 : f32 to vector<8x128xf32>
    %757 = arith.mulf %730, %756 : vector<8x128xf32>
    %758 = arith.addf %755, %757 : vector<8x128xf32>
    %759 = vector.broadcast %11 : f32 to vector<8x128xf32>
    %760 = arith.addf %758, %759 : vector<8x128xf32>
    %cst_140 = arith.constant 2.000000e+01 : f32
    %761 = vector.broadcast %cst_140 : f32 to vector<8x128xf32>
    %762 = arith.cmpf ogt, %740, %761 : vector<8x128xf32>
    %763 = math.exp %740 : vector<8x128xf32>
    %764 = math.log1p %763 : vector<8x128xf32>
    %765 = arith.select %762, %740, %764 : vector<8x128xi1>, vector<8x128xf32>
    %cst_141 = arith.constant 2.000000e+01 : f32
    %766 = vector.broadcast %cst_141 : f32 to vector<8x128xf32>
    %767 = arith.cmpf ogt, %750, %766 : vector<8x128xf32>
    %768 = math.exp %750 : vector<8x128xf32>
    %769 = math.log1p %768 : vector<8x128xf32>
    %770 = arith.select %767, %750, %769 : vector<8x128xi1>, vector<8x128xf32>
    %cst_142 = arith.constant 2.000000e+01 : f32
    %771 = vector.broadcast %cst_142 : f32 to vector<8x128xf32>
    %772 = arith.cmpf ogt, %760, %771 : vector<8x128xf32>
    %773 = math.exp %760 : vector<8x128xf32>
    %774 = math.log1p %773 : vector<8x128xf32>
    %775 = arith.select %772, %760, %774 : vector<8x128xi1>, vector<8x128xf32>
    %776 = vector.broadcast %12 : f32 to vector<8x128xf32>
    %777 = arith.mulf %765, %776 : vector<8x128xf32>
    %778 = vector.broadcast %15 : f32 to vector<8x128xf32>
    %779 = arith.mulf %770, %778 : vector<8x128xf32>
    %780 = arith.addf %777, %779 : vector<8x128xf32>
    %781 = vector.broadcast %18 : f32 to vector<8x128xf32>
    %782 = arith.mulf %775, %781 : vector<8x128xf32>
    %783 = arith.addf %780, %782 : vector<8x128xf32>
    %784 = vector.broadcast %21 : f32 to vector<8x128xf32>
    %785 = arith.addf %783, %784 : vector<8x128xf32>
    %786 = vector.broadcast %13 : f32 to vector<8x128xf32>
    %787 = arith.mulf %765, %786 : vector<8x128xf32>
    %788 = vector.broadcast %16 : f32 to vector<8x128xf32>
    %789 = arith.mulf %770, %788 : vector<8x128xf32>
    %790 = arith.addf %787, %789 : vector<8x128xf32>
    %791 = vector.broadcast %19 : f32 to vector<8x128xf32>
    %792 = arith.mulf %775, %791 : vector<8x128xf32>
    %793 = arith.addf %790, %792 : vector<8x128xf32>
    %794 = vector.broadcast %22 : f32 to vector<8x128xf32>
    %795 = arith.addf %793, %794 : vector<8x128xf32>
    %796 = vector.broadcast %14 : f32 to vector<8x128xf32>
    %797 = arith.mulf %765, %796 : vector<8x128xf32>
    %798 = vector.broadcast %17 : f32 to vector<8x128xf32>
    %799 = arith.mulf %770, %798 : vector<8x128xf32>
    %800 = arith.addf %797, %799 : vector<8x128xf32>
    %801 = vector.broadcast %20 : f32 to vector<8x128xf32>
    %802 = arith.mulf %775, %801 : vector<8x128xf32>
    %803 = arith.addf %800, %802 : vector<8x128xf32>
    %804 = vector.broadcast %23 : f32 to vector<8x128xf32>
    %805 = arith.addf %803, %804 : vector<8x128xf32>
    %cst_143 = arith.constant 2.000000e+01 : f32
    %806 = vector.broadcast %cst_143 : f32 to vector<8x128xf32>
    %807 = arith.cmpf ogt, %785, %806 : vector<8x128xf32>
    %808 = math.exp %785 : vector<8x128xf32>
    %809 = math.log1p %808 : vector<8x128xf32>
    %810 = arith.select %807, %785, %809 : vector<8x128xi1>, vector<8x128xf32>
    %cst_144 = arith.constant 2.000000e+01 : f32
    %811 = vector.broadcast %cst_144 : f32 to vector<8x128xf32>
    %812 = arith.cmpf ogt, %795, %811 : vector<8x128xf32>
    %813 = math.exp %795 : vector<8x128xf32>
    %814 = math.log1p %813 : vector<8x128xf32>
    %815 = arith.select %812, %795, %814 : vector<8x128xi1>, vector<8x128xf32>
    %cst_145 = arith.constant 2.000000e+01 : f32
    %816 = vector.broadcast %cst_145 : f32 to vector<8x128xf32>
    %817 = arith.cmpf ogt, %805, %816 : vector<8x128xf32>
    %818 = math.exp %805 : vector<8x128xf32>
    %819 = math.log1p %818 : vector<8x128xf32>
    %820 = arith.select %817, %805, %819 : vector<8x128xi1>, vector<8x128xf32>
    %821 = vector.broadcast %24 : f32 to vector<8x128xf32>
    %822 = arith.mulf %810, %821 : vector<8x128xf32>
    %823 = vector.broadcast %25 : f32 to vector<8x128xf32>
    %824 = arith.mulf %815, %823 : vector<8x128xf32>
    %825 = arith.addf %822, %824 : vector<8x128xf32>
    %826 = vector.broadcast %26 : f32 to vector<8x128xf32>
    %827 = arith.mulf %820, %826 : vector<8x128xf32>
    %828 = arith.addf %825, %827 : vector<8x128xf32>
    %829 = vector.broadcast %27 : f32 to vector<8x128xf32>
    %830 = arith.addf %828, %829 : vector<8x128xf32>
    %c0_146 = arith.constant 0 : index
    %c1_147 = arith.constant 1 : index
    %c1_148 = arith.constant 1 : index
    %c0_149 = arith.constant 0 : index
    %c0_150 = arith.constant 0 : index
    %831 = vector.load %arg2[%c0_146, %c1_147, %c1_148, %c0_149, %c0_150] : memref<3x3x6x8x128xf32, #tpu.memory_space<vmem>>, vector<1x1x1x8x128xf32>
    %832 = vector.shape_cast %831 : vector<1x1x1x8x128xf32> to vector<8x128xf32>
    %c1_151 = arith.constant 1 : index
    %c1_152 = arith.constant 1 : index
    %c1_153 = arith.constant 1 : index
    %c0_154 = arith.constant 0 : index
    %c0_155 = arith.constant 0 : index
    %833 = vector.load %arg2[%c1_151, %c1_152, %c1_153, %c0_154, %c0_155] : memref<3x3x6x8x128xf32, #tpu.memory_space<vmem>>, vector<1x1x1x8x128xf32>
    %834 = vector.shape_cast %833 : vector<1x1x1x8x128xf32> to vector<8x128xf32>
    %c2_156 = arith.constant 2 : index
    %c1_157 = arith.constant 1 : index
    %c1_158 = arith.constant 1 : index
    %c0_159 = arith.constant 0 : index
    %c0_160 = arith.constant 0 : index
    %835 = vector.load %arg2[%c2_156, %c1_157, %c1_158, %c0_159, %c0_160] : memref<3x3x6x8x128xf32, #tpu.memory_space<vmem>>, vector<1x1x1x8x128xf32>
    %836 = vector.shape_cast %835 : vector<1x1x1x8x128xf32> to vector<8x128xf32>
    %837 = vector.broadcast %0 : f32 to vector<8x128xf32>
    %838 = arith.mulf %832, %837 : vector<8x128xf32>
    %839 = vector.broadcast %3 : f32 to vector<8x128xf32>
    %840 = arith.mulf %834, %839 : vector<8x128xf32>
    %841 = arith.addf %838, %840 : vector<8x128xf32>
    %842 = vector.broadcast %6 : f32 to vector<8x128xf32>
    %843 = arith.mulf %836, %842 : vector<8x128xf32>
    %844 = arith.addf %841, %843 : vector<8x128xf32>
    %845 = vector.broadcast %9 : f32 to vector<8x128xf32>
    %846 = arith.addf %844, %845 : vector<8x128xf32>
    %847 = vector.broadcast %1 : f32 to vector<8x128xf32>
    %848 = arith.mulf %832, %847 : vector<8x128xf32>
    %849 = vector.broadcast %4 : f32 to vector<8x128xf32>
    %850 = arith.mulf %834, %849 : vector<8x128xf32>
    %851 = arith.addf %848, %850 : vector<8x128xf32>
    %852 = vector.broadcast %7 : f32 to vector<8x128xf32>
    %853 = arith.mulf %836, %852 : vector<8x128xf32>
    %854 = arith.addf %851, %853 : vector<8x128xf32>
    %855 = vector.broadcast %10 : f32 to vector<8x128xf32>
    %856 = arith.addf %854, %855 : vector<8x128xf32>
    %857 = vector.broadcast %2 : f32 to vector<8x128xf32>
    %858 = arith.mulf %832, %857 : vector<8x128xf32>
    %859 = vector.broadcast %5 : f32 to vector<8x128xf32>
    %860 = arith.mulf %834, %859 : vector<8x128xf32>
    %861 = arith.addf %858, %860 : vector<8x128xf32>
    %862 = vector.broadcast %8 : f32 to vector<8x128xf32>
    %863 = arith.mulf %836, %862 : vector<8x128xf32>
    %864 = arith.addf %861, %863 : vector<8x128xf32>
    %865 = vector.broadcast %11 : f32 to vector<8x128xf32>
    %866 = arith.addf %864, %865 : vector<8x128xf32>
    %cst_161 = arith.constant 2.000000e+01 : f32
    %867 = vector.broadcast %cst_161 : f32 to vector<8x128xf32>
    %868 = arith.cmpf ogt, %846, %867 : vector<8x128xf32>
    %869 = math.exp %846 : vector<8x128xf32>
    %870 = math.log1p %869 : vector<8x128xf32>
    %871 = arith.select %868, %846, %870 : vector<8x128xi1>, vector<8x128xf32>
    %cst_162 = arith.constant 2.000000e+01 : f32
    %872 = vector.broadcast %cst_162 : f32 to vector<8x128xf32>
    %873 = arith.cmpf ogt, %856, %872 : vector<8x128xf32>
    %874 = math.exp %856 : vector<8x128xf32>
    %875 = math.log1p %874 : vector<8x128xf32>
    %876 = arith.select %873, %856, %875 : vector<8x128xi1>, vector<8x128xf32>
    %cst_163 = arith.constant 2.000000e+01 : f32
    %877 = vector.broadcast %cst_163 : f32 to vector<8x128xf32>
    %878 = arith.cmpf ogt, %866, %877 : vector<8x128xf32>
    %879 = math.exp %866 : vector<8x128xf32>
    %880 = math.log1p %879 : vector<8x128xf32>
    %881 = arith.select %878, %866, %880 : vector<8x128xi1>, vector<8x128xf32>
    %882 = vector.broadcast %12 : f32 to vector<8x128xf32>
    %883 = arith.mulf %871, %882 : vector<8x128xf32>
    %884 = vector.broadcast %15 : f32 to vector<8x128xf32>
    %885 = arith.mulf %876, %884 : vector<8x128xf32>
    %886 = arith.addf %883, %885 : vector<8x128xf32>
    %887 = vector.broadcast %18 : f32 to vector<8x128xf32>
    %888 = arith.mulf %881, %887 : vector<8x128xf32>
    %889 = arith.addf %886, %888 : vector<8x128xf32>
    %890 = vector.broadcast %21 : f32 to vector<8x128xf32>
    %891 = arith.addf %889, %890 : vector<8x128xf32>
    %892 = vector.broadcast %13 : f32 to vector<8x128xf32>
    %893 = arith.mulf %871, %892 : vector<8x128xf32>
    %894 = vector.broadcast %16 : f32 to vector<8x128xf32>
    %895 = arith.mulf %876, %894 : vector<8x128xf32>
    %896 = arith.addf %893, %895 : vector<8x128xf32>
    %897 = vector.broadcast %19 : f32 to vector<8x128xf32>
    %898 = arith.mulf %881, %897 : vector<8x128xf32>
    %899 = arith.addf %896, %898 : vector<8x128xf32>
    %900 = vector.broadcast %22 : f32 to vector<8x128xf32>
    %901 = arith.addf %899, %900 : vector<8x128xf32>
    %902 = vector.broadcast %14 : f32 to vector<8x128xf32>
    %903 = arith.mulf %871, %902 : vector<8x128xf32>
    %904 = vector.broadcast %17 : f32 to vector<8x128xf32>
    %905 = arith.mulf %876, %904 : vector<8x128xf32>
    %906 = arith.addf %903, %905 : vector<8x128xf32>
    %907 = vector.broadcast %20 : f32 to vector<8x128xf32>
    %908 = arith.mulf %881, %907 : vector<8x128xf32>
    %909 = arith.addf %906, %908 : vector<8x128xf32>
    %910 = vector.broadcast %23 : f32 to vector<8x128xf32>
    %911 = arith.addf %909, %910 : vector<8x128xf32>
    %cst_164 = arith.constant 2.000000e+01 : f32
    %912 = vector.broadcast %cst_164 : f32 to vector<8x128xf32>
    %913 = arith.cmpf ogt, %891, %912 : vector<8x128xf32>
    %914 = math.exp %891 : vector<8x128xf32>
    %915 = math.log1p %914 : vector<8x128xf32>
    %916 = arith.select %913, %891, %915 : vector<8x128xi1>, vector<8x128xf32>
    %cst_165 = arith.constant 2.000000e+01 : f32
    %917 = vector.broadcast %cst_165 : f32 to vector<8x128xf32>
    %918 = arith.cmpf ogt, %901, %917 : vector<8x128xf32>
    %919 = math.exp %901 : vector<8x128xf32>
    %920 = math.log1p %919 : vector<8x128xf32>
    %921 = arith.select %918, %901, %920 : vector<8x128xi1>, vector<8x128xf32>
    %cst_166 = arith.constant 2.000000e+01 : f32
    %922 = vector.broadcast %cst_166 : f32 to vector<8x128xf32>
    %923 = arith.cmpf ogt, %911, %922 : vector<8x128xf32>
    %924 = math.exp %911 : vector<8x128xf32>
    %925 = math.log1p %924 : vector<8x128xf32>
    %926 = arith.select %923, %911, %925 : vector<8x128xi1>, vector<8x128xf32>
    %927 = vector.broadcast %24 : f32 to vector<8x128xf32>
    %928 = arith.mulf %916, %927 : vector<8x128xf32>
    %929 = vector.broadcast %25 : f32 to vector<8x128xf32>
    %930 = arith.mulf %921, %929 : vector<8x128xf32>
    %931 = arith.addf %928, %930 : vector<8x128xf32>
    %932 = vector.broadcast %26 : f32 to vector<8x128xf32>
    %933 = arith.mulf %926, %932 : vector<8x128xf32>
    %934 = arith.addf %931, %933 : vector<8x128xf32>
    %935 = vector.broadcast %27 : f32 to vector<8x128xf32>
    %936 = arith.addf %934, %935 : vector<8x128xf32>
    %937 = arith.addf %830, %936 : vector<8x128xf32>
    %c0_167 = arith.constant 0 : index
    %c1_168 = arith.constant 1 : index
    %c2_169 = arith.constant 2 : index
    %c0_170 = arith.constant 0 : index
    %c0_171 = arith.constant 0 : index
    %938 = vector.load %arg2[%c0_167, %c1_168, %c2_169, %c0_170, %c0_171] : memref<3x3x6x8x128xf32, #tpu.memory_space<vmem>>, vector<1x1x1x8x128xf32>
    %939 = vector.shape_cast %938 : vector<1x1x1x8x128xf32> to vector<8x128xf32>
    %c1_172 = arith.constant 1 : index
    %c1_173 = arith.constant 1 : index
    %c2_174 = arith.constant 2 : index
    %c0_175 = arith.constant 0 : index
    %c0_176 = arith.constant 0 : index
    %940 = vector.load %arg2[%c1_172, %c1_173, %c2_174, %c0_175, %c0_176] : memref<3x3x6x8x128xf32, #tpu.memory_space<vmem>>, vector<1x1x1x8x128xf32>
    %941 = vector.shape_cast %940 : vector<1x1x1x8x128xf32> to vector<8x128xf32>
    %c2_177 = arith.constant 2 : index
    %c1_178 = arith.constant 1 : index
    %c2_179 = arith.constant 2 : index
    %c0_180 = arith.constant 0 : index
    %c0_181 = arith.constant 0 : index
    %942 = vector.load %arg2[%c2_177, %c1_178, %c2_179, %c0_180, %c0_181] : memref<3x3x6x8x128xf32, #tpu.memory_space<vmem>>, vector<1x1x1x8x128xf32>
    %943 = vector.shape_cast %942 : vector<1x1x1x8x128xf32> to vector<8x128xf32>
    %944 = vector.broadcast %0 : f32 to vector<8x128xf32>
    %945 = arith.mulf %939, %944 : vector<8x128xf32>
    %946 = vector.broadcast %3 : f32 to vector<8x128xf32>
    %947 = arith.mulf %941, %946 : vector<8x128xf32>
    %948 = arith.addf %945, %947 : vector<8x128xf32>
    %949 = vector.broadcast %6 : f32 to vector<8x128xf32>
    %950 = arith.mulf %943, %949 : vector<8x128xf32>
    %951 = arith.addf %948, %950 : vector<8x128xf32>
    %952 = vector.broadcast %9 : f32 to vector<8x128xf32>
    %953 = arith.addf %951, %952 : vector<8x128xf32>
    %954 = vector.broadcast %1 : f32 to vector<8x128xf32>
    %955 = arith.mulf %939, %954 : vector<8x128xf32>
    %956 = vector.broadcast %4 : f32 to vector<8x128xf32>
    %957 = arith.mulf %941, %956 : vector<8x128xf32>
    %958 = arith.addf %955, %957 : vector<8x128xf32>
    %959 = vector.broadcast %7 : f32 to vector<8x128xf32>
    %960 = arith.mulf %943, %959 : vector<8x128xf32>
    %961 = arith.addf %958, %960 : vector<8x128xf32>
    %962 = vector.broadcast %10 : f32 to vector<8x128xf32>
    %963 = arith.addf %961, %962 : vector<8x128xf32>
    %964 = vector.broadcast %2 : f32 to vector<8x128xf32>
    %965 = arith.mulf %939, %964 : vector<8x128xf32>
    %966 = vector.broadcast %5 : f32 to vector<8x128xf32>
    %967 = arith.mulf %941, %966 : vector<8x128xf32>
    %968 = arith.addf %965, %967 : vector<8x128xf32>
    %969 = vector.broadcast %8 : f32 to vector<8x128xf32>
    %970 = arith.mulf %943, %969 : vector<8x128xf32>
    %971 = arith.addf %968, %970 : vector<8x128xf32>
    %972 = vector.broadcast %11 : f32 to vector<8x128xf32>
    %973 = arith.addf %971, %972 : vector<8x128xf32>
    %cst_182 = arith.constant 2.000000e+01 : f32
    %974 = vector.broadcast %cst_182 : f32 to vector<8x128xf32>
    %975 = arith.cmpf ogt, %953, %974 : vector<8x128xf32>
    %976 = math.exp %953 : vector<8x128xf32>
    %977 = math.log1p %976 : vector<8x128xf32>
    %978 = arith.select %975, %953, %977 : vector<8x128xi1>, vector<8x128xf32>
    %cst_183 = arith.constant 2.000000e+01 : f32
    %979 = vector.broadcast %cst_183 : f32 to vector<8x128xf32>
    %980 = arith.cmpf ogt, %963, %979 : vector<8x128xf32>
    %981 = math.exp %963 : vector<8x128xf32>
    %982 = math.log1p %981 : vector<8x128xf32>
    %983 = arith.select %980, %963, %982 : vector<8x128xi1>, vector<8x128xf32>
    %cst_184 = arith.constant 2.000000e+01 : f32
    %984 = vector.broadcast %cst_184 : f32 to vector<8x128xf32>
    %985 = arith.cmpf ogt, %973, %984 : vector<8x128xf32>
    %986 = math.exp %973 : vector<8x128xf32>
    %987 = math.log1p %986 : vector<8x128xf32>
    %988 = arith.select %985, %973, %987 : vector<8x128xi1>, vector<8x128xf32>
    %989 = vector.broadcast %12 : f32 to vector<8x128xf32>
    %990 = arith.mulf %978, %989 : vector<8x128xf32>
    %991 = vector.broadcast %15 : f32 to vector<8x128xf32>
    %992 = arith.mulf %983, %991 : vector<8x128xf32>
    %993 = arith.addf %990, %992 : vector<8x128xf32>
    %994 = vector.broadcast %18 : f32 to vector<8x128xf32>
    %995 = arith.mulf %988, %994 : vector<8x128xf32>
    %996 = arith.addf %993, %995 : vector<8x128xf32>
    %997 = vector.broadcast %21 : f32 to vector<8x128xf32>
    %998 = arith.addf %996, %997 : vector<8x128xf32>
    %999 = vector.broadcast %13 : f32 to vector<8x128xf32>
    %1000 = arith.mulf %978, %999 : vector<8x128xf32>
    %1001 = vector.broadcast %16 : f32 to vector<8x128xf32>
    %1002 = arith.mulf %983, %1001 : vector<8x128xf32>
    %1003 = arith.addf %1000, %1002 : vector<8x128xf32>
    %1004 = vector.broadcast %19 : f32 to vector<8x128xf32>
    %1005 = arith.mulf %988, %1004 : vector<8x128xf32>
    %1006 = arith.addf %1003, %1005 : vector<8x128xf32>
    %1007 = vector.broadcast %22 : f32 to vector<8x128xf32>
    %1008 = arith.addf %1006, %1007 : vector<8x128xf32>
    %1009 = vector.broadcast %14 : f32 to vector<8x128xf32>
    %1010 = arith.mulf %978, %1009 : vector<8x128xf32>
    %1011 = vector.broadcast %17 : f32 to vector<8x128xf32>
    %1012 = arith.mulf %983, %1011 : vector<8x128xf32>
    %1013 = arith.addf %1010, %1012 : vector<8x128xf32>
    %1014 = vector.broadcast %20 : f32 to vector<8x128xf32>
    %1015 = arith.mulf %988, %1014 : vector<8x128xf32>
    %1016 = arith.addf %1013, %1015 : vector<8x128xf32>
    %1017 = vector.broadcast %23 : f32 to vector<8x128xf32>
    %1018 = arith.addf %1016, %1017 : vector<8x128xf32>
    %cst_185 = arith.constant 2.000000e+01 : f32
    %1019 = vector.broadcast %cst_185 : f32 to vector<8x128xf32>
    %1020 = arith.cmpf ogt, %998, %1019 : vector<8x128xf32>
    %1021 = math.exp %998 : vector<8x128xf32>
    %1022 = math.log1p %1021 : vector<8x128xf32>
    %1023 = arith.select %1020, %998, %1022 : vector<8x128xi1>, vector<8x128xf32>
    %cst_186 = arith.constant 2.000000e+01 : f32
    %1024 = vector.broadcast %cst_186 : f32 to vector<8x128xf32>
    %1025 = arith.cmpf ogt, %1008, %1024 : vector<8x128xf32>
    %1026 = math.exp %1008 : vector<8x128xf32>
    %1027 = math.log1p %1026 : vector<8x128xf32>
    %1028 = arith.select %1025, %1008, %1027 : vector<8x128xi1>, vector<8x128xf32>
    %cst_187 = arith.constant 2.000000e+01 : f32
    %1029 = vector.broadcast %cst_187 : f32 to vector<8x128xf32>
    %1030 = arith.cmpf ogt, %1018, %1029 : vector<8x128xf32>
    %1031 = math.exp %1018 : vector<8x128xf32>
    %1032 = math.log1p %1031 : vector<8x128xf32>
    %1033 = arith.select %1030, %1018, %1032 : vector<8x128xi1>, vector<8x128xf32>
    %1034 = vector.broadcast %24 : f32 to vector<8x128xf32>
    %1035 = arith.mulf %1023, %1034 : vector<8x128xf32>
    %1036 = vector.broadcast %25 : f32 to vector<8x128xf32>
    %1037 = arith.mulf %1028, %1036 : vector<8x128xf32>
    %1038 = arith.addf %1035, %1037 : vector<8x128xf32>
    %1039 = vector.broadcast %26 : f32 to vector<8x128xf32>
    %1040 = arith.mulf %1033, %1039 : vector<8x128xf32>
    %1041 = arith.addf %1038, %1040 : vector<8x128xf32>
    %1042 = vector.broadcast %27 : f32 to vector<8x128xf32>
    %1043 = arith.addf %1041, %1042 : vector<8x128xf32>
    %1044 = arith.addf %937, %1043 : vector<8x128xf32>
    %c0_188 = arith.constant 0 : index
    %c1_189 = arith.constant 1 : index
    %c3_190 = arith.constant 3 : index
    %c0_191 = arith.constant 0 : index
    %c0_192 = arith.constant 0 : index
    %1045 = vector.load %arg2[%c0_188, %c1_189, %c3_190, %c0_191, %c0_192] : memref<3x3x6x8x128xf32, #tpu.memory_space<vmem>>, vector<1x1x1x8x128xf32>
    %1046 = vector.shape_cast %1045 : vector<1x1x1x8x128xf32> to vector<8x128xf32>
    %c1_193 = arith.constant 1 : index
    %c1_194 = arith.constant 1 : index
    %c3_195 = arith.constant 3 : index
    %c0_196 = arith.constant 0 : index
    %c0_197 = arith.constant 0 : index
    %1047 = vector.load %arg2[%c1_193, %c1_194, %c3_195, %c0_196, %c0_197] : memref<3x3x6x8x128xf32, #tpu.memory_space<vmem>>, vector<1x1x1x8x128xf32>
    %1048 = vector.shape_cast %1047 : vector<1x1x1x8x128xf32> to vector<8x128xf32>
    %c2_198 = arith.constant 2 : index
    %c1_199 = arith.constant 1 : index
    %c3_200 = arith.constant 3 : index
    %c0_201 = arith.constant 0 : index
    %c0_202 = arith.constant 0 : index
    %1049 = vector.load %arg2[%c2_198, %c1_199, %c3_200, %c0_201, %c0_202] : memref<3x3x6x8x128xf32, #tpu.memory_space<vmem>>, vector<1x1x1x8x128xf32>
    %1050 = vector.shape_cast %1049 : vector<1x1x1x8x128xf32> to vector<8x128xf32>
    %1051 = vector.broadcast %0 : f32 to vector<8x128xf32>
    %1052 = arith.mulf %1046, %1051 : vector<8x128xf32>
    %1053 = vector.broadcast %3 : f32 to vector<8x128xf32>
    %1054 = arith.mulf %1048, %1053 : vector<8x128xf32>
    %1055 = arith.addf %1052, %1054 : vector<8x128xf32>
    %1056 = vector.broadcast %6 : f32 to vector<8x128xf32>
    %1057 = arith.mulf %1050, %1056 : vector<8x128xf32>
    %1058 = arith.addf %1055, %1057 : vector<8x128xf32>
    %1059 = vector.broadcast %9 : f32 to vector<8x128xf32>
    %1060 = arith.addf %1058, %1059 : vector<8x128xf32>
    %1061 = vector.broadcast %1 : f32 to vector<8x128xf32>
    %1062 = arith.mulf %1046, %1061 : vector<8x128xf32>
    %1063 = vector.broadcast %4 : f32 to vector<8x128xf32>
    %1064 = arith.mulf %1048, %1063 : vector<8x128xf32>
    %1065 = arith.addf %1062, %1064 : vector<8x128xf32>
    %1066 = vector.broadcast %7 : f32 to vector<8x128xf32>
    %1067 = arith.mulf %1050, %1066 : vector<8x128xf32>
    %1068 = arith.addf %1065, %1067 : vector<8x128xf32>
    %1069 = vector.broadcast %10 : f32 to vector<8x128xf32>
    %1070 = arith.addf %1068, %1069 : vector<8x128xf32>
    %1071 = vector.broadcast %2 : f32 to vector<8x128xf32>
    %1072 = arith.mulf %1046, %1071 : vector<8x128xf32>
    %1073 = vector.broadcast %5 : f32 to vector<8x128xf32>
    %1074 = arith.mulf %1048, %1073 : vector<8x128xf32>
    %1075 = arith.addf %1072, %1074 : vector<8x128xf32>
    %1076 = vector.broadcast %8 : f32 to vector<8x128xf32>
    %1077 = arith.mulf %1050, %1076 : vector<8x128xf32>
    %1078 = arith.addf %1075, %1077 : vector<8x128xf32>
    %1079 = vector.broadcast %11 : f32 to vector<8x128xf32>
    %1080 = arith.addf %1078, %1079 : vector<8x128xf32>
    %cst_203 = arith.constant 2.000000e+01 : f32
    %1081 = vector.broadcast %cst_203 : f32 to vector<8x128xf32>
    %1082 = arith.cmpf ogt, %1060, %1081 : vector<8x128xf32>
    %1083 = math.exp %1060 : vector<8x128xf32>
    %1084 = math.log1p %1083 : vector<8x128xf32>
    %1085 = arith.select %1082, %1060, %1084 : vector<8x128xi1>, vector<8x128xf32>
    %cst_204 = arith.constant 2.000000e+01 : f32
    %1086 = vector.broadcast %cst_204 : f32 to vector<8x128xf32>
    %1087 = arith.cmpf ogt, %1070, %1086 : vector<8x128xf32>
    %1088 = math.exp %1070 : vector<8x128xf32>
    %1089 = math.log1p %1088 : vector<8x128xf32>
    %1090 = arith.select %1087, %1070, %1089 : vector<8x128xi1>, vector<8x128xf32>
    %cst_205 = arith.constant 2.000000e+01 : f32
    %1091 = vector.broadcast %cst_205 : f32 to vector<8x128xf32>
    %1092 = arith.cmpf ogt, %1080, %1091 : vector<8x128xf32>
    %1093 = math.exp %1080 : vector<8x128xf32>
    %1094 = math.log1p %1093 : vector<8x128xf32>
    %1095 = arith.select %1092, %1080, %1094 : vector<8x128xi1>, vector<8x128xf32>
    %1096 = vector.broadcast %12 : f32 to vector<8x128xf32>
    %1097 = arith.mulf %1085, %1096 : vector<8x128xf32>
    %1098 = vector.broadcast %15 : f32 to vector<8x128xf32>
    %1099 = arith.mulf %1090, %1098 : vector<8x128xf32>
    %1100 = arith.addf %1097, %1099 : vector<8x128xf32>
    %1101 = vector.broadcast %18 : f32 to vector<8x128xf32>
    %1102 = arith.mulf %1095, %1101 : vector<8x128xf32>
    %1103 = arith.addf %1100, %1102 : vector<8x128xf32>
    %1104 = vector.broadcast %21 : f32 to vector<8x128xf32>
    %1105 = arith.addf %1103, %1104 : vector<8x128xf32>
    %1106 = vector.broadcast %13 : f32 to vector<8x128xf32>
    %1107 = arith.mulf %1085, %1106 : vector<8x128xf32>
    %1108 = vector.broadcast %16 : f32 to vector<8x128xf32>
    %1109 = arith.mulf %1090, %1108 : vector<8x128xf32>
    %1110 = arith.addf %1107, %1109 : vector<8x128xf32>
    %1111 = vector.broadcast %19 : f32 to vector<8x128xf32>
    %1112 = arith.mulf %1095, %1111 : vector<8x128xf32>
    %1113 = arith.addf %1110, %1112 : vector<8x128xf32>
    %1114 = vector.broadcast %22 : f32 to vector<8x128xf32>
    %1115 = arith.addf %1113, %1114 : vector<8x128xf32>
    %1116 = vector.broadcast %14 : f32 to vector<8x128xf32>
    %1117 = arith.mulf %1085, %1116 : vector<8x128xf32>
    %1118 = vector.broadcast %17 : f32 to vector<8x128xf32>
    %1119 = arith.mulf %1090, %1118 : vector<8x128xf32>
    %1120 = arith.addf %1117, %1119 : vector<8x128xf32>
    %1121 = vector.broadcast %20 : f32 to vector<8x128xf32>
    %1122 = arith.mulf %1095, %1121 : vector<8x128xf32>
    %1123 = arith.addf %1120, %1122 : vector<8x128xf32>
    %1124 = vector.broadcast %23 : f32 to vector<8x128xf32>
    %1125 = arith.addf %1123, %1124 : vector<8x128xf32>
    %cst_206 = arith.constant 2.000000e+01 : f32
    %1126 = vector.broadcast %cst_206 : f32 to vector<8x128xf32>
    %1127 = arith.cmpf ogt, %1105, %1126 : vector<8x128xf32>
    %1128 = math.exp %1105 : vector<8x128xf32>
    %1129 = math.log1p %1128 : vector<8x128xf32>
    %1130 = arith.select %1127, %1105, %1129 : vector<8x128xi1>, vector<8x128xf32>
    %cst_207 = arith.constant 2.000000e+01 : f32
    %1131 = vector.broadcast %cst_207 : f32 to vector<8x128xf32>
    %1132 = arith.cmpf ogt, %1115, %1131 : vector<8x128xf32>
    %1133 = math.exp %1115 : vector<8x128xf32>
    %1134 = math.log1p %1133 : vector<8x128xf32>
    %1135 = arith.select %1132, %1115, %1134 : vector<8x128xi1>, vector<8x128xf32>
    %cst_208 = arith.constant 2.000000e+01 : f32
    %1136 = vector.broadcast %cst_208 : f32 to vector<8x128xf32>
    %1137 = arith.cmpf ogt, %1125, %1136 : vector<8x128xf32>
    %1138 = math.exp %1125 : vector<8x128xf32>
    %1139 = math.log1p %1138 : vector<8x128xf32>
    %1140 = arith.select %1137, %1125, %1139 : vector<8x128xi1>, vector<8x128xf32>
    %1141 = vector.broadcast %24 : f32 to vector<8x128xf32>
    %1142 = arith.mulf %1130, %1141 : vector<8x128xf32>
    %1143 = vector.broadcast %25 : f32 to vector<8x128xf32>
    %1144 = arith.mulf %1135, %1143 : vector<8x128xf32>
    %1145 = arith.addf %1142, %1144 : vector<8x128xf32>
    %1146 = vector.broadcast %26 : f32 to vector<8x128xf32>
    %1147 = arith.mulf %1140, %1146 : vector<8x128xf32>
    %1148 = arith.addf %1145, %1147 : vector<8x128xf32>
    %1149 = vector.broadcast %27 : f32 to vector<8x128xf32>
    %1150 = arith.addf %1148, %1149 : vector<8x128xf32>
    %1151 = arith.addf %1044, %1150 : vector<8x128xf32>
    %c0_209 = arith.constant 0 : index
    %c1_210 = arith.constant 1 : index
    %c4_211 = arith.constant 4 : index
    %c0_212 = arith.constant 0 : index
    %c0_213 = arith.constant 0 : index
    %1152 = vector.load %arg2[%c0_209, %c1_210, %c4_211, %c0_212, %c0_213] : memref<3x3x6x8x128xf32, #tpu.memory_space<vmem>>, vector<1x1x1x8x128xf32>
    %1153 = vector.shape_cast %1152 : vector<1x1x1x8x128xf32> to vector<8x128xf32>
    %c1_214 = arith.constant 1 : index
    %c1_215 = arith.constant 1 : index
    %c4_216 = arith.constant 4 : index
    %c0_217 = arith.constant 0 : index
    %c0_218 = arith.constant 0 : index
    %1154 = vector.load %arg2[%c1_214, %c1_215, %c4_216, %c0_217, %c0_218] : memref<3x3x6x8x128xf32, #tpu.memory_space<vmem>>, vector<1x1x1x8x128xf32>
    %1155 = vector.shape_cast %1154 : vector<1x1x1x8x128xf32> to vector<8x128xf32>
    %c2_219 = arith.constant 2 : index
    %c1_220 = arith.constant 1 : index
    %c4_221 = arith.constant 4 : index
    %c0_222 = arith.constant 0 : index
    %c0_223 = arith.constant 0 : index
    %1156 = vector.load %arg2[%c2_219, %c1_220, %c4_221, %c0_222, %c0_223] : memref<3x3x6x8x128xf32, #tpu.memory_space<vmem>>, vector<1x1x1x8x128xf32>
    %1157 = vector.shape_cast %1156 : vector<1x1x1x8x128xf32> to vector<8x128xf32>
    %1158 = vector.broadcast %0 : f32 to vector<8x128xf32>
    %1159 = arith.mulf %1153, %1158 : vector<8x128xf32>
    %1160 = vector.broadcast %3 : f32 to vector<8x128xf32>
    %1161 = arith.mulf %1155, %1160 : vector<8x128xf32>
    %1162 = arith.addf %1159, %1161 : vector<8x128xf32>
    %1163 = vector.broadcast %6 : f32 to vector<8x128xf32>
    %1164 = arith.mulf %1157, %1163 : vector<8x128xf32>
    %1165 = arith.addf %1162, %1164 : vector<8x128xf32>
    %1166 = vector.broadcast %9 : f32 to vector<8x128xf32>
    %1167 = arith.addf %1165, %1166 : vector<8x128xf32>
    %1168 = vector.broadcast %1 : f32 to vector<8x128xf32>
    %1169 = arith.mulf %1153, %1168 : vector<8x128xf32>
    %1170 = vector.broadcast %4 : f32 to vector<8x128xf32>
    %1171 = arith.mulf %1155, %1170 : vector<8x128xf32>
    %1172 = arith.addf %1169, %1171 : vector<8x128xf32>
    %1173 = vector.broadcast %7 : f32 to vector<8x128xf32>
    %1174 = arith.mulf %1157, %1173 : vector<8x128xf32>
    %1175 = arith.addf %1172, %1174 : vector<8x128xf32>
    %1176 = vector.broadcast %10 : f32 to vector<8x128xf32>
    %1177 = arith.addf %1175, %1176 : vector<8x128xf32>
    %1178 = vector.broadcast %2 : f32 to vector<8x128xf32>
    %1179 = arith.mulf %1153, %1178 : vector<8x128xf32>
    %1180 = vector.broadcast %5 : f32 to vector<8x128xf32>
    %1181 = arith.mulf %1155, %1180 : vector<8x128xf32>
    %1182 = arith.addf %1179, %1181 : vector<8x128xf32>
    %1183 = vector.broadcast %8 : f32 to vector<8x128xf32>
    %1184 = arith.mulf %1157, %1183 : vector<8x128xf32>
    %1185 = arith.addf %1182, %1184 : vector<8x128xf32>
    %1186 = vector.broadcast %11 : f32 to vector<8x128xf32>
    %1187 = arith.addf %1185, %1186 : vector<8x128xf32>
    %cst_224 = arith.constant 2.000000e+01 : f32
    %1188 = vector.broadcast %cst_224 : f32 to vector<8x128xf32>
    %1189 = arith.cmpf ogt, %1167, %1188 : vector<8x128xf32>
    %1190 = math.exp %1167 : vector<8x128xf32>
    %1191 = math.log1p %1190 : vector<8x128xf32>
    %1192 = arith.select %1189, %1167, %1191 : vector<8x128xi1>, vector<8x128xf32>
    %cst_225 = arith.constant 2.000000e+01 : f32
    %1193 = vector.broadcast %cst_225 : f32 to vector<8x128xf32>
    %1194 = arith.cmpf ogt, %1177, %1193 : vector<8x128xf32>
    %1195 = math.exp %1177 : vector<8x128xf32>
    %1196 = math.log1p %1195 : vector<8x128xf32>
    %1197 = arith.select %1194, %1177, %1196 : vector<8x128xi1>, vector<8x128xf32>
    %cst_226 = arith.constant 2.000000e+01 : f32
    %1198 = vector.broadcast %cst_226 : f32 to vector<8x128xf32>
    %1199 = arith.cmpf ogt, %1187, %1198 : vector<8x128xf32>
    %1200 = math.exp %1187 : vector<8x128xf32>
    %1201 = math.log1p %1200 : vector<8x128xf32>
    %1202 = arith.select %1199, %1187, %1201 : vector<8x128xi1>, vector<8x128xf32>
    %1203 = vector.broadcast %12 : f32 to vector<8x128xf32>
    %1204 = arith.mulf %1192, %1203 : vector<8x128xf32>
    %1205 = vector.broadcast %15 : f32 to vector<8x128xf32>
    %1206 = arith.mulf %1197, %1205 : vector<8x128xf32>
    %1207 = arith.addf %1204, %1206 : vector<8x128xf32>
    %1208 = vector.broadcast %18 : f32 to vector<8x128xf32>
    %1209 = arith.mulf %1202, %1208 : vector<8x128xf32>
    %1210 = arith.addf %1207, %1209 : vector<8x128xf32>
    %1211 = vector.broadcast %21 : f32 to vector<8x128xf32>
    %1212 = arith.addf %1210, %1211 : vector<8x128xf32>
    %1213 = vector.broadcast %13 : f32 to vector<8x128xf32>
    %1214 = arith.mulf %1192, %1213 : vector<8x128xf32>
    %1215 = vector.broadcast %16 : f32 to vector<8x128xf32>
    %1216 = arith.mulf %1197, %1215 : vector<8x128xf32>
    %1217 = arith.addf %1214, %1216 : vector<8x128xf32>
    %1218 = vector.broadcast %19 : f32 to vector<8x128xf32>
    %1219 = arith.mulf %1202, %1218 : vector<8x128xf32>
    %1220 = arith.addf %1217, %1219 : vector<8x128xf32>
    %1221 = vector.broadcast %22 : f32 to vector<8x128xf32>
    %1222 = arith.addf %1220, %1221 : vector<8x128xf32>
    %1223 = vector.broadcast %14 : f32 to vector<8x128xf32>
    %1224 = arith.mulf %1192, %1223 : vector<8x128xf32>
    %1225 = vector.broadcast %17 : f32 to vector<8x128xf32>
    %1226 = arith.mulf %1197, %1225 : vector<8x128xf32>
    %1227 = arith.addf %1224, %1226 : vector<8x128xf32>
    %1228 = vector.broadcast %20 : f32 to vector<8x128xf32>
    %1229 = arith.mulf %1202, %1228 : vector<8x128xf32>
    %1230 = arith.addf %1227, %1229 : vector<8x128xf32>
    %1231 = vector.broadcast %23 : f32 to vector<8x128xf32>
    %1232 = arith.addf %1230, %1231 : vector<8x128xf32>
    %cst_227 = arith.constant 2.000000e+01 : f32
    %1233 = vector.broadcast %cst_227 : f32 to vector<8x128xf32>
    %1234 = arith.cmpf ogt, %1212, %1233 : vector<8x128xf32>
    %1235 = math.exp %1212 : vector<8x128xf32>
    %1236 = math.log1p %1235 : vector<8x128xf32>
    %1237 = arith.select %1234, %1212, %1236 : vector<8x128xi1>, vector<8x128xf32>
    %cst_228 = arith.constant 2.000000e+01 : f32
    %1238 = vector.broadcast %cst_228 : f32 to vector<8x128xf32>
    %1239 = arith.cmpf ogt, %1222, %1238 : vector<8x128xf32>
    %1240 = math.exp %1222 : vector<8x128xf32>
    %1241 = math.log1p %1240 : vector<8x128xf32>
    %1242 = arith.select %1239, %1222, %1241 : vector<8x128xi1>, vector<8x128xf32>
    %cst_229 = arith.constant 2.000000e+01 : f32
    %1243 = vector.broadcast %cst_229 : f32 to vector<8x128xf32>
    %1244 = arith.cmpf ogt, %1232, %1243 : vector<8x128xf32>
    %1245 = math.exp %1232 : vector<8x128xf32>
    %1246 = math.log1p %1245 : vector<8x128xf32>
    %1247 = arith.select %1244, %1232, %1246 : vector<8x128xi1>, vector<8x128xf32>
    %1248 = vector.broadcast %24 : f32 to vector<8x128xf32>
    %1249 = arith.mulf %1237, %1248 : vector<8x128xf32>
    %1250 = vector.broadcast %25 : f32 to vector<8x128xf32>
    %1251 = arith.mulf %1242, %1250 : vector<8x128xf32>
    %1252 = arith.addf %1249, %1251 : vector<8x128xf32>
    %1253 = vector.broadcast %26 : f32 to vector<8x128xf32>
    %1254 = arith.mulf %1247, %1253 : vector<8x128xf32>
    %1255 = arith.addf %1252, %1254 : vector<8x128xf32>
    %1256 = vector.broadcast %27 : f32 to vector<8x128xf32>
    %1257 = arith.addf %1255, %1256 : vector<8x128xf32>
    %1258 = arith.addf %1151, %1257 : vector<8x128xf32>
    %c0_230 = arith.constant 0 : index
    %c1_231 = arith.constant 1 : index
    %c5_232 = arith.constant 5 : index
    %c0_233 = arith.constant 0 : index
    %c0_234 = arith.constant 0 : index
    %1259 = vector.load %arg2[%c0_230, %c1_231, %c5_232, %c0_233, %c0_234] : memref<3x3x6x8x128xf32, #tpu.memory_space<vmem>>, vector<1x1x1x8x128xf32>
    %1260 = vector.shape_cast %1259 : vector<1x1x1x8x128xf32> to vector<8x128xf32>
    %c1_235 = arith.constant 1 : index
    %c1_236 = arith.constant 1 : index
    %c5_237 = arith.constant 5 : index
    %c0_238 = arith.constant 0 : index
    %c0_239 = arith.constant 0 : index
    %1261 = vector.load %arg2[%c1_235, %c1_236, %c5_237, %c0_238, %c0_239] : memref<3x3x6x8x128xf32, #tpu.memory_space<vmem>>, vector<1x1x1x8x128xf32>
    %1262 = vector.shape_cast %1261 : vector<1x1x1x8x128xf32> to vector<8x128xf32>
    %c2_240 = arith.constant 2 : index
    %c1_241 = arith.constant 1 : index
    %c5_242 = arith.constant 5 : index
    %c0_243 = arith.constant 0 : index
    %c0_244 = arith.constant 0 : index
    %1263 = vector.load %arg2[%c2_240, %c1_241, %c5_242, %c0_243, %c0_244] : memref<3x3x6x8x128xf32, #tpu.memory_space<vmem>>, vector<1x1x1x8x128xf32>
    %1264 = vector.shape_cast %1263 : vector<1x1x1x8x128xf32> to vector<8x128xf32>
    %1265 = vector.broadcast %0 : f32 to vector<8x128xf32>
    %1266 = arith.mulf %1260, %1265 : vector<8x128xf32>
    %1267 = vector.broadcast %3 : f32 to vector<8x128xf32>
    %1268 = arith.mulf %1262, %1267 : vector<8x128xf32>
    %1269 = arith.addf %1266, %1268 : vector<8x128xf32>
    %1270 = vector.broadcast %6 : f32 to vector<8x128xf32>
    %1271 = arith.mulf %1264, %1270 : vector<8x128xf32>
    %1272 = arith.addf %1269, %1271 : vector<8x128xf32>
    %1273 = vector.broadcast %9 : f32 to vector<8x128xf32>
    %1274 = arith.addf %1272, %1273 : vector<8x128xf32>
    %1275 = vector.broadcast %1 : f32 to vector<8x128xf32>
    %1276 = arith.mulf %1260, %1275 : vector<8x128xf32>
    %1277 = vector.broadcast %4 : f32 to vector<8x128xf32>
    %1278 = arith.mulf %1262, %1277 : vector<8x128xf32>
    %1279 = arith.addf %1276, %1278 : vector<8x128xf32>
    %1280 = vector.broadcast %7 : f32 to vector<8x128xf32>
    %1281 = arith.mulf %1264, %1280 : vector<8x128xf32>
    %1282 = arith.addf %1279, %1281 : vector<8x128xf32>
    %1283 = vector.broadcast %10 : f32 to vector<8x128xf32>
    %1284 = arith.addf %1282, %1283 : vector<8x128xf32>
    %1285 = vector.broadcast %2 : f32 to vector<8x128xf32>
    %1286 = arith.mulf %1260, %1285 : vector<8x128xf32>
    %1287 = vector.broadcast %5 : f32 to vector<8x128xf32>
    %1288 = arith.mulf %1262, %1287 : vector<8x128xf32>
    %1289 = arith.addf %1286, %1288 : vector<8x128xf32>
    %1290 = vector.broadcast %8 : f32 to vector<8x128xf32>
    %1291 = arith.mulf %1264, %1290 : vector<8x128xf32>
    %1292 = arith.addf %1289, %1291 : vector<8x128xf32>
    %1293 = vector.broadcast %11 : f32 to vector<8x128xf32>
    %1294 = arith.addf %1292, %1293 : vector<8x128xf32>
    %cst_245 = arith.constant 2.000000e+01 : f32
    %1295 = vector.broadcast %cst_245 : f32 to vector<8x128xf32>
    %1296 = arith.cmpf ogt, %1274, %1295 : vector<8x128xf32>
    %1297 = math.exp %1274 : vector<8x128xf32>
    %1298 = math.log1p %1297 : vector<8x128xf32>
    %1299 = arith.select %1296, %1274, %1298 : vector<8x128xi1>, vector<8x128xf32>
    %cst_246 = arith.constant 2.000000e+01 : f32
    %1300 = vector.broadcast %cst_246 : f32 to vector<8x128xf32>
    %1301 = arith.cmpf ogt, %1284, %1300 : vector<8x128xf32>
    %1302 = math.exp %1284 : vector<8x128xf32>
    %1303 = math.log1p %1302 : vector<8x128xf32>
    %1304 = arith.select %1301, %1284, %1303 : vector<8x128xi1>, vector<8x128xf32>
    %cst_247 = arith.constant 2.000000e+01 : f32
    %1305 = vector.broadcast %cst_247 : f32 to vector<8x128xf32>
    %1306 = arith.cmpf ogt, %1294, %1305 : vector<8x128xf32>
    %1307 = math.exp %1294 : vector<8x128xf32>
    %1308 = math.log1p %1307 : vector<8x128xf32>
    %1309 = arith.select %1306, %1294, %1308 : vector<8x128xi1>, vector<8x128xf32>
    %1310 = vector.broadcast %12 : f32 to vector<8x128xf32>
    %1311 = arith.mulf %1299, %1310 : vector<8x128xf32>
    %1312 = vector.broadcast %15 : f32 to vector<8x128xf32>
    %1313 = arith.mulf %1304, %1312 : vector<8x128xf32>
    %1314 = arith.addf %1311, %1313 : vector<8x128xf32>
    %1315 = vector.broadcast %18 : f32 to vector<8x128xf32>
    %1316 = arith.mulf %1309, %1315 : vector<8x128xf32>
    %1317 = arith.addf %1314, %1316 : vector<8x128xf32>
    %1318 = vector.broadcast %21 : f32 to vector<8x128xf32>
    %1319 = arith.addf %1317, %1318 : vector<8x128xf32>
    %1320 = vector.broadcast %13 : f32 to vector<8x128xf32>
    %1321 = arith.mulf %1299, %1320 : vector<8x128xf32>
    %1322 = vector.broadcast %16 : f32 to vector<8x128xf32>
    %1323 = arith.mulf %1304, %1322 : vector<8x128xf32>
    %1324 = arith.addf %1321, %1323 : vector<8x128xf32>
    %1325 = vector.broadcast %19 : f32 to vector<8x128xf32>
    %1326 = arith.mulf %1309, %1325 : vector<8x128xf32>
    %1327 = arith.addf %1324, %1326 : vector<8x128xf32>
    %1328 = vector.broadcast %22 : f32 to vector<8x128xf32>
    %1329 = arith.addf %1327, %1328 : vector<8x128xf32>
    %1330 = vector.broadcast %14 : f32 to vector<8x128xf32>
    %1331 = arith.mulf %1299, %1330 : vector<8x128xf32>
    %1332 = vector.broadcast %17 : f32 to vector<8x128xf32>
    %1333 = arith.mulf %1304, %1332 : vector<8x128xf32>
    %1334 = arith.addf %1331, %1333 : vector<8x128xf32>
    %1335 = vector.broadcast %20 : f32 to vector<8x128xf32>
    %1336 = arith.mulf %1309, %1335 : vector<8x128xf32>
    %1337 = arith.addf %1334, %1336 : vector<8x128xf32>
    %1338 = vector.broadcast %23 : f32 to vector<8x128xf32>
    %1339 = arith.addf %1337, %1338 : vector<8x128xf32>
    %cst_248 = arith.constant 2.000000e+01 : f32
    %1340 = vector.broadcast %cst_248 : f32 to vector<8x128xf32>
    %1341 = arith.cmpf ogt, %1319, %1340 : vector<8x128xf32>
    %1342 = math.exp %1319 : vector<8x128xf32>
    %1343 = math.log1p %1342 : vector<8x128xf32>
    %1344 = arith.select %1341, %1319, %1343 : vector<8x128xi1>, vector<8x128xf32>
    %cst_249 = arith.constant 2.000000e+01 : f32
    %1345 = vector.broadcast %cst_249 : f32 to vector<8x128xf32>
    %1346 = arith.cmpf ogt, %1329, %1345 : vector<8x128xf32>
    %1347 = math.exp %1329 : vector<8x128xf32>
    %1348 = math.log1p %1347 : vector<8x128xf32>
    %1349 = arith.select %1346, %1329, %1348 : vector<8x128xi1>, vector<8x128xf32>
    %cst_250 = arith.constant 2.000000e+01 : f32
    %1350 = vector.broadcast %cst_250 : f32 to vector<8x128xf32>
    %1351 = arith.cmpf ogt, %1339, %1350 : vector<8x128xf32>
    %1352 = math.exp %1339 : vector<8x128xf32>
    %1353 = math.log1p %1352 : vector<8x128xf32>
    %1354 = arith.select %1351, %1339, %1353 : vector<8x128xi1>, vector<8x128xf32>
    %1355 = vector.broadcast %24 : f32 to vector<8x128xf32>
    %1356 = arith.mulf %1344, %1355 : vector<8x128xf32>
    %1357 = vector.broadcast %25 : f32 to vector<8x128xf32>
    %1358 = arith.mulf %1349, %1357 : vector<8x128xf32>
    %1359 = arith.addf %1356, %1358 : vector<8x128xf32>
    %1360 = vector.broadcast %26 : f32 to vector<8x128xf32>
    %1361 = arith.mulf %1354, %1360 : vector<8x128xf32>
    %1362 = arith.addf %1359, %1361 : vector<8x128xf32>
    %1363 = vector.broadcast %27 : f32 to vector<8x128xf32>
    %1364 = arith.addf %1362, %1363 : vector<8x128xf32>
    %1365 = arith.addf %1258, %1364 : vector<8x128xf32>
    %c0_251 = arith.constant 0 : index
    %c2_252 = arith.constant 2 : index
    %c0_253 = arith.constant 0 : index
    %c0_254 = arith.constant 0 : index
    %c0_255 = arith.constant 0 : index
    %1366 = vector.load %arg2[%c0_251, %c2_252, %c0_253, %c0_254, %c0_255] : memref<3x3x6x8x128xf32, #tpu.memory_space<vmem>>, vector<1x1x1x8x128xf32>
    %1367 = vector.shape_cast %1366 : vector<1x1x1x8x128xf32> to vector<8x128xf32>
    %c1_256 = arith.constant 1 : index
    %c2_257 = arith.constant 2 : index
    %c0_258 = arith.constant 0 : index
    %c0_259 = arith.constant 0 : index
    %c0_260 = arith.constant 0 : index
    %1368 = vector.load %arg2[%c1_256, %c2_257, %c0_258, %c0_259, %c0_260] : memref<3x3x6x8x128xf32, #tpu.memory_space<vmem>>, vector<1x1x1x8x128xf32>
    %1369 = vector.shape_cast %1368 : vector<1x1x1x8x128xf32> to vector<8x128xf32>
    %c2_261 = arith.constant 2 : index
    %c2_262 = arith.constant 2 : index
    %c0_263 = arith.constant 0 : index
    %c0_264 = arith.constant 0 : index
    %c0_265 = arith.constant 0 : index
    %1370 = vector.load %arg2[%c2_261, %c2_262, %c0_263, %c0_264, %c0_265] : memref<3x3x6x8x128xf32, #tpu.memory_space<vmem>>, vector<1x1x1x8x128xf32>
    %1371 = vector.shape_cast %1370 : vector<1x1x1x8x128xf32> to vector<8x128xf32>
    %1372 = vector.broadcast %0 : f32 to vector<8x128xf32>
    %1373 = arith.mulf %1367, %1372 : vector<8x128xf32>
    %1374 = vector.broadcast %3 : f32 to vector<8x128xf32>
    %1375 = arith.mulf %1369, %1374 : vector<8x128xf32>
    %1376 = arith.addf %1373, %1375 : vector<8x128xf32>
    %1377 = vector.broadcast %6 : f32 to vector<8x128xf32>
    %1378 = arith.mulf %1371, %1377 : vector<8x128xf32>
    %1379 = arith.addf %1376, %1378 : vector<8x128xf32>
    %1380 = vector.broadcast %9 : f32 to vector<8x128xf32>
    %1381 = arith.addf %1379, %1380 : vector<8x128xf32>
    %1382 = vector.broadcast %1 : f32 to vector<8x128xf32>
    %1383 = arith.mulf %1367, %1382 : vector<8x128xf32>
    %1384 = vector.broadcast %4 : f32 to vector<8x128xf32>
    %1385 = arith.mulf %1369, %1384 : vector<8x128xf32>
    %1386 = arith.addf %1383, %1385 : vector<8x128xf32>
    %1387 = vector.broadcast %7 : f32 to vector<8x128xf32>
    %1388 = arith.mulf %1371, %1387 : vector<8x128xf32>
    %1389 = arith.addf %1386, %1388 : vector<8x128xf32>
    %1390 = vector.broadcast %10 : f32 to vector<8x128xf32>
    %1391 = arith.addf %1389, %1390 : vector<8x128xf32>
    %1392 = vector.broadcast %2 : f32 to vector<8x128xf32>
    %1393 = arith.mulf %1367, %1392 : vector<8x128xf32>
    %1394 = vector.broadcast %5 : f32 to vector<8x128xf32>
    %1395 = arith.mulf %1369, %1394 : vector<8x128xf32>
    %1396 = arith.addf %1393, %1395 : vector<8x128xf32>
    %1397 = vector.broadcast %8 : f32 to vector<8x128xf32>
    %1398 = arith.mulf %1371, %1397 : vector<8x128xf32>
    %1399 = arith.addf %1396, %1398 : vector<8x128xf32>
    %1400 = vector.broadcast %11 : f32 to vector<8x128xf32>
    %1401 = arith.addf %1399, %1400 : vector<8x128xf32>
    %cst_266 = arith.constant 2.000000e+01 : f32
    %1402 = vector.broadcast %cst_266 : f32 to vector<8x128xf32>
    %1403 = arith.cmpf ogt, %1381, %1402 : vector<8x128xf32>
    %1404 = math.exp %1381 : vector<8x128xf32>
    %1405 = math.log1p %1404 : vector<8x128xf32>
    %1406 = arith.select %1403, %1381, %1405 : vector<8x128xi1>, vector<8x128xf32>
    %cst_267 = arith.constant 2.000000e+01 : f32
    %1407 = vector.broadcast %cst_267 : f32 to vector<8x128xf32>
    %1408 = arith.cmpf ogt, %1391, %1407 : vector<8x128xf32>
    %1409 = math.exp %1391 : vector<8x128xf32>
    %1410 = math.log1p %1409 : vector<8x128xf32>
    %1411 = arith.select %1408, %1391, %1410 : vector<8x128xi1>, vector<8x128xf32>
    %cst_268 = arith.constant 2.000000e+01 : f32
    %1412 = vector.broadcast %cst_268 : f32 to vector<8x128xf32>
    %1413 = arith.cmpf ogt, %1401, %1412 : vector<8x128xf32>
    %1414 = math.exp %1401 : vector<8x128xf32>
    %1415 = math.log1p %1414 : vector<8x128xf32>
    %1416 = arith.select %1413, %1401, %1415 : vector<8x128xi1>, vector<8x128xf32>
    %1417 = vector.broadcast %12 : f32 to vector<8x128xf32>
    %1418 = arith.mulf %1406, %1417 : vector<8x128xf32>
    %1419 = vector.broadcast %15 : f32 to vector<8x128xf32>
    %1420 = arith.mulf %1411, %1419 : vector<8x128xf32>
    %1421 = arith.addf %1418, %1420 : vector<8x128xf32>
    %1422 = vector.broadcast %18 : f32 to vector<8x128xf32>
    %1423 = arith.mulf %1416, %1422 : vector<8x128xf32>
    %1424 = arith.addf %1421, %1423 : vector<8x128xf32>
    %1425 = vector.broadcast %21 : f32 to vector<8x128xf32>
    %1426 = arith.addf %1424, %1425 : vector<8x128xf32>
    %1427 = vector.broadcast %13 : f32 to vector<8x128xf32>
    %1428 = arith.mulf %1406, %1427 : vector<8x128xf32>
    %1429 = vector.broadcast %16 : f32 to vector<8x128xf32>
    %1430 = arith.mulf %1411, %1429 : vector<8x128xf32>
    %1431 = arith.addf %1428, %1430 : vector<8x128xf32>
    %1432 = vector.broadcast %19 : f32 to vector<8x128xf32>
    %1433 = arith.mulf %1416, %1432 : vector<8x128xf32>
    %1434 = arith.addf %1431, %1433 : vector<8x128xf32>
    %1435 = vector.broadcast %22 : f32 to vector<8x128xf32>
    %1436 = arith.addf %1434, %1435 : vector<8x128xf32>
    %1437 = vector.broadcast %14 : f32 to vector<8x128xf32>
    %1438 = arith.mulf %1406, %1437 : vector<8x128xf32>
    %1439 = vector.broadcast %17 : f32 to vector<8x128xf32>
    %1440 = arith.mulf %1411, %1439 : vector<8x128xf32>
    %1441 = arith.addf %1438, %1440 : vector<8x128xf32>
    %1442 = vector.broadcast %20 : f32 to vector<8x128xf32>
    %1443 = arith.mulf %1416, %1442 : vector<8x128xf32>
    %1444 = arith.addf %1441, %1443 : vector<8x128xf32>
    %1445 = vector.broadcast %23 : f32 to vector<8x128xf32>
    %1446 = arith.addf %1444, %1445 : vector<8x128xf32>
    %cst_269 = arith.constant 2.000000e+01 : f32
    %1447 = vector.broadcast %cst_269 : f32 to vector<8x128xf32>
    %1448 = arith.cmpf ogt, %1426, %1447 : vector<8x128xf32>
    %1449 = math.exp %1426 : vector<8x128xf32>
    %1450 = math.log1p %1449 : vector<8x128xf32>
    %1451 = arith.select %1448, %1426, %1450 : vector<8x128xi1>, vector<8x128xf32>
    %cst_270 = arith.constant 2.000000e+01 : f32
    %1452 = vector.broadcast %cst_270 : f32 to vector<8x128xf32>
    %1453 = arith.cmpf ogt, %1436, %1452 : vector<8x128xf32>
    %1454 = math.exp %1436 : vector<8x128xf32>
    %1455 = math.log1p %1454 : vector<8x128xf32>
    %1456 = arith.select %1453, %1436, %1455 : vector<8x128xi1>, vector<8x128xf32>
    %cst_271 = arith.constant 2.000000e+01 : f32
    %1457 = vector.broadcast %cst_271 : f32 to vector<8x128xf32>
    %1458 = arith.cmpf ogt, %1446, %1457 : vector<8x128xf32>
    %1459 = math.exp %1446 : vector<8x128xf32>
    %1460 = math.log1p %1459 : vector<8x128xf32>
    %1461 = arith.select %1458, %1446, %1460 : vector<8x128xi1>, vector<8x128xf32>
    %1462 = vector.broadcast %24 : f32 to vector<8x128xf32>
    %1463 = arith.mulf %1451, %1462 : vector<8x128xf32>
    %1464 = vector.broadcast %25 : f32 to vector<8x128xf32>
    %1465 = arith.mulf %1456, %1464 : vector<8x128xf32>
    %1466 = arith.addf %1463, %1465 : vector<8x128xf32>
    %1467 = vector.broadcast %26 : f32 to vector<8x128xf32>
    %1468 = arith.mulf %1461, %1467 : vector<8x128xf32>
    %1469 = arith.addf %1466, %1468 : vector<8x128xf32>
    %1470 = vector.broadcast %27 : f32 to vector<8x128xf32>
    %1471 = arith.addf %1469, %1470 : vector<8x128xf32>
    %c0_272 = arith.constant 0 : index
    %c2_273 = arith.constant 2 : index
    %c1_274 = arith.constant 1 : index
    %c0_275 = arith.constant 0 : index
    %c0_276 = arith.constant 0 : index
    %1472 = vector.load %arg2[%c0_272, %c2_273, %c1_274, %c0_275, %c0_276] : memref<3x3x6x8x128xf32, #tpu.memory_space<vmem>>, vector<1x1x1x8x128xf32>
    %1473 = vector.shape_cast %1472 : vector<1x1x1x8x128xf32> to vector<8x128xf32>
    %c1_277 = arith.constant 1 : index
    %c2_278 = arith.constant 2 : index
    %c1_279 = arith.constant 1 : index
    %c0_280 = arith.constant 0 : index
    %c0_281 = arith.constant 0 : index
    %1474 = vector.load %arg2[%c1_277, %c2_278, %c1_279, %c0_280, %c0_281] : memref<3x3x6x8x128xf32, #tpu.memory_space<vmem>>, vector<1x1x1x8x128xf32>
    %1475 = vector.shape_cast %1474 : vector<1x1x1x8x128xf32> to vector<8x128xf32>
    %c2_282 = arith.constant 2 : index
    %c2_283 = arith.constant 2 : index
    %c1_284 = arith.constant 1 : index
    %c0_285 = arith.constant 0 : index
    %c0_286 = arith.constant 0 : index
    %1476 = vector.load %arg2[%c2_282, %c2_283, %c1_284, %c0_285, %c0_286] : memref<3x3x6x8x128xf32, #tpu.memory_space<vmem>>, vector<1x1x1x8x128xf32>
    %1477 = vector.shape_cast %1476 : vector<1x1x1x8x128xf32> to vector<8x128xf32>
    %1478 = vector.broadcast %0 : f32 to vector<8x128xf32>
    %1479 = arith.mulf %1473, %1478 : vector<8x128xf32>
    %1480 = vector.broadcast %3 : f32 to vector<8x128xf32>
    %1481 = arith.mulf %1475, %1480 : vector<8x128xf32>
    %1482 = arith.addf %1479, %1481 : vector<8x128xf32>
    %1483 = vector.broadcast %6 : f32 to vector<8x128xf32>
    %1484 = arith.mulf %1477, %1483 : vector<8x128xf32>
    %1485 = arith.addf %1482, %1484 : vector<8x128xf32>
    %1486 = vector.broadcast %9 : f32 to vector<8x128xf32>
    %1487 = arith.addf %1485, %1486 : vector<8x128xf32>
    %1488 = vector.broadcast %1 : f32 to vector<8x128xf32>
    %1489 = arith.mulf %1473, %1488 : vector<8x128xf32>
    %1490 = vector.broadcast %4 : f32 to vector<8x128xf32>
    %1491 = arith.mulf %1475, %1490 : vector<8x128xf32>
    %1492 = arith.addf %1489, %1491 : vector<8x128xf32>
    %1493 = vector.broadcast %7 : f32 to vector<8x128xf32>
    %1494 = arith.mulf %1477, %1493 : vector<8x128xf32>
    %1495 = arith.addf %1492, %1494 : vector<8x128xf32>
    %1496 = vector.broadcast %10 : f32 to vector<8x128xf32>
    %1497 = arith.addf %1495, %1496 : vector<8x128xf32>
    %1498 = vector.broadcast %2 : f32 to vector<8x128xf32>
    %1499 = arith.mulf %1473, %1498 : vector<8x128xf32>
    %1500 = vector.broadcast %5 : f32 to vector<8x128xf32>
    %1501 = arith.mulf %1475, %1500 : vector<8x128xf32>
    %1502 = arith.addf %1499, %1501 : vector<8x128xf32>
    %1503 = vector.broadcast %8 : f32 to vector<8x128xf32>
    %1504 = arith.mulf %1477, %1503 : vector<8x128xf32>
    %1505 = arith.addf %1502, %1504 : vector<8x128xf32>
    %1506 = vector.broadcast %11 : f32 to vector<8x128xf32>
    %1507 = arith.addf %1505, %1506 : vector<8x128xf32>
    %cst_287 = arith.constant 2.000000e+01 : f32
    %1508 = vector.broadcast %cst_287 : f32 to vector<8x128xf32>
    %1509 = arith.cmpf ogt, %1487, %1508 : vector<8x128xf32>
    %1510 = math.exp %1487 : vector<8x128xf32>
    %1511 = math.log1p %1510 : vector<8x128xf32>
    %1512 = arith.select %1509, %1487, %1511 : vector<8x128xi1>, vector<8x128xf32>
    %cst_288 = arith.constant 2.000000e+01 : f32
    %1513 = vector.broadcast %cst_288 : f32 to vector<8x128xf32>
    %1514 = arith.cmpf ogt, %1497, %1513 : vector<8x128xf32>
    %1515 = math.exp %1497 : vector<8x128xf32>
    %1516 = math.log1p %1515 : vector<8x128xf32>
    %1517 = arith.select %1514, %1497, %1516 : vector<8x128xi1>, vector<8x128xf32>
    %cst_289 = arith.constant 2.000000e+01 : f32
    %1518 = vector.broadcast %cst_289 : f32 to vector<8x128xf32>
    %1519 = arith.cmpf ogt, %1507, %1518 : vector<8x128xf32>
    %1520 = math.exp %1507 : vector<8x128xf32>
    %1521 = math.log1p %1520 : vector<8x128xf32>
    %1522 = arith.select %1519, %1507, %1521 : vector<8x128xi1>, vector<8x128xf32>
    %1523 = vector.broadcast %12 : f32 to vector<8x128xf32>
    %1524 = arith.mulf %1512, %1523 : vector<8x128xf32>
    %1525 = vector.broadcast %15 : f32 to vector<8x128xf32>
    %1526 = arith.mulf %1517, %1525 : vector<8x128xf32>
    %1527 = arith.addf %1524, %1526 : vector<8x128xf32>
    %1528 = vector.broadcast %18 : f32 to vector<8x128xf32>
    %1529 = arith.mulf %1522, %1528 : vector<8x128xf32>
    %1530 = arith.addf %1527, %1529 : vector<8x128xf32>
    %1531 = vector.broadcast %21 : f32 to vector<8x128xf32>
    %1532 = arith.addf %1530, %1531 : vector<8x128xf32>
    %1533 = vector.broadcast %13 : f32 to vector<8x128xf32>
    %1534 = arith.mulf %1512, %1533 : vector<8x128xf32>
    %1535 = vector.broadcast %16 : f32 to vector<8x128xf32>
    %1536 = arith.mulf %1517, %1535 : vector<8x128xf32>
    %1537 = arith.addf %1534, %1536 : vector<8x128xf32>
    %1538 = vector.broadcast %19 : f32 to vector<8x128xf32>
    %1539 = arith.mulf %1522, %1538 : vector<8x128xf32>
    %1540 = arith.addf %1537, %1539 : vector<8x128xf32>
    %1541 = vector.broadcast %22 : f32 to vector<8x128xf32>
    %1542 = arith.addf %1540, %1541 : vector<8x128xf32>
    %1543 = vector.broadcast %14 : f32 to vector<8x128xf32>
    %1544 = arith.mulf %1512, %1543 : vector<8x128xf32>
    %1545 = vector.broadcast %17 : f32 to vector<8x128xf32>
    %1546 = arith.mulf %1517, %1545 : vector<8x128xf32>
    %1547 = arith.addf %1544, %1546 : vector<8x128xf32>
    %1548 = vector.broadcast %20 : f32 to vector<8x128xf32>
    %1549 = arith.mulf %1522, %1548 : vector<8x128xf32>
    %1550 = arith.addf %1547, %1549 : vector<8x128xf32>
    %1551 = vector.broadcast %23 : f32 to vector<8x128xf32>
    %1552 = arith.addf %1550, %1551 : vector<8x128xf32>
    %cst_290 = arith.constant 2.000000e+01 : f32
    %1553 = vector.broadcast %cst_290 : f32 to vector<8x128xf32>
    %1554 = arith.cmpf ogt, %1532, %1553 : vector<8x128xf32>
    %1555 = math.exp %1532 : vector<8x128xf32>
    %1556 = math.log1p %1555 : vector<8x128xf32>
    %1557 = arith.select %1554, %1532, %1556 : vector<8x128xi1>, vector<8x128xf32>
    %cst_291 = arith.constant 2.000000e+01 : f32
    %1558 = vector.broadcast %cst_291 : f32 to vector<8x128xf32>
    %1559 = arith.cmpf ogt, %1542, %1558 : vector<8x128xf32>
    %1560 = math.exp %1542 : vector<8x128xf32>
    %1561 = math.log1p %1560 : vector<8x128xf32>
    %1562 = arith.select %1559, %1542, %1561 : vector<8x128xi1>, vector<8x128xf32>
    %cst_292 = arith.constant 2.000000e+01 : f32
    %1563 = vector.broadcast %cst_292 : f32 to vector<8x128xf32>
    %1564 = arith.cmpf ogt, %1552, %1563 : vector<8x128xf32>
    %1565 = math.exp %1552 : vector<8x128xf32>
    %1566 = math.log1p %1565 : vector<8x128xf32>
    %1567 = arith.select %1564, %1552, %1566 : vector<8x128xi1>, vector<8x128xf32>
    %1568 = vector.broadcast %24 : f32 to vector<8x128xf32>
    %1569 = arith.mulf %1557, %1568 : vector<8x128xf32>
    %1570 = vector.broadcast %25 : f32 to vector<8x128xf32>
    %1571 = arith.mulf %1562, %1570 : vector<8x128xf32>
    %1572 = arith.addf %1569, %1571 : vector<8x128xf32>
    %1573 = vector.broadcast %26 : f32 to vector<8x128xf32>
    %1574 = arith.mulf %1567, %1573 : vector<8x128xf32>
    %1575 = arith.addf %1572, %1574 : vector<8x128xf32>
    %1576 = vector.broadcast %27 : f32 to vector<8x128xf32>
    %1577 = arith.addf %1575, %1576 : vector<8x128xf32>
    %1578 = arith.addf %1471, %1577 : vector<8x128xf32>
    %c0_293 = arith.constant 0 : index
    %c2_294 = arith.constant 2 : index
    %c2_295 = arith.constant 2 : index
    %c0_296 = arith.constant 0 : index
    %c0_297 = arith.constant 0 : index
    %1579 = vector.load %arg2[%c0_293, %c2_294, %c2_295, %c0_296, %c0_297] : memref<3x3x6x8x128xf32, #tpu.memory_space<vmem>>, vector<1x1x1x8x128xf32>
    %1580 = vector.shape_cast %1579 : vector<1x1x1x8x128xf32> to vector<8x128xf32>
    %c1_298 = arith.constant 1 : index
    %c2_299 = arith.constant 2 : index
    %c2_300 = arith.constant 2 : index
    %c0_301 = arith.constant 0 : index
    %c0_302 = arith.constant 0 : index
    %1581 = vector.load %arg2[%c1_298, %c2_299, %c2_300, %c0_301, %c0_302] : memref<3x3x6x8x128xf32, #tpu.memory_space<vmem>>, vector<1x1x1x8x128xf32>
    %1582 = vector.shape_cast %1581 : vector<1x1x1x8x128xf32> to vector<8x128xf32>
    %c2_303 = arith.constant 2 : index
    %c2_304 = arith.constant 2 : index
    %c2_305 = arith.constant 2 : index
    %c0_306 = arith.constant 0 : index
    %c0_307 = arith.constant 0 : index
    %1583 = vector.load %arg2[%c2_303, %c2_304, %c2_305, %c0_306, %c0_307] : memref<3x3x6x8x128xf32, #tpu.memory_space<vmem>>, vector<1x1x1x8x128xf32>
    %1584 = vector.shape_cast %1583 : vector<1x1x1x8x128xf32> to vector<8x128xf32>
    %1585 = vector.broadcast %0 : f32 to vector<8x128xf32>
    %1586 = arith.mulf %1580, %1585 : vector<8x128xf32>
    %1587 = vector.broadcast %3 : f32 to vector<8x128xf32>
    %1588 = arith.mulf %1582, %1587 : vector<8x128xf32>
    %1589 = arith.addf %1586, %1588 : vector<8x128xf32>
    %1590 = vector.broadcast %6 : f32 to vector<8x128xf32>
    %1591 = arith.mulf %1584, %1590 : vector<8x128xf32>
    %1592 = arith.addf %1589, %1591 : vector<8x128xf32>
    %1593 = vector.broadcast %9 : f32 to vector<8x128xf32>
    %1594 = arith.addf %1592, %1593 : vector<8x128xf32>
    %1595 = vector.broadcast %1 : f32 to vector<8x128xf32>
    %1596 = arith.mulf %1580, %1595 : vector<8x128xf32>
    %1597 = vector.broadcast %4 : f32 to vector<8x128xf32>
    %1598 = arith.mulf %1582, %1597 : vector<8x128xf32>
    %1599 = arith.addf %1596, %1598 : vector<8x128xf32>
    %1600 = vector.broadcast %7 : f32 to vector<8x128xf32>
    %1601 = arith.mulf %1584, %1600 : vector<8x128xf32>
    %1602 = arith.addf %1599, %1601 : vector<8x128xf32>
    %1603 = vector.broadcast %10 : f32 to vector<8x128xf32>
    %1604 = arith.addf %1602, %1603 : vector<8x128xf32>
    %1605 = vector.broadcast %2 : f32 to vector<8x128xf32>
    %1606 = arith.mulf %1580, %1605 : vector<8x128xf32>
    %1607 = vector.broadcast %5 : f32 to vector<8x128xf32>
    %1608 = arith.mulf %1582, %1607 : vector<8x128xf32>
    %1609 = arith.addf %1606, %1608 : vector<8x128xf32>
    %1610 = vector.broadcast %8 : f32 to vector<8x128xf32>
    %1611 = arith.mulf %1584, %1610 : vector<8x128xf32>
    %1612 = arith.addf %1609, %1611 : vector<8x128xf32>
    %1613 = vector.broadcast %11 : f32 to vector<8x128xf32>
    %1614 = arith.addf %1612, %1613 : vector<8x128xf32>
    %cst_308 = arith.constant 2.000000e+01 : f32
    %1615 = vector.broadcast %cst_308 : f32 to vector<8x128xf32>
    %1616 = arith.cmpf ogt, %1594, %1615 : vector<8x128xf32>
    %1617 = math.exp %1594 : vector<8x128xf32>
    %1618 = math.log1p %1617 : vector<8x128xf32>
    %1619 = arith.select %1616, %1594, %1618 : vector<8x128xi1>, vector<8x128xf32>
    %cst_309 = arith.constant 2.000000e+01 : f32
    %1620 = vector.broadcast %cst_309 : f32 to vector<8x128xf32>
    %1621 = arith.cmpf ogt, %1604, %1620 : vector<8x128xf32>
    %1622 = math.exp %1604 : vector<8x128xf32>
    %1623 = math.log1p %1622 : vector<8x128xf32>
    %1624 = arith.select %1621, %1604, %1623 : vector<8x128xi1>, vector<8x128xf32>
    %cst_310 = arith.constant 2.000000e+01 : f32
    %1625 = vector.broadcast %cst_310 : f32 to vector<8x128xf32>
    %1626 = arith.cmpf ogt, %1614, %1625 : vector<8x128xf32>
    %1627 = math.exp %1614 : vector<8x128xf32>
    %1628 = math.log1p %1627 : vector<8x128xf32>
    %1629 = arith.select %1626, %1614, %1628 : vector<8x128xi1>, vector<8x128xf32>
    %1630 = vector.broadcast %12 : f32 to vector<8x128xf32>
    %1631 = arith.mulf %1619, %1630 : vector<8x128xf32>
    %1632 = vector.broadcast %15 : f32 to vector<8x128xf32>
    %1633 = arith.mulf %1624, %1632 : vector<8x128xf32>
    %1634 = arith.addf %1631, %1633 : vector<8x128xf32>
    %1635 = vector.broadcast %18 : f32 to vector<8x128xf32>
    %1636 = arith.mulf %1629, %1635 : vector<8x128xf32>
    %1637 = arith.addf %1634, %1636 : vector<8x128xf32>
    %1638 = vector.broadcast %21 : f32 to vector<8x128xf32>
    %1639 = arith.addf %1637, %1638 : vector<8x128xf32>
    %1640 = vector.broadcast %13 : f32 to vector<8x128xf32>
    %1641 = arith.mulf %1619, %1640 : vector<8x128xf32>
    %1642 = vector.broadcast %16 : f32 to vector<8x128xf32>
    %1643 = arith.mulf %1624, %1642 : vector<8x128xf32>
    %1644 = arith.addf %1641, %1643 : vector<8x128xf32>
    %1645 = vector.broadcast %19 : f32 to vector<8x128xf32>
    %1646 = arith.mulf %1629, %1645 : vector<8x128xf32>
    %1647 = arith.addf %1644, %1646 : vector<8x128xf32>
    %1648 = vector.broadcast %22 : f32 to vector<8x128xf32>
    %1649 = arith.addf %1647, %1648 : vector<8x128xf32>
    %1650 = vector.broadcast %14 : f32 to vector<8x128xf32>
    %1651 = arith.mulf %1619, %1650 : vector<8x128xf32>
    %1652 = vector.broadcast %17 : f32 to vector<8x128xf32>
    %1653 = arith.mulf %1624, %1652 : vector<8x128xf32>
    %1654 = arith.addf %1651, %1653 : vector<8x128xf32>
    %1655 = vector.broadcast %20 : f32 to vector<8x128xf32>
    %1656 = arith.mulf %1629, %1655 : vector<8x128xf32>
    %1657 = arith.addf %1654, %1656 : vector<8x128xf32>
    %1658 = vector.broadcast %23 : f32 to vector<8x128xf32>
    %1659 = arith.addf %1657, %1658 : vector<8x128xf32>
    %cst_311 = arith.constant 2.000000e+01 : f32
    %1660 = vector.broadcast %cst_311 : f32 to vector<8x128xf32>
    %1661 = arith.cmpf ogt, %1639, %1660 : vector<8x128xf32>
    %1662 = math.exp %1639 : vector<8x128xf32>
    %1663 = math.log1p %1662 : vector<8x128xf32>
    %1664 = arith.select %1661, %1639, %1663 : vector<8x128xi1>, vector<8x128xf32>
    %cst_312 = arith.constant 2.000000e+01 : f32
    %1665 = vector.broadcast %cst_312 : f32 to vector<8x128xf32>
    %1666 = arith.cmpf ogt, %1649, %1665 : vector<8x128xf32>
    %1667 = math.exp %1649 : vector<8x128xf32>
    %1668 = math.log1p %1667 : vector<8x128xf32>
    %1669 = arith.select %1666, %1649, %1668 : vector<8x128xi1>, vector<8x128xf32>
    %cst_313 = arith.constant 2.000000e+01 : f32
    %1670 = vector.broadcast %cst_313 : f32 to vector<8x128xf32>
    %1671 = arith.cmpf ogt, %1659, %1670 : vector<8x128xf32>
    %1672 = math.exp %1659 : vector<8x128xf32>
    %1673 = math.log1p %1672 : vector<8x128xf32>
    %1674 = arith.select %1671, %1659, %1673 : vector<8x128xi1>, vector<8x128xf32>
    %1675 = vector.broadcast %24 : f32 to vector<8x128xf32>
    %1676 = arith.mulf %1664, %1675 : vector<8x128xf32>
    %1677 = vector.broadcast %25 : f32 to vector<8x128xf32>
    %1678 = arith.mulf %1669, %1677 : vector<8x128xf32>
    %1679 = arith.addf %1676, %1678 : vector<8x128xf32>
    %1680 = vector.broadcast %26 : f32 to vector<8x128xf32>
    %1681 = arith.mulf %1674, %1680 : vector<8x128xf32>
    %1682 = arith.addf %1679, %1681 : vector<8x128xf32>
    %1683 = vector.broadcast %27 : f32 to vector<8x128xf32>
    %1684 = arith.addf %1682, %1683 : vector<8x128xf32>
    %1685 = arith.addf %1578, %1684 : vector<8x128xf32>
    %c0_314 = arith.constant 0 : index
    %c2_315 = arith.constant 2 : index
    %c3_316 = arith.constant 3 : index
    %c0_317 = arith.constant 0 : index
    %c0_318 = arith.constant 0 : index
    %1686 = vector.load %arg2[%c0_314, %c2_315, %c3_316, %c0_317, %c0_318] : memref<3x3x6x8x128xf32, #tpu.memory_space<vmem>>, vector<1x1x1x8x128xf32>
    %1687 = vector.shape_cast %1686 : vector<1x1x1x8x128xf32> to vector<8x128xf32>
    %c1_319 = arith.constant 1 : index
    %c2_320 = arith.constant 2 : index
    %c3_321 = arith.constant 3 : index
    %c0_322 = arith.constant 0 : index
    %c0_323 = arith.constant 0 : index
    %1688 = vector.load %arg2[%c1_319, %c2_320, %c3_321, %c0_322, %c0_323] : memref<3x3x6x8x128xf32, #tpu.memory_space<vmem>>, vector<1x1x1x8x128xf32>
    %1689 = vector.shape_cast %1688 : vector<1x1x1x8x128xf32> to vector<8x128xf32>
    %c2_324 = arith.constant 2 : index
    %c2_325 = arith.constant 2 : index
    %c3_326 = arith.constant 3 : index
    %c0_327 = arith.constant 0 : index
    %c0_328 = arith.constant 0 : index
    %1690 = vector.load %arg2[%c2_324, %c2_325, %c3_326, %c0_327, %c0_328] : memref<3x3x6x8x128xf32, #tpu.memory_space<vmem>>, vector<1x1x1x8x128xf32>
    %1691 = vector.shape_cast %1690 : vector<1x1x1x8x128xf32> to vector<8x128xf32>
    %1692 = vector.broadcast %0 : f32 to vector<8x128xf32>
    %1693 = arith.mulf %1687, %1692 : vector<8x128xf32>
    %1694 = vector.broadcast %3 : f32 to vector<8x128xf32>
    %1695 = arith.mulf %1689, %1694 : vector<8x128xf32>
    %1696 = arith.addf %1693, %1695 : vector<8x128xf32>
    %1697 = vector.broadcast %6 : f32 to vector<8x128xf32>
    %1698 = arith.mulf %1691, %1697 : vector<8x128xf32>
    %1699 = arith.addf %1696, %1698 : vector<8x128xf32>
    %1700 = vector.broadcast %9 : f32 to vector<8x128xf32>
    %1701 = arith.addf %1699, %1700 : vector<8x128xf32>
    %1702 = vector.broadcast %1 : f32 to vector<8x128xf32>
    %1703 = arith.mulf %1687, %1702 : vector<8x128xf32>
    %1704 = vector.broadcast %4 : f32 to vector<8x128xf32>
    %1705 = arith.mulf %1689, %1704 : vector<8x128xf32>
    %1706 = arith.addf %1703, %1705 : vector<8x128xf32>
    %1707 = vector.broadcast %7 : f32 to vector<8x128xf32>
    %1708 = arith.mulf %1691, %1707 : vector<8x128xf32>
    %1709 = arith.addf %1706, %1708 : vector<8x128xf32>
    %1710 = vector.broadcast %10 : f32 to vector<8x128xf32>
    %1711 = arith.addf %1709, %1710 : vector<8x128xf32>
    %1712 = vector.broadcast %2 : f32 to vector<8x128xf32>
    %1713 = arith.mulf %1687, %1712 : vector<8x128xf32>
    %1714 = vector.broadcast %5 : f32 to vector<8x128xf32>
    %1715 = arith.mulf %1689, %1714 : vector<8x128xf32>
    %1716 = arith.addf %1713, %1715 : vector<8x128xf32>
    %1717 = vector.broadcast %8 : f32 to vector<8x128xf32>
    %1718 = arith.mulf %1691, %1717 : vector<8x128xf32>
    %1719 = arith.addf %1716, %1718 : vector<8x128xf32>
    %1720 = vector.broadcast %11 : f32 to vector<8x128xf32>
    %1721 = arith.addf %1719, %1720 : vector<8x128xf32>
    %cst_329 = arith.constant 2.000000e+01 : f32
    %1722 = vector.broadcast %cst_329 : f32 to vector<8x128xf32>
    %1723 = arith.cmpf ogt, %1701, %1722 : vector<8x128xf32>
    %1724 = math.exp %1701 : vector<8x128xf32>
    %1725 = math.log1p %1724 : vector<8x128xf32>
    %1726 = arith.select %1723, %1701, %1725 : vector<8x128xi1>, vector<8x128xf32>
    %cst_330 = arith.constant 2.000000e+01 : f32
    %1727 = vector.broadcast %cst_330 : f32 to vector<8x128xf32>
    %1728 = arith.cmpf ogt, %1711, %1727 : vector<8x128xf32>
    %1729 = math.exp %1711 : vector<8x128xf32>
    %1730 = math.log1p %1729 : vector<8x128xf32>
    %1731 = arith.select %1728, %1711, %1730 : vector<8x128xi1>, vector<8x128xf32>
    %cst_331 = arith.constant 2.000000e+01 : f32
    %1732 = vector.broadcast %cst_331 : f32 to vector<8x128xf32>
    %1733 = arith.cmpf ogt, %1721, %1732 : vector<8x128xf32>
    %1734 = math.exp %1721 : vector<8x128xf32>
    %1735 = math.log1p %1734 : vector<8x128xf32>
    %1736 = arith.select %1733, %1721, %1735 : vector<8x128xi1>, vector<8x128xf32>
    %1737 = vector.broadcast %12 : f32 to vector<8x128xf32>
    %1738 = arith.mulf %1726, %1737 : vector<8x128xf32>
    %1739 = vector.broadcast %15 : f32 to vector<8x128xf32>
    %1740 = arith.mulf %1731, %1739 : vector<8x128xf32>
    %1741 = arith.addf %1738, %1740 : vector<8x128xf32>
    %1742 = vector.broadcast %18 : f32 to vector<8x128xf32>
    %1743 = arith.mulf %1736, %1742 : vector<8x128xf32>
    %1744 = arith.addf %1741, %1743 : vector<8x128xf32>
    %1745 = vector.broadcast %21 : f32 to vector<8x128xf32>
    %1746 = arith.addf %1744, %1745 : vector<8x128xf32>
    %1747 = vector.broadcast %13 : f32 to vector<8x128xf32>
    %1748 = arith.mulf %1726, %1747 : vector<8x128xf32>
    %1749 = vector.broadcast %16 : f32 to vector<8x128xf32>
    %1750 = arith.mulf %1731, %1749 : vector<8x128xf32>
    %1751 = arith.addf %1748, %1750 : vector<8x128xf32>
    %1752 = vector.broadcast %19 : f32 to vector<8x128xf32>
    %1753 = arith.mulf %1736, %1752 : vector<8x128xf32>
    %1754 = arith.addf %1751, %1753 : vector<8x128xf32>
    %1755 = vector.broadcast %22 : f32 to vector<8x128xf32>
    %1756 = arith.addf %1754, %1755 : vector<8x128xf32>
    %1757 = vector.broadcast %14 : f32 to vector<8x128xf32>
    %1758 = arith.mulf %1726, %1757 : vector<8x128xf32>
    %1759 = vector.broadcast %17 : f32 to vector<8x128xf32>
    %1760 = arith.mulf %1731, %1759 : vector<8x128xf32>
    %1761 = arith.addf %1758, %1760 : vector<8x128xf32>
    %1762 = vector.broadcast %20 : f32 to vector<8x128xf32>
    %1763 = arith.mulf %1736, %1762 : vector<8x128xf32>
    %1764 = arith.addf %1761, %1763 : vector<8x128xf32>
    %1765 = vector.broadcast %23 : f32 to vector<8x128xf32>
    %1766 = arith.addf %1764, %1765 : vector<8x128xf32>
    %cst_332 = arith.constant 2.000000e+01 : f32
    %1767 = vector.broadcast %cst_332 : f32 to vector<8x128xf32>
    %1768 = arith.cmpf ogt, %1746, %1767 : vector<8x128xf32>
    %1769 = math.exp %1746 : vector<8x128xf32>
    %1770 = math.log1p %1769 : vector<8x128xf32>
    %1771 = arith.select %1768, %1746, %1770 : vector<8x128xi1>, vector<8x128xf32>
    %cst_333 = arith.constant 2.000000e+01 : f32
    %1772 = vector.broadcast %cst_333 : f32 to vector<8x128xf32>
    %1773 = arith.cmpf ogt, %1756, %1772 : vector<8x128xf32>
    %1774 = math.exp %1756 : vector<8x128xf32>
    %1775 = math.log1p %1774 : vector<8x128xf32>
    %1776 = arith.select %1773, %1756, %1775 : vector<8x128xi1>, vector<8x128xf32>
    %cst_334 = arith.constant 2.000000e+01 : f32
    %1777 = vector.broadcast %cst_334 : f32 to vector<8x128xf32>
    %1778 = arith.cmpf ogt, %1766, %1777 : vector<8x128xf32>
    %1779 = math.exp %1766 : vector<8x128xf32>
    %1780 = math.log1p %1779 : vector<8x128xf32>
    %1781 = arith.select %1778, %1766, %1780 : vector<8x128xi1>, vector<8x128xf32>
    %1782 = vector.broadcast %24 : f32 to vector<8x128xf32>
    %1783 = arith.mulf %1771, %1782 : vector<8x128xf32>
    %1784 = vector.broadcast %25 : f32 to vector<8x128xf32>
    %1785 = arith.mulf %1776, %1784 : vector<8x128xf32>
    %1786 = arith.addf %1783, %1785 : vector<8x128xf32>
    %1787 = vector.broadcast %26 : f32 to vector<8x128xf32>
    %1788 = arith.mulf %1781, %1787 : vector<8x128xf32>
    %1789 = arith.addf %1786, %1788 : vector<8x128xf32>
    %1790 = vector.broadcast %27 : f32 to vector<8x128xf32>
    %1791 = arith.addf %1789, %1790 : vector<8x128xf32>
    %1792 = arith.addf %1685, %1791 : vector<8x128xf32>
    %c0_335 = arith.constant 0 : index
    %c2_336 = arith.constant 2 : index
    %c4_337 = arith.constant 4 : index
    %c0_338 = arith.constant 0 : index
    %c0_339 = arith.constant 0 : index
    %1793 = vector.load %arg2[%c0_335, %c2_336, %c4_337, %c0_338, %c0_339] : memref<3x3x6x8x128xf32, #tpu.memory_space<vmem>>, vector<1x1x1x8x128xf32>
    %1794 = vector.shape_cast %1793 : vector<1x1x1x8x128xf32> to vector<8x128xf32>
    %c1_340 = arith.constant 1 : index
    %c2_341 = arith.constant 2 : index
    %c4_342 = arith.constant 4 : index
    %c0_343 = arith.constant 0 : index
    %c0_344 = arith.constant 0 : index
    %1795 = vector.load %arg2[%c1_340, %c2_341, %c4_342, %c0_343, %c0_344] : memref<3x3x6x8x128xf32, #tpu.memory_space<vmem>>, vector<1x1x1x8x128xf32>
    %1796 = vector.shape_cast %1795 : vector<1x1x1x8x128xf32> to vector<8x128xf32>
    %c2_345 = arith.constant 2 : index
    %c2_346 = arith.constant 2 : index
    %c4_347 = arith.constant 4 : index
    %c0_348 = arith.constant 0 : index
    %c0_349 = arith.constant 0 : index
    %1797 = vector.load %arg2[%c2_345, %c2_346, %c4_347, %c0_348, %c0_349] : memref<3x3x6x8x128xf32, #tpu.memory_space<vmem>>, vector<1x1x1x8x128xf32>
    %1798 = vector.shape_cast %1797 : vector<1x1x1x8x128xf32> to vector<8x128xf32>
    %1799 = vector.broadcast %0 : f32 to vector<8x128xf32>
    %1800 = arith.mulf %1794, %1799 : vector<8x128xf32>
    %1801 = vector.broadcast %3 : f32 to vector<8x128xf32>
    %1802 = arith.mulf %1796, %1801 : vector<8x128xf32>
    %1803 = arith.addf %1800, %1802 : vector<8x128xf32>
    %1804 = vector.broadcast %6 : f32 to vector<8x128xf32>
    %1805 = arith.mulf %1798, %1804 : vector<8x128xf32>
    %1806 = arith.addf %1803, %1805 : vector<8x128xf32>
    %1807 = vector.broadcast %9 : f32 to vector<8x128xf32>
    %1808 = arith.addf %1806, %1807 : vector<8x128xf32>
    %1809 = vector.broadcast %1 : f32 to vector<8x128xf32>
    %1810 = arith.mulf %1794, %1809 : vector<8x128xf32>
    %1811 = vector.broadcast %4 : f32 to vector<8x128xf32>
    %1812 = arith.mulf %1796, %1811 : vector<8x128xf32>
    %1813 = arith.addf %1810, %1812 : vector<8x128xf32>
    %1814 = vector.broadcast %7 : f32 to vector<8x128xf32>
    %1815 = arith.mulf %1798, %1814 : vector<8x128xf32>
    %1816 = arith.addf %1813, %1815 : vector<8x128xf32>
    %1817 = vector.broadcast %10 : f32 to vector<8x128xf32>
    %1818 = arith.addf %1816, %1817 : vector<8x128xf32>
    %1819 = vector.broadcast %2 : f32 to vector<8x128xf32>
    %1820 = arith.mulf %1794, %1819 : vector<8x128xf32>
    %1821 = vector.broadcast %5 : f32 to vector<8x128xf32>
    %1822 = arith.mulf %1796, %1821 : vector<8x128xf32>
    %1823 = arith.addf %1820, %1822 : vector<8x128xf32>
    %1824 = vector.broadcast %8 : f32 to vector<8x128xf32>
    %1825 = arith.mulf %1798, %1824 : vector<8x128xf32>
    %1826 = arith.addf %1823, %1825 : vector<8x128xf32>
    %1827 = vector.broadcast %11 : f32 to vector<8x128xf32>
    %1828 = arith.addf %1826, %1827 : vector<8x128xf32>
    %cst_350 = arith.constant 2.000000e+01 : f32
    %1829 = vector.broadcast %cst_350 : f32 to vector<8x128xf32>
    %1830 = arith.cmpf ogt, %1808, %1829 : vector<8x128xf32>
    %1831 = math.exp %1808 : vector<8x128xf32>
    %1832 = math.log1p %1831 : vector<8x128xf32>
    %1833 = arith.select %1830, %1808, %1832 : vector<8x128xi1>, vector<8x128xf32>
    %cst_351 = arith.constant 2.000000e+01 : f32
    %1834 = vector.broadcast %cst_351 : f32 to vector<8x128xf32>
    %1835 = arith.cmpf ogt, %1818, %1834 : vector<8x128xf32>
    %1836 = math.exp %1818 : vector<8x128xf32>
    %1837 = math.log1p %1836 : vector<8x128xf32>
    %1838 = arith.select %1835, %1818, %1837 : vector<8x128xi1>, vector<8x128xf32>
    %cst_352 = arith.constant 2.000000e+01 : f32
    %1839 = vector.broadcast %cst_352 : f32 to vector<8x128xf32>
    %1840 = arith.cmpf ogt, %1828, %1839 : vector<8x128xf32>
    %1841 = math.exp %1828 : vector<8x128xf32>
    %1842 = math.log1p %1841 : vector<8x128xf32>
    %1843 = arith.select %1840, %1828, %1842 : vector<8x128xi1>, vector<8x128xf32>
    %1844 = vector.broadcast %12 : f32 to vector<8x128xf32>
    %1845 = arith.mulf %1833, %1844 : vector<8x128xf32>
    %1846 = vector.broadcast %15 : f32 to vector<8x128xf32>
    %1847 = arith.mulf %1838, %1846 : vector<8x128xf32>
    %1848 = arith.addf %1845, %1847 : vector<8x128xf32>
    %1849 = vector.broadcast %18 : f32 to vector<8x128xf32>
    %1850 = arith.mulf %1843, %1849 : vector<8x128xf32>
    %1851 = arith.addf %1848, %1850 : vector<8x128xf32>
    %1852 = vector.broadcast %21 : f32 to vector<8x128xf32>
    %1853 = arith.addf %1851, %1852 : vector<8x128xf32>
    %1854 = vector.broadcast %13 : f32 to vector<8x128xf32>
    %1855 = arith.mulf %1833, %1854 : vector<8x128xf32>
    %1856 = vector.broadcast %16 : f32 to vector<8x128xf32>
    %1857 = arith.mulf %1838, %1856 : vector<8x128xf32>
    %1858 = arith.addf %1855, %1857 : vector<8x128xf32>
    %1859 = vector.broadcast %19 : f32 to vector<8x128xf32>
    %1860 = arith.mulf %1843, %1859 : vector<8x128xf32>
    %1861 = arith.addf %1858, %1860 : vector<8x128xf32>
    %1862 = vector.broadcast %22 : f32 to vector<8x128xf32>
    %1863 = arith.addf %1861, %1862 : vector<8x128xf32>
    %1864 = vector.broadcast %14 : f32 to vector<8x128xf32>
    %1865 = arith.mulf %1833, %1864 : vector<8x128xf32>
    %1866 = vector.broadcast %17 : f32 to vector<8x128xf32>
    %1867 = arith.mulf %1838, %1866 : vector<8x128xf32>
    %1868 = arith.addf %1865, %1867 : vector<8x128xf32>
    %1869 = vector.broadcast %20 : f32 to vector<8x128xf32>
    %1870 = arith.mulf %1843, %1869 : vector<8x128xf32>
    %1871 = arith.addf %1868, %1870 : vector<8x128xf32>
    %1872 = vector.broadcast %23 : f32 to vector<8x128xf32>
    %1873 = arith.addf %1871, %1872 : vector<8x128xf32>
    %cst_353 = arith.constant 2.000000e+01 : f32
    %1874 = vector.broadcast %cst_353 : f32 to vector<8x128xf32>
    %1875 = arith.cmpf ogt, %1853, %1874 : vector<8x128xf32>
    %1876 = math.exp %1853 : vector<8x128xf32>
    %1877 = math.log1p %1876 : vector<8x128xf32>
    %1878 = arith.select %1875, %1853, %1877 : vector<8x128xi1>, vector<8x128xf32>
    %cst_354 = arith.constant 2.000000e+01 : f32
    %1879 = vector.broadcast %cst_354 : f32 to vector<8x128xf32>
    %1880 = arith.cmpf ogt, %1863, %1879 : vector<8x128xf32>
    %1881 = math.exp %1863 : vector<8x128xf32>
    %1882 = math.log1p %1881 : vector<8x128xf32>
    %1883 = arith.select %1880, %1863, %1882 : vector<8x128xi1>, vector<8x128xf32>
    %cst_355 = arith.constant 2.000000e+01 : f32
    %1884 = vector.broadcast %cst_355 : f32 to vector<8x128xf32>
    %1885 = arith.cmpf ogt, %1873, %1884 : vector<8x128xf32>
    %1886 = math.exp %1873 : vector<8x128xf32>
    %1887 = math.log1p %1886 : vector<8x128xf32>
    %1888 = arith.select %1885, %1873, %1887 : vector<8x128xi1>, vector<8x128xf32>
    %1889 = vector.broadcast %24 : f32 to vector<8x128xf32>
    %1890 = arith.mulf %1878, %1889 : vector<8x128xf32>
    %1891 = vector.broadcast %25 : f32 to vector<8x128xf32>
    %1892 = arith.mulf %1883, %1891 : vector<8x128xf32>
    %1893 = arith.addf %1890, %1892 : vector<8x128xf32>
    %1894 = vector.broadcast %26 : f32 to vector<8x128xf32>
    %1895 = arith.mulf %1888, %1894 : vector<8x128xf32>
    %1896 = arith.addf %1893, %1895 : vector<8x128xf32>
    %1897 = vector.broadcast %27 : f32 to vector<8x128xf32>
    %1898 = arith.addf %1896, %1897 : vector<8x128xf32>
    %1899 = arith.addf %1792, %1898 : vector<8x128xf32>
    %c0_356 = arith.constant 0 : index
    %c2_357 = arith.constant 2 : index
    %c5_358 = arith.constant 5 : index
    %c0_359 = arith.constant 0 : index
    %c0_360 = arith.constant 0 : index
    %1900 = vector.load %arg2[%c0_356, %c2_357, %c5_358, %c0_359, %c0_360] : memref<3x3x6x8x128xf32, #tpu.memory_space<vmem>>, vector<1x1x1x8x128xf32>
    %1901 = vector.shape_cast %1900 : vector<1x1x1x8x128xf32> to vector<8x128xf32>
    %c1_361 = arith.constant 1 : index
    %c2_362 = arith.constant 2 : index
    %c5_363 = arith.constant 5 : index
    %c0_364 = arith.constant 0 : index
    %c0_365 = arith.constant 0 : index
    %1902 = vector.load %arg2[%c1_361, %c2_362, %c5_363, %c0_364, %c0_365] : memref<3x3x6x8x128xf32, #tpu.memory_space<vmem>>, vector<1x1x1x8x128xf32>
    %1903 = vector.shape_cast %1902 : vector<1x1x1x8x128xf32> to vector<8x128xf32>
    %c2_366 = arith.constant 2 : index
    %c2_367 = arith.constant 2 : index
    %c5_368 = arith.constant 5 : index
    %c0_369 = arith.constant 0 : index
    %c0_370 = arith.constant 0 : index
    %1904 = vector.load %arg2[%c2_366, %c2_367, %c5_368, %c0_369, %c0_370] : memref<3x3x6x8x128xf32, #tpu.memory_space<vmem>>, vector<1x1x1x8x128xf32>
    %1905 = vector.shape_cast %1904 : vector<1x1x1x8x128xf32> to vector<8x128xf32>
    %1906 = vector.broadcast %0 : f32 to vector<8x128xf32>
    %1907 = arith.mulf %1901, %1906 : vector<8x128xf32>
    %1908 = vector.broadcast %3 : f32 to vector<8x128xf32>
    %1909 = arith.mulf %1903, %1908 : vector<8x128xf32>
    %1910 = arith.addf %1907, %1909 : vector<8x128xf32>
    %1911 = vector.broadcast %6 : f32 to vector<8x128xf32>
    %1912 = arith.mulf %1905, %1911 : vector<8x128xf32>
    %1913 = arith.addf %1910, %1912 : vector<8x128xf32>
    %1914 = vector.broadcast %9 : f32 to vector<8x128xf32>
    %1915 = arith.addf %1913, %1914 : vector<8x128xf32>
    %1916 = vector.broadcast %1 : f32 to vector<8x128xf32>
    %1917 = arith.mulf %1901, %1916 : vector<8x128xf32>
    %1918 = vector.broadcast %4 : f32 to vector<8x128xf32>
    %1919 = arith.mulf %1903, %1918 : vector<8x128xf32>
    %1920 = arith.addf %1917, %1919 : vector<8x128xf32>
    %1921 = vector.broadcast %7 : f32 to vector<8x128xf32>
    %1922 = arith.mulf %1905, %1921 : vector<8x128xf32>
    %1923 = arith.addf %1920, %1922 : vector<8x128xf32>
    %1924 = vector.broadcast %10 : f32 to vector<8x128xf32>
    %1925 = arith.addf %1923, %1924 : vector<8x128xf32>
    %1926 = vector.broadcast %2 : f32 to vector<8x128xf32>
    %1927 = arith.mulf %1901, %1926 : vector<8x128xf32>
    %1928 = vector.broadcast %5 : f32 to vector<8x128xf32>
    %1929 = arith.mulf %1903, %1928 : vector<8x128xf32>
    %1930 = arith.addf %1927, %1929 : vector<8x128xf32>
    %1931 = vector.broadcast %8 : f32 to vector<8x128xf32>
    %1932 = arith.mulf %1905, %1931 : vector<8x128xf32>
    %1933 = arith.addf %1930, %1932 : vector<8x128xf32>
    %1934 = vector.broadcast %11 : f32 to vector<8x128xf32>
    %1935 = arith.addf %1933, %1934 : vector<8x128xf32>
    %cst_371 = arith.constant 2.000000e+01 : f32
    %1936 = vector.broadcast %cst_371 : f32 to vector<8x128xf32>
    %1937 = arith.cmpf ogt, %1915, %1936 : vector<8x128xf32>
    %1938 = math.exp %1915 : vector<8x128xf32>
    %1939 = math.log1p %1938 : vector<8x128xf32>
    %1940 = arith.select %1937, %1915, %1939 : vector<8x128xi1>, vector<8x128xf32>
    %cst_372 = arith.constant 2.000000e+01 : f32
    %1941 = vector.broadcast %cst_372 : f32 to vector<8x128xf32>
    %1942 = arith.cmpf ogt, %1925, %1941 : vector<8x128xf32>
    %1943 = math.exp %1925 : vector<8x128xf32>
    %1944 = math.log1p %1943 : vector<8x128xf32>
    %1945 = arith.select %1942, %1925, %1944 : vector<8x128xi1>, vector<8x128xf32>
    %cst_373 = arith.constant 2.000000e+01 : f32
    %1946 = vector.broadcast %cst_373 : f32 to vector<8x128xf32>
    %1947 = arith.cmpf ogt, %1935, %1946 : vector<8x128xf32>
    %1948 = math.exp %1935 : vector<8x128xf32>
    %1949 = math.log1p %1948 : vector<8x128xf32>
    %1950 = arith.select %1947, %1935, %1949 : vector<8x128xi1>, vector<8x128xf32>
    %1951 = vector.broadcast %12 : f32 to vector<8x128xf32>
    %1952 = arith.mulf %1940, %1951 : vector<8x128xf32>
    %1953 = vector.broadcast %15 : f32 to vector<8x128xf32>
    %1954 = arith.mulf %1945, %1953 : vector<8x128xf32>
    %1955 = arith.addf %1952, %1954 : vector<8x128xf32>
    %1956 = vector.broadcast %18 : f32 to vector<8x128xf32>
    %1957 = arith.mulf %1950, %1956 : vector<8x128xf32>
    %1958 = arith.addf %1955, %1957 : vector<8x128xf32>
    %1959 = vector.broadcast %21 : f32 to vector<8x128xf32>
    %1960 = arith.addf %1958, %1959 : vector<8x128xf32>
    %1961 = vector.broadcast %13 : f32 to vector<8x128xf32>
    %1962 = arith.mulf %1940, %1961 : vector<8x128xf32>
    %1963 = vector.broadcast %16 : f32 to vector<8x128xf32>
    %1964 = arith.mulf %1945, %1963 : vector<8x128xf32>
    %1965 = arith.addf %1962, %1964 : vector<8x128xf32>
    %1966 = vector.broadcast %19 : f32 to vector<8x128xf32>
    %1967 = arith.mulf %1950, %1966 : vector<8x128xf32>
    %1968 = arith.addf %1965, %1967 : vector<8x128xf32>
    %1969 = vector.broadcast %22 : f32 to vector<8x128xf32>
    %1970 = arith.addf %1968, %1969 : vector<8x128xf32>
    %1971 = vector.broadcast %14 : f32 to vector<8x128xf32>
    %1972 = arith.mulf %1940, %1971 : vector<8x128xf32>
    %1973 = vector.broadcast %17 : f32 to vector<8x128xf32>
    %1974 = arith.mulf %1945, %1973 : vector<8x128xf32>
    %1975 = arith.addf %1972, %1974 : vector<8x128xf32>
    %1976 = vector.broadcast %20 : f32 to vector<8x128xf32>
    %1977 = arith.mulf %1950, %1976 : vector<8x128xf32>
    %1978 = arith.addf %1975, %1977 : vector<8x128xf32>
    %1979 = vector.broadcast %23 : f32 to vector<8x128xf32>
    %1980 = arith.addf %1978, %1979 : vector<8x128xf32>
    %cst_374 = arith.constant 2.000000e+01 : f32
    %1981 = vector.broadcast %cst_374 : f32 to vector<8x128xf32>
    %1982 = arith.cmpf ogt, %1960, %1981 : vector<8x128xf32>
    %1983 = math.exp %1960 : vector<8x128xf32>
    %1984 = math.log1p %1983 : vector<8x128xf32>
    %1985 = arith.select %1982, %1960, %1984 : vector<8x128xi1>, vector<8x128xf32>
    %cst_375 = arith.constant 2.000000e+01 : f32
    %1986 = vector.broadcast %cst_375 : f32 to vector<8x128xf32>
    %1987 = arith.cmpf ogt, %1970, %1986 : vector<8x128xf32>
    %1988 = math.exp %1970 : vector<8x128xf32>
    %1989 = math.log1p %1988 : vector<8x128xf32>
    %1990 = arith.select %1987, %1970, %1989 : vector<8x128xi1>, vector<8x128xf32>
    %cst_376 = arith.constant 2.000000e+01 : f32
    %1991 = vector.broadcast %cst_376 : f32 to vector<8x128xf32>
    %1992 = arith.cmpf ogt, %1980, %1991 : vector<8x128xf32>
    %1993 = math.exp %1980 : vector<8x128xf32>
    %1994 = math.log1p %1993 : vector<8x128xf32>
    %1995 = arith.select %1992, %1980, %1994 : vector<8x128xi1>, vector<8x128xf32>
    %1996 = vector.broadcast %24 : f32 to vector<8x128xf32>
    %1997 = arith.mulf %1985, %1996 : vector<8x128xf32>
    %1998 = vector.broadcast %25 : f32 to vector<8x128xf32>
    %1999 = arith.mulf %1990, %1998 : vector<8x128xf32>
    %2000 = arith.addf %1997, %1999 : vector<8x128xf32>
    %2001 = vector.broadcast %26 : f32 to vector<8x128xf32>
    %2002 = arith.mulf %1995, %2001 : vector<8x128xf32>
    %2003 = arith.addf %2000, %2002 : vector<8x128xf32>
    %2004 = vector.broadcast %27 : f32 to vector<8x128xf32>
    %2005 = arith.addf %2003, %2004 : vector<8x128xf32>
    %2006 = arith.addf %1899, %2005 : vector<8x128xf32>
    %2007 = vector.broadcast %28 : f32 to vector<8x128xf32>
    %2008 = arith.mulf %724, %2007 : vector<8x128xf32>
    %2009 = vector.broadcast %31 : f32 to vector<8x128xf32>
    %2010 = arith.mulf %1365, %2009 : vector<8x128xf32>
    %2011 = arith.addf %2008, %2010 : vector<8x128xf32>
    %2012 = vector.broadcast %34 : f32 to vector<8x128xf32>
    %2013 = arith.mulf %2006, %2012 : vector<8x128xf32>
    %2014 = arith.addf %2011, %2013 : vector<8x128xf32>
    %2015 = vector.broadcast %37 : f32 to vector<8x128xf32>
    %2016 = arith.addf %2014, %2015 : vector<8x128xf32>
    %2017 = vector.broadcast %29 : f32 to vector<8x128xf32>
    %2018 = arith.mulf %724, %2017 : vector<8x128xf32>
    %2019 = vector.broadcast %32 : f32 to vector<8x128xf32>
    %2020 = arith.mulf %1365, %2019 : vector<8x128xf32>
    %2021 = arith.addf %2018, %2020 : vector<8x128xf32>
    %2022 = vector.broadcast %35 : f32 to vector<8x128xf32>
    %2023 = arith.mulf %2006, %2022 : vector<8x128xf32>
    %2024 = arith.addf %2021, %2023 : vector<8x128xf32>
    %2025 = vector.broadcast %38 : f32 to vector<8x128xf32>
    %2026 = arith.addf %2024, %2025 : vector<8x128xf32>
    %2027 = vector.broadcast %30 : f32 to vector<8x128xf32>
    %2028 = arith.mulf %724, %2027 : vector<8x128xf32>
    %2029 = vector.broadcast %33 : f32 to vector<8x128xf32>
    %2030 = arith.mulf %1365, %2029 : vector<8x128xf32>
    %2031 = arith.addf %2028, %2030 : vector<8x128xf32>
    %2032 = vector.broadcast %36 : f32 to vector<8x128xf32>
    %2033 = arith.mulf %2006, %2032 : vector<8x128xf32>
    %2034 = arith.addf %2031, %2033 : vector<8x128xf32>
    %2035 = vector.broadcast %39 : f32 to vector<8x128xf32>
    %2036 = arith.addf %2034, %2035 : vector<8x128xf32>
    %cst_377 = arith.constant 2.000000e+01 : f32
    %2037 = vector.broadcast %cst_377 : f32 to vector<8x128xf32>
    %2038 = arith.cmpf ogt, %2016, %2037 : vector<8x128xf32>
    %2039 = math.exp %2016 : vector<8x128xf32>
    %2040 = math.log1p %2039 : vector<8x128xf32>
    %2041 = arith.select %2038, %2016, %2040 : vector<8x128xi1>, vector<8x128xf32>
    %cst_378 = arith.constant 2.000000e+01 : f32
    %2042 = vector.broadcast %cst_378 : f32 to vector<8x128xf32>
    %2043 = arith.cmpf ogt, %2026, %2042 : vector<8x128xf32>
    %2044 = math.exp %2026 : vector<8x128xf32>
    %2045 = math.log1p %2044 : vector<8x128xf32>
    %2046 = arith.select %2043, %2026, %2045 : vector<8x128xi1>, vector<8x128xf32>
    %cst_379 = arith.constant 2.000000e+01 : f32
    %2047 = vector.broadcast %cst_379 : f32 to vector<8x128xf32>
    %2048 = arith.cmpf ogt, %2036, %2047 : vector<8x128xf32>
    %2049 = math.exp %2036 : vector<8x128xf32>
    %2050 = math.log1p %2049 : vector<8x128xf32>
    %2051 = arith.select %2048, %2036, %2050 : vector<8x128xi1>, vector<8x128xf32>
    %2052 = vector.broadcast %40 : f32 to vector<8x128xf32>
    %2053 = arith.mulf %2041, %2052 : vector<8x128xf32>
    %2054 = vector.broadcast %43 : f32 to vector<8x128xf32>
    %2055 = arith.mulf %2046, %2054 : vector<8x128xf32>
    %2056 = arith.addf %2053, %2055 : vector<8x128xf32>
    %2057 = vector.broadcast %46 : f32 to vector<8x128xf32>
    %2058 = arith.mulf %2051, %2057 : vector<8x128xf32>
    %2059 = arith.addf %2056, %2058 : vector<8x128xf32>
    %2060 = vector.broadcast %49 : f32 to vector<8x128xf32>
    %2061 = arith.addf %2059, %2060 : vector<8x128xf32>
    %2062 = vector.broadcast %41 : f32 to vector<8x128xf32>
    %2063 = arith.mulf %2041, %2062 : vector<8x128xf32>
    %2064 = vector.broadcast %44 : f32 to vector<8x128xf32>
    %2065 = arith.mulf %2046, %2064 : vector<8x128xf32>
    %2066 = arith.addf %2063, %2065 : vector<8x128xf32>
    %2067 = vector.broadcast %47 : f32 to vector<8x128xf32>
    %2068 = arith.mulf %2051, %2067 : vector<8x128xf32>
    %2069 = arith.addf %2066, %2068 : vector<8x128xf32>
    %2070 = vector.broadcast %50 : f32 to vector<8x128xf32>
    %2071 = arith.addf %2069, %2070 : vector<8x128xf32>
    %2072 = vector.broadcast %42 : f32 to vector<8x128xf32>
    %2073 = arith.mulf %2041, %2072 : vector<8x128xf32>
    %2074 = vector.broadcast %45 : f32 to vector<8x128xf32>
    %2075 = arith.mulf %2046, %2074 : vector<8x128xf32>
    %2076 = arith.addf %2073, %2075 : vector<8x128xf32>
    %2077 = vector.broadcast %48 : f32 to vector<8x128xf32>
    %2078 = arith.mulf %2051, %2077 : vector<8x128xf32>
    %2079 = arith.addf %2076, %2078 : vector<8x128xf32>
    %2080 = vector.broadcast %51 : f32 to vector<8x128xf32>
    %2081 = arith.addf %2079, %2080 : vector<8x128xf32>
    %cst_380 = arith.constant 2.000000e+01 : f32
    %2082 = vector.broadcast %cst_380 : f32 to vector<8x128xf32>
    %2083 = arith.cmpf ogt, %2061, %2082 : vector<8x128xf32>
    %2084 = math.exp %2061 : vector<8x128xf32>
    %2085 = math.log1p %2084 : vector<8x128xf32>
    %2086 = arith.select %2083, %2061, %2085 : vector<8x128xi1>, vector<8x128xf32>
    %cst_381 = arith.constant 2.000000e+01 : f32
    %2087 = vector.broadcast %cst_381 : f32 to vector<8x128xf32>
    %2088 = arith.cmpf ogt, %2071, %2087 : vector<8x128xf32>
    %2089 = math.exp %2071 : vector<8x128xf32>
    %2090 = math.log1p %2089 : vector<8x128xf32>
    %2091 = arith.select %2088, %2071, %2090 : vector<8x128xi1>, vector<8x128xf32>
    %cst_382 = arith.constant 2.000000e+01 : f32
    %2092 = vector.broadcast %cst_382 : f32 to vector<8x128xf32>
    %2093 = arith.cmpf ogt, %2081, %2092 : vector<8x128xf32>
    %2094 = math.exp %2081 : vector<8x128xf32>
    %2095 = math.log1p %2094 : vector<8x128xf32>
    %2096 = arith.select %2093, %2081, %2095 : vector<8x128xi1>, vector<8x128xf32>
    %2097 = vector.broadcast %52 : f32 to vector<8x128xf32>
    %2098 = arith.mulf %2086, %2097 : vector<8x128xf32>
    %2099 = vector.broadcast %53 : f32 to vector<8x128xf32>
    %2100 = arith.mulf %2091, %2099 : vector<8x128xf32>
    %2101 = arith.addf %2098, %2100 : vector<8x128xf32>
    %2102 = vector.broadcast %54 : f32 to vector<8x128xf32>
    %2103 = arith.mulf %2096, %2102 : vector<8x128xf32>
    %2104 = arith.addf %2101, %2103 : vector<8x128xf32>
    %2105 = vector.broadcast %55 : f32 to vector<8x128xf32>
    %2106 = arith.addf %2104, %2105 : vector<8x128xf32>
    %c0_383 = arith.constant 0 : index
    %c0_384 = arith.constant 0 : index
    %c0_385 = arith.constant 0 : index
    %c0_386 = arith.constant 0 : index
    %2107 = vector.load %arg3[%c0_383, %c0_384, %c0_385, %c0_386] : memref<2x3x8x128xf32, #tpu.memory_space<vmem>>, vector<1x1x8x128xf32>
    %2108 = vector.shape_cast %2107 : vector<1x1x8x128xf32> to vector<8x128xf32>
    %c1_387 = arith.constant 1 : index
    %c0_388 = arith.constant 0 : index
    %c0_389 = arith.constant 0 : index
    %c0_390 = arith.constant 0 : index
    %2109 = vector.load %arg3[%c1_387, %c0_388, %c0_389, %c0_390] : memref<2x3x8x128xf32, #tpu.memory_space<vmem>>, vector<1x1x8x128xf32>
    %2110 = vector.shape_cast %2109 : vector<1x1x8x128xf32> to vector<8x128xf32>
    %2111 = vector.broadcast %56 : f32 to vector<8x128xf32>
    %2112 = arith.mulf %2108, %2111 : vector<8x128xf32>
    %2113 = vector.broadcast %59 : f32 to vector<8x128xf32>
    %2114 = arith.mulf %2110, %2113 : vector<8x128xf32>
    %2115 = arith.addf %2112, %2114 : vector<8x128xf32>
    %2116 = vector.broadcast %62 : f32 to vector<8x128xf32>
    %2117 = arith.addf %2115, %2116 : vector<8x128xf32>
    %2118 = vector.broadcast %57 : f32 to vector<8x128xf32>
    %2119 = arith.mulf %2108, %2118 : vector<8x128xf32>
    %2120 = vector.broadcast %60 : f32 to vector<8x128xf32>
    %2121 = arith.mulf %2110, %2120 : vector<8x128xf32>
    %2122 = arith.addf %2119, %2121 : vector<8x128xf32>
    %2123 = vector.broadcast %63 : f32 to vector<8x128xf32>
    %2124 = arith.addf %2122, %2123 : vector<8x128xf32>
    %2125 = vector.broadcast %58 : f32 to vector<8x128xf32>
    %2126 = arith.mulf %2108, %2125 : vector<8x128xf32>
    %2127 = vector.broadcast %61 : f32 to vector<8x128xf32>
    %2128 = arith.mulf %2110, %2127 : vector<8x128xf32>
    %2129 = arith.addf %2126, %2128 : vector<8x128xf32>
    %2130 = vector.broadcast %64 : f32 to vector<8x128xf32>
    %2131 = arith.addf %2129, %2130 : vector<8x128xf32>
    %cst_391 = arith.constant 2.000000e+01 : f32
    %2132 = vector.broadcast %cst_391 : f32 to vector<8x128xf32>
    %2133 = arith.cmpf ogt, %2117, %2132 : vector<8x128xf32>
    %2134 = math.exp %2117 : vector<8x128xf32>
    %2135 = math.log1p %2134 : vector<8x128xf32>
    %2136 = arith.select %2133, %2117, %2135 : vector<8x128xi1>, vector<8x128xf32>
    %cst_392 = arith.constant 2.000000e+01 : f32
    %2137 = vector.broadcast %cst_392 : f32 to vector<8x128xf32>
    %2138 = arith.cmpf ogt, %2124, %2137 : vector<8x128xf32>
    %2139 = math.exp %2124 : vector<8x128xf32>
    %2140 = math.log1p %2139 : vector<8x128xf32>
    %2141 = arith.select %2138, %2124, %2140 : vector<8x128xi1>, vector<8x128xf32>
    %cst_393 = arith.constant 2.000000e+01 : f32
    %2142 = vector.broadcast %cst_393 : f32 to vector<8x128xf32>
    %2143 = arith.cmpf ogt, %2131, %2142 : vector<8x128xf32>
    %2144 = math.exp %2131 : vector<8x128xf32>
    %2145 = math.log1p %2144 : vector<8x128xf32>
    %2146 = arith.select %2143, %2131, %2145 : vector<8x128xi1>, vector<8x128xf32>
    %2147 = vector.broadcast %65 : f32 to vector<8x128xf32>
    %2148 = arith.mulf %2136, %2147 : vector<8x128xf32>
    %2149 = vector.broadcast %68 : f32 to vector<8x128xf32>
    %2150 = arith.mulf %2141, %2149 : vector<8x128xf32>
    %2151 = arith.addf %2148, %2150 : vector<8x128xf32>
    %2152 = vector.broadcast %71 : f32 to vector<8x128xf32>
    %2153 = arith.mulf %2146, %2152 : vector<8x128xf32>
    %2154 = arith.addf %2151, %2153 : vector<8x128xf32>
    %2155 = vector.broadcast %74 : f32 to vector<8x128xf32>
    %2156 = arith.addf %2154, %2155 : vector<8x128xf32>
    %2157 = vector.broadcast %66 : f32 to vector<8x128xf32>
    %2158 = arith.mulf %2136, %2157 : vector<8x128xf32>
    %2159 = vector.broadcast %69 : f32 to vector<8x128xf32>
    %2160 = arith.mulf %2141, %2159 : vector<8x128xf32>
    %2161 = arith.addf %2158, %2160 : vector<8x128xf32>
    %2162 = vector.broadcast %72 : f32 to vector<8x128xf32>
    %2163 = arith.mulf %2146, %2162 : vector<8x128xf32>
    %2164 = arith.addf %2161, %2163 : vector<8x128xf32>
    %2165 = vector.broadcast %75 : f32 to vector<8x128xf32>
    %2166 = arith.addf %2164, %2165 : vector<8x128xf32>
    %2167 = vector.broadcast %67 : f32 to vector<8x128xf32>
    %2168 = arith.mulf %2136, %2167 : vector<8x128xf32>
    %2169 = vector.broadcast %70 : f32 to vector<8x128xf32>
    %2170 = arith.mulf %2141, %2169 : vector<8x128xf32>
    %2171 = arith.addf %2168, %2170 : vector<8x128xf32>
    %2172 = vector.broadcast %73 : f32 to vector<8x128xf32>
    %2173 = arith.mulf %2146, %2172 : vector<8x128xf32>
    %2174 = arith.addf %2171, %2173 : vector<8x128xf32>
    %2175 = vector.broadcast %76 : f32 to vector<8x128xf32>
    %2176 = arith.addf %2174, %2175 : vector<8x128xf32>
    %cst_394 = arith.constant 2.000000e+01 : f32
    %2177 = vector.broadcast %cst_394 : f32 to vector<8x128xf32>
    %2178 = arith.cmpf ogt, %2156, %2177 : vector<8x128xf32>
    %2179 = math.exp %2156 : vector<8x128xf32>
    %2180 = math.log1p %2179 : vector<8x128xf32>
    %2181 = arith.select %2178, %2156, %2180 : vector<8x128xi1>, vector<8x128xf32>
    %cst_395 = arith.constant 2.000000e+01 : f32
    %2182 = vector.broadcast %cst_395 : f32 to vector<8x128xf32>
    %2183 = arith.cmpf ogt, %2166, %2182 : vector<8x128xf32>
    %2184 = math.exp %2166 : vector<8x128xf32>
    %2185 = math.log1p %2184 : vector<8x128xf32>
    %2186 = arith.select %2183, %2166, %2185 : vector<8x128xi1>, vector<8x128xf32>
    %cst_396 = arith.constant 2.000000e+01 : f32
    %2187 = vector.broadcast %cst_396 : f32 to vector<8x128xf32>
    %2188 = arith.cmpf ogt, %2176, %2187 : vector<8x128xf32>
    %2189 = math.exp %2176 : vector<8x128xf32>
    %2190 = math.log1p %2189 : vector<8x128xf32>
    %2191 = arith.select %2188, %2176, %2190 : vector<8x128xi1>, vector<8x128xf32>
    %2192 = vector.broadcast %77 : f32 to vector<8x128xf32>
    %2193 = arith.mulf %2181, %2192 : vector<8x128xf32>
    %2194 = vector.broadcast %78 : f32 to vector<8x128xf32>
    %2195 = arith.mulf %2186, %2194 : vector<8x128xf32>
    %2196 = arith.addf %2193, %2195 : vector<8x128xf32>
    %2197 = vector.broadcast %79 : f32 to vector<8x128xf32>
    %2198 = arith.mulf %2191, %2197 : vector<8x128xf32>
    %2199 = arith.addf %2196, %2198 : vector<8x128xf32>
    %2200 = vector.broadcast %80 : f32 to vector<8x128xf32>
    %2201 = arith.addf %2199, %2200 : vector<8x128xf32>
    %c0_397 = arith.constant 0 : index
    %c1_398 = arith.constant 1 : index
    %c0_399 = arith.constant 0 : index
    %c0_400 = arith.constant 0 : index
    %2202 = vector.load %arg3[%c0_397, %c1_398, %c0_399, %c0_400] : memref<2x3x8x128xf32, #tpu.memory_space<vmem>>, vector<1x1x8x128xf32>
    %2203 = vector.shape_cast %2202 : vector<1x1x8x128xf32> to vector<8x128xf32>
    %c1_401 = arith.constant 1 : index
    %c1_402 = arith.constant 1 : index
    %c0_403 = arith.constant 0 : index
    %c0_404 = arith.constant 0 : index
    %2204 = vector.load %arg3[%c1_401, %c1_402, %c0_403, %c0_404] : memref<2x3x8x128xf32, #tpu.memory_space<vmem>>, vector<1x1x8x128xf32>
    %2205 = vector.shape_cast %2204 : vector<1x1x8x128xf32> to vector<8x128xf32>
    %2206 = vector.broadcast %56 : f32 to vector<8x128xf32>
    %2207 = arith.mulf %2203, %2206 : vector<8x128xf32>
    %2208 = vector.broadcast %59 : f32 to vector<8x128xf32>
    %2209 = arith.mulf %2205, %2208 : vector<8x128xf32>
    %2210 = arith.addf %2207, %2209 : vector<8x128xf32>
    %2211 = vector.broadcast %62 : f32 to vector<8x128xf32>
    %2212 = arith.addf %2210, %2211 : vector<8x128xf32>
    %2213 = vector.broadcast %57 : f32 to vector<8x128xf32>
    %2214 = arith.mulf %2203, %2213 : vector<8x128xf32>
    %2215 = vector.broadcast %60 : f32 to vector<8x128xf32>
    %2216 = arith.mulf %2205, %2215 : vector<8x128xf32>
    %2217 = arith.addf %2214, %2216 : vector<8x128xf32>
    %2218 = vector.broadcast %63 : f32 to vector<8x128xf32>
    %2219 = arith.addf %2217, %2218 : vector<8x128xf32>
    %2220 = vector.broadcast %58 : f32 to vector<8x128xf32>
    %2221 = arith.mulf %2203, %2220 : vector<8x128xf32>
    %2222 = vector.broadcast %61 : f32 to vector<8x128xf32>
    %2223 = arith.mulf %2205, %2222 : vector<8x128xf32>
    %2224 = arith.addf %2221, %2223 : vector<8x128xf32>
    %2225 = vector.broadcast %64 : f32 to vector<8x128xf32>
    %2226 = arith.addf %2224, %2225 : vector<8x128xf32>
    %cst_405 = arith.constant 2.000000e+01 : f32
    %2227 = vector.broadcast %cst_405 : f32 to vector<8x128xf32>
    %2228 = arith.cmpf ogt, %2212, %2227 : vector<8x128xf32>
    %2229 = math.exp %2212 : vector<8x128xf32>
    %2230 = math.log1p %2229 : vector<8x128xf32>
    %2231 = arith.select %2228, %2212, %2230 : vector<8x128xi1>, vector<8x128xf32>
    %cst_406 = arith.constant 2.000000e+01 : f32
    %2232 = vector.broadcast %cst_406 : f32 to vector<8x128xf32>
    %2233 = arith.cmpf ogt, %2219, %2232 : vector<8x128xf32>
    %2234 = math.exp %2219 : vector<8x128xf32>
    %2235 = math.log1p %2234 : vector<8x128xf32>
    %2236 = arith.select %2233, %2219, %2235 : vector<8x128xi1>, vector<8x128xf32>
    %cst_407 = arith.constant 2.000000e+01 : f32
    %2237 = vector.broadcast %cst_407 : f32 to vector<8x128xf32>
    %2238 = arith.cmpf ogt, %2226, %2237 : vector<8x128xf32>
    %2239 = math.exp %2226 : vector<8x128xf32>
    %2240 = math.log1p %2239 : vector<8x128xf32>
    %2241 = arith.select %2238, %2226, %2240 : vector<8x128xi1>, vector<8x128xf32>
    %2242 = vector.broadcast %65 : f32 to vector<8x128xf32>
    %2243 = arith.mulf %2231, %2242 : vector<8x128xf32>
    %2244 = vector.broadcast %68 : f32 to vector<8x128xf32>
    %2245 = arith.mulf %2236, %2244 : vector<8x128xf32>
    %2246 = arith.addf %2243, %2245 : vector<8x128xf32>
    %2247 = vector.broadcast %71 : f32 to vector<8x128xf32>
    %2248 = arith.mulf %2241, %2247 : vector<8x128xf32>
    %2249 = arith.addf %2246, %2248 : vector<8x128xf32>
    %2250 = vector.broadcast %74 : f32 to vector<8x128xf32>
    %2251 = arith.addf %2249, %2250 : vector<8x128xf32>
    %2252 = vector.broadcast %66 : f32 to vector<8x128xf32>
    %2253 = arith.mulf %2231, %2252 : vector<8x128xf32>
    %2254 = vector.broadcast %69 : f32 to vector<8x128xf32>
    %2255 = arith.mulf %2236, %2254 : vector<8x128xf32>
    %2256 = arith.addf %2253, %2255 : vector<8x128xf32>
    %2257 = vector.broadcast %72 : f32 to vector<8x128xf32>
    %2258 = arith.mulf %2241, %2257 : vector<8x128xf32>
    %2259 = arith.addf %2256, %2258 : vector<8x128xf32>
    %2260 = vector.broadcast %75 : f32 to vector<8x128xf32>
    %2261 = arith.addf %2259, %2260 : vector<8x128xf32>
    %2262 = vector.broadcast %67 : f32 to vector<8x128xf32>
    %2263 = arith.mulf %2231, %2262 : vector<8x128xf32>
    %2264 = vector.broadcast %70 : f32 to vector<8x128xf32>
    %2265 = arith.mulf %2236, %2264 : vector<8x128xf32>
    %2266 = arith.addf %2263, %2265 : vector<8x128xf32>
    %2267 = vector.broadcast %73 : f32 to vector<8x128xf32>
    %2268 = arith.mulf %2241, %2267 : vector<8x128xf32>
    %2269 = arith.addf %2266, %2268 : vector<8x128xf32>
    %2270 = vector.broadcast %76 : f32 to vector<8x128xf32>
    %2271 = arith.addf %2269, %2270 : vector<8x128xf32>
    %cst_408 = arith.constant 2.000000e+01 : f32
    %2272 = vector.broadcast %cst_408 : f32 to vector<8x128xf32>
    %2273 = arith.cmpf ogt, %2251, %2272 : vector<8x128xf32>
    %2274 = math.exp %2251 : vector<8x128xf32>
    %2275 = math.log1p %2274 : vector<8x128xf32>
    %2276 = arith.select %2273, %2251, %2275 : vector<8x128xi1>, vector<8x128xf32>
    %cst_409 = arith.constant 2.000000e+01 : f32
    %2277 = vector.broadcast %cst_409 : f32 to vector<8x128xf32>
    %2278 = arith.cmpf ogt, %2261, %2277 : vector<8x128xf32>
    %2279 = math.exp %2261 : vector<8x128xf32>
    %2280 = math.log1p %2279 : vector<8x128xf32>
    %2281 = arith.select %2278, %2261, %2280 : vector<8x128xi1>, vector<8x128xf32>
    %cst_410 = arith.constant 2.000000e+01 : f32
    %2282 = vector.broadcast %cst_410 : f32 to vector<8x128xf32>
    %2283 = arith.cmpf ogt, %2271, %2282 : vector<8x128xf32>
    %2284 = math.exp %2271 : vector<8x128xf32>
    %2285 = math.log1p %2284 : vector<8x128xf32>
    %2286 = arith.select %2283, %2271, %2285 : vector<8x128xi1>, vector<8x128xf32>
    %2287 = vector.broadcast %77 : f32 to vector<8x128xf32>
    %2288 = arith.mulf %2276, %2287 : vector<8x128xf32>
    %2289 = vector.broadcast %78 : f32 to vector<8x128xf32>
    %2290 = arith.mulf %2281, %2289 : vector<8x128xf32>
    %2291 = arith.addf %2288, %2290 : vector<8x128xf32>
    %2292 = vector.broadcast %79 : f32 to vector<8x128xf32>
    %2293 = arith.mulf %2286, %2292 : vector<8x128xf32>
    %2294 = arith.addf %2291, %2293 : vector<8x128xf32>
    %2295 = vector.broadcast %80 : f32 to vector<8x128xf32>
    %2296 = arith.addf %2294, %2295 : vector<8x128xf32>
    %2297 = arith.addf %2201, %2296 : vector<8x128xf32>
    %c0_411 = arith.constant 0 : index
    %c2_412 = arith.constant 2 : index
    %c0_413 = arith.constant 0 : index
    %c0_414 = arith.constant 0 : index
    %2298 = vector.load %arg3[%c0_411, %c2_412, %c0_413, %c0_414] : memref<2x3x8x128xf32, #tpu.memory_space<vmem>>, vector<1x1x8x128xf32>
    %2299 = vector.shape_cast %2298 : vector<1x1x8x128xf32> to vector<8x128xf32>
    %c1_415 = arith.constant 1 : index
    %c2_416 = arith.constant 2 : index
    %c0_417 = arith.constant 0 : index
    %c0_418 = arith.constant 0 : index
    %2300 = vector.load %arg3[%c1_415, %c2_416, %c0_417, %c0_418] : memref<2x3x8x128xf32, #tpu.memory_space<vmem>>, vector<1x1x8x128xf32>
    %2301 = vector.shape_cast %2300 : vector<1x1x8x128xf32> to vector<8x128xf32>
    %2302 = vector.broadcast %56 : f32 to vector<8x128xf32>
    %2303 = arith.mulf %2299, %2302 : vector<8x128xf32>
    %2304 = vector.broadcast %59 : f32 to vector<8x128xf32>
    %2305 = arith.mulf %2301, %2304 : vector<8x128xf32>
    %2306 = arith.addf %2303, %2305 : vector<8x128xf32>
    %2307 = vector.broadcast %62 : f32 to vector<8x128xf32>
    %2308 = arith.addf %2306, %2307 : vector<8x128xf32>
    %2309 = vector.broadcast %57 : f32 to vector<8x128xf32>
    %2310 = arith.mulf %2299, %2309 : vector<8x128xf32>
    %2311 = vector.broadcast %60 : f32 to vector<8x128xf32>
    %2312 = arith.mulf %2301, %2311 : vector<8x128xf32>
    %2313 = arith.addf %2310, %2312 : vector<8x128xf32>
    %2314 = vector.broadcast %63 : f32 to vector<8x128xf32>
    %2315 = arith.addf %2313, %2314 : vector<8x128xf32>
    %2316 = vector.broadcast %58 : f32 to vector<8x128xf32>
    %2317 = arith.mulf %2299, %2316 : vector<8x128xf32>
    %2318 = vector.broadcast %61 : f32 to vector<8x128xf32>
    %2319 = arith.mulf %2301, %2318 : vector<8x128xf32>
    %2320 = arith.addf %2317, %2319 : vector<8x128xf32>
    %2321 = vector.broadcast %64 : f32 to vector<8x128xf32>
    %2322 = arith.addf %2320, %2321 : vector<8x128xf32>
    %cst_419 = arith.constant 2.000000e+01 : f32
    %2323 = vector.broadcast %cst_419 : f32 to vector<8x128xf32>
    %2324 = arith.cmpf ogt, %2308, %2323 : vector<8x128xf32>
    %2325 = math.exp %2308 : vector<8x128xf32>
    %2326 = math.log1p %2325 : vector<8x128xf32>
    %2327 = arith.select %2324, %2308, %2326 : vector<8x128xi1>, vector<8x128xf32>
    %cst_420 = arith.constant 2.000000e+01 : f32
    %2328 = vector.broadcast %cst_420 : f32 to vector<8x128xf32>
    %2329 = arith.cmpf ogt, %2315, %2328 : vector<8x128xf32>
    %2330 = math.exp %2315 : vector<8x128xf32>
    %2331 = math.log1p %2330 : vector<8x128xf32>
    %2332 = arith.select %2329, %2315, %2331 : vector<8x128xi1>, vector<8x128xf32>
    %cst_421 = arith.constant 2.000000e+01 : f32
    %2333 = vector.broadcast %cst_421 : f32 to vector<8x128xf32>
    %2334 = arith.cmpf ogt, %2322, %2333 : vector<8x128xf32>
    %2335 = math.exp %2322 : vector<8x128xf32>
    %2336 = math.log1p %2335 : vector<8x128xf32>
    %2337 = arith.select %2334, %2322, %2336 : vector<8x128xi1>, vector<8x128xf32>
    %2338 = vector.broadcast %65 : f32 to vector<8x128xf32>
    %2339 = arith.mulf %2327, %2338 : vector<8x128xf32>
    %2340 = vector.broadcast %68 : f32 to vector<8x128xf32>
    %2341 = arith.mulf %2332, %2340 : vector<8x128xf32>
    %2342 = arith.addf %2339, %2341 : vector<8x128xf32>
    %2343 = vector.broadcast %71 : f32 to vector<8x128xf32>
    %2344 = arith.mulf %2337, %2343 : vector<8x128xf32>
    %2345 = arith.addf %2342, %2344 : vector<8x128xf32>
    %2346 = vector.broadcast %74 : f32 to vector<8x128xf32>
    %2347 = arith.addf %2345, %2346 : vector<8x128xf32>
    %2348 = vector.broadcast %66 : f32 to vector<8x128xf32>
    %2349 = arith.mulf %2327, %2348 : vector<8x128xf32>
    %2350 = vector.broadcast %69 : f32 to vector<8x128xf32>
    %2351 = arith.mulf %2332, %2350 : vector<8x128xf32>
    %2352 = arith.addf %2349, %2351 : vector<8x128xf32>
    %2353 = vector.broadcast %72 : f32 to vector<8x128xf32>
    %2354 = arith.mulf %2337, %2353 : vector<8x128xf32>
    %2355 = arith.addf %2352, %2354 : vector<8x128xf32>
    %2356 = vector.broadcast %75 : f32 to vector<8x128xf32>
    %2357 = arith.addf %2355, %2356 : vector<8x128xf32>
    %2358 = vector.broadcast %67 : f32 to vector<8x128xf32>
    %2359 = arith.mulf %2327, %2358 : vector<8x128xf32>
    %2360 = vector.broadcast %70 : f32 to vector<8x128xf32>
    %2361 = arith.mulf %2332, %2360 : vector<8x128xf32>
    %2362 = arith.addf %2359, %2361 : vector<8x128xf32>
    %2363 = vector.broadcast %73 : f32 to vector<8x128xf32>
    %2364 = arith.mulf %2337, %2363 : vector<8x128xf32>
    %2365 = arith.addf %2362, %2364 : vector<8x128xf32>
    %2366 = vector.broadcast %76 : f32 to vector<8x128xf32>
    %2367 = arith.addf %2365, %2366 : vector<8x128xf32>
    %cst_422 = arith.constant 2.000000e+01 : f32
    %2368 = vector.broadcast %cst_422 : f32 to vector<8x128xf32>
    %2369 = arith.cmpf ogt, %2347, %2368 : vector<8x128xf32>
    %2370 = math.exp %2347 : vector<8x128xf32>
    %2371 = math.log1p %2370 : vector<8x128xf32>
    %2372 = arith.select %2369, %2347, %2371 : vector<8x128xi1>, vector<8x128xf32>
    %cst_423 = arith.constant 2.000000e+01 : f32
    %2373 = vector.broadcast %cst_423 : f32 to vector<8x128xf32>
    %2374 = arith.cmpf ogt, %2357, %2373 : vector<8x128xf32>
    %2375 = math.exp %2357 : vector<8x128xf32>
    %2376 = math.log1p %2375 : vector<8x128xf32>
    %2377 = arith.select %2374, %2357, %2376 : vector<8x128xi1>, vector<8x128xf32>
    %cst_424 = arith.constant 2.000000e+01 : f32
    %2378 = vector.broadcast %cst_424 : f32 to vector<8x128xf32>
    %2379 = arith.cmpf ogt, %2367, %2378 : vector<8x128xf32>
    %2380 = math.exp %2367 : vector<8x128xf32>
    %2381 = math.log1p %2380 : vector<8x128xf32>
    %2382 = arith.select %2379, %2367, %2381 : vector<8x128xi1>, vector<8x128xf32>
    %2383 = vector.broadcast %77 : f32 to vector<8x128xf32>
    %2384 = arith.mulf %2372, %2383 : vector<8x128xf32>
    %2385 = vector.broadcast %78 : f32 to vector<8x128xf32>
    %2386 = arith.mulf %2377, %2385 : vector<8x128xf32>
    %2387 = arith.addf %2384, %2386 : vector<8x128xf32>
    %2388 = vector.broadcast %79 : f32 to vector<8x128xf32>
    %2389 = arith.mulf %2382, %2388 : vector<8x128xf32>
    %2390 = arith.addf %2387, %2389 : vector<8x128xf32>
    %2391 = vector.broadcast %80 : f32 to vector<8x128xf32>
    %2392 = arith.addf %2390, %2391 : vector<8x128xf32>
    %2393 = arith.addf %2297, %2392 : vector<8x128xf32>
    %2394 = vector.broadcast %81 : f32 to vector<8x128xf32>
    %2395 = arith.mulf %2106, %2394 : vector<8x128xf32>
    %2396 = vector.broadcast %82 : f32 to vector<8x128xf32>
    %2397 = arith.mulf %2393, %2396 : vector<8x128xf32>
    %2398 = arith.addf %2395, %2397 : vector<8x128xf32>
    %2399 = vector.broadcast %83 : f32 to vector<8x128xf32>
    %2400 = arith.addf %2398, %2399 : vector<8x128xf32>
    %c0_425 = arith.constant 0 : index
    %c0_426 = arith.constant 0 : index
    %2401 = vector.load %arg4[%c0_425, %c0_426] : memref<8x128xf32, #tpu.memory_space<vmem>>, vector<8x128xf32>
    tpu.vector_store %arg4[%c0_425, %c0_426], %2400 {strides = array<i32>} : memref<8x128xf32, #tpu.memory_space<vmem>>, vector<8x128xf32>,
    return
  }
  func.func @transform_0(%arg0: i32) -> i32 {
    %c0_i32 = arith.constant 0 : i32
    %c0_i32_0 = arith.constant 0 : i32
    return %c0_i32 : i32
  }
  func.func @transform_1(%arg0: i32) -> (i32, i32, i32, i32, i32) {
    %c0_i32 = arith.constant 0 : i32
    %c0_i32_0 = arith.constant 0 : i32
    %c0_i32_1 = arith.constant 0 : i32
    %c0_i32_2 = arith.constant 0 : i32
    %c0_i32_3 = arith.constant 0 : i32
    return %c0_i32, %c0_i32_0, %c0_i32_1, %arg0, %c0_i32_2 : i32, i32, i32, i32, i32
  }
  func.func @transform_2(%arg0: i32) -> (i32, i32, i32, i32) {
    %c0_i32 = arith.constant 0 : i32
    %c0_i32_0 = arith.constant 0 : i32
    %c0_i32_1 = arith.constant 0 : i32
    %c0_i32_2 = arith.constant 0 : i32
    return %c0_i32, %c0_i32_0, %arg0, %c0_i32_1 : i32, i32, i32, i32
  }
  func.func @transform_3(%arg0: i32) -> (i32, i32) {
    %c0_i32 = arith.constant 0 : i32
    %c0_i32_0 = arith.constant 0 : i32
    return %arg0, %c0_i32 : i32, i32
  }
}

</mosaic_0001>

<llo_original>
// kernel: tpu_custom_call.1
$region0: #{tpu_custom_call.1}
  #allocation0 [shape = 'u32[]', space=smem, size = 0x4, offset = 0x4, fixed_abs, tag = 'smem constant byte address 0x4 - core index']
  #allocation1 [shape = 'u32[144,128]{1,0:T(1,128)}', space=vmem, size = 0x12000, scoped, tag = 'internal scratch']
  %s0 = inlined_call_operand.hbm [shape: f32[84], index: 0, kind: input, shape index: {}]
  %s1 = inlined_call_operand.hbm [shape: f32[3,3,6,8,128], index: 1, kind: input, shape index: {}]
  %s2 = inlined_call_operand.hbm [shape: f32[2,3,8,128], index: 2, kind: input, shape index: {}]
  %s3 = inlined_call_operand.hbm [shape: f32[8,128], index: 3, kind: output, shape index: {}]
  %s4 = sld [smem:[#allocation0]]
  $region34: #{tpu_custom_call.1} parent=0
    _
  %s6 = ssub.s32 1, %s4
  %s7 = scalar_select 0, %s6, %s4
  $region1: #{tpu_custom_call.1} parent=0
    #allocation2 [shape = 'u8[512]{0}', space=smem, size = 0x200, scoped, tag = 'input window, operand 0, single buffered']
    #allocation3 [shape = 's32[1]{0}', space=sflag, size = 0x4, scoped, tag = 'scoped memory for tpu_custom_call.1']
    #allocation4 [shape = 's32[1]{0}', space=sflag, size = 0x4, scoped, tag = 'scoped memory for tpu_custom_call.1']
    #allocation5 [shape = 's32[1]{0}', space=sflag, size = 0x4, scoped, tag = 'scoped memory for tpu_custom_call.1']
    #allocation6 [shape = 'u8[221184]{0}', space=vmem, size = 0x36000, scoped, tag = 'input window, operand 1, single buffered']
    #allocation7 [shape = 'u8[24576]{0}', space=vmem, size = 0x6000, scoped, tag = 'input window, operand 2, single buffered']
    #allocation8 [shape = 's32[1]{0}', space=sflag, size = 0x4, scoped, tag = 'scoped memory for tpu_custom_call.1']
    #allocation9 [shape = 'u8[4096]{0}', space=vmem, size = 0x1000, scoped, tag = 'output window, operand 0, single buffered']
    %8 = vsyncpa [#allocation5], 0
    %9 = vsyncpa [#allocation3], 0
    %10 = vsyncpa [#allocation8], 0
    %11 = vsyncpa [#allocation4], 0
    // Predicated region
    $region2: #{tpu_custom_call.1} parent=1 // pred_check
      _
    $region3: #{tpu_custom_call.1} parent=1 // pred_check_branch
      %13 = sbr.rel (0) target = $region5
    $region4: #{tpu_custom_call.1} parent=1 // pred_region
      %s15 = ssub.s32 16, 16
      %16 = vsyncadd [#allocation5], %s15
      %19 = dma.hbm_to_smem %s0, 16, [#allocation2], [#allocation5]
    $region5: #{tpu_custom_call.1} parent=1 // pred_fallthru
      _
    // Predicated region
    $region6: #{tpu_custom_call.1} parent=1 // pred_check
      _
    $region7: #{tpu_custom_call.1} parent=1 // pred_check_branch
      %21 = sbr.rel (0) target = $region9
    $region8: #{tpu_custom_call.1} parent=1 // pred_region
      %s23 = ssub.s32 6912, 6912
      %24 = vsyncadd [#allocation3], %s23
      %s25 = sshll.u32 [#allocation6], 4
      %s26 = int_to_ptr.vmem [resolvable:$true] %s25
      %31 = dma.hbm_to_vmem [thread:$0]  %s1, 6912, %s26, [#allocation3], 128, 128, 8
    $region9: #{tpu_custom_call.1} parent=1 // pred_fallthru
      _
    // Predicated region
    $region10: #{tpu_custom_call.1} parent=1 // pred_check
      _
    $region11: #{tpu_custom_call.1} parent=1 // pred_check_branch
      %33 = sbr.rel (0) target = $region13
    $region12: #{tpu_custom_call.1} parent=1 // pred_region
      %s35 = ssub.s32 768, 768
      %36 = vsyncadd [#allocation8], %s35
      %s37 = sshll.u32 [#allocation7], 4
      %s38 = int_to_ptr.vmem [resolvable:$true] %s37
      %43 = dma.hbm_to_vmem [thread:$0]  %s2, 768, %s38, [#allocation8], 128, 128, 8
    $region13: #{tpu_custom_call.1} parent=1 // pred_fallthru
      _
    // Predicated region
    $region14: #{tpu_custom_call.1} parent=1 // pred_check
      _
    $region15: #{tpu_custom_call.1} parent=1 // pred_check_branch
      %45 = sbr.rel (0) target = $region17
    $region16: #{tpu_custom_call.1} parent=1 // pred_region
      %46 = dma.done [#allocation5], 16
    $region17: #{tpu_custom_call.1} parent=1 // pred_fallthru
      _
    // Predicated region
    $region18: #{tpu_custom_call.1} parent=1 // pred_check
      _
    $region19: #{tpu_custom_call.1} parent=1 // pred_check_branch
      %48 = sbr.rel (0) target = $region21
    $region20: #{tpu_custom_call.1} parent=1 // pred_region
      %49 = dma.done [#allocation3], 6912
    $region21: #{tpu_custom_call.1} parent=1 // pred_fallthru
      _
    // Predicated region
    $region22: #{tpu_custom_call.1} parent=1 // pred_check
      _
    $region23: #{tpu_custom_call.1} parent=1 // pred_check_branch
      %51 = sbr.rel (0) target = $region25
    $region24: #{tpu_custom_call.1} parent=1 // pred_region
      %52 = dma.done [#allocation8], 768
    $region25: #{tpu_custom_call.1} parent=1 // pred_fallthru
      _
    %53 = sfence
    %s54 = sld [smem:[#allocation2]]
    %s55 = sld [smem:[#allocation2 + $0x1]]
    %s56 = sld [smem:[#allocation2 + $0x2]]
    %s57 = sld [smem:[#allocation2 + $0x3]]
    %s58 = sld [smem:[#allocation2 + $0x4]]
    %s59 = sld [smem:[#allocation2 + $0x5]]
    %s60 = sld [smem:[#allocation2 + $0x6]]
    %s61 = sld [smem:[#allocation2 + $0x7]]
    %s62 = sld [smem:[#allocation2 + $0x8]]
    %s63 = sld [smem:[#allocation2 + $0x9]]
    %s64 = sld [smem:[#allocation2 + $0xa]]
    %s65 = sld [smem:[#allocation2 + $0xb]]
    %s66 = sld [smem:[#allocation2 + $0xc]]
    %s67 = sld [smem:[#allocation2 + $0xd]]
    %s68 = sld [smem:[#allocation2 + $0xe]]
    %s69 = sld [smem:[#allocation2 + $0xf]]
    %s70 = sld [smem:[#allocation2 + $0x10]]
    %s71 = sld [smem:[#allocation2 + $0x11]]
    %s72 = sld [smem:[#allocation2 + $0x12]]
    %s73 = sld [smem:[#allocation2 + $0x13]]
    %s74 = sld [smem:[#allocation2 + $0x14]]
    %s75 = sld [smem:[#allocation2 + $0x15]]
    %s76 = sld [smem:[#allocation2 + $0x16]]
    %s77 = sld [smem:[#allocation2 + $0x17]]
    %s78 = sld [smem:[#allocation2 + $0x18]]
    %s79 = sld [smem:[#allocation2 + $0x19]]
    %s80 = sld [smem:[#allocation2 + $0x1a]]
    %s81 = sld [smem:[#allocation2 + $0x1b]]
    %s82 = sld [smem:[#allocation2 + $0x1c]]
    %s83 = sld [smem:[#allocation2 + $0x1d]]
    %s84 = sld [smem:[#allocation2 + $0x1e]]
    %s85 = sld [smem:[#allocation2 + $0x1f]]
    %s86 = sld [smem:[#allocation2 + $0x20]]
    %s87 = sld [smem:[#allocation2 + $0x21]]
    %s88 = sld [smem:[#allocation2 + $0x22]]
    %s89 = sld [smem:[#allocation2 + $0x23]]
    %s90 = sld [smem:[#allocation2 + $0x24]]
    %s91 = sld [smem:[#allocation2 + $0x25]]
    %s92 = sld [smem:[#allocation2 + $0x26]]
    %s93 = sld [smem:[#allocation2 + $0x27]]
    %s94 = sld [smem:[#allocation2 + $0x28]]
    %s95 = sld [smem:[#allocation2 + $0x29]]
    %s96 = sld [smem:[#allocation2 + $0x2a]]
    %s97 = sld [smem:[#allocation2 + $0x2b]]
    %s98 = sld [smem:[#allocation2 + $0x2c]]
    %s99 = sld [smem:[#allocation2 + $0x2d]]
    %s100 = sld [smem:[#allocation2 + $0x2e]]
    %s101 = sld [smem:[#allocation2 + $0x2f]]
    %s102 = sld [smem:[#allocation2 + $0x30]]
    %s103 = sld [smem:[#allocation2 + $0x31]]
    %s104 = sld [smem:[#allocation2 + $0x32]]
    %s105 = sld [smem:[#allocation2 + $0x33]]
    %s106 = sld [smem:[#allocation2 + $0x34]]
    %s107 = sld [smem:[#allocation2 + $0x35]]
    %s108 = sld [smem:[#allocation2 + $0x36]]
    %s109 = sld [smem:[#allocation2 + $0x37]]
    %s110 = sld [smem:[#allocation2 + $0x38]]
    %s111 = sld [smem:[#allocation2 + $0x39]]
    %s112 = sld [smem:[#allocation2 + $0x3a]]
    %s113 = sld [smem:[#allocation2 + $0x3b]]
    %s114 = sld [smem:[#allocation2 + $0x3c]]
    %s115 = sld [smem:[#allocation2 + $0x3d]]
    %s116 = sld [smem:[#allocation2 + $0x3e]]
    %s117 = sld [smem:[#allocation2 + $0x3f]]
    %s118 = sld [smem:[#allocation2 + $0x40]]
    %s119 = sld [smem:[#allocation2 + $0x41]]
    %s120 = sld [smem:[#allocation2 + $0x42]]
    %s121 = sld [smem:[#allocation2 + $0x43]]
    %s122 = sld [smem:[#allocation2 + $0x44]]
    %s123 = sld [smem:[#allocation2 + $0x45]]
    %s124 = sld [smem:[#allocation2 + $0x46]]
    %s125 = sld [smem:[#allocation2 + $0x47]]
    %s126 = sld [smem:[#allocation2 + $0x48]]
    %s127 = sld [smem:[#allocation2 + $0x49]]
    %s128 = sld [smem:[#allocation2 + $0x4a]]
    %s129 = sld [smem:[#allocation2 + $0x4b]]
    %s130 = sld [smem:[#allocation2 + $0x4c]]
    %s131 = sld [smem:[#allocation2 + $0x4d]]
    %s132 = sld [smem:[#allocation2 + $0x4e]]
    %s133 = sld [smem:[#allocation2 + $0x4f]]
    %s134 = sld [smem:[#allocation2 + $0x50]]
    %s135 = sld [smem:[#allocation2 + $0x51]]
    %s136 = sld [smem:[#allocation2 + $0x52]]
    %s137 = sld [smem:[#allocation2 + $0x53]]
    %v138 = vld [vmem:[#allocation6] sm:$0xff]
    %s139 = scalar_lea.vmem [#allocation6], 144
    %v140 = vld [vmem:[%s139] sm:$0xff]
    %s141 = scalar_lea.vmem [#allocation6], 288
    %v142 = vld [vmem:[%s141] sm:$0xff]
    %v143 = vstv %s54
    %v144 = vmul.f32 %v138, %v143
    %v145 = vstv %s57
    %v146 = vmul.f32 %v140, %v145
    %v147 = vadd.f32 %v144, %v146
    %v148 = vstv %s60
    %v149 = vmul.f32 %v142, %v148
    %v150 = vadd.f32 %v147, %v149
    %v151 = vstv %s63
    %v152 = vadd.f32 %v150, %v151
    %v153 = vstv %s55
    %v154 = vmul.f32 %v138, %v153
    %v155 = vstv %s58
    %v156 = vmul.f32 %v140, %v155
    %v157 = vadd.f32 %v154, %v156
    %v158 = vstv %s61
    %v159 = vmul.f32 %v142, %v158
    %v160 = vadd.f32 %v157, %v159
    %v161 = vstv %s64
    %v162 = vadd.f32 %v160, %v161
    %v163 = vstv %s56
    %v164 = vmul.f32 %v138, %v163
    %v165 = vstv %s59
    %v166 = vmul.f32 %v140, %v165
    %v167 = vadd.f32 %v164, %v166
    %v168 = vstv %s62
    %v169 = vmul.f32 %v142, %v168
    %v170 = vadd.f32 %v167, %v169
    %v171 = vstv %s65
    %v172 = vadd.f32 %v170, %v171
    %vm173 = vcmp.gt.f32.partialorder %v152, 20.0
    %v174 = vmul.f32 %v152, 1.442695
    %v175 = vpow.pop %v174
    %v176 = vadd.f32 %v175, 1.0
    %v177 = vlog2.pop %v176
    %v178 = vmul.f32 %v177, 0.6931472
    %v179 = vmul.f32 -0.5, %v175
    %v180 = vadd.f32 %v179, 1.0
    %v181 = vmul.f32 %v180, %v175
    %v182 = vand.u32 2147483647, %v175
    %vm183 = vcmp.lt.f32.partialorder %v182, 0.0004427343
    %v184 = vsel %vm183, %v181, %v178
    %v185 = vsel %vm173, %v152, %v184
    %vm186 = vcmp.gt.f32.partialorder %v162, 20.0
    %v187 = vmul.f32 %v162, 1.442695
    %v188 = vpow.pop %v187
    %v189 = vadd.f32 %v188, 1.0
    %v190 = vlog2.pop %v189
    %v191 = vmul.f32 %v190, 0.6931472
    %v192 = vmul.f32 -0.5, %v188
    %v193 = vadd.f32 %v192, 1.0
    %v194 = vmul.f32 %v193, %v188
    %v195 = vand.u32 2147483647, %v188
    %vm196 = vcmp.lt.f32.partialorder %v195, 0.0004427343
    %v197 = vsel %vm196, %v194, %v191
    %v198 = vsel %vm186, %v162, %v197
    %vm199 = vcmp.gt.f32.partialorder %v172, 20.0
    %v200 = vmul.f32 %v172, 1.442695
    %v201 = vpow.pop %v200
    %v202 = vadd.f32 %v201, 1.0
    %v203 = vlog2.pop %v202
    %v204 = vmul.f32 %v203, 0.6931472
    %v205 = vmul.f32 -0.5, %v201
    %v206 = vadd.f32 %v205, 1.0
    %v207 = vmul.f32 %v206, %v201
    %v208 = vand.u32 2147483647, %v201
    %vm209 = vcmp.lt.f32.partialorder %v208, 0.0004427343
    %v210 = vsel %vm209, %v207, %v204
    %v211 = vsel %vm199, %v172, %v210
    %v212 = vstv %s66
    %v213 = vmul.f32 %v185, %v212
    %v214 = vstv %s69
    %v215 = vmul.f32 %v198, %v214
    %v216 = vadd.f32 %v213, %v215
    %v217 = vstv %s72
    %v218 = vmul.f32 %v211, %v217
    %v219 = vadd.f32 %v216, %v218
    %v220 = vstv %s75
    %v221 = vadd.f32 %v219, %v220
    %v222 = vstv %s67
    %v223 = vmul.f32 %v185, %v222
    %v224 = vstv %s70
    %v225 = vmul.f32 %v198, %v224
    %v226 = vadd.f32 %v223, %v225
    %v227 = vstv %s73
    %v228 = vmul.f32 %v211, %v227
    %v229 = vadd.f32 %v226, %v228
    %v230 = vstv %s76
    %v231 = vadd.f32 %v229, %v230
    %v232 = vstv %s68
    %v233 = vmul.f32 %v185, %v232
    %v234 = vstv %s71
    %v235 = vmul.f32 %v198, %v234
    %v236 = vadd.f32 %v233, %v235
    %v237 = vstv %s74
    %v238 = vmul.f32 %v211, %v237
    %v239 = vadd.f32 %v236, %v238
    %v240 = vstv %s77
    %v241 = vadd.f32 %v239, %v240
    %vm242 = vcmp.gt.f32.partialorder %v221, 20.0
    %v243 = vmul.f32 %v221, 1.442695
    %v244 = vpow.pop %v243
    %v245 = vadd.f32 %v244, 1.0
    %v246 = vlog2.pop %v245
    %v247 = vmul.f32 %v246, 0.6931472
    %v248 = vmul.f32 -0.5, %v244
    %v249 = vadd.f32 %v248, 1.0
    %v250 = vmul.f32 %v249, %v244
    %v251 = vand.u32 2147483647, %v244
    %vm252 = vcmp.lt.f32.partialorder %v251, 0.0004427343
    %v253 = vsel %vm252, %v250, %v247
    %v254 = vsel %vm242, %v221, %v253
    %vm255 = vcmp.gt.f32.partialorder %v231, 20.0
    %v256 = vmul.f32 %v231, 1.442695
    %v257 = vpow.pop %v256
    %v258 = vadd.f32 %v257, 1.0
    %v259 = vlog2.pop %v258
    %v260 = vmul.f32 %v259, 0.6931472
    %v261 = vmul.f32 -0.5, %v257
    %v262 = vadd.f32 %v261, 1.0
    %v263 = vmul.f32 %v262, %v257
    %v264 = vand.u32 2147483647, %v257
    %vm265 = vcmp.lt.f32.partialorder %v264, 0.0004427343
    %v266 = vsel %vm265, %v263, %v260
    %v267 = vsel %vm255, %v231, %v266
    %vm268 = vcmp.gt.f32.partialorder %v241, 20.0
    %v269 = vmul.f32 %v241, 1.442695
    %v270 = vpow.pop %v269
    %v271 = vadd.f32 %v270, 1.0
    %v272 = vlog2.pop %v271
    %v273 = vmul.f32 %v272, 0.6931472
    %v274 = vmul.f32 -0.5, %v270
    %v275 = vadd.f32 %v274, 1.0
    %v276 = vmul.f32 %v275, %v270
    %v277 = vand.u32 2147483647, %v270
    %vm278 = vcmp.lt.f32.partialorder %v277, 0.0004427343
    %v279 = vsel %vm278, %v276, %v273
    %v280 = vsel %vm268, %v241, %v279
    %v281 = vstv %s78
    %v282 = vmul.f32 %v254, %v281
    %v283 = vstv %s79
    %v284 = vmul.f32 %v267, %v283
    %v285 = vadd.f32 %v282, %v284
    %v286 = vstv %s80
    %v287 = vmul.f32 %v280, %v286
    %v288 = vadd.f32 %v285, %v287
    %v289 = vstv %s81
    %v290 = vadd.f32 %v288, %v289
    %s291 = scalar_lea.vmem [#allocation6], 8
    %v292 = vld [vmem:[%s291] sm:$0xff]
    %s293 = scalar_lea.vmem [#allocation6], 152
    %v294 = vld [vmem:[%s293] sm:$0xff]
    %s295 = scalar_lea.vmem [#allocation6], 296
    %v296 = vld [vmem:[%s295] sm:$0xff]
    %v297 = vmul.f32 %v292, %v143
    %v298 = vmul.f32 %v294, %v145
    %v299 = vadd.f32 %v297, %v298
    %v300 = vmul.f32 %v296, %v148
    %v301 = vadd.f32 %v299, %v300
    %v302 = vadd.f32 %v301, %v151
    %v303 = vmul.f32 %v292, %v153
    %v304 = vmul.f32 %v294, %v155
    %v305 = vadd.f32 %v303, %v304
    %v306 = vmul.f32 %v296, %v158
    %v307 = vadd.f32 %v305, %v306
    %v308 = vadd.f32 %v307, %v161
    %v309 = vmul.f32 %v292, %v163
    %v310 = vmul.f32 %v294, %v165
    %v311 = vadd.f32 %v309, %v310
    %v312 = vmul.f32 %v296, %v168
    %v313 = vadd.f32 %v311, %v312
    %v314 = vadd.f32 %v313, %v171
    %vm315 = vcmp.gt.f32.partialorder %v302, 20.0
    %v316 = vmul.f32 %v302, 1.442695
    %v317 = vpow.pop %v316
    %v318 = vadd.f32 %v317, 1.0
    %v319 = vlog2.pop %v318
    %v320 = vmul.f32 %v319, 0.6931472
    %v321 = vmul.f32 -0.5, %v317
    %v322 = vadd.f32 %v321, 1.0
    %v323 = vmul.f32 %v322, %v317
    %v324 = vand.u32 2147483647, %v317
    %vm325 = vcmp.lt.f32.partialorder %v324, 0.0004427343
    %v326 = vsel %vm325, %v323, %v320
    %v327 = vsel %vm315, %v302, %v326
    %vm328 = vcmp.gt.f32.partialorder %v308, 20.0
    %v329 = vmul.f32 %v308, 1.442695
    %v330 = vpow.pop %v329
    %v331 = vadd.f32 %v330, 1.0
    %v332 = vlog2.pop %v331
    %v333 = vmul.f32 %v332, 0.6931472
    %v334 = vmul.f32 -0.5, %v330
    %v335 = vadd.f32 %v334, 1.0
    %v336 = vmul.f32 %v335, %v330
    %v337 = vand.u32 2147483647, %v330
    %vm338 = vcmp.lt.f32.partialorder %v337, 0.0004427343
    %v339 = vsel %vm338, %v336, %v333
    %v340 = vsel %vm328, %v308, %v339
    %vm341 = vcmp.gt.f32.partialorder %v314, 20.0
    %v342 = vmul.f32 %v314, 1.442695
    %v343 = vpow.pop %v342
    %v344 = vadd.f32 %v343, 1.0
    %v345 = vlog2.pop %v344
    %v346 = vmul.f32 %v345, 0.6931472
    %v347 = vmul.f32 -0.5, %v343
    %v348 = vadd.f32 %v347, 1.0
    %v349 = vmul.f32 %v348, %v343
    %v350 = vand.u32 2147483647, %v343
    %vm351 = vcmp.lt.f32.partialorder %v350, 0.0004427343
    %v352 = vsel %vm351, %v349, %v346
    %v353 = vsel %vm341, %v314, %v352
    %v354 = vmul.f32 %v327, %v212
    %v355 = vmul.f32 %v340, %v214
    %v356 = vadd.f32 %v354, %v355
    %v357 = vmul.f32 %v353, %v217
    %v358 = vadd.f32 %v356, %v357
    %v359 = vadd.f32 %v358, %v220
    %v360 = vmul.f32 %v327, %v222
    %v361 = vmul.f32 %v340, %v224
    %v362 = vadd.f32 %v360, %v361
    %v363 = vmul.f32 %v353, %v227
    %v364 = vadd.f32 %v362, %v363
    %v365 = vadd.f32 %v364, %v230
    %v366 = vmul.f32 %v327, %v232
    %v367 = vmul.f32 %v340, %v234
    %v368 = vadd.f32 %v366, %v367
    %v369 = vmul.f32 %v353, %v237
    %v370 = vadd.f32 %v368, %v369
    %v371 = vadd.f32 %v370, %v240
    %vm372 = vcmp.gt.f32.partialorder %v359, 20.0
    %v373 = vmul.f32 %v359, 1.442695
    %v374 = vpow.pop %v373
    %v375 = vadd.f32 %v374, 1.0
    %v376 = vlog2.pop %v375
    %v377 = vmul.f32 %v376, 0.6931472
    %v378 = vmul.f32 -0.5, %v374
    %v379 = vadd.f32 %v378, 1.0
    %v380 = vmul.f32 %v379, %v374
    %v381 = vand.u32 2147483647, %v374
    %vm382 = vcmp.lt.f32.partialorder %v381, 0.0004427343
    %v383 = vsel %vm382, %v380, %v377
    %v384 = vsel %vm372, %v359, %v383
    %vm385 = vcmp.gt.f32.partialorder %v365, 20.0
    %v386 = vmul.f32 %v365, 1.442695
    %v387 = vpow.pop %v386
    %v388 = vadd.f32 %v387, 1.0
    %v389 = vlog2.pop %v388
    %v390 = vmul.f32 %v389, 0.6931472
    %v391 = vmul.f32 -0.5, %v387
    %v392 = vadd.f32 %v391, 1.0
    %v393 = vmul.f32 %v392, %v387
    %v394 = vand.u32 2147483647, %v387
    %vm395 = vcmp.lt.f32.partialorder %v394, 0.0004427343
    %v396 = vsel %vm395, %v393, %v390
    %v397 = vsel %vm385, %v365, %v396
    %vm398 = vcmp.gt.f32.partialorder %v371, 20.0
    %v399 = vmul.f32 %v371, 1.442695
    %v400 = vpow.pop %v399
    %v401 = vadd.f32 %v400, 1.0
    %v402 = vlog2.pop %v401
    %v403 = vmul.f32 %v402, 0.6931472
    %v404 = vmul.f32 -0.5, %v400
    %v405 = vadd.f32 %v404, 1.0
    %v406 = vmul.f32 %v405, %v400
    %v407 = vand.u32 2147483647, %v400
    %vm408 = vcmp.lt.f32.partialorder %v407, 0.0004427343
    %v409 = vsel %vm408, %v406, %v403
    %v410 = vsel %vm398, %v371, %v409
    %v411 = vmul.f32 %v384, %v281
    %v412 = vmul.f32 %v397, %v283
    %v413 = vadd.f32 %v411, %v412
    %v414 = vmul.f32 %v410, %v286
    %v415 = vadd.f32 %v413, %v414
    %v416 = vadd.f32 %v415, %v289
    %v417 = vadd.f32 %v290, %v416
    %s418 = scalar_lea.vmem [#allocation6], 16
    %v419 = vld [vmem:[%s418] sm:$0xff]
    %s420 = scalar_lea.vmem [#allocation6], 160
    %v421 = vld [vmem:[%s420] sm:$0xff]
    %s422 = scalar_lea.vmem [#allocation6], 304
    %v423 = vld [vmem:[%s422] sm:$0xff]
    %v424 = vmul.f32 %v419, %v143
    %v425 = vmul.f32 %v421, %v145
    %v426 = vadd.f32 %v424, %v425
    %v427 = vmul.f32 %v423, %v148
    %v428 = vadd.f32 %v426, %v427
    %v429 = vadd.f32 %v428, %v151
    %v430 = vmul.f32 %v419, %v153
    %v431 = vmul.f32 %v421, %v155
    %v432 = vadd.f32 %v430, %v431
    %v433 = vmul.f32 %v423, %v158
    %v434 = vadd.f32 %v432, %v433
    %v435 = vadd.f32 %v434, %v161
    %v436 = vmul.f32 %v419, %v163
    %v437 = vmul.f32 %v421, %v165
    %v438 = vadd.f32 %v436, %v437
    %v439 = vmul.f32 %v423, %v168
    %v440 = vadd.f32 %v438, %v439
    %v441 = vadd.f32 %v440, %v171
    %vm442 = vcmp.gt.f32.partialorder %v429, 20.0
    %v443 = vmul.f32 %v429, 1.442695
    %v444 = vpow.pop %v443
    %v445 = vadd.f32 %v444, 1.0
    %v446 = vlog2.pop %v445
    %v447 = vmul.f32 %v446, 0.6931472
    %v448 = vmul.f32 -0.5, %v444
    %v449 = vadd.f32 %v448, 1.0
    %v450 = vmul.f32 %v449, %v444
    %v451 = vand.u32 2147483647, %v444
    %vm452 = vcmp.lt.f32.partialorder %v451, 0.0004427343
    %v453 = vsel %vm452, %v450, %v447
    %v454 = vsel %vm442, %v429, %v453
    %vm455 = vcmp.gt.f32.partialorder %v435, 20.0
    %v456 = vmul.f32 %v435, 1.442695
    %v457 = vpow.pop %v456
    %v458 = vadd.f32 %v457, 1.0
    %v459 = vlog2.pop %v458
    %v460 = vmul.f32 %v459, 0.6931472
    %v461 = vmul.f32 -0.5, %v457
    %v462 = vadd.f32 %v461, 1.0
    %v463 = vmul.f32 %v462, %v457
    %v464 = vand.u32 2147483647, %v457
    %vm465 = vcmp.lt.f32.partialorder %v464, 0.0004427343
    %v466 = vsel %vm465, %v463, %v460
    %v467 = vsel %vm455, %v435, %v466
    %vm468 = vcmp.gt.f32.partialorder %v441, 20.0
    %v469 = vmul.f32 %v441, 1.442695
    %v470 = vpow.pop %v469
    %v471 = vadd.f32 %v470, 1.0
    %v472 = vlog2.pop %v471
    %v473 = vmul.f32 %v472, 0.6931472
    %v474 = vmul.f32 -0.5, %v470
    %v475 = vadd.f32 %v474, 1.0
    %v476 = vmul.f32 %v475, %v470
    %v477 = vand.u32 2147483647, %v470
    %vm478 = vcmp.lt.f32.partialorder %v477, 0.0004427343
    %v479 = vsel %vm478, %v476, %v473
    %v480 = vsel %vm468, %v441, %v479
    %v481 = vmul.f32 %v454, %v212
    %v482 = vmul.f32 %v467, %v214
    %v483 = vadd.f32 %v481, %v482
    %v484 = vmul.f32 %v480, %v217
    %v485 = vadd.f32 %v483, %v484
    %v486 = vadd.f32 %v485, %v220
    %v487 = vmul.f32 %v454, %v222
    %v488 = vmul.f32 %v467, %v224
    %v489 = vadd.f32 %v487, %v488
    %v490 = vmul.f32 %v480, %v227
    %v491 = vadd.f32 %v489, %v490
    %v492 = vadd.f32 %v491, %v230
    %v493 = vmul.f32 %v454, %v232
    %v494 = vmul.f32 %v467, %v234
    %v495 = vadd.f32 %v493, %v494
    %v496 = vmul.f32 %v480, %v237
    %v497 = vadd.f32 %v495, %v496
    %v498 = vadd.f32 %v497, %v240
    %vm499 = vcmp.gt.f32.partialorder %v486, 20.0
    %v500 = vmul.f32 %v486, 1.442695
    %v501 = vpow.pop %v500
    %v502 = vadd.f32 %v501, 1.0
    %v503 = vlog2.pop %v502
    %v504 = vmul.f32 %v503, 0.6931472
    %v505 = vmul.f32 -0.5, %v501
    %v506 = vadd.f32 %v505, 1.0
    %v507 = vmul.f32 %v506, %v501
    %v508 = vand.u32 2147483647, %v501
    %vm509 = vcmp.lt.f32.partialorder %v508, 0.0004427343
    %v510 = vsel %vm509, %v507, %v504
    %v511 = vsel %vm499, %v486, %v510
    %vm512 = vcmp.gt.f32.partialorder %v492, 20.0
    %v513 = vmul.f32 %v492, 1.442695
    %v514 = vpow.pop %v513
    %v515 = vadd.f32 %v514, 1.0
    %v516 = vlog2.pop %v515
    %v517 = vmul.f32 %v516, 0.6931472
    %v518 = vmul.f32 -0.5, %v514
    %v519 = vadd.f32 %v518, 1.0
    %v520 = vmul.f32 %v519, %v514
    %v521 = vand.u32 2147483647, %v514
    %vm522 = vcmp.lt.f32.partialorder %v521, 0.0004427343
    %v523 = vsel %vm522, %v520, %v517
    %v524 = vsel %vm512, %v492, %v523
    %vm525 = vcmp.gt.f32.partialorder %v498, 20.0
    %v526 = vmul.f32 %v498, 1.442695
    %v527 = vpow.pop %v526
    %v528 = vadd.f32 %v527, 1.0
    %v529 = vlog2.pop %v528
    %v530 = vmul.f32 %v529, 0.6931472
    %v531 = vmul.f32 -0.5, %v527
    %v532 = vadd.f32 %v531, 1.0
    %v533 = vmul.f32 %v532, %v527
    %v534 = vand.u32 2147483647, %v527
    %vm535 = vcmp.lt.f32.partialorder %v534, 0.0004427343
    %v536 = vsel %vm535, %v533, %v530
    %v537 = vsel %vm525, %v498, %v536
    %v538 = vmul.f32 %v511, %v281
    %v539 = vmul.f32 %v524, %v283
    %v540 = vadd.f32 %v538, %v539
    %v541 = vmul.f32 %v537, %v286
    %v542 = vadd.f32 %v540, %v541
    %v543 = vadd.f32 %v542, %v289
    %v544 = vadd.f32 %v417, %v543
    %s545 = scalar_lea.vmem [#allocation6], 24
    %v546 = vld [vmem:[%s545] sm:$0xff]
    %s547 = scalar_lea.vmem [#allocation6], 168
    %v548 = vld [vmem:[%s547] sm:$0xff]
    %s549 = scalar_lea.vmem [#allocation6], 312
    %v550 = vld [vmem:[%s549] sm:$0xff]
    %v551 = vmul.f32 %v546, %v143
    %v552 = vmul.f32 %v548, %v145
    %v553 = vadd.f32 %v551, %v552
    %v554 = vmul.f32 %v550, %v148
    %v555 = vadd.f32 %v553, %v554
    %v556 = vadd.f32 %v555, %v151
    %v557 = vmul.f32 %v546, %v153
    %v558 = vmul.f32 %v548, %v155
    %v559 = vadd.f32 %v557, %v558
    %v560 = vmul.f32 %v550, %v158
    %v561 = vadd.f32 %v559, %v560
    %v562 = vadd.f32 %v561, %v161
    %v563 = vmul.f32 %v546, %v163
    %v564 = vmul.f32 %v548, %v165
    %v565 = vadd.f32 %v563, %v564
    %v566 = vmul.f32 %v550, %v168
    %v567 = vadd.f32 %v565, %v566
    %v568 = vadd.f32 %v567, %v171
    %vm569 = vcmp.gt.f32.partialorder %v556, 20.0
    %v570 = vmul.f32 %v556, 1.442695
    %v571 = vpow.pop %v570
    %v572 = vadd.f32 %v571, 1.0
    %v573 = vlog2.pop %v572
    %v574 = vmul.f32 %v573, 0.6931472
    %v575 = vmul.f32 -0.5, %v571
    %v576 = vadd.f32 %v575, 1.0
    %v577 = vmul.f32 %v576, %v571
    %v578 = vand.u32 2147483647, %v571
    %vm579 = vcmp.lt.f32.partialorder %v578, 0.0004427343
    %v580 = vsel %vm579, %v577, %v574
    %v581 = vsel %vm569, %v556, %v580
    %vm582 = vcmp.gt.f32.partialorder %v562, 20.0
    %v583 = vmul.f32 %v562, 1.442695
    %v584 = vpow.pop %v583
    %v585 = vadd.f32 %v584, 1.0
    %v586 = vlog2.pop %v585
    %v587 = vmul.f32 %v586, 0.6931472
    %v588 = vmul.f32 -0.5, %v584
    %v589 = vadd.f32 %v588, 1.0
    %v590 = vmul.f32 %v589, %v584
    %v591 = vand.u32 2147483647, %v584
    %vm592 = vcmp.lt.f32.partialorder %v591, 0.0004427343
    %v593 = vsel %vm592, %v590, %v587
    %v594 = vsel %vm582, %v562, %v593
    %vm595 = vcmp.gt.f32.partialorder %v568, 20.0
    %v596 = vmul.f32 %v568, 1.442695
    %v597 = vpow.pop %v596
    %v598 = vadd.f32 %v597, 1.0
    %v599 = vlog2.pop %v598
    %v600 = vmul.f32 %v599, 0.6931472
    %v601 = vmul.f32 -0.5, %v597
    %v602 = vadd.f32 %v601, 1.0
    %v603 = vmul.f32 %v602, %v597
    %v604 = vand.u32 2147483647, %v597
    %vm605 = vcmp.lt.f32.partialorder %v604, 0.0004427343
    %v606 = vsel %vm605, %v603, %v600
    %v607 = vsel %vm595, %v568, %v606
    %v608 = vmul.f32 %v581, %v212
    %v609 = vmul.f32 %v594, %v214
    %v610 = vadd.f32 %v608, %v609
    %v611 = vmul.f32 %v607, %v217
    %v612 = vadd.f32 %v610, %v611
    %v613 = vadd.f32 %v612, %v220
    %v614 = vmul.f32 %v581, %v222
    %v615 = vmul.f32 %v594, %v224
    %v616 = vadd.f32 %v614, %v615
    %v617 = vmul.f32 %v607, %v227
    %v618 = vadd.f32 %v616, %v617
    %v619 = vadd.f32 %v618, %v230
    %v620 = vmul.f32 %v581, %v232
    %v621 = vmul.f32 %v594, %v234
    %v622 = vadd.f32 %v620, %v621
    %v623 = vmul.f32 %v607, %v237
    %v624 = vadd.f32 %v622, %v623
    %v625 = vadd.f32 %v624, %v240
    %vm626 = vcmp.gt.f32.partialorder %v613, 20.0
    %v627 = vmul.f32 %v613, 1.442695
    %v628 = vpow.pop %v627
    %v629 = vadd.f32 %v628, 1.0
    %v630 = vlog2.pop %v629
    %v631 = vmul.f32 %v630, 0.6931472
    %v632 = vmul.f32 -0.5, %v628
    %v633 = vadd.f32 %v632, 1.0
    %v634 = vmul.f32 %v633, %v628
    %v635 = vand.u32 2147483647, %v628
    %vm636 = vcmp.lt.f32.partialorder %v635, 0.0004427343
    %v637 = vsel %vm636, %v634, %v631
    %v638 = vsel %vm626, %v613, %v637
    %vm639 = vcmp.gt.f32.partialorder %v619, 20.0
    %v640 = vmul.f32 %v619, 1.442695
    %v641 = vpow.pop %v640
    %v642 = vadd.f32 %v641, 1.0
    %v643 = vlog2.pop %v642
    %v644 = vmul.f32 %v643, 0.6931472
    %v645 = vmul.f32 -0.5, %v641
    %v646 = vadd.f32 %v645, 1.0
    %v647 = vmul.f32 %v646, %v641
    %v648 = vand.u32 2147483647, %v641
    %vm649 = vcmp.lt.f32.partialorder %v648, 0.0004427343
    %v650 = vsel %vm649, %v647, %v644
    %v651 = vsel %vm639, %v619, %v650
    %vm652 = vcmp.gt.f32.partialorder %v625, 20.0
    %v653 = vmul.f32 %v625, 1.442695
    %v654 = vpow.pop %v653
    %v655 = vadd.f32 %v654, 1.0
    %v656 = vlog2.pop %v655
    %v657 = vmul.f32 %v656, 0.6931472
    %v658 = vmul.f32 -0.5, %v654
    %v659 = vadd.f32 %v658, 1.0
    %v660 = vmul.f32 %v659, %v654
    %v661 = vand.u32 2147483647, %v654
    %vm662 = vcmp.lt.f32.partialorder %v661, 0.0004427343
    %v663 = vsel %vm662, %v660, %v657
    %v664 = vsel %vm652, %v625, %v663
    %v665 = vmul.f32 %v638, %v281
    %v666 = vmul.f32 %v651, %v283
    %v667 = vadd.f32 %v665, %v666
    %v668 = vmul.f32 %v664, %v286
    %v669 = vadd.f32 %v667, %v668
    %v670 = vadd.f32 %v669, %v289
    %v671 = vadd.f32 %v544, %v670
    %s672 = scalar_lea.vmem [#allocation6], 32
    %v673 = vld [vmem:[%s672] sm:$0xff]
    %s674 = scalar_lea.vmem [#allocation6], 176
    %v675 = vld [vmem:[%s674] sm:$0xff]
    %s676 = scalar_lea.vmem [#allocation6], 320
    %v677 = vld [vmem:[%s676] sm:$0xff]
    %v678 = vmul.f32 %v673, %v143
    %v679 = vmul.f32 %v675, %v145
    %v680 = vadd.f32 %v678, %v679
    %v681 = vmul.f32 %v677, %v148
    %v682 = vadd.f32 %v680, %v681
    %v683 = vadd.f32 %v682, %v151
    %v684 = vmul.f32 %v673, %v153
    %v685 = vmul.f32 %v675, %v155
    %v686 = vadd.f32 %v684, %v685
    %v687 = vmul.f32 %v677, %v158
    %v688 = vadd.f32 %v686, %v687
    %v689 = vadd.f32 %v688, %v161
    %v690 = vmul.f32 %v673, %v163
    %v691 = vmul.f32 %v675, %v165
    %v692 = vadd.f32 %v690, %v691
    %v693 = vmul.f32 %v677, %v168
    %v694 = vadd.f32 %v692, %v693
    %v695 = vadd.f32 %v694, %v171
    %vm696 = vcmp.gt.f32.partialorder %v683, 20.0
    %v697 = vmul.f32 %v683, 1.442695
    %v698 = vpow.pop %v697
    %v699 = vadd.f32 %v698, 1.0
    %v700 = vlog2.pop %v699
    %v701 = vmul.f32 %v700, 0.6931472
    %v702 = vmul.f32 -0.5, %v698
    %v703 = vadd.f32 %v702, 1.0
    %v704 = vmul.f32 %v703, %v698
    %v705 = vand.u32 2147483647, %v698
    %vm706 = vcmp.lt.f32.partialorder %v705, 0.0004427343
    %v707 = vsel %vm706, %v704, %v701
    %v708 = vsel %vm696, %v683, %v707
    %vm709 = vcmp.gt.f32.partialorder %v689, 20.0
    %v710 = vmul.f32 %v689, 1.442695
    %v711 = vpow.pop %v710
    %v712 = vadd.f32 %v711, 1.0
    %v713 = vlog2.pop %v712
    %v714 = vmul.f32 %v713, 0.6931472
    %v715 = vmul.f32 -0.5, %v711
    %v716 = vadd.f32 %v715, 1.0
    %v717 = vmul.f32 %v716, %v711
    %v718 = vand.u32 2147483647, %v711
    %vm719 = vcmp.lt.f32.partialorder %v718, 0.0004427343
    %v720 = vsel %vm719, %v717, %v714
    %v721 = vsel %vm709, %v689, %v720
    %vm722 = vcmp.gt.f32.partialorder %v695, 20.0
    %v723 = vmul.f32 %v695, 1.442695
    %v724 = vpow.pop %v723
    %v725 = vadd.f32 %v724, 1.0
    %v726 = vlog2.pop %v725
    %v727 = vmul.f32 %v726, 0.6931472
    %v728 = vmul.f32 -0.5, %v724
    %v729 = vadd.f32 %v728, 1.0
    %v730 = vmul.f32 %v729, %v724
    %v731 = vand.u32 2147483647, %v724
    %vm732 = vcmp.lt.f32.partialorder %v731, 0.0004427343
    %v733 = vsel %vm732, %v730, %v727
    %v734 = vsel %vm722, %v695, %v733
    %v735 = vmul.f32 %v708, %v212
    %v736 = vmul.f32 %v721, %v214
    %v737 = vadd.f32 %v735, %v736
    %v738 = vmul.f32 %v734, %v217
    %v739 = vadd.f32 %v737, %v738
    %v740 = vadd.f32 %v739, %v220
    %v741 = vmul.f32 %v708, %v222
    %v742 = vmul.f32 %v721, %v224
    %v743 = vadd.f32 %v741, %v742
    %v744 = vmul.f32 %v734, %v227
    %v745 = vadd.f32 %v743, %v744
    %v746 = vadd.f32 %v745, %v230
    %v747 = vmul.f32 %v708, %v232
    %v748 = vmul.f32 %v721, %v234
    %v749 = vadd.f32 %v747, %v748
    %v750 = vmul.f32 %v734, %v237
    %v751 = vadd.f32 %v749, %v750
    %v752 = vadd.f32 %v751, %v240
    %vm753 = vcmp.gt.f32.partialorder %v740, 20.0
    %v754 = vmul.f32 %v740, 1.442695
    %v755 = vpow.pop %v754
    %v756 = vadd.f32 %v755, 1.0
    %v757 = vlog2.pop %v756
    %v758 = vmul.f32 %v757, 0.6931472
    %v759 = vmul.f32 -0.5, %v755
    %v760 = vadd.f32 %v759, 1.0
    %v761 = vmul.f32 %v760, %v755
    %v762 = vand.u32 2147483647, %v755
    %vm763 = vcmp.lt.f32.partialorder %v762, 0.0004427343
    %v764 = vsel %vm763, %v761, %v758
    %v765 = vsel %vm753, %v740, %v764
    %vm766 = vcmp.gt.f32.partialorder %v746, 20.0
    %v767 = vmul.f32 %v746, 1.442695
    %v768 = vpow.pop %v767
    %v769 = vadd.f32 %v768, 1.0
    %v770 = vlog2.pop %v769
    %v771 = vmul.f32 %v770, 0.6931472
    %v772 = vmul.f32 -0.5, %v768
    %v773 = vadd.f32 %v772, 1.0
    %v774 = vmul.f32 %v773, %v768
    %v775 = vand.u32 2147483647, %v768
    %vm776 = vcmp.lt.f32.partialorder %v775, 0.0004427343
    %v777 = vsel %vm776, %v774, %v771
    %v778 = vsel %vm766, %v746, %v777
    %vm779 = vcmp.gt.f32.partialorder %v752, 20.0
    %v780 = vmul.f32 %v752, 1.442695
    %v781 = vpow.pop %v780
    %v782 = vadd.f32 %v781, 1.0
    %v783 = vlog2.pop %v782
    %v784 = vmul.f32 %v783, 0.6931472
    %v785 = vmul.f32 -0.5, %v781
    %v786 = vadd.f32 %v785, 1.0
    %v787 = vmul.f32 %v786, %v781
    %v788 = vand.u32 2147483647, %v781
    %vm789 = vcmp.lt.f32.partialorder %v788, 0.0004427343
    %v790 = vsel %vm789, %v787, %v784
    %v791 = vsel %vm779, %v752, %v790
    %v792 = vmul.f32 %v765, %v281
    %v793 = vmul.f32 %v778, %v283
    %v794 = vadd.f32 %v792, %v793
    %v795 = vmul.f32 %v791, %v286
    %v796 = vadd.f32 %v794, %v795
    %v797 = vadd.f32 %v796, %v289
    %v798 = vadd.f32 %v671, %v797
    %s799 = scalar_lea.vmem [#allocation6], 40
    %v800 = vld [vmem:[%s799] sm:$0xff]
    %s801 = scalar_lea.vmem [#allocation6], 184
    %v802 = vld [vmem:[%s801] sm:$0xff]
    %s803 = scalar_lea.vmem [#allocation6], 328
    %v804 = vld [vmem:[%s803] sm:$0xff]
    %v805 = vmul.f32 %v800, %v143
    %v806 = vmul.f32 %v802, %v145
    %v807 = vadd.f32 %v805, %v806
    %v808 = vmul.f32 %v804, %v148
    %v809 = vadd.f32 %v807, %v808
    %v810 = vadd.f32 %v809, %v151
    %v811 = vmul.f32 %v800, %v153
    %v812 = vmul.f32 %v802, %v155
    %v813 = vadd.f32 %v811, %v812
    %v814 = vmul.f32 %v804, %v158
    %v815 = vadd.f32 %v813, %v814
    %v816 = vadd.f32 %v815, %v161
    %v817 = vmul.f32 %v800, %v163
    %v818 = vmul.f32 %v802, %v165
    %v819 = vadd.f32 %v817, %v818
    %v820 = vmul.f32 %v804, %v168
    %v821 = vadd.f32 %v819, %v820
    %v822 = vadd.f32 %v821, %v171
    %vm823 = vcmp.gt.f32.partialorder %v810, 20.0
    %v824 = vmul.f32 %v810, 1.442695
    %v825 = vpow.pop %v824
    %v826 = vadd.f32 %v825, 1.0
    %v827 = vlog2.pop %v826
    %v828 = vmul.f32 %v827, 0.6931472
    %v829 = vmul.f32 -0.5, %v825
    %v830 = vadd.f32 %v829, 1.0
    %v831 = vmul.f32 %v830, %v825
    %v832 = vand.u32 2147483647, %v825
    %vm833 = vcmp.lt.f32.partialorder %v832, 0.0004427343
    %v834 = vsel %vm833, %v831, %v828
    %v835 = vsel %vm823, %v810, %v834
    %vm836 = vcmp.gt.f32.partialorder %v816, 20.0
    %v837 = vmul.f32 %v816, 1.442695
    %v838 = vpow.pop %v837
    %v839 = vadd.f32 %v838, 1.0
    %v840 = vlog2.pop %v839
    %v841 = vmul.f32 %v840, 0.6931472
    %v842 = vmul.f32 -0.5, %v838
    %v843 = vadd.f32 %v842, 1.0
    %v844 = vmul.f32 %v843, %v838
    %v845 = vand.u32 2147483647, %v838
    %vm846 = vcmp.lt.f32.partialorder %v845, 0.0004427343
    %v847 = vsel %vm846, %v844, %v841
    %v848 = vsel %vm836, %v816, %v847
    %vm849 = vcmp.gt.f32.partialorder %v822, 20.0
    %v850 = vmul.f32 %v822, 1.442695
    %v851 = vpow.pop %v850
    %v852 = vadd.f32 %v851, 1.0
    %v853 = vlog2.pop %v852
    %v854 = vmul.f32 %v853, 0.6931472
    %v855 = vmul.f32 -0.5, %v851
    %v856 = vadd.f32 %v855, 1.0
    %v857 = vmul.f32 %v856, %v851
    %v858 = vand.u32 2147483647, %v851
    %vm859 = vcmp.lt.f32.partialorder %v858, 0.0004427343
    %v860 = vsel %vm859, %v857, %v854
    %v861 = vsel %vm849, %v822, %v860
    %v862 = vmul.f32 %v835, %v212
    %v863 = vmul.f32 %v848, %v214
    %v864 = vadd.f32 %v862, %v863
    %v865 = vmul.f32 %v861, %v217
    %v866 = vadd.f32 %v864, %v865
    %v867 = vadd.f32 %v866, %v220
    %v868 = vmul.f32 %v835, %v222
    %v869 = vmul.f32 %v848, %v224
    %v870 = vadd.f32 %v868, %v869
    %v871 = vmul.f32 %v861, %v227
    %v872 = vadd.f32 %v870, %v871
    %v873 = vadd.f32 %v872, %v230
    %v874 = vmul.f32 %v835, %v232
    %v875 = vmul.f32 %v848, %v234
    %v876 = vadd.f32 %v874, %v875
    %v877 = vmul.f32 %v861, %v237
    %v878 = vadd.f32 %v876, %v877
    %v879 = vadd.f32 %v878, %v240
    %vm880 = vcmp.gt.f32.partialorder %v867, 20.0
    %v881 = vmul.f32 %v867, 1.442695
    %v882 = vpow.pop %v881
    %v883 = vadd.f32 %v882, 1.0
    %v884 = vlog2.pop %v883
    %v885 = vmul.f32 %v884, 0.6931472
    %v886 = vmul.f32 -0.5, %v882
    %v887 = vadd.f32 %v886, 1.0
    %v888 = vmul.f32 %v887, %v882
    %v889 = vand.u32 2147483647, %v882
    %vm890 = vcmp.lt.f32.partialorder %v889, 0.0004427343
    %v891 = vsel %vm890, %v888, %v885
    %v892 = vsel %vm880, %v867, %v891
    %vm893 = vcmp.gt.f32.partialorder %v873, 20.0
    %v894 = vmul.f32 %v873, 1.442695
    %v895 = vpow.pop %v894
    %v896 = vadd.f32 %v895, 1.0
    %v897 = vlog2.pop %v896
    %v898 = vmul.f32 %v897, 0.6931472
    %v899 = vmul.f32 -0.5, %v895
    %v900 = vadd.f32 %v899, 1.0
    %v901 = vmul.f32 %v900, %v895
    %v902 = vand.u32 2147483647, %v895
    %vm903 = vcmp.lt.f32.partialorder %v902, 0.0004427343
    %v904 = vsel %vm903, %v901, %v898
    %v905 = vsel %vm893, %v873, %v904
    %vm906 = vcmp.gt.f32.partialorder %v879, 20.0
    %v907 = vmul.f32 %v879, 1.442695
    %v908 = vpow.pop %v907
    %v909 = vadd.f32 %v908, 1.0
    %v910 = vlog2.pop %v909
    %v911 = vmul.f32 %v910, 0.6931472
    %v912 = vmul.f32 -0.5, %v908
    %v913 = vadd.f32 %v912, 1.0
    %v914 = vmul.f32 %v913, %v908
    %v915 = vand.u32 2147483647, %v908
    %vm916 = vcmp.lt.f32.partialorder %v915, 0.0004427343
    %v917 = vsel %vm916, %v914, %v911
    %v918 = vsel %vm906, %v879, %v917
    %v919 = vmul.f32 %v892, %v281
    %v920 = vmul.f32 %v905, %v283
    %v921 = vadd.f32 %v919, %v920
    %v922 = vmul.f32 %v918, %v286
    %v923 = vadd.f32 %v921, %v922
    %v924 = vadd.f32 %v923, %v289
    %v925 = vadd.f32 %v798, %v924
    %s926 = scalar_lea.vmem [#allocation6], 48
    %v927 = vld [vmem:[%s926] sm:$0xff]
    %s928 = scalar_lea.vmem [#allocation6], 192
    %v929 = vld [vmem:[%s928] sm:$0xff]
    %s930 = scalar_lea.vmem [#allocation6], 336
    %v931 = vld [vmem:[%s930] sm:$0xff]
    %v932 = vmul.f32 %v927, %v143
    %v933 = vmul.f32 %v929, %v145
    %v934 = vadd.f32 %v932, %v933
    %v935 = vmul.f32 %v931, %v148
    %v936 = vadd.f32 %v934, %v935
    %v937 = vadd.f32 %v936, %v151
    %v938 = vmul.f32 %v927, %v153
    %v939 = vmul.f32 %v929, %v155
    %v940 = vadd.f32 %v938, %v939
    %v941 = vmul.f32 %v931, %v158
    %v942 = vadd.f32 %v940, %v941
    %v943 = vadd.f32 %v942, %v161
    %v944 = vmul.f32 %v927, %v163
    %v945 = vmul.f32 %v929, %v165
    %v946 = vadd.f32 %v944, %v945
    %v947 = vmul.f32 %v931, %v168
    %v948 = vadd.f32 %v946, %v947
    %v949 = vadd.f32 %v948, %v171
    %vm950 = vcmp.gt.f32.partialorder %v937, 20.0
    %v951 = vmul.f32 %v937, 1.442695
    %v952 = vpow.pop %v951
    %v953 = vadd.f32 %v952, 1.0
    %v954 = vlog2.pop %v953
    %v955 = vmul.f32 %v954, 0.6931472
    %v956 = vmul.f32 -0.5, %v952
    %v957 = vadd.f32 %v956, 1.0
    %v958 = vmul.f32 %v957, %v952
    %v959 = vand.u32 2147483647, %v952
    %vm960 = vcmp.lt.f32.partialorder %v959, 0.0004427343
    %v961 = vsel %vm960, %v958, %v955
    %v962 = vsel %vm950, %v937, %v961
    %vm963 = vcmp.gt.f32.partialorder %v943, 20.0
    %v964 = vmul.f32 %v943, 1.442695
    %v965 = vpow.pop %v964
    %v966 = vadd.f32 %v965, 1.0
    %v967 = vlog2.pop %v966
    %v968 = vmul.f32 %v967, 0.6931472
    %v969 = vmul.f32 -0.5, %v965
    %v970 = vadd.f32 %v969, 1.0
    %v971 = vmul.f32 %v970, %v965
    %v972 = vand.u32 2147483647, %v965
    %vm973 = vcmp.lt.f32.partialorder %v972, 0.0004427343
    %v974 = vsel %vm973, %v971, %v968
    %v975 = vsel %vm963, %v943, %v974
    %vm976 = vcmp.gt.f32.partialorder %v949, 20.0
    %v977 = vmul.f32 %v949, 1.442695
    %v978 = vpow.pop %v977
    %v979 = vadd.f32 %v978, 1.0
    %v980 = vlog2.pop %v979
    %v981 = vmul.f32 %v980, 0.6931472
    %v982 = vmul.f32 -0.5, %v978
    %v983 = vadd.f32 %v982, 1.0
    %v984 = vmul.f32 %v983, %v978
    %v985 = vand.u32 2147483647, %v978
    %vm986 = vcmp.lt.f32.partialorder %v985, 0.0004427343
    %v987 = vsel %vm986, %v984, %v981
    %v988 = vsel %vm976, %v949, %v987
    %v989 = vmul.f32 %v962, %v212
    %v990 = vmul.f32 %v975, %v214
    %v991 = vadd.f32 %v989, %v990
    %v992 = vmul.f32 %v988, %v217
    %v993 = vadd.f32 %v991, %v992
    %v994 = vadd.f32 %v993, %v220
    %v995 = vmul.f32 %v962, %v222
    %v996 = vmul.f32 %v975, %v224
    %v997 = vadd.f32 %v995, %v996
    %v998 = vmul.f32 %v988, %v227
    %v999 = vadd.f32 %v997, %v998
    %v1000 = vadd.f32 %v999, %v230
    %v1001 = vmul.f32 %v962, %v232
    %v1002 = vmul.f32 %v975, %v234
    %v1003 = vadd.f32 %v1001, %v1002
    %v1004 = vmul.f32 %v988, %v237
    %v1005 = vadd.f32 %v1003, %v1004
    %v1006 = vadd.f32 %v1005, %v240
    %vm1007 = vcmp.gt.f32.partialorder %v994, 20.0
    %v1008 = vmul.f32 %v994, 1.442695
    %v1009 = vpow.pop %v1008
    %v1010 = vadd.f32 %v1009, 1.0
    %v1011 = vlog2.pop %v1010
    %v1012 = vmul.f32 %v1011, 0.6931472
    %v1013 = vmul.f32 -0.5, %v1009
    %v1014 = vadd.f32 %v1013, 1.0
    %v1015 = vmul.f32 %v1014, %v1009
    %v1016 = vand.u32 2147483647, %v1009
    %vm1017 = vcmp.lt.f32.partialorder %v1016, 0.0004427343
    %v1018 = vsel %vm1017, %v1015, %v1012
    %v1019 = vsel %vm1007, %v994, %v1018
    %vm1020 = vcmp.gt.f32.partialorder %v1000, 20.0
    %v1021 = vmul.f32 %v1000, 1.442695
    %v1022 = vpow.pop %v1021
    %v1023 = vadd.f32 %v1022, 1.0
    %v1024 = vlog2.pop %v1023
    %v1025 = vmul.f32 %v1024, 0.6931472
    %v1026 = vmul.f32 -0.5, %v1022
    %v1027 = vadd.f32 %v1026, 1.0
    %v1028 = vmul.f32 %v1027, %v1022
    %v1029 = vand.u32 2147483647, %v1022
    %vm1030 = vcmp.lt.f32.partialorder %v1029, 0.0004427343
    %v1031 = vsel %vm1030, %v1028, %v1025
    %v1032 = vsel %vm1020, %v1000, %v1031
    %vm1033 = vcmp.gt.f32.partialorder %v1006, 20.0
    %v1034 = vmul.f32 %v1006, 1.442695
    %v1035 = vpow.pop %v1034
    %v1036 = vadd.f32 %v1035, 1.0
    %v1037 = vlog2.pop %v1036
    %v1038 = vmul.f32 %v1037, 0.6931472
    %v1039 = vmul.f32 -0.5, %v1035
    %v1040 = vadd.f32 %v1039, 1.0
    %v1041 = vmul.f32 %v1040, %v1035
    %v1042 = vand.u32 2147483647, %v1035
    %vm1043 = vcmp.lt.f32.partialorder %v1042, 0.0004427343
    %v1044 = vsel %vm1043, %v1041, %v1038
    %v1045 = vsel %vm1033, %v1006, %v1044
    %v1046 = vmul.f32 %v1019, %v281
    %v1047 = vmul.f32 %v1032, %v283
    %v1048 = vadd.f32 %v1046, %v1047
    %v1049 = vmul.f32 %v1045, %v286
    %v1050 = vadd.f32 %v1048, %v1049
    %v1051 = vadd.f32 %v1050, %v289
    %s1052 = scalar_lea.vmem [#allocation6], 56
    %v1053 = vld [vmem:[%s1052] sm:$0xff]
    %s1054 = scalar_lea.vmem [#allocation6], 200
    %v1055 = vld [vmem:[%s1054] sm:$0xff]
    %s1056 = scalar_lea.vmem [#allocation6], 344
    %v1057 = vld [vmem:[%s1056] sm:$0xff]
    %v1058 = vmul.f32 %v1053, %v143
    %v1059 = vmul.f32 %v1055, %v145
    %v1060 = vadd.f32 %v1058, %v1059
    %v1061 = vmul.f32 %v1057, %v148
    %v1062 = vadd.f32 %v1060, %v1061
    %v1063 = vadd.f32 %v1062, %v151
    %v1064 = vmul.f32 %v1053, %v153
    %v1065 = vmul.f32 %v1055, %v155
    %v1066 = vadd.f32 %v1064, %v1065
    %v1067 = vmul.f32 %v1057, %v158
    %v1068 = vadd.f32 %v1066, %v1067
    %v1069 = vadd.f32 %v1068, %v161
    %v1070 = vmul.f32 %v1053, %v163
    %v1071 = vmul.f32 %v1055, %v165
    %v1072 = vadd.f32 %v1070, %v1071
    %v1073 = vmul.f32 %v1057, %v168
    %v1074 = vadd.f32 %v1072, %v1073
    %v1075 = vadd.f32 %v1074, %v171
    %vm1076 = vcmp.gt.f32.partialorder %v1063, 20.0
    %v1077 = vmul.f32 %v1063, 1.442695
    %v1078 = vpow.pop %v1077
    %v1079 = vadd.f32 %v1078, 1.0
    %v1080 = vlog2.pop %v1079
    %v1081 = vmul.f32 %v1080, 0.6931472
    %v1082 = vmul.f32 -0.5, %v1078
    %v1083 = vadd.f32 %v1082, 1.0
    %v1084 = vmul.f32 %v1083, %v1078
    %v1085 = vand.u32 2147483647, %v1078
    %vm1086 = vcmp.lt.f32.partialorder %v1085, 0.0004427343
    %v1087 = vsel %vm1086, %v1084, %v1081
    %v1088 = vsel %vm1076, %v1063, %v1087
    %vm1089 = vcmp.gt.f32.partialorder %v1069, 20.0
    %v1090 = vmul.f32 %v1069, 1.442695
    %v1091 = vpow.pop %v1090
    %v1092 = vadd.f32 %v1091, 1.0
    %v1093 = vlog2.pop %v1092
    %v1094 = vmul.f32 %v1093, 0.6931472
    %v1095 = vmul.f32 -0.5, %v1091
    %v1096 = vadd.f32 %v1095, 1.0
    %v1097 = vmul.f32 %v1096, %v1091
    %v1098 = vand.u32 2147483647, %v1091
    %vm1099 = vcmp.lt.f32.partialorder %v1098, 0.0004427343
    %v1100 = vsel %vm1099, %v1097, %v1094
    %v1101 = vsel %vm1089, %v1069, %v1100
    %vm1102 = vcmp.gt.f32.partialorder %v1075, 20.0
    %v1103 = vmul.f32 %v1075, 1.442695
    %v1104 = vpow.pop %v1103
    %v1105 = vadd.f32 %v1104, 1.0
    %v1106 = vlog2.pop %v1105
    %v1107 = vmul.f32 %v1106, 0.6931472
    %v1108 = vmul.f32 -0.5, %v1104
    %v1109 = vadd.f32 %v1108, 1.0
    %v1110 = vmul.f32 %v1109, %v1104
    %v1111 = vand.u32 2147483647, %v1104
    %vm1112 = vcmp.lt.f32.partialorder %v1111, 0.0004427343
    %v1113 = vsel %vm1112, %v1110, %v1107
    %v1114 = vsel %vm1102, %v1075, %v1113
    %v1115 = vmul.f32 %v1088, %v212
    %v1116 = vmul.f32 %v1101, %v214
    %v1117 = vadd.f32 %v1115, %v1116
    %v1118 = vmul.f32 %v1114, %v217
    %v1119 = vadd.f32 %v1117, %v1118
    %v1120 = vadd.f32 %v1119, %v220
    %v1121 = vmul.f32 %v1088, %v222
    %v1122 = vmul.f32 %v1101, %v224
    %v1123 = vadd.f32 %v1121, %v1122
    %v1124 = vmul.f32 %v1114, %v227
    %v1125 = vadd.f32 %v1123, %v1124
    %v1126 = vadd.f32 %v1125, %v230
    %v1127 = vmul.f32 %v1088, %v232
    %v1128 = vmul.f32 %v1101, %v234
    %v1129 = vadd.f32 %v1127, %v1128
    %v1130 = vmul.f32 %v1114, %v237
    %v1131 = vadd.f32 %v1129, %v1130
    %v1132 = vadd.f32 %v1131, %v240
    %vm1133 = vcmp.gt.f32.partialorder %v1120, 20.0
    %v1134 = vmul.f32 %v1120, 1.442695
    %v1135 = vpow.pop %v1134
    %v1136 = vadd.f32 %v1135, 1.0
    %v1137 = vlog2.pop %v1136
    %v1138 = vmul.f32 %v1137, 0.6931472
    %v1139 = vmul.f32 -0.5, %v1135
    %v1140 = vadd.f32 %v1139, 1.0
    %v1141 = vmul.f32 %v1140, %v1135
    %v1142 = vand.u32 2147483647, %v1135
    %vm1143 = vcmp.lt.f32.partialorder %v1142, 0.0004427343
    %v1144 = vsel %vm1143, %v1141, %v1138
    %v1145 = vsel %vm1133, %v1120, %v1144
    %vm1146 = vcmp.gt.f32.partialorder %v1126, 20.0
    %v1147 = vmul.f32 %v1126, 1.442695
    %v1148 = vpow.pop %v1147
    %v1149 = vadd.f32 %v1148, 1.0
    %v1150 = vlog2.pop %v1149
    %v1151 = vmul.f32 %v1150, 0.6931472
    %v1152 = vmul.f32 -0.5, %v1148
    %v1153 = vadd.f32 %v1152, 1.0
    %v1154 = vmul.f32 %v1153, %v1148
    %v1155 = vand.u32 2147483647, %v1148
    %vm1156 = vcmp.lt.f32.partialorder %v1155, 0.0004427343
    %v1157 = vsel %vm1156, %v1154, %v1151
    %v1158 = vsel %vm1146, %v1126, %v1157
    %vm1159 = vcmp.gt.f32.partialorder %v1132, 20.0
    %v1160 = vmul.f32 %v1132, 1.442695
    %v1161 = vpow.pop %v1160
    %v1162 = vadd.f32 %v1161, 1.0
    %v1163 = vlog2.pop %v1162
    %v1164 = vmul.f32 %v1163, 0.6931472
    %v1165 = vmul.f32 -0.5, %v1161
    %v1166 = vadd.f32 %v1165, 1.0
    %v1167 = vmul.f32 %v1166, %v1161
    %v1168 = vand.u32 2147483647, %v1161
    %vm1169 = vcmp.lt.f32.partialorder %v1168, 0.0004427343
    %v1170 = vsel %vm1169, %v1167, %v1164
    %v1171 = vsel %vm1159, %v1132, %v1170
    %v1172 = vmul.f32 %v1145, %v281
    %v1173 = vmul.f32 %v1158, %v283
    %v1174 = vadd.f32 %v1172, %v1173
    %v1175 = vmul.f32 %v1171, %v286
    %v1176 = vadd.f32 %v1174, %v1175
    %v1177 = vadd.f32 %v1176, %v289
    %v1178 = vadd.f32 %v1051, %v1177
    %s1179 = scalar_lea.vmem [#allocation6], 64
    %v1180 = vld [vmem:[%s1179] sm:$0xff]
    %s1181 = scalar_lea.vmem [#allocation6], 208
    %v1182 = vld [vmem:[%s1181] sm:$0xff]
    %s1183 = scalar_lea.vmem [#allocation6], 352
    %v1184 = vld [vmem:[%s1183] sm:$0xff]
    %v1185 = vmul.f32 %v1180, %v143
    %v1186 = vmul.f32 %v1182, %v145
    %v1187 = vadd.f32 %v1185, %v1186
    %v1188 = vmul.f32 %v1184, %v148
    %v1189 = vadd.f32 %v1187, %v1188
    %v1190 = vadd.f32 %v1189, %v151
    %v1191 = vmul.f32 %v1180, %v153
    %v1192 = vmul.f32 %v1182, %v155
    %v1193 = vadd.f32 %v1191, %v1192
    %v1194 = vmul.f32 %v1184, %v158
    %v1195 = vadd.f32 %v1193, %v1194
    %v1196 = vadd.f32 %v1195, %v161
    %v1197 = vmul.f32 %v1180, %v163
    %v1198 = vmul.f32 %v1182, %v165
    %v1199 = vadd.f32 %v1197, %v1198
    %v1200 = vmul.f32 %v1184, %v168
    %v1201 = vadd.f32 %v1199, %v1200
    %v1202 = vadd.f32 %v1201, %v171
    %vm1203 = vcmp.gt.f32.partialorder %v1190, 20.0
    %v1204 = vmul.f32 %v1190, 1.442695
    %v1205 = vpow.pop %v1204
    %v1206 = vadd.f32 %v1205, 1.0
    %v1207 = vlog2.pop %v1206
    %v1208 = vmul.f32 %v1207, 0.6931472
    %v1209 = vmul.f32 -0.5, %v1205
    %v1210 = vadd.f32 %v1209, 1.0
    %v1211 = vmul.f32 %v1210, %v1205
    %v1212 = vand.u32 2147483647, %v1205
    %vm1213 = vcmp.lt.f32.partialorder %v1212, 0.0004427343
    %v1214 = vsel %vm1213, %v1211, %v1208
    %v1215 = vsel %vm1203, %v1190, %v1214
    %vm1216 = vcmp.gt.f32.partialorder %v1196, 20.0
    %v1217 = vmul.f32 %v1196, 1.442695
    %v1218 = vpow.pop %v1217
    %v1219 = vadd.f32 %v1218, 1.0
    %v1220 = vlog2.pop %v1219
    %v1221 = vmul.f32 %v1220, 0.6931472
    %v1222 = vmul.f32 -0.5, %v1218
    %v1223 = vadd.f32 %v1222, 1.0
    %v1224 = vmul.f32 %v1223, %v1218
    %v1225 = vand.u32 2147483647, %v1218
    %vm1226 = vcmp.lt.f32.partialorder %v1225, 0.0004427343
    %v1227 = vsel %vm1226, %v1224, %v1221
    %v1228 = vsel %vm1216, %v1196, %v1227
    %vm1229 = vcmp.gt.f32.partialorder %v1202, 20.0
    %v1230 = vmul.f32 %v1202, 1.442695
    %v1231 = vpow.pop %v1230
    %v1232 = vadd.f32 %v1231, 1.0
    %v1233 = vlog2.pop %v1232
    %v1234 = vmul.f32 %v1233, 0.6931472
    %v1235 = vmul.f32 -0.5, %v1231
    %v1236 = vadd.f32 %v1235, 1.0
    %v1237 = vmul.f32 %v1236, %v1231
    %v1238 = vand.u32 2147483647, %v1231
    %vm1239 = vcmp.lt.f32.partialorder %v1238, 0.0004427343
    %v1240 = vsel %vm1239, %v1237, %v1234
    %v1241 = vsel %vm1229, %v1202, %v1240
    %v1242 = vmul.f32 %v1215, %v212
    %v1243 = vmul.f32 %v1228, %v214
    %v1244 = vadd.f32 %v1242, %v1243
    %v1245 = vmul.f32 %v1241, %v217
    %v1246 = vadd.f32 %v1244, %v1245
    %v1247 = vadd.f32 %v1246, %v220
    %v1248 = vmul.f32 %v1215, %v222
    %v1249 = vmul.f32 %v1228, %v224
    %v1250 = vadd.f32 %v1248, %v1249
    %v1251 = vmul.f32 %v1241, %v227
    %v1252 = vadd.f32 %v1250, %v1251
    %v1253 = vadd.f32 %v1252, %v230
    %v1254 = vmul.f32 %v1215, %v232
    %v1255 = vmul.f32 %v1228, %v234
    %v1256 = vadd.f32 %v1254, %v1255
    %v1257 = vmul.f32 %v1241, %v237
    %v1258 = vadd.f32 %v1256, %v1257
    %v1259 = vadd.f32 %v1258, %v240
    %vm1260 = vcmp.gt.f32.partialorder %v1247, 20.0
    %v1261 = vmul.f32 %v1247, 1.442695
    %v1262 = vpow.pop %v1261
    %v1263 = vadd.f32 %v1262, 1.0
    %v1264 = vlog2.pop %v1263
    %v1265 = vmul.f32 %v1264, 0.6931472
    %v1266 = vmul.f32 -0.5, %v1262
    %v1267 = vadd.f32 %v1266, 1.0
    %v1268 = vmul.f32 %v1267, %v1262
    %v1269 = vand.u32 2147483647, %v1262
    %vm1270 = vcmp.lt.f32.partialorder %v1269, 0.0004427343
    %v1271 = vsel %vm1270, %v1268, %v1265
    %v1272 = vsel %vm1260, %v1247, %v1271
    %vm1273 = vcmp.gt.f32.partialorder %v1253, 20.0
    %v1274 = vmul.f32 %v1253, 1.442695
    %v1275 = vpow.pop %v1274
    %v1276 = vadd.f32 %v1275, 1.0
    %v1277 = vlog2.pop %v1276
    %v1278 = vmul.f32 %v1277, 0.6931472
    %v1279 = vmul.f32 -0.5, %v1275
    %v1280 = vadd.f32 %v1279, 1.0
    %v1281 = vmul.f32 %v1280, %v1275
    %v1282 = vand.u32 2147483647, %v1275
    %vm1283 = vcmp.lt.f32.partialorder %v1282, 0.0004427343
    %v1284 = vsel %vm1283, %v1281, %v1278
    %v1285 = vsel %vm1273, %v1253, %v1284
    %vm1286 = vcmp.gt.f32.partialorder %v1259, 20.0
    %v1287 = vmul.f32 %v1259, 1.442695
    %v1288 = vpow.pop %v1287
    %v1289 = vadd.f32 %v1288, 1.0
    %v1290 = vlog2.pop %v1289
    %v1291 = vmul.f32 %v1290, 0.6931472
    %v1292 = vmul.f32 -0.5, %v1288
    %v1293 = vadd.f32 %v1292, 1.0
    %v1294 = vmul.f32 %v1293, %v1288
    %v1295 = vand.u32 2147483647, %v1288
    %vm1296 = vcmp.lt.f32.partialorder %v1295, 0.0004427343
    %v1297 = vsel %vm1296, %v1294, %v1291
    %v1298 = vsel %vm1286, %v1259, %v1297
    %v1299 = vmul.f32 %v1272, %v281
    %v1300 = vmul.f32 %v1285, %v283
    %v1301 = vadd.f32 %v1299, %v1300
    %v1302 = vmul.f32 %v1298, %v286
    %v1303 = vadd.f32 %v1301, %v1302
    %v1304 = vadd.f32 %v1303, %v289
    %v1305 = vadd.f32 %v1178, %v1304
    %s1306 = scalar_lea.vmem [#allocation6], 72
    %v1307 = vld [vmem:[%s1306] sm:$0xff]
    %s1308 = scalar_lea.vmem [#allocation6], 216
    %v1309 = vld [vmem:[%s1308] sm:$0xff]
    %s1310 = scalar_lea.vmem [#allocation6], 360
    %v1311 = vld [vmem:[%s1310] sm:$0xff]
    %v1312 = vmul.f32 %v1307, %v143
    %v1313 = vmul.f32 %v1309, %v145
    %v1314 = vadd.f32 %v1312, %v1313
    %v1315 = vmul.f32 %v1311, %v148
    %v1316 = vadd.f32 %v1314, %v1315
    %v1317 = vadd.f32 %v1316, %v151
    %v1318 = vmul.f32 %v1307, %v153
    %v1319 = vmul.f32 %v1309, %v155
    %v1320 = vadd.f32 %v1318, %v1319
    %v1321 = vmul.f32 %v1311, %v158
    %v1322 = vadd.f32 %v1320, %v1321
    %v1323 = vadd.f32 %v1322, %v161
    %v1324 = vmul.f32 %v1307, %v163
    %v1325 = vmul.f32 %v1309, %v165
    %v1326 = vadd.f32 %v1324, %v1325
    %v1327 = vmul.f32 %v1311, %v168
    %v1328 = vadd.f32 %v1326, %v1327
    %v1329 = vadd.f32 %v1328, %v171
    %vm1330 = vcmp.gt.f32.partialorder %v1317, 20.0
    %v1331 = vmul.f32 %v1317, 1.442695
    %v1332 = vpow.pop %v1331
    %v1333 = vadd.f32 %v1332, 1.0
    %v1334 = vlog2.pop %v1333
    %v1335 = vmul.f32 %v1334, 0.6931472
    %v1336 = vmul.f32 -0.5, %v1332
    %v1337 = vadd.f32 %v1336, 1.0
    %v1338 = vmul.f32 %v1337, %v1332
    %v1339 = vand.u32 2147483647, %v1332
    %vm1340 = vcmp.lt.f32.partialorder %v1339, 0.0004427343
    %v1341 = vsel %vm1340, %v1338, %v1335
    %v1342 = vsel %vm1330, %v1317, %v1341
    %vm1343 = vcmp.gt.f32.partialorder %v1323, 20.0
    %v1344 = vmul.f32 %v1323, 1.442695
    %v1345 = vpow.pop %v1344
    %v1346 = vadd.f32 %v1345, 1.0
    %v1347 = vlog2.pop %v1346
    %v1348 = vmul.f32 %v1347, 0.6931472
    %v1349 = vmul.f32 -0.5, %v1345
    %v1350 = vadd.f32 %v1349, 1.0
    %v1351 = vmul.f32 %v1350, %v1345
    %v1352 = vand.u32 2147483647, %v1345
    %vm1353 = vcmp.lt.f32.partialorder %v1352, 0.0004427343
    %v1354 = vsel %vm1353, %v1351, %v1348
    %v1355 = vsel %vm1343, %v1323, %v1354
    %vm1356 = vcmp.gt.f32.partialorder %v1329, 20.0
    %v1357 = vmul.f32 %v1329, 1.442695
    %v1358 = vpow.pop %v1357
    %v1359 = vadd.f32 %v1358, 1.0
    %v1360 = vlog2.pop %v1359
    %v1361 = vmul.f32 %v1360, 0.6931472
    %v1362 = vmul.f32 -0.5, %v1358
    %v1363 = vadd.f32 %v1362, 1.0
    %v1364 = vmul.f32 %v1363, %v1358
    %v1365 = vand.u32 2147483647, %v1358
    %vm1366 = vcmp.lt.f32.partialorder %v1365, 0.0004427343
    %v1367 = vsel %vm1366, %v1364, %v1361
    %v1368 = vsel %vm1356, %v1329, %v1367
    %v1369 = vmul.f32 %v1342, %v212
    %v1370 = vmul.f32 %v1355, %v214
    %v1371 = vadd.f32 %v1369, %v1370
    %v1372 = vmul.f32 %v1368, %v217
    %v1373 = vadd.f32 %v1371, %v1372
    %v1374 = vadd.f32 %v1373, %v220
    %v1375 = vmul.f32 %v1342, %v222
    %v1376 = vmul.f32 %v1355, %v224
    %v1377 = vadd.f32 %v1375, %v1376
    %v1378 = vmul.f32 %v1368, %v227
    %v1379 = vadd.f32 %v1377, %v1378
    %v1380 = vadd.f32 %v1379, %v230
    %v1381 = vmul.f32 %v1342, %v232
    %v1382 = vmul.f32 %v1355, %v234
    %v1383 = vadd.f32 %v1381, %v1382
    %v1384 = vmul.f32 %v1368, %v237
    %v1385 = vadd.f32 %v1383, %v1384
    %v1386 = vadd.f32 %v1385, %v240
    %vm1387 = vcmp.gt.f32.partialorder %v1374, 20.0
    %v1388 = vmul.f32 %v1374, 1.442695
    %v1389 = vpow.pop %v1388
    %v1390 = vadd.f32 %v1389, 1.0
    %v1391 = vlog2.pop %v1390
    %v1392 = vmul.f32 %v1391, 0.6931472
    %v1393 = vmul.f32 -0.5, %v1389
    %v1394 = vadd.f32 %v1393, 1.0
    %v1395 = vmul.f32 %v1394, %v1389
    %v1396 = vand.u32 2147483647, %v1389
    %vm1397 = vcmp.lt.f32.partialorder %v1396, 0.0004427343
    %v1398 = vsel %vm1397, %v1395, %v1392
    %v1399 = vsel %vm1387, %v1374, %v1398
    %vm1400 = vcmp.gt.f32.partialorder %v1380, 20.0
    %v1401 = vmul.f32 %v1380, 1.442695
    %v1402 = vpow.pop %v1401
    %v1403 = vadd.f32 %v1402, 1.0
    %v1404 = vlog2.pop %v1403
    %v1405 = vmul.f32 %v1404, 0.6931472
    %v1406 = vmul.f32 -0.5, %v1402
    %v1407 = vadd.f32 %v1406, 1.0
    %v1408 = vmul.f32 %v1407, %v1402
    %v1409 = vand.u32 2147483647, %v1402
    %vm1410 = vcmp.lt.f32.partialorder %v1409, 0.0004427343
    %v1411 = vsel %vm1410, %v1408, %v1405
    %v1412 = vsel %vm1400, %v1380, %v1411
    %vm1413 = vcmp.gt.f32.partialorder %v1386, 20.0
    %v1414 = vmul.f32 %v1386, 1.442695
    %v1415 = vpow.pop %v1414
    %v1416 = vadd.f32 %v1415, 1.0
    %v1417 = vlog2.pop %v1416
    %v1418 = vmul.f32 %v1417, 0.6931472
    %v1419 = vmul.f32 -0.5, %v1415
    %v1420 = vadd.f32 %v1419, 1.0
    %v1421 = vmul.f32 %v1420, %v1415
    %v1422 = vand.u32 2147483647, %v1415
    %vm1423 = vcmp.lt.f32.partialorder %v1422, 0.0004427343
    %v1424 = vsel %vm1423, %v1421, %v1418
    %v1425 = vsel %vm1413, %v1386, %v1424
    %v1426 = vmul.f32 %v1399, %v281
    %v1427 = vmul.f32 %v1412, %v283
    %v1428 = vadd.f32 %v1426, %v1427
    %v1429 = vmul.f32 %v1425, %v286
    %v1430 = vadd.f32 %v1428, %v1429
    %v1431 = vadd.f32 %v1430, %v289
    %v1432 = vadd.f32 %v1305, %v1431
    %s1433 = scalar_lea.vmem [#allocation6], 80
    %v1434 = vld [vmem:[%s1433] sm:$0xff]
    %s1435 = scalar_lea.vmem [#allocation6], 224
    %v1436 = vld [vmem:[%s1435] sm:$0xff]
    %s1437 = scalar_lea.vmem [#allocation6], 368
    %v1438 = vld [vmem:[%s1437] sm:$0xff]
    %v1439 = vmul.f32 %v1434, %v143
    %v1440 = vmul.f32 %v1436, %v145
    %v1441 = vadd.f32 %v1439, %v1440
    %v1442 = vmul.f32 %v1438, %v148
    %v1443 = vadd.f32 %v1441, %v1442
    %v1444 = vadd.f32 %v1443, %v151
    %v1445 = vmul.f32 %v1434, %v153
    %v1446 = vmul.f32 %v1436, %v155
    %v1447 = vadd.f32 %v1445, %v1446
    %v1448 = vmul.f32 %v1438, %v158
    %v1449 = vadd.f32 %v1447, %v1448
    %v1450 = vadd.f32 %v1449, %v161
    %v1451 = vmul.f32 %v1434, %v163
    %v1452 = vmul.f32 %v1436, %v165
    %v1453 = vadd.f32 %v1451, %v1452
    %v1454 = vmul.f32 %v1438, %v168
    %v1455 = vadd.f32 %v1453, %v1454
    %v1456 = vadd.f32 %v1455, %v171
    %vm1457 = vcmp.gt.f32.partialorder %v1444, 20.0
    %v1458 = vmul.f32 %v1444, 1.442695
    %v1459 = vpow.pop %v1458
    %v1460 = vadd.f32 %v1459, 1.0
    %v1461 = vlog2.pop %v1460
    %v1462 = vmul.f32 %v1461, 0.6931472
    %v1463 = vmul.f32 -0.5, %v1459
    %v1464 = vadd.f32 %v1463, 1.0
    %v1465 = vmul.f32 %v1464, %v1459
    %v1466 = vand.u32 2147483647, %v1459
    %vm1467 = vcmp.lt.f32.partialorder %v1466, 0.0004427343
    %v1468 = vsel %vm1467, %v1465, %v1462
    %v1469 = vsel %vm1457, %v1444, %v1468
    %vm1470 = vcmp.gt.f32.partialorder %v1450, 20.0
    %v1471 = vmul.f32 %v1450, 1.442695
    %v1472 = vpow.pop %v1471
    %v1473 = vadd.f32 %v1472, 1.0
    %v1474 = vlog2.pop %v1473
    %v1475 = vmul.f32 %v1474, 0.6931472
    %v1476 = vmul.f32 -0.5, %v1472
    %v1477 = vadd.f32 %v1476, 1.0
    %v1478 = vmul.f32 %v1477, %v1472
    %v1479 = vand.u32 2147483647, %v1472
    %vm1480 = vcmp.lt.f32.partialorder %v1479, 0.0004427343
    %v1481 = vsel %vm1480, %v1478, %v1475
    %v1482 = vsel %vm1470, %v1450, %v1481
    %vm1483 = vcmp.gt.f32.partialorder %v1456, 20.0
    %v1484 = vmul.f32 %v1456, 1.442695
    %v1485 = vpow.pop %v1484
    %v1486 = vadd.f32 %v1485, 1.0
    %v1487 = vlog2.pop %v1486
    %v1488 = vmul.f32 %v1487, 0.6931472
    %v1489 = vmul.f32 -0.5, %v1485
    %v1490 = vadd.f32 %v1489, 1.0
    %v1491 = vmul.f32 %v1490, %v1485
    %v1492 = vand.u32 2147483647, %v1485
    %vm1493 = vcmp.lt.f32.partialorder %v1492, 0.0004427343
    %v1494 = vsel %vm1493, %v1491, %v1488
    %v1495 = vsel %vm1483, %v1456, %v1494
    %v1496 = vmul.f32 %v1469, %v212
    %v1497 = vmul.f32 %v1482, %v214
    %v1498 = vadd.f32 %v1496, %v1497
    %v1499 = vmul.f32 %v1495, %v217
    %v1500 = vadd.f32 %v1498, %v1499
    %v1501 = vadd.f32 %v1500, %v220
    %v1502 = vmul.f32 %v1469, %v222
    %v1503 = vmul.f32 %v1482, %v224
    %v1504 = vadd.f32 %v1502, %v1503
    %v1505 = vmul.f32 %v1495, %v227
    %v1506 = vadd.f32 %v1504, %v1505
    %v1507 = vadd.f32 %v1506, %v230
    %v1508 = vmul.f32 %v1469, %v232
    %v1509 = vmul.f32 %v1482, %v234
    %v1510 = vadd.f32 %v1508, %v1509
    %v1511 = vmul.f32 %v1495, %v237
    %v1512 = vadd.f32 %v1510, %v1511
    %v1513 = vadd.f32 %v1512, %v240
    %vm1514 = vcmp.gt.f32.partialorder %v1501, 20.0
    %v1515 = vmul.f32 %v1501, 1.442695
    %v1516 = vpow.pop %v1515
    %v1517 = vadd.f32 %v1516, 1.0
    %v1518 = vlog2.pop %v1517
    %v1519 = vmul.f32 %v1518, 0.6931472
    %v1520 = vmul.f32 -0.5, %v1516
    %v1521 = vadd.f32 %v1520, 1.0
    %v1522 = vmul.f32 %v1521, %v1516
    %v1523 = vand.u32 2147483647, %v1516
    %vm1524 = vcmp.lt.f32.partialorder %v1523, 0.0004427343
    %v1525 = vsel %vm1524, %v1522, %v1519
    %v1526 = vsel %vm1514, %v1501, %v1525
    %vm1527 = vcmp.gt.f32.partialorder %v1507, 20.0
    %v1528 = vmul.f32 %v1507, 1.442695
    %v1529 = vpow.pop %v1528
    %v1530 = vadd.f32 %v1529, 1.0
    %v1531 = vlog2.pop %v1530
    %v1532 = vmul.f32 %v1531, 0.6931472
    %v1533 = vmul.f32 -0.5, %v1529
    %v1534 = vadd.f32 %v1533, 1.0
    %v1535 = vmul.f32 %v1534, %v1529
    %v1536 = vand.u32 2147483647, %v1529
    %vm1537 = vcmp.lt.f32.partialorder %v1536, 0.0004427343
    %v1538 = vsel %vm1537, %v1535, %v1532
    %v1539 = vsel %vm1527, %v1507, %v1538
    %vm1540 = vcmp.gt.f32.partialorder %v1513, 20.0
    %v1541 = vmul.f32 %v1513, 1.442695
    %v1542 = vpow.pop %v1541
    %v1543 = vadd.f32 %v1542, 1.0
    %v1544 = vlog2.pop %v1543
    %v1545 = vmul.f32 %v1544, 0.6931472
    %v1546 = vmul.f32 -0.5, %v1542
    %v1547 = vadd.f32 %v1546, 1.0
    %v1548 = vmul.f32 %v1547, %v1542
    %v1549 = vand.u32 2147483647, %v1542
    %vm1550 = vcmp.lt.f32.partialorder %v1549, 0.0004427343
    %v1551 = vsel %vm1550, %v1548, %v1545
    %v1552 = vsel %vm1540, %v1513, %v1551
    %v1553 = vmul.f32 %v1526, %v281
    %v1554 = vmul.f32 %v1539, %v283
    %v1555 = vadd.f32 %v1553, %v1554
    %v1556 = vmul.f32 %v1552, %v286
    %v1557 = vadd.f32 %v1555, %v1556
    %v1558 = vadd.f32 %v1557, %v289
    %v1559 = vadd.f32 %v1432, %v1558
    %s1560 = scalar_lea.vmem [#allocation6], 88
    %v1561 = vld [vmem:[%s1560] sm:$0xff]
    %s1562 = scalar_lea.vmem [#allocation6], 232
    %v1563 = vld [vmem:[%s1562] sm:$0xff]
    %s1564 = scalar_lea.vmem [#allocation6], 376
    %v1565 = vld [vmem:[%s1564] sm:$0xff]
    %v1566 = vmul.f32 %v1561, %v143
    %v1567 = vmul.f32 %v1563, %v145
    %v1568 = vadd.f32 %v1566, %v1567
    %v1569 = vmul.f32 %v1565, %v148
    %v1570 = vadd.f32 %v1568, %v1569
    %v1571 = vadd.f32 %v1570, %v151
    %v1572 = vmul.f32 %v1561, %v153
    %v1573 = vmul.f32 %v1563, %v155
    %v1574 = vadd.f32 %v1572, %v1573
    %v1575 = vmul.f32 %v1565, %v158
    %v1576 = vadd.f32 %v1574, %v1575
    %v1577 = vadd.f32 %v1576, %v161
    %v1578 = vmul.f32 %v1561, %v163
    %v1579 = vmul.f32 %v1563, %v165
    %v1580 = vadd.f32 %v1578, %v1579
    %v1581 = vmul.f32 %v1565, %v168
    %v1582 = vadd.f32 %v1580, %v1581
    %v1583 = vadd.f32 %v1582, %v171
    %vm1584 = vcmp.gt.f32.partialorder %v1571, 20.0
    %v1585 = vmul.f32 %v1571, 1.442695
    %v1586 = vpow.pop %v1585
    %v1587 = vadd.f32 %v1586, 1.0
    %v1588 = vlog2.pop %v1587
    %v1589 = vmul.f32 %v1588, 0.6931472
    %v1590 = vmul.f32 -0.5, %v1586
    %v1591 = vadd.f32 %v1590, 1.0
    %v1592 = vmul.f32 %v1591, %v1586
    %v1593 = vand.u32 2147483647, %v1586
    %vm1594 = vcmp.lt.f32.partialorder %v1593, 0.0004427343
    %v1595 = vsel %vm1594, %v1592, %v1589
    %v1596 = vsel %vm1584, %v1571, %v1595
    %vm1597 = vcmp.gt.f32.partialorder %v1577, 20.0
    %v1598 = vmul.f32 %v1577, 1.442695
    %v1599 = vpow.pop %v1598
    %v1600 = vadd.f32 %v1599, 1.0
    %v1601 = vlog2.pop %v1600
    %v1602 = vmul.f32 %v1601, 0.6931472
    %v1603 = vmul.f32 -0.5, %v1599
    %v1604 = vadd.f32 %v1603, 1.0
    %v1605 = vmul.f32 %v1604, %v1599
    %v1606 = vand.u32 2147483647, %v1599
    %vm1607 = vcmp.lt.f32.partialorder %v1606, 0.0004427343
    %v1608 = vsel %vm1607, %v1605, %v1602
    %v1609 = vsel %vm1597, %v1577, %v1608
    %vm1610 = vcmp.gt.f32.partialorder %v1583, 20.0
    %v1611 = vmul.f32 %v1583, 1.442695
    %v1612 = vpow.pop %v1611
    %v1613 = vadd.f32 %v1612, 1.0
    %v1614 = vlog2.pop %v1613
    %v1615 = vmul.f32 %v1614, 0.6931472
    %v1616 = vmul.f32 -0.5, %v1612
    %v1617 = vadd.f32 %v1616, 1.0
    %v1618 = vmul.f32 %v1617, %v1612
    %v1619 = vand.u32 2147483647, %v1612
    %vm1620 = vcmp.lt.f32.partialorder %v1619, 0.0004427343
    %v1621 = vsel %vm1620, %v1618, %v1615
    %v1622 = vsel %vm1610, %v1583, %v1621
    %v1623 = vmul.f32 %v1596, %v212
    %v1624 = vmul.f32 %v1609, %v214
    %v1625 = vadd.f32 %v1623, %v1624
    %v1626 = vmul.f32 %v1622, %v217
    %v1627 = vadd.f32 %v1625, %v1626
    %v1628 = vadd.f32 %v1627, %v220
    %v1629 = vmul.f32 %v1596, %v222
    %v1630 = vmul.f32 %v1609, %v224
    %v1631 = vadd.f32 %v1629, %v1630
    %v1632 = vmul.f32 %v1622, %v227
    %v1633 = vadd.f32 %v1631, %v1632
    %v1634 = vadd.f32 %v1633, %v230
    %v1635 = vmul.f32 %v1596, %v232
    %v1636 = vmul.f32 %v1609, %v234
    %v1637 = vadd.f32 %v1635, %v1636
    %v1638 = vmul.f32 %v1622, %v237
    %v1639 = vadd.f32 %v1637, %v1638
    %v1640 = vadd.f32 %v1639, %v240
    %vm1641 = vcmp.gt.f32.partialorder %v1628, 20.0
    %v1642 = vmul.f32 %v1628, 1.442695
    %v1643 = vpow.pop %v1642
    %v1644 = vadd.f32 %v1643, 1.0
    %v1645 = vlog2.pop %v1644
    %v1646 = vmul.f32 %v1645, 0.6931472
    %v1647 = vmul.f32 -0.5, %v1643
    %v1648 = vadd.f32 %v1647, 1.0
    %v1649 = vmul.f32 %v1648, %v1643
    %v1650 = vand.u32 2147483647, %v1643
    %vm1651 = vcmp.lt.f32.partialorder %v1650, 0.0004427343
    %v1652 = vsel %vm1651, %v1649, %v1646
    %v1653 = vsel %vm1641, %v1628, %v1652
    %vm1654 = vcmp.gt.f32.partialorder %v1634, 20.0
    %v1655 = vmul.f32 %v1634, 1.442695
    %v1656 = vpow.pop %v1655
    %v1657 = vadd.f32 %v1656, 1.0
    %v1658 = vlog2.pop %v1657
    %v1659 = vmul.f32 %v1658, 0.6931472
    %v1660 = vmul.f32 -0.5, %v1656
    %v1661 = vadd.f32 %v1660, 1.0
    %v1662 = vmul.f32 %v1661, %v1656
    %v1663 = vand.u32 2147483647, %v1656
    %vm1664 = vcmp.lt.f32.partialorder %v1663, 0.0004427343
    %v1665 = vsel %vm1664, %v1662, %v1659
    %v1666 = vsel %vm1654, %v1634, %v1665
    %vm1667 = vcmp.gt.f32.partialorder %v1640, 20.0
    %v1668 = vmul.f32 %v1640, 1.442695
    %v1669 = vpow.pop %v1668
    %v1670 = vadd.f32 %v1669, 1.0
    %v1671 = vlog2.pop %v1670
    %v1672 = vmul.f32 %v1671, 0.6931472
    %v1673 = vmul.f32 -0.5, %v1669
    %v1674 = vadd.f32 %v1673, 1.0
    %v1675 = vmul.f32 %v1674, %v1669
    %v1676 = vand.u32 2147483647, %v1669
    %vm1677 = vcmp.lt.f32.partialorder %v1676, 0.0004427343
    %v1678 = vsel %vm1677, %v1675, %v1672
    %v1679 = vsel %vm1667, %v1640, %v1678
    %v1680 = vmul.f32 %v1653, %v281
    %v1681 = vmul.f32 %v1666, %v283
    %v1682 = vadd.f32 %v1680, %v1681
    %v1683 = vmul.f32 %v1679, %v286
    %v1684 = vadd.f32 %v1682, %v1683
    %v1685 = vadd.f32 %v1684, %v289
    %v1686 = vadd.f32 %v1559, %v1685
    %s1687 = scalar_lea.vmem [#allocation6], 96
    %v1688 = vld [vmem:[%s1687] sm:$0xff]
    %s1689 = scalar_lea.vmem [#allocation6], 240
    %v1690 = vld [vmem:[%s1689] sm:$0xff]
    %s1691 = scalar_lea.vmem [#allocation6], 384
    %v1692 = vld [vmem:[%s1691] sm:$0xff]
    %v1693 = vmul.f32 %v1688, %v143
    %v1694 = vmul.f32 %v1690, %v145
    %v1695 = vadd.f32 %v1693, %v1694
    %v1696 = vmul.f32 %v1692, %v148
    %v1697 = vadd.f32 %v1695, %v1696
    %v1698 = vadd.f32 %v1697, %v151
    %v1699 = vmul.f32 %v1688, %v153
    %v1700 = vmul.f32 %v1690, %v155
    %v1701 = vadd.f32 %v1699, %v1700
    %v1702 = vmul.f32 %v1692, %v158
    %v1703 = vadd.f32 %v1701, %v1702
    %v1704 = vadd.f32 %v1703, %v161
    %v1705 = vmul.f32 %v1688, %v163
    %v1706 = vmul.f32 %v1690, %v165
    %v1707 = vadd.f32 %v1705, %v1706
    %v1708 = vmul.f32 %v1692, %v168
    %v1709 = vadd.f32 %v1707, %v1708
    %v1710 = vadd.f32 %v1709, %v171
    %vm1711 = vcmp.gt.f32.partialorder %v1698, 20.0
    %v1712 = vmul.f32 %v1698, 1.442695
    %v1713 = vpow.pop %v1712
    %v1714 = vadd.f32 %v1713, 1.0
    %v1715 = vlog2.pop %v1714
    %v1716 = vmul.f32 %v1715, 0.6931472
    %v1717 = vmul.f32 -0.5, %v1713
    %v1718 = vadd.f32 %v1717, 1.0
    %v1719 = vmul.f32 %v1718, %v1713
    %v1720 = vand.u32 2147483647, %v1713
    %vm1721 = vcmp.lt.f32.partialorder %v1720, 0.0004427343
    %v1722 = vsel %vm1721, %v1719, %v1716
    %v1723 = vsel %vm1711, %v1698, %v1722
    %vm1724 = vcmp.gt.f32.partialorder %v1704, 20.0
    %v1725 = vmul.f32 %v1704, 1.442695
    %v1726 = vpow.pop %v1725
    %v1727 = vadd.f32 %v1726, 1.0
    %v1728 = vlog2.pop %v1727
    %v1729 = vmul.f32 %v1728, 0.6931472
    %v1730 = vmul.f32 -0.5, %v1726
    %v1731 = vadd.f32 %v1730, 1.0
    %v1732 = vmul.f32 %v1731, %v1726
    %v1733 = vand.u32 2147483647, %v1726
    %vm1734 = vcmp.lt.f32.partialorder %v1733, 0.0004427343
    %v1735 = vsel %vm1734, %v1732, %v1729
    %v1736 = vsel %vm1724, %v1704, %v1735
    %vm1737 = vcmp.gt.f32.partialorder %v1710, 20.0
    %v1738 = vmul.f32 %v1710, 1.442695
    %v1739 = vpow.pop %v1738
    %v1740 = vadd.f32 %v1739, 1.0
    %v1741 = vlog2.pop %v1740
    %v1742 = vmul.f32 %v1741, 0.6931472
    %v1743 = vmul.f32 -0.5, %v1739
    %v1744 = vadd.f32 %v1743, 1.0
    %v1745 = vmul.f32 %v1744, %v1739
    %v1746 = vand.u32 2147483647, %v1739
    %vm1747 = vcmp.lt.f32.partialorder %v1746, 0.0004427343
    %v1748 = vsel %vm1747, %v1745, %v1742
    %v1749 = vsel %vm1737, %v1710, %v1748
    %v1750 = vmul.f32 %v1723, %v212
    %v1751 = vmul.f32 %v1736, %v214
    %v1752 = vadd.f32 %v1750, %v1751
    %v1753 = vmul.f32 %v1749, %v217
    %v1754 = vadd.f32 %v1752, %v1753
    %v1755 = vadd.f32 %v1754, %v220
    %v1756 = vmul.f32 %v1723, %v222
    %v1757 = vmul.f32 %v1736, %v224
    %v1758 = vadd.f32 %v1756, %v1757
    %v1759 = vmul.f32 %v1749, %v227
    %v1760 = vadd.f32 %v1758, %v1759
    %v1761 = vadd.f32 %v1760, %v230
    %v1762 = vmul.f32 %v1723, %v232
    %v1763 = vmul.f32 %v1736, %v234
    %v1764 = vadd.f32 %v1762, %v1763
    %v1765 = vmul.f32 %v1749, %v237
    %v1766 = vadd.f32 %v1764, %v1765
    %v1767 = vadd.f32 %v1766, %v240
    %vm1768 = vcmp.gt.f32.partialorder %v1755, 20.0
    %v1769 = vmul.f32 %v1755, 1.442695
    %v1770 = vpow.pop %v1769
    %v1771 = vadd.f32 %v1770, 1.0
    %v1772 = vlog2.pop %v1771
    %v1773 = vmul.f32 %v1772, 0.6931472
    %v1774 = vmul.f32 -0.5, %v1770
    %v1775 = vadd.f32 %v1774, 1.0
    %v1776 = vmul.f32 %v1775, %v1770
    %v1777 = vand.u32 2147483647, %v1770
    %vm1778 = vcmp.lt.f32.partialorder %v1777, 0.0004427343
    %v1779 = vsel %vm1778, %v1776, %v1773
    %v1780 = vsel %vm1768, %v1755, %v1779
    %vm1781 = vcmp.gt.f32.partialorder %v1761, 20.0
    %v1782 = vmul.f32 %v1761, 1.442695
    %v1783 = vpow.pop %v1782
    %v1784 = vadd.f32 %v1783, 1.0
    %v1785 = vlog2.pop %v1784
    %v1786 = vmul.f32 %v1785, 0.6931472
    %v1787 = vmul.f32 -0.5, %v1783
    %v1788 = vadd.f32 %v1787, 1.0
    %v1789 = vmul.f32 %v1788, %v1783
    %v1790 = vand.u32 2147483647, %v1783
    %vm1791 = vcmp.lt.f32.partialorder %v1790, 0.0004427343
    %v1792 = vsel %vm1791, %v1789, %v1786
    %v1793 = vsel %vm1781, %v1761, %v1792
    %vm1794 = vcmp.gt.f32.partialorder %v1767, 20.0
    %v1795 = vmul.f32 %v1767, 1.442695
    %v1796 = vpow.pop %v1795
    %v1797 = vadd.f32 %v1796, 1.0
    %v1798 = vlog2.pop %v1797
    %v1799 = vmul.f32 %v1798, 0.6931472
    %v1800 = vmul.f32 -0.5, %v1796
    %v1801 = vadd.f32 %v1800, 1.0
    %v1802 = vmul.f32 %v1801, %v1796
    %v1803 = vand.u32 2147483647, %v1796
    %vm1804 = vcmp.lt.f32.partialorder %v1803, 0.0004427343
    %v1805 = vsel %vm1804, %v1802, %v1799
    %v1806 = vsel %vm1794, %v1767, %v1805
    %v1807 = vmul.f32 %v1780, %v281
    %v1808 = vmul.f32 %v1793, %v283
    %v1809 = vadd.f32 %v1807, %v1808
    %v1810 = vmul.f32 %v1806, %v286
    %v1811 = vadd.f32 %v1809, %v1810
    %v1812 = vadd.f32 %v1811, %v289
    %s1813 = scalar_lea.vmem [#allocation6], 104
    %v1814 = vld [vmem:[%s1813] sm:$0xff]
    %s1815 = scalar_lea.vmem [#allocation6], 248
    %v1816 = vld [vmem:[%s1815] sm:$0xff]
    %s1817 = scalar_lea.vmem [#allocation6], 392
    %v1818 = vld [vmem:[%s1817] sm:$0xff]
    %v1819 = vmul.f32 %v1814, %v143
    %v1820 = vmul.f32 %v1816, %v145
    %v1821 = vadd.f32 %v1819, %v1820
    %v1822 = vmul.f32 %v1818, %v148
    %v1823 = vadd.f32 %v1821, %v1822
    %v1824 = vadd.f32 %v1823, %v151
    %v1825 = vmul.f32 %v1814, %v153
    %v1826 = vmul.f32 %v1816, %v155
    %v1827 = vadd.f32 %v1825, %v1826
    %v1828 = vmul.f32 %v1818, %v158
    %v1829 = vadd.f32 %v1827, %v1828
    %v1830 = vadd.f32 %v1829, %v161
    %v1831 = vmul.f32 %v1814, %v163
    %v1832 = vmul.f32 %v1816, %v165
    %v1833 = vadd.f32 %v1831, %v1832
    %v1834 = vmul.f32 %v1818, %v168
    %v1835 = vadd.f32 %v1833, %v1834
    %v1836 = vadd.f32 %v1835, %v171
    %vm1837 = vcmp.gt.f32.partialorder %v1824, 20.0
    %v1838 = vmul.f32 %v1824, 1.442695
    %v1839 = vpow.pop %v1838
    %v1840 = vadd.f32 %v1839, 1.0
    %v1841 = vlog2.pop %v1840
    %v1842 = vmul.f32 %v1841, 0.6931472
    %v1843 = vmul.f32 -0.5, %v1839
    %v1844 = vadd.f32 %v1843, 1.0
    %v1845 = vmul.f32 %v1844, %v1839
    %v1846 = vand.u32 2147483647, %v1839
    %vm1847 = vcmp.lt.f32.partialorder %v1846, 0.0004427343
    %v1848 = vsel %vm1847, %v1845, %v1842
    %v1849 = vsel %vm1837, %v1824, %v1848
    %vm1850 = vcmp.gt.f32.partialorder %v1830, 20.0
    %v1851 = vmul.f32 %v1830, 1.442695
    %v1852 = vpow.pop %v1851
    %v1853 = vadd.f32 %v1852, 1.0
    %v1854 = vlog2.pop %v1853
    %v1855 = vmul.f32 %v1854, 0.6931472
    %v1856 = vmul.f32 -0.5, %v1852
    %v1857 = vadd.f32 %v1856, 1.0
    %v1858 = vmul.f32 %v1857, %v1852
    %v1859 = vand.u32 2147483647, %v1852
    %vm1860 = vcmp.lt.f32.partialorder %v1859, 0.0004427343
    %v1861 = vsel %vm1860, %v1858, %v1855
    %v1862 = vsel %vm1850, %v1830, %v1861
    %vm1863 = vcmp.gt.f32.partialorder %v1836, 20.0
    %v1864 = vmul.f32 %v1836, 1.442695
    %v1865 = vpow.pop %v1864
    %v1866 = vadd.f32 %v1865, 1.0
    %v1867 = vlog2.pop %v1866
    %v1868 = vmul.f32 %v1867, 0.6931472
    %v1869 = vmul.f32 -0.5, %v1865
    %v1870 = vadd.f32 %v1869, 1.0
    %v1871 = vmul.f32 %v1870, %v1865
    %v1872 = vand.u32 2147483647, %v1865
    %vm1873 = vcmp.lt.f32.partialorder %v1872, 0.0004427343
    %v1874 = vsel %vm1873, %v1871, %v1868
    %v1875 = vsel %vm1863, %v1836, %v1874
    %v1876 = vmul.f32 %v1849, %v212
    %v1877 = vmul.f32 %v1862, %v214
    %v1878 = vadd.f32 %v1876, %v1877
    %v1879 = vmul.f32 %v1875, %v217
    %v1880 = vadd.f32 %v1878, %v1879
    %v1881 = vadd.f32 %v1880, %v220
    %v1882 = vmul.f32 %v1849, %v222
    %v1883 = vmul.f32 %v1862, %v224
    %v1884 = vadd.f32 %v1882, %v1883
    %v1885 = vmul.f32 %v1875, %v227
    %v1886 = vadd.f32 %v1884, %v1885
    %v1887 = vadd.f32 %v1886, %v230
    %v1888 = vmul.f32 %v1849, %v232
    %v1889 = vmul.f32 %v1862, %v234
    %v1890 = vadd.f32 %v1888, %v1889
    %v1891 = vmul.f32 %v1875, %v237
    %v1892 = vadd.f32 %v1890, %v1891
    %v1893 = vadd.f32 %v1892, %v240
    %vm1894 = vcmp.gt.f32.partialorder %v1881, 20.0
    %v1895 = vmul.f32 %v1881, 1.442695
    %v1896 = vpow.pop %v1895
    %v1897 = vadd.f32 %v1896, 1.0
    %v1898 = vlog2.pop %v1897
    %v1899 = vmul.f32 %v1898, 0.6931472
    %v1900 = vmul.f32 -0.5, %v1896
    %v1901 = vadd.f32 %v1900, 1.0
    %v1902 = vmul.f32 %v1901, %v1896
    %v1903 = vand.u32 2147483647, %v1896
    %vm1904 = vcmp.lt.f32.partialorder %v1903, 0.0004427343
    %v1905 = vsel %vm1904, %v1902, %v1899
    %v1906 = vsel %vm1894, %v1881, %v1905
    %vm1907 = vcmp.gt.f32.partialorder %v1887, 20.0
    %v1908 = vmul.f32 %v1887, 1.442695
    %v1909 = vpow.pop %v1908
    %v1910 = vadd.f32 %v1909, 1.0
    %v1911 = vlog2.pop %v1910
    %v1912 = vmul.f32 %v1911, 0.6931472
    %v1913 = vmul.f32 -0.5, %v1909
    %v1914 = vadd.f32 %v1913, 1.0
    %v1915 = vmul.f32 %v1914, %v1909
    %v1916 = vand.u32 2147483647, %v1909
    %vm1917 = vcmp.lt.f32.partialorder %v1916, 0.0004427343
    %v1918 = vsel %vm1917, %v1915, %v1912
    %v1919 = vsel %vm1907, %v1887, %v1918
    %vm1920 = vcmp.gt.f32.partialorder %v1893, 20.0
    %v1921 = vmul.f32 %v1893, 1.442695
    %v1922 = vpow.pop %v1921
    %v1923 = vadd.f32 %v1922, 1.0
    %v1924 = vlog2.pop %v1923
    %v1925 = vmul.f32 %v1924, 0.6931472
    %v1926 = vmul.f32 -0.5, %v1922
    %v1927 = vadd.f32 %v1926, 1.0
    %v1928 = vmul.f32 %v1927, %v1922
    %v1929 = vand.u32 2147483647, %v1922
    %vm1930 = vcmp.lt.f32.partialorder %v1929, 0.0004427343
    %v1931 = vsel %vm1930, %v1928, %v1925
    %v1932 = vsel %vm1920, %v1893, %v1931
    %v1933 = vmul.f32 %v1906, %v281
    %v1934 = vmul.f32 %v1919, %v283
    %v1935 = vadd.f32 %v1933, %v1934
    %v1936 = vmul.f32 %v1932, %v286
    %v1937 = vadd.f32 %v1935, %v1936
    %v1938 = vadd.f32 %v1937, %v289
    %v1939 = vadd.f32 %v1812, %v1938
    %s1940 = scalar_lea.vmem [#allocation6], 112
    %v1941 = vld [vmem:[%s1940] sm:$0xff]
    %s1942 = scalar_lea.vmem [#allocation6], 256
    %v1943 = vld [vmem:[%s1942] sm:$0xff]
    %s1944 = scalar_lea.vmem [#allocation6], 400
    %v1945 = vld [vmem:[%s1944] sm:$0xff]
    %v1946 = vmul.f32 %v1941, %v143
    %v1947 = vmul.f32 %v1943, %v145
    %v1948 = vadd.f32 %v1946, %v1947
    %v1949 = vmul.f32 %v1945, %v148
    %v1950 = vadd.f32 %v1948, %v1949
    %v1951 = vadd.f32 %v1950, %v151
    %v1952 = vmul.f32 %v1941, %v153
    %v1953 = vmul.f32 %v1943, %v155
    %v1954 = vadd.f32 %v1952, %v1953
    %v1955 = vmul.f32 %v1945, %v158
    %v1956 = vadd.f32 %v1954, %v1955
    %v1957 = vadd.f32 %v1956, %v161
    %v1958 = vmul.f32 %v1941, %v163
    %v1959 = vmul.f32 %v1943, %v165
    %v1960 = vadd.f32 %v1958, %v1959
    %v1961 = vmul.f32 %v1945, %v168
    %v1962 = vadd.f32 %v1960, %v1961
    %v1963 = vadd.f32 %v1962, %v171
    %vm1964 = vcmp.gt.f32.partialorder %v1951, 20.0
    %v1965 = vmul.f32 %v1951, 1.442695
    %v1966 = vpow.pop %v1965
    %v1967 = vadd.f32 %v1966, 1.0
    %v1968 = vlog2.pop %v1967
    %v1969 = vmul.f32 %v1968, 0.6931472
    %v1970 = vmul.f32 -0.5, %v1966
    %v1971 = vadd.f32 %v1970, 1.0
    %v1972 = vmul.f32 %v1971, %v1966
    %v1973 = vand.u32 2147483647, %v1966
    %vm1974 = vcmp.lt.f32.partialorder %v1973, 0.0004427343
    %v1975 = vsel %vm1974, %v1972, %v1969
    %v1976 = vsel %vm1964, %v1951, %v1975
    %vm1977 = vcmp.gt.f32.partialorder %v1957, 20.0
    %v1978 = vmul.f32 %v1957, 1.442695
    %v1979 = vpow.pop %v1978
    %v1980 = vadd.f32 %v1979, 1.0
    %v1981 = vlog2.pop %v1980
    %v1982 = vmul.f32 %v1981, 0.6931472
    %v1983 = vmul.f32 -0.5, %v1979
    %v1984 = vadd.f32 %v1983, 1.0
    %v1985 = vmul.f32 %v1984, %v1979
    %v1986 = vand.u32 2147483647, %v1979
    %vm1987 = vcmp.lt.f32.partialorder %v1986, 0.0004427343
    %v1988 = vsel %vm1987, %v1985, %v1982
    %v1989 = vsel %vm1977, %v1957, %v1988
    %vm1990 = vcmp.gt.f32.partialorder %v1963, 20.0
    %v1991 = vmul.f32 %v1963, 1.442695
    %v1992 = vpow.pop %v1991
    %v1993 = vadd.f32 %v1992, 1.0
    %v1994 = vlog2.pop %v1993
    %v1995 = vmul.f32 %v1994, 0.6931472
    %v1996 = vmul.f32 -0.5, %v1992
    %v1997 = vadd.f32 %v1996, 1.0
    %v1998 = vmul.f32 %v1997, %v1992
    %v1999 = vand.u32 2147483647, %v1992
    %vm2000 = vcmp.lt.f32.partialorder %v1999, 0.0004427343
    %v2001 = vsel %vm2000, %v1998, %v1995
    %v2002 = vsel %vm1990, %v1963, %v2001
    %v2003 = vmul.f32 %v1976, %v212
    %v2004 = vmul.f32 %v1989, %v214
    %v2005 = vadd.f32 %v2003, %v2004
    %v2006 = vmul.f32 %v2002, %v217
    %v2007 = vadd.f32 %v2005, %v2006
    %v2008 = vadd.f32 %v2007, %v220
    %v2009 = vmul.f32 %v1976, %v222
    %v2010 = vmul.f32 %v1989, %v224
    %v2011 = vadd.f32 %v2009, %v2010
    %v2012 = vmul.f32 %v2002, %v227
    %v2013 = vadd.f32 %v2011, %v2012
    %v2014 = vadd.f32 %v2013, %v230
    %v2015 = vmul.f32 %v1976, %v232
    %v2016 = vmul.f32 %v1989, %v234
    %v2017 = vadd.f32 %v2015, %v2016
    %v2018 = vmul.f32 %v2002, %v237
    %v2019 = vadd.f32 %v2017, %v2018
    %v2020 = vadd.f32 %v2019, %v240
    %vm2021 = vcmp.gt.f32.partialorder %v2008, 20.0
    %v2022 = vmul.f32 %v2008, 1.442695
    %v2023 = vpow.pop %v2022
    %v2024 = vadd.f32 %v2023, 1.0
    %v2025 = vlog2.pop %v2024
    %v2026 = vmul.f32 %v2025, 0.6931472
    %v2027 = vmul.f32 -0.5, %v2023
    %v2028 = vadd.f32 %v2027, 1.0
    %v2029 = vmul.f32 %v2028, %v2023
    %v2030 = vand.u32 2147483647, %v2023
    %vm2031 = vcmp.lt.f32.partialorder %v2030, 0.0004427343
    %v2032 = vsel %vm2031, %v2029, %v2026
    %v2033 = vsel %vm2021, %v2008, %v2032
    %vm2034 = vcmp.gt.f32.partialorder %v2014, 20.0
    %v2035 = vmul.f32 %v2014, 1.442695
    %v2036 = vpow.pop %v2035
    %v2037 = vadd.f32 %v2036, 1.0
    %v2038 = vlog2.pop %v2037
    %v2039 = vmul.f32 %v2038, 0.6931472
    %v2040 = vmul.f32 -0.5, %v2036
    %v2041 = vadd.f32 %v2040, 1.0
    %v2042 = vmul.f32 %v2041, %v2036
    %v2043 = vand.u32 2147483647, %v2036
    %vm2044 = vcmp.lt.f32.partialorder %v2043, 0.0004427343
    %v2045 = vsel %vm2044, %v2042, %v2039
    %v2046 = vsel %vm2034, %v2014, %v2045
    %vm2047 = vcmp.gt.f32.partialorder %v2020, 20.0
    %v2048 = vmul.f32 %v2020, 1.442695
    %v2049 = vpow.pop %v2048
    %v2050 = vadd.f32 %v2049, 1.0
    %v2051 = vlog2.pop %v2050
    %v2052 = vmul.f32 %v2051, 0.6931472
    %v2053 = vmul.f32 -0.5, %v2049
    %v2054 = vadd.f32 %v2053, 1.0
    %v2055 = vmul.f32 %v2054, %v2049
    %v2056 = vand.u32 2147483647, %v2049
    %vm2057 = vcmp.lt.f32.partialorder %v2056, 0.0004427343
    %v2058 = vsel %vm2057, %v2055, %v2052
    %v2059 = vsel %vm2047, %v2020, %v2058
    %v2060 = vmul.f32 %v2033, %v281
    %v2061 = vmul.f32 %v2046, %v283
    %v2062 = vadd.f32 %v2060, %v2061
    %v2063 = vmul.f32 %v2059, %v286
    %v2064 = vadd.f32 %v2062, %v2063
    %v2065 = vadd.f32 %v2064, %v289
    %v2066 = vadd.f32 %v1939, %v2065
    %s2067 = scalar_lea.vmem [#allocation6], 120
    %v2068 = vld [vmem:[%s2067] sm:$0xff]
    %s2069 = scalar_lea.vmem [#allocation6], 264
    %v2070 = vld [vmem:[%s2069] sm:$0xff]
    %s2071 = scalar_lea.vmem [#allocation6], 408
    %v2072 = vld [vmem:[%s2071] sm:$0xff]
    %v2073 = vmul.f32 %v2068, %v143
    %v2074 = vmul.f32 %v2070, %v145
    %v2075 = vadd.f32 %v2073, %v2074
    %v2076 = vmul.f32 %v2072, %v148
    %v2077 = vadd.f32 %v2075, %v2076
    %v2078 = vadd.f32 %v2077, %v151
    %v2079 = vmul.f32 %v2068, %v153
    %v2080 = vmul.f32 %v2070, %v155
    %v2081 = vadd.f32 %v2079, %v2080
    %v2082 = vmul.f32 %v2072, %v158
    %v2083 = vadd.f32 %v2081, %v2082
    %v2084 = vadd.f32 %v2083, %v161
    %v2085 = vmul.f32 %v2068, %v163
    %v2086 = vmul.f32 %v2070, %v165
    %v2087 = vadd.f32 %v2085, %v2086
    %v2088 = vmul.f32 %v2072, %v168
    %v2089 = vadd.f32 %v2087, %v2088
    %v2090 = vadd.f32 %v2089, %v171
    %vm2091 = vcmp.gt.f32.partialorder %v2078, 20.0
    %v2092 = vmul.f32 %v2078, 1.442695
    %v2093 = vpow.pop %v2092
    %v2094 = vadd.f32 %v2093, 1.0
    %v2095 = vlog2.pop %v2094
    %v2096 = vmul.f32 %v2095, 0.6931472
    %v2097 = vmul.f32 -0.5, %v2093
    %v2098 = vadd.f32 %v2097, 1.0
    %v2099 = vmul.f32 %v2098, %v2093
    %v2100 = vand.u32 2147483647, %v2093
    %vm2101 = vcmp.lt.f32.partialorder %v2100, 0.0004427343
    %v2102 = vsel %vm2101, %v2099, %v2096
    %v2103 = vsel %vm2091, %v2078, %v2102
    %vm2104 = vcmp.gt.f32.partialorder %v2084, 20.0
    %v2105 = vmul.f32 %v2084, 1.442695
    %v2106 = vpow.pop %v2105
    %v2107 = vadd.f32 %v2106, 1.0
    %v2108 = vlog2.pop %v2107
    %v2109 = vmul.f32 %v2108, 0.6931472
    %v2110 = vmul.f32 -0.5, %v2106
    %v2111 = vadd.f32 %v2110, 1.0
    %v2112 = vmul.f32 %v2111, %v2106
    %v2113 = vand.u32 2147483647, %v2106
    %vm2114 = vcmp.lt.f32.partialorder %v2113, 0.0004427343
    %v2115 = vsel %vm2114, %v2112, %v2109
    %v2116 = vsel %vm2104, %v2084, %v2115
    %vm2117 = vcmp.gt.f32.partialorder %v2090, 20.0
    %v2118 = vmul.f32 %v2090, 1.442695
    %v2119 = vpow.pop %v2118
    %v2120 = vadd.f32 %v2119, 1.0
    %v2121 = vlog2.pop %v2120
    %v2122 = vmul.f32 %v2121, 0.6931472
    %v2123 = vmul.f32 -0.5, %v2119
    %v2124 = vadd.f32 %v2123, 1.0
    %v2125 = vmul.f32 %v2124, %v2119
    %v2126 = vand.u32 2147483647, %v2119
    %vm2127 = vcmp.lt.f32.partialorder %v2126, 0.0004427343
    %v2128 = vsel %vm2127, %v2125, %v2122
    %v2129 = vsel %vm2117, %v2090, %v2128
    %v2130 = vmul.f32 %v2103, %v212
    %v2131 = vmul.f32 %v2116, %v214
    %v2132 = vadd.f32 %v2130, %v2131
    %v2133 = vmul.f32 %v2129, %v217
    %v2134 = vadd.f32 %v2132, %v2133
    %v2135 = vadd.f32 %v2134, %v220
    %v2136 = vmul.f32 %v2103, %v222
    %v2137 = vmul.f32 %v2116, %v224
    %v2138 = vadd.f32 %v2136, %v2137
    %v2139 = vmul.f32 %v2129, %v227
    %v2140 = vadd.f32 %v2138, %v2139
    %v2141 = vadd.f32 %v2140, %v230
    %v2142 = vmul.f32 %v2103, %v232
    %v2143 = vmul.f32 %v2116, %v234
    %v2144 = vadd.f32 %v2142, %v2143
    %v2145 = vmul.f32 %v2129, %v237
    %v2146 = vadd.f32 %v2144, %v2145
    %v2147 = vadd.f32 %v2146, %v240
    %vm2148 = vcmp.gt.f32.partialorder %v2135, 20.0
    %v2149 = vmul.f32 %v2135, 1.442695
    %v2150 = vpow.pop %v2149
    %v2151 = vadd.f32 %v2150, 1.0
    %v2152 = vlog2.pop %v2151
    %v2153 = vmul.f32 %v2152, 0.6931472
    %v2154 = vmul.f32 -0.5, %v2150
    %v2155 = vadd.f32 %v2154, 1.0
    %v2156 = vmul.f32 %v2155, %v2150
    %v2157 = vand.u32 2147483647, %v2150
    %vm2158 = vcmp.lt.f32.partialorder %v2157, 0.0004427343
    %v2159 = vsel %vm2158, %v2156, %v2153
    %v2160 = vsel %vm2148, %v2135, %v2159
    %vm2161 = vcmp.gt.f32.partialorder %v2141, 20.0
    %v2162 = vmul.f32 %v2141, 1.442695
    %v2163 = vpow.pop %v2162
    %v2164 = vadd.f32 %v2163, 1.0
    %v2165 = vlog2.pop %v2164
    %v2166 = vmul.f32 %v2165, 0.6931472
    %v2167 = vmul.f32 -0.5, %v2163
    %v2168 = vadd.f32 %v2167, 1.0
    %v2169 = vmul.f32 %v2168, %v2163
    %v2170 = vand.u32 2147483647, %v2163
    %vm2171 = vcmp.lt.f32.partialorder %v2170, 0.0004427343
    %v2172 = vsel %vm2171, %v2169, %v2166
    %v2173 = vsel %vm2161, %v2141, %v2172
    %vm2174 = vcmp.gt.f32.partialorder %v2147, 20.0
    %v2175 = vmul.f32 %v2147, 1.442695
    %v2176 = vpow.pop %v2175
    %v2177 = vadd.f32 %v2176, 1.0
    %v2178 = vlog2.pop %v2177
    %v2179 = vmul.f32 %v2178, 0.6931472
    %v2180 = vmul.f32 -0.5, %v2176
    %v2181 = vadd.f32 %v2180, 1.0
    %v2182 = vmul.f32 %v2181, %v2176
    %v2183 = vand.u32 2147483647, %v2176
    %vm2184 = vcmp.lt.f32.partialorder %v2183, 0.0004427343
    %v2185 = vsel %vm2184, %v2182, %v2179
    %v2186 = vsel %vm2174, %v2147, %v2185
    %v2187 = vmul.f32 %v2160, %v281
    %v2188 = vmul.f32 %v2173, %v283
    %v2189 = vadd.f32 %v2187, %v2188
    %v2190 = vmul.f32 %v2186, %v286
    %v2191 = vadd.f32 %v2189, %v2190
    %v2192 = vadd.f32 %v2191, %v289
    %v2193 = vadd.f32 %v2066, %v2192
    %s2194 = scalar_lea.vmem [#allocation6], 128
    %v2195 = vld [vmem:[%s2194] sm:$0xff]
    %s2196 = scalar_lea.vmem [#allocation6], 272
    %v2197 = vld [vmem:[%s2196] sm:$0xff]
    %s2198 = scalar_lea.vmem [#allocation6], 416
    %v2199 = vld [vmem:[%s2198] sm:$0xff]
    %v2200 = vmul.f32 %v2195, %v143
    %v2201 = vmul.f32 %v2197, %v145
    %v2202 = vadd.f32 %v2200, %v2201
    %v2203 = vmul.f32 %v2199, %v148
    %v2204 = vadd.f32 %v2202, %v2203
    %v2205 = vadd.f32 %v2204, %v151
    %v2206 = vmul.f32 %v2195, %v153
    %v2207 = vmul.f32 %v2197, %v155
    %v2208 = vadd.f32 %v2206, %v2207
    %v2209 = vmul.f32 %v2199, %v158
    %v2210 = vadd.f32 %v2208, %v2209
    %v2211 = vadd.f32 %v2210, %v161
    %v2212 = vmul.f32 %v2195, %v163
    %v2213 = vmul.f32 %v2197, %v165
    %v2214 = vadd.f32 %v2212, %v2213
    %v2215 = vmul.f32 %v2199, %v168
    %v2216 = vadd.f32 %v2214, %v2215
    %v2217 = vadd.f32 %v2216, %v171
    %vm2218 = vcmp.gt.f32.partialorder %v2205, 20.0
    %v2219 = vmul.f32 %v2205, 1.442695
    %v2220 = vpow.pop %v2219
    %v2221 = vadd.f32 %v2220, 1.0
    %v2222 = vlog2.pop %v2221
    %v2223 = vmul.f32 %v2222, 0.6931472
    %v2224 = vmul.f32 -0.5, %v2220
    %v2225 = vadd.f32 %v2224, 1.0
    %v2226 = vmul.f32 %v2225, %v2220
    %v2227 = vand.u32 2147483647, %v2220
    %vm2228 = vcmp.lt.f32.partialorder %v2227, 0.0004427343
    %v2229 = vsel %vm2228, %v2226, %v2223
    %v2230 = vsel %vm2218, %v2205, %v2229
    %vm2231 = vcmp.gt.f32.partialorder %v2211, 20.0
    %v2232 = vmul.f32 %v2211, 1.442695
    %v2233 = vpow.pop %v2232
    %v2234 = vadd.f32 %v2233, 1.0
    %v2235 = vlog2.pop %v2234
    %v2236 = vmul.f32 %v2235, 0.6931472
    %v2237 = vmul.f32 -0.5, %v2233
    %v2238 = vadd.f32 %v2237, 1.0
    %v2239 = vmul.f32 %v2238, %v2233
    %v2240 = vand.u32 2147483647, %v2233
    %vm2241 = vcmp.lt.f32.partialorder %v2240, 0.0004427343
    %v2242 = vsel %vm2241, %v2239, %v2236
    %v2243 = vsel %vm2231, %v2211, %v2242
    %vm2244 = vcmp.gt.f32.partialorder %v2217, 20.0
    %v2245 = vmul.f32 %v2217, 1.442695
    %v2246 = vpow.pop %v2245
    %v2247 = vadd.f32 %v2246, 1.0
    %v2248 = vlog2.pop %v2247
    %v2249 = vmul.f32 %v2248, 0.6931472
    %v2250 = vmul.f32 -0.5, %v2246
    %v2251 = vadd.f32 %v2250, 1.0
    %v2252 = vmul.f32 %v2251, %v2246
    %v2253 = vand.u32 2147483647, %v2246
    %vm2254 = vcmp.lt.f32.partialorder %v2253, 0.0004427343
    %v2255 = vsel %vm2254, %v2252, %v2249
    %v2256 = vsel %vm2244, %v2217, %v2255
    %v2257 = vmul.f32 %v2230, %v212
    %v2258 = vmul.f32 %v2243, %v214
    %v2259 = vadd.f32 %v2257, %v2258
    %v2260 = vmul.f32 %v2256, %v217
    %v2261 = vadd.f32 %v2259, %v2260
    %v2262 = vadd.f32 %v2261, %v220
    %v2263 = vmul.f32 %v2230, %v222
    %v2264 = vmul.f32 %v2243, %v224
    %v2265 = vadd.f32 %v2263, %v2264
    %v2266 = vmul.f32 %v2256, %v227
    %v2267 = vadd.f32 %v2265, %v2266
    %v2268 = vadd.f32 %v2267, %v230
    %v2269 = vmul.f32 %v2230, %v232
    %v2270 = vmul.f32 %v2243, %v234
    %v2271 = vadd.f32 %v2269, %v2270
    %v2272 = vmul.f32 %v2256, %v237
    %v2273 = vadd.f32 %v2271, %v2272
    %v2274 = vadd.f32 %v2273, %v240
    %vm2275 = vcmp.gt.f32.partialorder %v2262, 20.0
    %v2276 = vmul.f32 %v2262, 1.442695
    %v2277 = vpow.pop %v2276
    %v2278 = vadd.f32 %v2277, 1.0
    %v2279 = vlog2.pop %v2278
    %v2280 = vmul.f32 %v2279, 0.6931472
    %v2281 = vmul.f32 -0.5, %v2277
    %v2282 = vadd.f32 %v2281, 1.0
    %v2283 = vmul.f32 %v2282, %v2277
    %v2284 = vand.u32 2147483647, %v2277
    %vm2285 = vcmp.lt.f32.partialorder %v2284, 0.0004427343
    %v2286 = vsel %vm2285, %v2283, %v2280
    %v2287 = vsel %vm2275, %v2262, %v2286
    %vm2288 = vcmp.gt.f32.partialorder %v2268, 20.0
    %v2289 = vmul.f32 %v2268, 1.442695
    %v2290 = vpow.pop %v2289
    %v2291 = vadd.f32 %v2290, 1.0
    %v2292 = vlog2.pop %v2291
    %v2293 = vmul.f32 %v2292, 0.6931472
    %v2294 = vmul.f32 -0.5, %v2290
    %v2295 = vadd.f32 %v2294, 1.0
    %v2296 = vmul.f32 %v2295, %v2290
    %v2297 = vand.u32 2147483647, %v2290
    %vm2298 = vcmp.lt.f32.partialorder %v2297, 0.0004427343
    %v2299 = vsel %vm2298, %v2296, %v2293
    %v2300 = vsel %vm2288, %v2268, %v2299
    %vm2301 = vcmp.gt.f32.partialorder %v2274, 20.0
    %v2302 = vmul.f32 %v2274, 1.442695
    %v2303 = vpow.pop %v2302
    %v2304 = vadd.f32 %v2303, 1.0
    %v2305 = vlog2.pop %v2304
    %v2306 = vmul.f32 %v2305, 0.6931472
    %v2307 = vmul.f32 -0.5, %v2303
    %v2308 = vadd.f32 %v2307, 1.0
    %v2309 = vmul.f32 %v2308, %v2303
    %v2310 = vand.u32 2147483647, %v2303
    %vm2311 = vcmp.lt.f32.partialorder %v2310, 0.0004427343
    %v2312 = vsel %vm2311, %v2309, %v2306
    %v2313 = vsel %vm2301, %v2274, %v2312
    %v2314 = vmul.f32 %v2287, %v281
    %v2315 = vmul.f32 %v2300, %v283
    %v2316 = vadd.f32 %v2314, %v2315
    %v2317 = vmul.f32 %v2313, %v286
    %v2318 = vadd.f32 %v2316, %v2317
    %v2319 = vadd.f32 %v2318, %v289
    %v2320 = vadd.f32 %v2193, %v2319
    %s2321 = scalar_lea.vmem [#allocation6], 136
    %v2322 = vld [vmem:[%s2321] sm:$0xff]
    %s2323 = scalar_lea.vmem [#allocation6], 280
    %v2324 = vld [vmem:[%s2323] sm:$0xff]
    %s2325 = scalar_lea.vmem [#allocation6], 424
    %v2326 = vld [vmem:[%s2325] sm:$0xff]
    %v2327 = vmul.f32 %v2322, %v143
    %v2328 = vmul.f32 %v2324, %v145
    %v2329 = vadd.f32 %v2327, %v2328
    %v2330 = vmul.f32 %v2326, %v148
    %v2331 = vadd.f32 %v2329, %v2330
    %v2332 = vadd.f32 %v2331, %v151
    %v2333 = vmul.f32 %v2322, %v153
    %v2334 = vmul.f32 %v2324, %v155
    %v2335 = vadd.f32 %v2333, %v2334
    %v2336 = vmul.f32 %v2326, %v158
    %v2337 = vadd.f32 %v2335, %v2336
    %v2338 = vadd.f32 %v2337, %v161
    %v2339 = vmul.f32 %v2322, %v163
    %v2340 = vmul.f32 %v2324, %v165
    %v2341 = vadd.f32 %v2339, %v2340
    %v2342 = vmul.f32 %v2326, %v168
    %v2343 = vadd.f32 %v2341, %v2342
    %v2344 = vadd.f32 %v2343, %v171
    %vm2345 = vcmp.gt.f32.partialorder %v2332, 20.0
    %v2346 = vmul.f32 %v2332, 1.442695
    %v2347 = vpow.pop %v2346
    %v2348 = vadd.f32 %v2347, 1.0
    %v2349 = vlog2.pop %v2348
    %v2350 = vmul.f32 %v2349, 0.6931472
    %v2351 = vmul.f32 -0.5, %v2347
    %v2352 = vadd.f32 %v2351, 1.0
    %v2353 = vmul.f32 %v2352, %v2347
    %v2354 = vand.u32 2147483647, %v2347
    %vm2355 = vcmp.lt.f32.partialorder %v2354, 0.0004427343
    %v2356 = vsel %vm2355, %v2353, %v2350
    %v2357 = vsel %vm2345, %v2332, %v2356
    %vm2358 = vcmp.gt.f32.partialorder %v2338, 20.0
    %v2359 = vmul.f32 %v2338, 1.442695
    %v2360 = vpow.pop %v2359
    %v2361 = vadd.f32 %v2360, 1.0
    %v2362 = vlog2.pop %v2361
    %v2363 = vmul.f32 %v2362, 0.6931472
    %v2364 = vmul.f32 -0.5, %v2360
    %v2365 = vadd.f32 %v2364, 1.0
    %v2366 = vmul.f32 %v2365, %v2360
    %v2367 = vand.u32 2147483647, %v2360
    %vm2368 = vcmp.lt.f32.partialorder %v2367, 0.0004427343
    %v2369 = vsel %vm2368, %v2366, %v2363
    %v2370 = vsel %vm2358, %v2338, %v2369
    %vm2371 = vcmp.gt.f32.partialorder %v2344, 20.0
    %v2372 = vmul.f32 %v2344, 1.442695
    %v2373 = vpow.pop %v2372
    %v2374 = vadd.f32 %v2373, 1.0
    %v2375 = vlog2.pop %v2374
    %v2376 = vmul.f32 %v2375, 0.6931472
    %v2377 = vmul.f32 -0.5, %v2373
    %v2378 = vadd.f32 %v2377, 1.0
    %v2379 = vmul.f32 %v2378, %v2373
    %v2380 = vand.u32 2147483647, %v2373
    %vm2381 = vcmp.lt.f32.partialorder %v2380, 0.0004427343
    %v2382 = vsel %vm2381, %v2379, %v2376
    %v2383 = vsel %vm2371, %v2344, %v2382
    %v2384 = vmul.f32 %v2357, %v212
    %v2385 = vmul.f32 %v2370, %v214
    %v2386 = vadd.f32 %v2384, %v2385
    %v2387 = vmul.f32 %v2383, %v217
    %v2388 = vadd.f32 %v2386, %v2387
    %v2389 = vadd.f32 %v2388, %v220
    %v2390 = vmul.f32 %v2357, %v222
    %v2391 = vmul.f32 %v2370, %v224
    %v2392 = vadd.f32 %v2390, %v2391
    %v2393 = vmul.f32 %v2383, %v227
    %v2394 = vadd.f32 %v2392, %v2393
    %v2395 = vadd.f32 %v2394, %v230
    %v2396 = vmul.f32 %v2357, %v232
    %v2397 = vmul.f32 %v2370, %v234
    %v2398 = vadd.f32 %v2396, %v2397
    %v2399 = vmul.f32 %v2383, %v237
    %v2400 = vadd.f32 %v2398, %v2399
    %v2401 = vadd.f32 %v2400, %v240
    %vm2402 = vcmp.gt.f32.partialorder %v2389, 20.0
    %v2403 = vmul.f32 %v2389, 1.442695
    %v2404 = vpow.pop %v2403
    %v2405 = vadd.f32 %v2404, 1.0
    %v2406 = vlog2.pop %v2405
    %v2407 = vmul.f32 %v2406, 0.6931472
    %v2408 = vmul.f32 -0.5, %v2404
    %v2409 = vadd.f32 %v2408, 1.0
    %v2410 = vmul.f32 %v2409, %v2404
    %v2411 = vand.u32 2147483647, %v2404
    %vm2412 = vcmp.lt.f32.partialorder %v2411, 0.0004427343
    %v2413 = vsel %vm2412, %v2410, %v2407
    %v2414 = vsel %vm2402, %v2389, %v2413
    %vm2415 = vcmp.gt.f32.partialorder %v2395, 20.0
    %v2416 = vmul.f32 %v2395, 1.442695
    %v2417 = vpow.pop %v2416
    %v2418 = vadd.f32 %v2417, 1.0
    %v2419 = vlog2.pop %v2418
    %v2420 = vmul.f32 %v2419, 0.6931472
    %v2421 = vmul.f32 -0.5, %v2417
    %v2422 = vadd.f32 %v2421, 1.0
    %v2423 = vmul.f32 %v2422, %v2417
    %v2424 = vand.u32 2147483647, %v2417
    %vm2425 = vcmp.lt.f32.partialorder %v2424, 0.0004427343
    %v2426 = vsel %vm2425, %v2423, %v2420
    %v2427 = vsel %vm2415, %v2395, %v2426
    %vm2428 = vcmp.gt.f32.partialorder %v2401, 20.0
    %v2429 = vmul.f32 %v2401, 1.442695
    %v2430 = vpow.pop %v2429
    %v2431 = vadd.f32 %v2430, 1.0
    %v2432 = vlog2.pop %v2431
    %v2433 = vmul.f32 %v2432, 0.6931472
    %v2434 = vmul.f32 -0.5, %v2430
    %v2435 = vadd.f32 %v2434, 1.0
    %v2436 = vmul.f32 %v2435, %v2430
    %v2437 = vand.u32 2147483647, %v2430
    %vm2438 = vcmp.lt.f32.partialorder %v2437, 0.0004427343
    %v2439 = vsel %vm2438, %v2436, %v2433
    %v2440 = vsel %vm2428, %v2401, %v2439
    %v2441 = vmul.f32 %v2414, %v281
    %v2442 = vmul.f32 %v2427, %v283
    %v2443 = vadd.f32 %v2441, %v2442
    %v2444 = vmul.f32 %v2440, %v286
    %v2445 = vadd.f32 %v2443, %v2444
    %v2446 = vadd.f32 %v2445, %v289
    %v2447 = vadd.f32 %v2320, %v2446
    %v2448 = vstv %s82
    %v2449 = vmul.f32 %v925, %v2448
    %v2450 = vstv %s85
    %v2451 = vmul.f32 %v1686, %v2450
    %v2452 = vadd.f32 %v2449, %v2451
    %v2453 = vstv %s88
    %v2454 = vmul.f32 %v2447, %v2453
    %v2455 = vadd.f32 %v2452, %v2454
    %v2456 = vstv %s91
    %v2457 = vadd.f32 %v2455, %v2456
    %v2458 = vstv %s83
    %v2459 = vmul.f32 %v925, %v2458
    %v2460 = vstv %s86
    %v2461 = vmul.f32 %v1686, %v2460
    %v2462 = vadd.f32 %v2459, %v2461
    %v2463 = vstv %s89
    %v2464 = vmul.f32 %v2447, %v2463
    %v2465 = vadd.f32 %v2462, %v2464
    %v2466 = vstv %s92
    %v2467 = vadd.f32 %v2465, %v2466
    %v2468 = vstv %s84
    %v2469 = vmul.f32 %v925, %v2468
    %v2470 = vstv %s87
    %v2471 = vmul.f32 %v1686, %v2470
    %v2472 = vadd.f32 %v2469, %v2471
    %v2473 = vstv %s90
    %v2474 = vmul.f32 %v2447, %v2473
    %v2475 = vadd.f32 %v2472, %v2474
    %v2476 = vstv %s93
    %v2477 = vadd.f32 %v2475, %v2476
    %vm2478 = vcmp.gt.f32.partialorder %v2457, 20.0
    %v2479 = vmul.f32 %v2457, 1.442695
    %v2480 = vpow.pop %v2479
    %v2481 = vadd.f32 %v2480, 1.0
    %v2482 = vlog2.pop %v2481
    %v2483 = vmul.f32 %v2482, 0.6931472
    %v2484 = vmul.f32 -0.5, %v2480
    %v2485 = vadd.f32 %v2484, 1.0
    %v2486 = vmul.f32 %v2485, %v2480
    %v2487 = vand.u32 2147483647, %v2480
    %vm2488 = vcmp.lt.f32.partialorder %v2487, 0.0004427343
    %v2489 = vsel %vm2488, %v2486, %v2483
    %v2490 = vsel %vm2478, %v2457, %v2489
    %vm2491 = vcmp.gt.f32.partialorder %v2467, 20.0
    %v2492 = vmul.f32 %v2467, 1.442695
    %v2493 = vpow.pop %v2492
    %v2494 = vadd.f32 %v2493, 1.0
    %v2495 = vlog2.pop %v2494
    %v2496 = vmul.f32 %v2495, 0.6931472
    %v2497 = vmul.f32 -0.5, %v2493
    %v2498 = vadd.f32 %v2497, 1.0
    %v2499 = vmul.f32 %v2498, %v2493
    %v2500 = vand.u32 2147483647, %v2493
    %vm2501 = vcmp.lt.f32.partialorder %v2500, 0.0004427343
    %v2502 = vsel %vm2501, %v2499, %v2496
    %v2503 = vsel %vm2491, %v2467, %v2502
    %vm2504 = vcmp.gt.f32.partialorder %v2477, 20.0
    %v2505 = vmul.f32 %v2477, 1.442695
    %v2506 = vpow.pop %v2505
    %v2507 = vadd.f32 %v2506, 1.0
    %v2508 = vlog2.pop %v2507
    %v2509 = vmul.f32 %v2508, 0.6931472
    %v2510 = vmul.f32 -0.5, %v2506
    %v2511 = vadd.f32 %v2510, 1.0
    %v2512 = vmul.f32 %v2511, %v2506
    %v2513 = vand.u32 2147483647, %v2506
    %vm2514 = vcmp.lt.f32.partialorder %v2513, 0.0004427343
    %v2515 = vsel %vm2514, %v2512, %v2509
    %v2516 = vsel %vm2504, %v2477, %v2515
    %v2517 = vstv %s94
    %v2518 = vmul.f32 %v2490, %v2517
    %v2519 = vstv %s97
    %v2520 = vmul.f32 %v2503, %v2519
    %v2521 = vadd.f32 %v2518, %v2520
    %v2522 = vstv %s100
    %v2523 = vmul.f32 %v2516, %v2522
    %v2524 = vadd.f32 %v2521, %v2523
    %v2525 = vstv %s103
    %v2526 = vadd.f32 %v2524, %v2525
    %v2527 = vstv %s95
    %v2528 = vmul.f32 %v2490, %v2527
    %v2529 = vstv %s98
    %v2530 = vmul.f32 %v2503, %v2529
    %v2531 = vadd.f32 %v2528, %v2530
    %v2532 = vstv %s101
    %v2533 = vmul.f32 %v2516, %v2532
    %v2534 = vadd.f32 %v2531, %v2533
    %v2535 = vstv %s104
    %v2536 = vadd.f32 %v2534, %v2535
    %v2537 = vstv %s96
    %v2538 = vmul.f32 %v2490, %v2537
    %v2539 = vstv %s99
    %v2540 = vmul.f32 %v2503, %v2539
    %v2541 = vadd.f32 %v2538, %v2540
    %v2542 = vstv %s102
    %v2543 = vmul.f32 %v2516, %v2542
    %v2544 = vadd.f32 %v2541, %v2543
    %v2545 = vstv %s105
    %v2546 = vadd.f32 %v2544, %v2545
    %vm2547 = vcmp.gt.f32.partialorder %v2526, 20.0
    %v2548 = vmul.f32 %v2526, 1.442695
    %v2549 = vpow.pop %v2548
    %v2550 = vadd.f32 %v2549, 1.0
    %v2551 = vlog2.pop %v2550
    %v2552 = vmul.f32 %v2551, 0.6931472
    %v2553 = vmul.f32 -0.5, %v2549
    %v2554 = vadd.f32 %v2553, 1.0
    %v2555 = vmul.f32 %v2554, %v2549
    %v2556 = vand.u32 2147483647, %v2549
    %vm2557 = vcmp.lt.f32.partialorder %v2556, 0.0004427343
    %v2558 = vsel %vm2557, %v2555, %v2552
    %v2559 = vsel %vm2547, %v2526, %v2558
    %vm2560 = vcmp.gt.f32.partialorder %v2536, 20.0
    %v2561 = vmul.f32 %v2536, 1.442695
    %v2562 = vpow.pop %v2561
    %v2563 = vadd.f32 %v2562, 1.0
    %v2564 = vlog2.pop %v2563
    %v2565 = vmul.f32 %v2564, 0.6931472
    %v2566 = vmul.f32 -0.5, %v2562
    %v2567 = vadd.f32 %v2566, 1.0
    %v2568 = vmul.f32 %v2567, %v2562
    %v2569 = vand.u32 2147483647, %v2562
    %vm2570 = vcmp.lt.f32.partialorder %v2569, 0.0004427343
    %v2571 = vsel %vm2570, %v2568, %v2565
    %v2572 = vsel %vm2560, %v2536, %v2571
    %vm2573 = vcmp.gt.f32.partialorder %v2546, 20.0
    %v2574 = vmul.f32 %v2546, 1.442695
    %v2575 = vpow.pop %v2574
    %v2576 = vadd.f32 %v2575, 1.0
    %v2577 = vlog2.pop %v2576
    %v2578 = vmul.f32 %v2577, 0.6931472
    %v2579 = vmul.f32 -0.5, %v2575
    %v2580 = vadd.f32 %v2579, 1.0
    %v2581 = vmul.f32 %v2580, %v2575
    %v2582 = vand.u32 2147483647, %v2575
    %vm2583 = vcmp.lt.f32.partialorder %v2582, 0.0004427343
    %v2584 = vsel %vm2583, %v2581, %v2578
    %v2585 = vsel %vm2573, %v2546, %v2584
    %v2586 = vstv %s106
    %v2587 = vmul.f32 %v2559, %v2586
    %v2588 = vstv %s107
    %v2589 = vmul.f32 %v2572, %v2588
    %v2590 = vadd.f32 %v2587, %v2589
    %v2591 = vstv %s108
    %v2592 = vmul.f32 %v2585, %v2591
    %v2593 = vadd.f32 %v2590, %v2592
    %v2594 = vstv %s109
    %v2595 = vadd.f32 %v2593, %v2594
    %v2596 = vld [vmem:[#allocation7] sm:$0xff]
    %s2597 = scalar_lea.vmem [#allocation7], 24
    %v2598 = vld [vmem:[%s2597] sm:$0xff]
    %v2599 = vstv %s110
    %v2600 = vmul.f32 %v2596, %v2599
    %v2601 = vstv %s113
    %v2602 = vmul.f32 %v2598, %v2601
    %v2603 = vadd.f32 %v2600, %v2602
    %v2604 = vstv %s116
    %v2605 = vadd.f32 %v2603, %v2604
    %v2606 = vstv %s111
    %v2607 = vmul.f32 %v2596, %v2606
    %v2608 = vstv %s114
    %v2609 = vmul.f32 %v2598, %v2608
    %v2610 = vadd.f32 %v2607, %v2609
    %v2611 = vstv %s117
    %v2612 = vadd.f32 %v2610, %v2611
    %v2613 = vstv %s112
    %v2614 = vmul.f32 %v2596, %v2613
    %v2615 = vstv %s115
    %v2616 = vmul.f32 %v2598, %v2615
    %v2617 = vadd.f32 %v2614, %v2616
    %v2618 = vstv %s118
    %v2619 = vadd.f32 %v2617, %v2618
    %vm2620 = vcmp.gt.f32.partialorder %v2605, 20.0
    %v2621 = vmul.f32 %v2605, 1.442695
    %v2622 = vpow.pop %v2621
    %v2623 = vadd.f32 %v2622, 1.0
    %v2624 = vlog2.pop %v2623
    %v2625 = vmul.f32 %v2624, 0.6931472
    %v2626 = vmul.f32 -0.5, %v2622
    %v2627 = vadd.f32 %v2626, 1.0
    %v2628 = vmul.f32 %v2627, %v2622
    %v2629 = vand.u32 2147483647, %v2622
    %vm2630 = vcmp.lt.f32.partialorder %v2629, 0.0004427343
    %v2631 = vsel %vm2630, %v2628, %v2625
    %v2632 = vsel %vm2620, %v2605, %v2631
    %vm2633 = vcmp.gt.f32.partialorder %v2612, 20.0
    %v2634 = vmul.f32 %v2612, 1.442695
    %v2635 = vpow.pop %v2634
    %v2636 = vadd.f32 %v2635, 1.0
    %v2637 = vlog2.pop %v2636
    %v2638 = vmul.f32 %v2637, 0.6931472
    %v2639 = vmul.f32 -0.5, %v2635
    %v2640 = vadd.f32 %v2639, 1.0
    %v2641 = vmul.f32 %v2640, %v2635
    %v2642 = vand.u32 2147483647, %v2635
    %vm2643 = vcmp.lt.f32.partialorder %v2642, 0.0004427343
    %v2644 = vsel %vm2643, %v2641, %v2638
    %v2645 = vsel %vm2633, %v2612, %v2644
    %vm2646 = vcmp.gt.f32.partialorder %v2619, 20.0
    %v2647 = vmul.f32 %v2619, 1.442695
    %v2648 = vpow.pop %v2647
    %v2649 = vadd.f32 %v2648, 1.0
    %v2650 = vlog2.pop %v2649
    %v2651 = vmul.f32 %v2650, 0.6931472
    %v2652 = vmul.f32 -0.5, %v2648
    %v2653 = vadd.f32 %v2652, 1.0
    %v2654 = vmul.f32 %v2653, %v2648
    %v2655 = vand.u32 2147483647, %v2648
    %vm2656 = vcmp.lt.f32.partialorder %v2655, 0.0004427343
    %v2657 = vsel %vm2656, %v2654, %v2651
    %v2658 = vsel %vm2646, %v2619, %v2657
    %v2659 = vstv %s119
    %v2660 = vmul.f32 %v2632, %v2659
    %v2661 = vstv %s122
    %v2662 = vmul.f32 %v2645, %v2661
    %v2663 = vadd.f32 %v2660, %v2662
    %v2664 = vstv %s125
    %v2665 = vmul.f32 %v2658, %v2664
    %v2666 = vadd.f32 %v2663, %v2665
    %v2667 = vstv %s128
    %v2668 = vadd.f32 %v2666, %v2667
    %v2669 = vstv %s120
    %v2670 = vmul.f32 %v2632, %v2669
    %v2671 = vstv %s123
    %v2672 = vmul.f32 %v2645, %v2671
    %v2673 = vadd.f32 %v2670, %v2672
    %v2674 = vstv %s126
    %v2675 = vmul.f32 %v2658, %v2674
    %v2676 = vadd.f32 %v2673, %v2675
    %v2677 = vstv %s129
    %v2678 = vadd.f32 %v2676, %v2677
    %v2679 = vstv %s121
    %v2680 = vmul.f32 %v2632, %v2679
    %v2681 = vstv %s124
    %v2682 = vmul.f32 %v2645, %v2681
    %v2683 = vadd.f32 %v2680, %v2682
    %v2684 = vstv %s127
    %v2685 = vmul.f32 %v2658, %v2684
    %v2686 = vadd.f32 %v2683, %v2685
    %v2687 = vstv %s130
    %v2688 = vadd.f32 %v2686, %v2687
    %vm2689 = vcmp.gt.f32.partialorder %v2668, 20.0
    %v2690 = vmul.f32 %v2668, 1.442695
    %v2691 = vpow.pop %v2690
    %v2692 = vadd.f32 %v2691, 1.0
    %v2693 = vlog2.pop %v2692
    %v2694 = vmul.f32 %v2693, 0.6931472
    %v2695 = vmul.f32 -0.5, %v2691
    %v2696 = vadd.f32 %v2695, 1.0
    %v2697 = vmul.f32 %v2696, %v2691
    %v2698 = vand.u32 2147483647, %v2691
    %vm2699 = vcmp.lt.f32.partialorder %v2698, 0.0004427343
    %v2700 = vsel %vm2699, %v2697, %v2694
    %v2701 = vsel %vm2689, %v2668, %v2700
    %vm2702 = vcmp.gt.f32.partialorder %v2678, 20.0
    %v2703 = vmul.f32 %v2678, 1.442695
    %v2704 = vpow.pop %v2703
    %v2705 = vadd.f32 %v2704, 1.0
    %v2706 = vlog2.pop %v2705
    %v2707 = vmul.f32 %v2706, 0.6931472
    %v2708 = vmul.f32 -0.5, %v2704
    %v2709 = vadd.f32 %v2708, 1.0
    %v2710 = vmul.f32 %v2709, %v2704
    %v2711 = vand.u32 2147483647, %v2704
    %vm2712 = vcmp.lt.f32.partialorder %v2711, 0.0004427343
    %v2713 = vsel %vm2712, %v2710, %v2707
    %v2714 = vsel %vm2702, %v2678, %v2713
    %vm2715 = vcmp.gt.f32.partialorder %v2688, 20.0
    %v2716 = vmul.f32 %v2688, 1.442695
    %v2717 = vpow.pop %v2716
    %v2718 = vadd.f32 %v2717, 1.0
    %v2719 = vlog2.pop %v2718
    %v2720 = vmul.f32 %v2719, 0.6931472
    %v2721 = vmul.f32 -0.5, %v2717
    %v2722 = vadd.f32 %v2721, 1.0
    %v2723 = vmul.f32 %v2722, %v2717
    %v2724 = vand.u32 2147483647, %v2717
    %vm2725 = vcmp.lt.f32.partialorder %v2724, 0.0004427343
    %v2726 = vsel %vm2725, %v2723, %v2720
    %v2727 = vsel %vm2715, %v2688, %v2726
    %v2728 = vstv %s131
    %v2729 = vmul.f32 %v2701, %v2728
    %v2730 = vstv %s132
    %v2731 = vmul.f32 %v2714, %v2730
    %v2732 = vadd.f32 %v2729, %v2731
    %v2733 = vstv %s133
    %v2734 = vmul.f32 %v2727, %v2733
    %v2735 = vadd.f32 %v2732, %v2734
    %v2736 = vstv %s134
    %v2737 = vadd.f32 %v2735, %v2736
    %s2738 = scalar_lea.vmem [#allocation7], 8
    %v2739 = vld [vmem:[%s2738] sm:$0xff]
    %s2740 = scalar_lea.vmem [#allocation7], 32
    %v2741 = vld [vmem:[%s2740] sm:$0xff]
    %v2742 = vmul.f32 %v2739, %v2599
    %v2743 = vmul.f32 %v2741, %v2601
    %v2744 = vadd.f32 %v2742, %v2743
    %v2745 = vadd.f32 %v2744, %v2604
    %v2746 = vmul.f32 %v2739, %v2606
    %v2747 = vmul.f32 %v2741, %v2608
    %v2748 = vadd.f32 %v2746, %v2747
    %v2749 = vadd.f32 %v2748, %v2611
    %v2750 = vmul.f32 %v2739, %v2613
    %v2751 = vmul.f32 %v2741, %v2615
    %v2752 = vadd.f32 %v2750, %v2751
    %v2753 = vadd.f32 %v2752, %v2618
    %vm2754 = vcmp.gt.f32.partialorder %v2745, 20.0
    %v2755 = vmul.f32 %v2745, 1.442695
    %v2756 = vpow.pop %v2755
    %v2757 = vadd.f32 %v2756, 1.0
    %v2758 = vlog2.pop %v2757
    %v2759 = vmul.f32 %v2758, 0.6931472
    %v2760 = vmul.f32 -0.5, %v2756
    %v2761 = vadd.f32 %v2760, 1.0
    %v2762 = vmul.f32 %v2761, %v2756
    %v2763 = vand.u32 2147483647, %v2756
    %vm2764 = vcmp.lt.f32.partialorder %v2763, 0.0004427343
    %v2765 = vsel %vm2764, %v2762, %v2759
    %v2766 = vsel %vm2754, %v2745, %v2765
    %vm2767 = vcmp.gt.f32.partialorder %v2749, 20.0
    %v2768 = vmul.f32 %v2749, 1.442695
    %v2769 = vpow.pop %v2768
    %v2770 = vadd.f32 %v2769, 1.0
    %v2771 = vlog2.pop %v2770
    %v2772 = vmul.f32 %v2771, 0.6931472
    %v2773 = vmul.f32 -0.5, %v2769
    %v2774 = vadd.f32 %v2773, 1.0
    %v2775 = vmul.f32 %v2774, %v2769
    %v2776 = vand.u32 2147483647, %v2769
    %vm2777 = vcmp.lt.f32.partialorder %v2776, 0.0004427343
    %v2778 = vsel %vm2777, %v2775, %v2772
    %v2779 = vsel %vm2767, %v2749, %v2778
    %vm2780 = vcmp.gt.f32.partialorder %v2753, 20.0
    %v2781 = vmul.f32 %v2753, 1.442695
    %v2782 = vpow.pop %v2781
    %v2783 = vadd.f32 %v2782, 1.0
    %v2784 = vlog2.pop %v2783
    %v2785 = vmul.f32 %v2784, 0.6931472
    %v2786 = vmul.f32 -0.5, %v2782
    %v2787 = vadd.f32 %v2786, 1.0
    %v2788 = vmul.f32 %v2787, %v2782
    %v2789 = vand.u32 2147483647, %v2782
    %vm2790 = vcmp.lt.f32.partialorder %v2789, 0.0004427343
    %v2791 = vsel %vm2790, %v2788, %v2785
    %v2792 = vsel %vm2780, %v2753, %v2791
    %v2793 = vmul.f32 %v2766, %v2659
    %v2794 = vmul.f32 %v2779, %v2661
    %v2795 = vadd.f32 %v2793, %v2794
    %v2796 = vmul.f32 %v2792, %v2664
    %v2797 = vadd.f32 %v2795, %v2796
    %v2798 = vadd.f32 %v2797, %v2667
    %v2799 = vmul.f32 %v2766, %v2669
    %v2800 = vmul.f32 %v2779, %v2671
    %v2801 = vadd.f32 %v2799, %v2800
    %v2802 = vmul.f32 %v2792, %v2674
    %v2803 = vadd.f32 %v2801, %v2802
    %v2804 = vadd.f32 %v2803, %v2677
    %v2805 = vmul.f32 %v2766, %v2679
    %v2806 = vmul.f32 %v2779, %v2681
    %v2807 = vadd.f32 %v2805, %v2806
    %v2808 = vmul.f32 %v2792, %v2684
    %v2809 = vadd.f32 %v2807, %v2808
    %v2810 = vadd.f32 %v2809, %v2687
    %vm2811 = vcmp.gt.f32.partialorder %v2798, 20.0
    %v2812 = vmul.f32 %v2798, 1.442695
    %v2813 = vpow.pop %v2812
    %v2814 = vadd.f32 %v2813, 1.0
    %v2815 = vlog2.pop %v2814
    %v2816 = vmul.f32 %v2815, 0.6931472
    %v2817 = vmul.f32 -0.5, %v2813
    %v2818 = vadd.f32 %v2817, 1.0
    %v2819 = vmul.f32 %v2818, %v2813
    %v2820 = vand.u32 2147483647, %v2813
    %vm2821 = vcmp.lt.f32.partialorder %v2820, 0.0004427343
    %v2822 = vsel %vm2821, %v2819, %v2816
    %v2823 = vsel %vm2811, %v2798, %v2822
    %vm2824 = vcmp.gt.f32.partialorder %v2804, 20.0
    %v2825 = vmul.f32 %v2804, 1.442695
    %v2826 = vpow.pop %v2825
    %v2827 = vadd.f32 %v2826, 1.0
    %v2828 = vlog2.pop %v2827
    %v2829 = vmul.f32 %v2828, 0.6931472
    %v2830 = vmul.f32 -0.5, %v2826
    %v2831 = vadd.f32 %v2830, 1.0
    %v2832 = vmul.f32 %v2831, %v2826
    %v2833 = vand.u32 2147483647, %v2826
    %vm2834 = vcmp.lt.f32.partialorder %v2833, 0.0004427343
    %v2835 = vsel %vm2834, %v2832, %v2829
    %v2836 = vsel %vm2824, %v2804, %v2835
    %vm2837 = vcmp.gt.f32.partialorder %v2810, 20.0
    %v2838 = vmul.f32 %v2810, 1.442695
    %v2839 = vpow.pop %v2838
    %v2840 = vadd.f32 %v2839, 1.0
    %v2841 = vlog2.pop %v2840
    %v2842 = vmul.f32 %v2841, 0.6931472
    %v2843 = vmul.f32 -0.5, %v2839
    %v2844 = vadd.f32 %v2843, 1.0
    %v2845 = vmul.f32 %v2844, %v2839
    %v2846 = vand.u32 2147483647, %v2839
    %vm2847 = vcmp.lt.f32.partialorder %v2846, 0.0004427343
    %v2848 = vsel %vm2847, %v2845, %v2842
    %v2849 = vsel %vm2837, %v2810, %v2848
    %v2850 = vmul.f32 %v2823, %v2728
    %v2851 = vmul.f32 %v2836, %v2730
    %v2852 = vadd.f32 %v2850, %v2851
    %v2853 = vmul.f32 %v2849, %v2733
    %v2854 = vadd.f32 %v2852, %v2853
    %v2855 = vadd.f32 %v2854, %v2736
    %v2856 = vadd.f32 %v2737, %v2855
    %s2857 = scalar_lea.vmem [#allocation7], 16
    %v2858 = vld [vmem:[%s2857] sm:$0xff]
    %s2859 = scalar_lea.vmem [#allocation7], 40
    %v2860 = vld [vmem:[%s2859] sm:$0xff]
    %v2861 = vmul.f32 %v2858, %v2599
    %v2862 = vmul.f32 %v2860, %v2601
    %v2863 = vadd.f32 %v2861, %v2862
    %v2864 = vadd.f32 %v2863, %v2604
    %v2865 = vmul.f32 %v2858, %v2606
    %v2866 = vmul.f32 %v2860, %v2608
    %v2867 = vadd.f32 %v2865, %v2866
    %v2868 = vadd.f32 %v2867, %v2611
    %v2869 = vmul.f32 %v2858, %v2613
    %v2870 = vmul.f32 %v2860, %v2615
    %v2871 = vadd.f32 %v2869, %v2870
    %v2872 = vadd.f32 %v2871, %v2618
    %vm2873 = vcmp.gt.f32.partialorder %v2864, 20.0
    %v2874 = vmul.f32 %v2864, 1.442695
    %v2875 = vpow.pop %v2874
    %v2876 = vadd.f32 %v2875, 1.0
    %v2877 = vlog2.pop %v2876
    %v2878 = vmul.f32 %v2877, 0.6931472
    %v2879 = vmul.f32 -0.5, %v2875
    %v2880 = vadd.f32 %v2879, 1.0
    %v2881 = vmul.f32 %v2880, %v2875
    %v2882 = vand.u32 2147483647, %v2875
    %vm2883 = vcmp.lt.f32.partialorder %v2882, 0.0004427343
    %v2884 = vsel %vm2883, %v2881, %v2878
    %v2885 = vsel %vm2873, %v2864, %v2884
    %vm2886 = vcmp.gt.f32.partialorder %v2868, 20.0
    %v2887 = vmul.f32 %v2868, 1.442695
    %v2888 = vpow.pop %v2887
    %v2889 = vadd.f32 %v2888, 1.0
    %v2890 = vlog2.pop %v2889
    %v2891 = vmul.f32 %v2890, 0.6931472
    %v2892 = vmul.f32 -0.5, %v2888
    %v2893 = vadd.f32 %v2892, 1.0
    %v2894 = vmul.f32 %v2893, %v2888
    %v2895 = vand.u32 2147483647, %v2888
    %vm2896 = vcmp.lt.f32.partialorder %v2895, 0.0004427343
    %v2897 = vsel %vm2896, %v2894, %v2891
    %v2898 = vsel %vm2886, %v2868, %v2897
    %vm2899 = vcmp.gt.f32.partialorder %v2872, 20.0
    %v2900 = vmul.f32 %v2872, 1.442695
    %v2901 = vpow.pop %v2900
    %v2902 = vadd.f32 %v2901, 1.0
    %v2903 = vlog2.pop %v2902
    %v2904 = vmul.f32 %v2903, 0.6931472
    %v2905 = vmul.f32 -0.5, %v2901
    %v2906 = vadd.f32 %v2905, 1.0
    %v2907 = vmul.f32 %v2906, %v2901
    %v2908 = vand.u32 2147483647, %v2901
    %vm2909 = vcmp.lt.f32.partialorder %v2908, 0.0004427343
    %v2910 = vsel %vm2909, %v2907, %v2904
    %v2911 = vsel %vm2899, %v2872, %v2910
    %v2912 = vmul.f32 %v2885, %v2659
    %v2913 = vmul.f32 %v2898, %v2661
    %v2914 = vadd.f32 %v2912, %v2913
    %v2915 = vmul.f32 %v2911, %v2664
    %v2916 = vadd.f32 %v2914, %v2915
    %v2917 = vadd.f32 %v2916, %v2667
    %v2918 = vmul.f32 %v2885, %v2669
    %v2919 = vmul.f32 %v2898, %v2671
    %v2920 = vadd.f32 %v2918, %v2919
    %v2921 = vmul.f32 %v2911, %v2674
    %v2922 = vadd.f32 %v2920, %v2921
    %v2923 = vadd.f32 %v2922, %v2677
    %v2924 = vmul.f32 %v2885, %v2679
    %v2925 = vmul.f32 %v2898, %v2681
    %v2926 = vadd.f32 %v2924, %v2925
    %v2927 = vmul.f32 %v2911, %v2684
    %v2928 = vadd.f32 %v2926, %v2927
    %v2929 = vadd.f32 %v2928, %v2687
    %vm2930 = vcmp.gt.f32.partialorder %v2917, 20.0
    %v2931 = vmul.f32 %v2917, 1.442695
    %v2932 = vpow.pop %v2931
    %v2933 = vadd.f32 %v2932, 1.0
    %v2934 = vlog2.pop %v2933
    %v2935 = vmul.f32 %v2934, 0.6931472
    %v2936 = vmul.f32 -0.5, %v2932
    %v2937 = vadd.f32 %v2936, 1.0
    %v2938 = vmul.f32 %v2937, %v2932
    %v2939 = vand.u32 2147483647, %v2932
    %vm2940 = vcmp.lt.f32.partialorder %v2939, 0.0004427343
    %v2941 = vsel %vm2940, %v2938, %v2935
    %v2942 = vsel %vm2930, %v2917, %v2941
    %vm2943 = vcmp.gt.f32.partialorder %v2923, 20.0
    %v2944 = vmul.f32 %v2923, 1.442695
    %v2945 = vpow.pop %v2944
    %v2946 = vadd.f32 %v2945, 1.0
    %v2947 = vlog2.pop %v2946
    %v2948 = vmul.f32 %v2947, 0.6931472
    %v2949 = vmul.f32 -0.5, %v2945
    %v2950 = vadd.f32 %v2949, 1.0
    %v2951 = vmul.f32 %v2950, %v2945
    %v2952 = vand.u32 2147483647, %v2945
    %vm2953 = vcmp.lt.f32.partialorder %v2952, 0.0004427343
    %v2954 = vsel %vm2953, %v2951, %v2948
    %v2955 = vsel %vm2943, %v2923, %v2954
    %vm2956 = vcmp.gt.f32.partialorder %v2929, 20.0
    %v2957 = vmul.f32 %v2929, 1.442695
    %v2958 = vpow.pop %v2957
    %v2959 = vadd.f32 %v2958, 1.0
    %v2960 = vlog2.pop %v2959
    %v2961 = vmul.f32 %v2960, 0.6931472
    %v2962 = vmul.f32 -0.5, %v2958
    %v2963 = vadd.f32 %v2962, 1.0
    %v2964 = vmul.f32 %v2963, %v2958
    %v2965 = vand.u32 2147483647, %v2958
    %vm2966 = vcmp.lt.f32.partialorder %v2965, 0.0004427343
    %v2967 = vsel %vm2966, %v2964, %v2961
    %v2968 = vsel %vm2956, %v2929, %v2967
    %v2969 = vmul.f32 %v2942, %v2728
    %v2970 = vmul.f32 %v2955, %v2730
    %v2971 = vadd.f32 %v2969, %v2970
    %v2972 = vmul.f32 %v2968, %v2733
    %v2973 = vadd.f32 %v2971, %v2972
    %v2974 = vadd.f32 %v2973, %v2736
    %v2975 = vadd.f32 %v2856, %v2974
    %v2976 = vstv %s135
    %v2977 = vmul.f32 %v2595, %v2976
    %v2978 = vstv %s136
    %v2979 = vmul.f32 %v2975, %v2978
    %v2980 = vadd.f32 %v2977, %v2979
    %v2981 = vstv %s137
    %v2982 = vadd.f32 %v2980, %v2981
    %2983 = vst [vmem:[#allocation9] sm:$0xff] %v2982
    // Predicated region
    $region26: #{tpu_custom_call.1} parent=1 // pred_check
      _
    $region27: #{tpu_custom_call.1} parent=1 // pred_check_branch
      %2985 = sbr.rel (0) target = $region29
    $region28: #{tpu_custom_call.1} parent=1 // pred_region
      %s2987 = ssub.s32 128, 128
      %2988 = vsyncadd [#allocation4], %s2987
      %s2990 = sshll.u32 [#allocation9], 4
      %s2991 = int_to_ptr.vmem [resolvable:$true] %s2990
      %2993 = dma.vmem_to_hbm [thread:$0]  %s2991, 128, %s3, [#allocation4]
    $region29: #{tpu_custom_call.1} parent=1 // pred_fallthru
      _
    // Predicated region
    $region30: #{tpu_custom_call.1} parent=1 // pred_check
      _
    $region31: #{tpu_custom_call.1} parent=1 // pred_check_branch
      %2995 = sbr.rel (0) target = $region33
    $region32: #{tpu_custom_call.1} parent=1 // pred_region
      %2996 = dma.done [#allocation4], 128
    $region33: #{tpu_custom_call.1} parent=1 // pred_fallthru
      _
    %2997 = vsyncpa [#allocation3], 1
    %2998 = vsyncpa [#allocation8], 1
    %2999 = vsyncpa [#allocation4], 1
    %3000 = vsyncpa [#allocation5], 1

</llo_original>
